<compile_context>
chip_gen: v7x
topology: tpu7x:2x2x1
jax: 0.10.0
libtpu: 0.0.40
codegen_flags: <defaults>
</compile_context>

<pallas_src>
import jax
import jax.numpy as jnp
import numpy as np
from jax import lax
from jax.experimental import pallas as pl
from jax.experimental.pallas import tpu as pltpu


# ----------------------------- Pallas kernels -----------------------------

def lstm_stack_kernel(x_ref, len_ref, wih0_ref, whh0_ref, b0_ref,
                      wih1_ref, whh1_ref, b1_ref, wout_ref, proj_ref,
                      xp_scr, y_scr, h_scr, c_scr):
    """Two fused LSTM layers (PyTorch gate order i,f,g,o) with length masking,
    plus the per-stack fusion projection h_last @ W_{q|h}.

    One grid step handles one stack (question or history); the grid axis selects
    the stacked weights via the BlockSpec index_maps.

    x_ref:    (T, Np, E)  bf16 time-major embeddings (batch padded to Np)
    len_ref:  (Np, 1)     int32 true lengths (0 for padded rows)
    wih*_ref: (E|H, 4H)   bf16 input weights (transposed)
    whh*_ref: (H, 4H)     bf16 recurrent weights (transposed)
    b*_ref:   (1, 4H)     f32  b_ih + b_hh
    wout_ref: (H, H)      f32  this stack's block of the fusion Linear
    proj_ref: (Np, H)     f32  h_last @ wout  (DynamicRNN output, pre-fused)
    xp_scr:   (T, Np, 4H) f32  hoisted input projection (bias folded in)
    y_scr:    (T, Np, H)  f32  layer-0 output sequence (stays in VMEM)
    """
    T, Np, E = x_ref.shape
    H = h_scr.shape[1]
    len_col = len_ref[...]                                    # (Np, 1) int32

    def run_layer(whh_ref, write_y):
        h_scr[...] = jnp.zeros_like(h_scr)
        c_scr[...] = jnp.zeros_like(c_scr)

        def step(t, carry):
            h = h_scr[...]
            c = c_scr[...]
            # Only the small recurrent matmul lives inside the serial loop.
            gates = xp_scr[t] + jnp.dot(h.astype(jnp.bfloat16), whh_ref[...],
                                        preferred_element_type=jnp.float32)
            i_g = jax.nn.sigmoid(gates[:, 0 * H:1 * H])
            f_g = jax.nn.sigmoid(gates[:, 1 * H:2 * H])
            g_g = jnp.tanh(gates[:, 2 * H:3 * H])
            o_g = jax.nn.sigmoid(gates[:, 3 * H:4 * H])
            c_new = f_g * c + i_g * g_g
            h_new = o_g * jnp.tanh(c_new)
            mask = t < len_col                                # freeze past len-1
            h2 = jnp.where(mask, h_new, h)
            c2 = jnp.where(mask, c_new, c)
            h_scr[...] = h2
            c_scr[...] = c2
            if write_y:
                y_scr[t] = h2
            return carry

        lax.fori_loop(0, T, step, 0, unroll=True)             # T is small & static

    # ---- Layer 0: hoisted input projection (one big bf16 MXU matmul) ----
    xp0 = jnp.dot(x_ref[...].reshape(T * Np, E), wih0_ref[...],
                  preferred_element_type=jnp.float32) + b0_ref[...]
    xp_scr[...] = xp0.reshape(T, Np, 4 * H)
    run_layer(whh0_ref, write_y=True)

    # ---- Layer 1: project the VMEM-resident layer-0 sequence in one matmul ----
    xp1 = jnp.dot(y_scr[...].reshape(T * Np, H).astype(jnp.bfloat16), wih1_ref[...],
                  preferred_element_type=jnp.float32) + b1_ref[...]
    xp_scr[...] = xp1.reshape(T, Np, 4 * H)
    run_layer(whh1_ref, write_y=False)

    # ---- Finalize: per-stack fusion projection rides the parallel grid ----
    proj_ref[...] = jnp.dot(h_scr[...], wout_ref[...],
                            preferred_element_type=jnp.float32)


def fusion_kernel(img_ref, sel_ref, proj_ref, wimg_ref, b_ref, o_ref):
    """tanh(repeat(img) @ W_img + qh @ W_q + hh @ W_h + b), where the q/h
    projections were already computed in the LSTM kernel.  repeat(img) is never
    materialized: project once per image, then replicate with a 0/1 matmul.

    img_ref: (B, IMG), sel_ref: (Np, B) 0/1 selection (row n -> image n // R),
    proj_ref: (2, Np, H) pre-projected question/history terms, o_ref: (Np, H).
    """
    img_proj = jnp.dot(img_ref[...], wimg_ref[...],
                       preferred_element_type=jnp.float32)     # (B, H)
    img_rep = jnp.dot(sel_ref[...], img_proj,
                      preferred_element_type=jnp.float32)      # (Np, H)
    o_ref[...] = jnp.tanh(img_rep + proj_ref[0] + proj_ref[1] + b_ref[...])


# ----------------------------- Wrappers -----------------------------

_VMEM_SPEC = pl.BlockSpec(memory_space=pltpu.MemorySpace.VMEM)


def _round_up(n, m):
    return ((n + m - 1) // m) * m


def lstm_stacks(x2, len2, wih0, whh0, b0, wih1, whh1, b1, wout2):
    """Run both (question, history) 2-layer LSTM stacks in one pallas_call.
    Returns the stacked fusion contributions (2, Np, H)."""
    S, T, Np, E = x2.shape            # S == 2
    H = whh0.shape[1]
    return pl.pallas_call(
        lstm_stack_kernel,
        out_shape=jax.ShapeDtypeStruct((S, Np, H), jnp.float32),
        grid_spec=pltpu.PrefetchScalarGridSpec(
            num_scalar_prefetch=0,
            grid=(S,),
            in_specs=[
                pl.BlockSpec((None, T, Np, E), lambda s: (s, 0, 0, 0)),
                pl.BlockSpec((None, Np, 1), lambda s: (s, 0, 0)),
                pl.BlockSpec((None, E, 4 * H), lambda s: (s, 0, 0)),
                pl.BlockSpec((None, H, 4 * H), lambda s: (s, 0, 0)),
                pl.BlockSpec((None, 1, 4 * H), lambda s: (s, 0, 0)),
                pl.BlockSpec((None, H, 4 * H), lambda s: (s, 0, 0)),
                pl.BlockSpec((None, H, 4 * H), lambda s: (s, 0, 0)),
                pl.BlockSpec((None, 1, 4 * H), lambda s: (s, 0, 0)),
                pl.BlockSpec((None, H, H), lambda s: (s, 0, 0)),
            ],
            out_specs=pl.BlockSpec((None, Np, H), lambda s: (s, 0, 0)),
            scratch_shapes=[
                pltpu.VMEM((T, Np, 4 * H), jnp.float32),   # hoisted input projection
                pltpu.VMEM((T, Np, H), jnp.float32),       # layer-0 output sequence
                pltpu.VMEM((Np, H), jnp.float32),          # h
                pltpu.VMEM((Np, H), jnp.float32),          # c
            ],
        ),
        # "parallel" -> the two stacks split across the 2 TensorCores on v7x.
        compiler_params=pltpu.CompilerParams(dimension_semantics=("parallel",)),
    )(x2, len2, wih0, whh0, b0, wih1, whh1, b1, wout2)


def fusion(img, sel, proj2, w_img, b):
    Np, H = proj2.shape[1], proj2.shape[2]
    return pl.pallas_call(
        fusion_kernel,
        out_shape=jax.ShapeDtypeStruct((Np, H), jnp.float32),
        in_specs=[_VMEM_SPEC] * 5,
        out_specs=_VMEM_SPEC,
    )(img, sel, proj2, w_img, b)


def pack_params(params, img_feature_size, hidden):
    """Torch-layout params -> kernel layout (stacked stacks, bf16 LSTM weights,
    fusion Linear split into per-input weight blocks)."""
    q, h = params['ques_rnn'], params['hist_rnn']
    assert len(q) == 2 and len(h) == 2, "kernel is specialized for num_layers=2"

    def stack(layer, item):
        return jnp.stack([q[layer][item], h[layer][item]], axis=0)

    kp = dict(
        word_embed=params['word_embed'],
        wih0=stack(0, 0).astype(jnp.bfloat16),
        whh0=stack(0, 1).astype(jnp.bfloat16),
        b0=stack(0, 2).astype(jnp.float32),
        wih1=stack(1, 0).astype(jnp.bfloat16),
        whh1=stack(1, 1).astype(jnp.bfloat16),
        b1=stack(1, 2).astype(jnp.float32),
    )
    W = params['fusion_w_t']                       # (IMG + 2H, H)
    IMG, H = img_feature_size, hidden
    kp['w_img'] = W[:IMG]
    kp['w_qh'] = jnp.stack([W[IMG:IMG + H], W[IMG + H:]], axis=0)   # (2, H, H)
    kp['fusion_b'] = params['fusion_b']
    return kp


def late_fusion_encoder_forward(kparams, batch, max_ques_count, img_feature_size):
    img = batch['img_feat']                        # (B, IMG)
    ques = batch['ques']                           # (B, R, Tq) int32
    hist = batch['hist']                           # (B, R, Th) int32
    B = img.shape[0]
    R = max_ques_count
    N = B * R
    Np = _round_up(N, 8)                           # sublane-pad the batch dim

    ques_flat = ques.reshape(N, ques.shape[2])
    hist_flat = hist.reshape(N, hist.shape[2])
    T = max(ques_flat.shape[1], hist_flat.shape[1])

    emb = kparams['word_embed']
    qe = jnp.take(emb, ques_flat, axis=0)          # embedding gather (JAX glue)
    he = jnp.take(emb, hist_flat, axis=0)

    def prep(e):                                   # pad (N,T*,E) -> bf16 (T,Np,E)
        e = jnp.pad(e, ((0, Np - N), (0, T - e.shape[1]), (0, 0)))
        return jnp.transpose(e, (1, 0, 2)).astype(jnp.bfloat16)

    x2 = jnp.stack([prep(qe), prep(he)], axis=0)   # (2, T, Np, E)

    def prep_len(l):
        return jnp.pad(l.reshape(-1).astype(jnp.int32), (0, Np - N))

    len2 = jnp.stack([prep_len(batch['ques_len']), prep_len(batch['hist_len'])],
                     axis=0).reshape(2, Np, 1)

    proj2 = lstm_stacks(x2, len2, kparams['wih0'], kparams['whh0'], kparams['b0'],
                        kparams['wih1'], kparams['whh1'], kparams['b1'],
                        kparams['w_qh'])           # (2, Np, H) = (qh@Wq, hh@Wh)

    # 0/1 selection matrix: output row n takes image n // R (zero for pad rows).
    rows = jnp.arange(Np)
    sel = (((rows[:, None] // R) == jnp.arange(B)[None, :])
           & (rows[:, None] < N)).astype(jnp.float32)

    out_p = fusion(img.astype(jnp.float32), sel, proj2,
                   kparams['w_img'], kparams['fusion_b'])      # (Np, H)
    # TODO(synk): nn.Dropout(p=0.5) is identity in eval mode; not applied here.
    return out_p[:N]


# ----------------------------- Reference (pure JAX, f32) -----------------------------

def _ref_lstm(x, lengths, layers):
    N, T, _ = x.shape
    inp = x.astype(jnp.float32)
    h = None
    for (wih_t, whh_t, b) in layers:
        H = whh_t.shape[0]
        h = jnp.zeros((N, H), jnp.float32)
        c = jnp.zeros((N, H), jnp.float32)
        ys = []
        for t in range(T):
            gates = inp[:, t, :] @ wih_t + h @ whh_t + b
            i = jax.nn.sigmoid(gates[:, :H])
            f = jax.nn.sigmoid(gates[:, H:2 * H])
            g = jnp.tanh(gates[:, 2 * H:3 * H])
            o = jax.nn.sigmoid(gates[:, 3 * H:])
            c_new = f * c + i * g
            h_new = o * jnp.tanh(c_new)
            mask = (t < lengths)[:, None]
            h = jnp.where(mask, h_new, h)
            c = jnp.where(mask, c_new, c)
            ys.append(h)
        inp = jnp.stack(ys, axis=1)
    return h


def _ref_forward(params, batch, R, IMG):
    B = batch['img_feat'].shape[0]
    img_rep = jnp.repeat(batch['img_feat'][:, None, :], R, axis=1).reshape(B * R, IMG)
    emb = params['word_embed']
    qe = jnp.take(emb, batch['ques'].reshape(B * R, -1), axis=0)
    he = jnp.take(emb, batch['hist'].reshape(B * R, -1), axis=0)
    qh = _ref_lstm(qe, batch['ques_len'].reshape(-1), params['ques_rnn'])
    hh = _ref_lstm(he, batch['hist_len'].reshape(-1), params['hist_rnn'])
    fused = jnp.concatenate([img_rep.astype(jnp.float32), qh, hh], axis=1)
    return jnp.tanh(fused @ params['fusion_w_t'] + params['fusion_b'])


# ----------------------------- Main -----------------------------

def _make_lstm_params(key, num_layers, e_in, hidden):
    layers = []
    k = 1.0 / np.sqrt(hidden)
    for l in range(num_layers):
        ein = e_in if l == 0 else hidden
        key, k1, k2, k3, k4 = jax.random.split(key, 5)
        wih_t = jax.random.uniform(k1, (ein, 4 * hidden), jnp.float32, -k, k)
        whh_t = jax.random.uniform(k2, (hidden, 4 * hidden), jnp.float32, -k, k)
        b_ih = jax.random.uniform(k3, (4 * hidden,), jnp.float32, -k, k)
        b_hh = jax.random.uniform(k4, (4 * hidden,), jnp.float32, -k, k)
        layers.append((wih_t, whh_t, (b_ih + b_hh)[None, :]))
    return layers, key


if __name__ == "__main__":
    # Small, TPU-friendly shapes consistent with the module's forward.
    B, R = 2, 3            # batch, max_ques_count (dialog rounds)
    Tq, Th = 8, 10         # question / history token lengths (differ on purpose)
    VOCAB = 50
    E = 64                 # embed_size
    H = 128                # rnn_hidden_size
    IMG = 256              # img_feature_size
    NUM_LAYERS = 2

    key = jax.random.PRNGKey(0)
    key, k_emb, k_img, k_q, k_h, k_ql, k_hl, k_fw = jax.random.split(key, 8)

    # Parameters (deterministic, synthetic, torch layout).
    word_embed = 0.1 * jax.random.normal(k_emb, (VOCAB, E), jnp.float32)
    word_embed = word_embed.at[0].set(0.0)                 # padding_idx=0
    ques_rnn, key = _make_lstm_params(key, NUM_LAYERS, E, H)
    hist_rnn, key = _make_lstm_params(key, NUM_LAYERS, E, H)
    fusion_size = IMG + 2 * H
    xav = np.sqrt(6.0 / (fusion_size + H))
    fusion_w_t = jax.random.uniform(k_fw, (fusion_size, H), jnp.float32, -xav, xav)
    fusion_b = jnp.zeros((1, H), jnp.float32)              # init.constant(bias, 0)

    params = dict(word_embed=word_embed, ques_rnn=ques_rnn, hist_rnn=hist_rnn,
                  fusion_w_t=fusion_w_t, fusion_b=fusion_b)
    kparams = pack_params(params, IMG, H)

    # Inputs.
    batch = dict(
        img_feat=jax.random.normal(k_img, (B, IMG), jnp.float32),
        ques=jax.random.randint(k_q, (B, R, Tq), 0, VOCAB, jnp.int32),
        hist=jax.random.randint(k_h, (B, R, Th), 0, VOCAB, jnp.int32),
        ques_len=jax.random.randint(k_ql, (B, R), 1, Tq + 1, jnp.int32),
        hist_len=jax.random.randint(k_hl, (B, R), 1, Th + 1, jnp.int32),
    )

    out = late_fusion_encoder_forward(kparams, batch, R, IMG)
    out = jax.block_until_ready(out)
    assert out.shape == (B * R, H), out.shape

    ref = jax.block_until_ready(_ref_forward(params, batch, R, IMG))
    np.testing.assert_allclose(np.asarray(out), np.asarray(ref), atol=1e-2, rtol=1e-2)

    print("KERNEL_OK")
</pallas_src>

<mosaic_0001>
module attributes {stable_mosaic.version = 11 : i64} {
  func.func @lstm_stack_kernel(%arg0: i32, %arg1: memref<1x10x8x64xbf16, #tpu.memory_space<vmem>>, %arg2: memref<1x8x1xi32, #tpu.memory_space<vmem>>, %arg3: memref<1x64x512xbf16, #tpu.memory_space<vmem>>, %arg4: memref<1x128x512xbf16, #tpu.memory_space<vmem>>, %arg5: memref<1x1x512xf32, #tpu.memory_space<vmem>>, %arg6: memref<1x128x512xbf16, #tpu.memory_space<vmem>>, %arg7: memref<1x128x512xbf16, #tpu.memory_space<vmem>>, %arg8: memref<1x1x512xf32, #tpu.memory_space<vmem>>, %arg9: memref<1x128x128xf32, #tpu.memory_space<vmem>>, %arg10: memref<1x8x128xf32, #tpu.memory_space<vmem>>, %arg11: memref<10x8x512xf32, #tpu.memory_space<vmem>>, %arg12: memref<10x8x128xf32, #tpu.memory_space<vmem>>, %arg13: memref<8x128xf32, #tpu.memory_space<vmem>>, %arg14: memref<8x128xf32, #tpu.memory_space<vmem>>) attributes {dimension_semantics = [#tpu.dimension_semantics<parallel>], iteration_bounds = array<i64: 2>, scalar_prefetch = 0 : i64, scratch_operands = 4 : i64, tpu.core_type = #tpu.core_type<tc>, window_params = [{transform_indices = @transform_0, window_bounds = array<i64: 1, 10, 8, 64>}, {transform_indices = @transform_1, window_bounds = array<i64: 1, 8, 1>}, {transform_indices = @transform_2, window_bounds = array<i64: 1, 64, 512>}, {transform_indices = @transform_3, window_bounds = array<i64: 1, 128, 512>}, {transform_indices = @transform_4, window_bounds = array<i64: 1, 1, 512>}, {transform_indices = @transform_5, window_bounds = array<i64: 1, 128, 512>}, {transform_indices = @transform_6, window_bounds = array<i64: 1, 128, 512>}, {transform_indices = @transform_7, window_bounds = array<i64: 1, 1, 512>}, {transform_indices = @transform_8, window_bounds = array<i64: 1, 128, 128>}, {transform_indices = @transform_9, window_bounds = array<i64: 1, 8, 128>}]} {
    %c0 = arith.constant 0 : index
    %c0_0 = arith.constant 0 : index
    %c0_1 = arith.constant 0 : index
    %0 = vector.load %arg2[%c0, %c0_0, %c0_1] : memref<1x8x1xi32, #tpu.memory_space<vmem>>, vector<1x8x1xi32>
    %1 = vector.shape_cast %0 : vector<1x8x1xi32> to vector<8x1xi32>
    %c0_2 = arith.constant 0 : index
    %c0_3 = arith.constant 0 : index
    %c0_4 = arith.constant 0 : index
    %c0_5 = arith.constant 0 : index
    %2 = vector.load %arg1[%c0_2, %c0_3, %c0_4, %c0_5] : memref<1x10x8x64xbf16, #tpu.memory_space<vmem>>, vector<1x10x8x64xbf16>
    %3 = vector.shape_cast %2 : vector<1x10x8x64xbf16> to vector<10x8x64xbf16>
    %4 = vector.shape_cast %3 : vector<10x8x64xbf16> to vector<80x64xbf16>
    %c0_6 = arith.constant 0 : index
    %c0_7 = arith.constant 0 : index
    %c0_8 = arith.constant 0 : index
    %5 = vector.load %arg3[%c0_6, %c0_7, %c0_8] : memref<1x64x512xbf16, #tpu.memory_space<vmem>>, vector<1x64x512xbf16>
    %6 = vector.shape_cast %5 : vector<1x64x512xbf16> to vector<64x512xbf16>
    %cst = arith.constant dense<0.000000e+00> : vector<80x512xf32>
    %7 = tpu.matmul %4, %6, %cst {dimension_numbers = #tpu.dot_dimension_numbers<[1], [0], [0], [1], [0, 0, 1, 1], [], []>} : vector<80x64xbf16>, vector<64x512xbf16>, vector<80x512xf32> -> vector<80x512xf32>
    %c0_9 = arith.constant 0 : index
    %c0_10 = arith.constant 0 : index
    %c0_11 = arith.constant 0 : index
    %8 = vector.load %arg5[%c0_9, %c0_10, %c0_11] : memref<1x1x512xf32, #tpu.memory_space<vmem>>, vector<1x1x512xf32>
    %9 = vector.shape_cast %8 : vector<1x1x512xf32> to vector<1x512xf32>
    %10 = vector.broadcast %9 : vector<1x512xf32> to vector<80x512xf32>
    %11 = arith.addf %7, %10 : vector<80x512xf32>
    %12 = vector.shape_cast %11 : vector<80x512xf32> to vector<10x8x512xf32>
    %c0_12 = arith.constant 0 : index
    %c0_13 = arith.constant 0 : index
    %c0_14 = arith.constant 0 : index
    %13 = vector.load %arg11[%c0_12, %c0_13, %c0_14] : memref<10x8x512xf32, #tpu.memory_space<vmem>>, vector<10x8x512xf32>
    tpu.vector_store %arg11[%c0_12, %c0_13, %c0_14], %12 {strides = array<i32>} : memref<10x8x512xf32, #tpu.memory_space<vmem>>, vector<10x8x512xf32>,
    %cst_15 = arith.constant 0.000000e+00 : f32
    %14 = vector.broadcast %cst_15 : f32 to vector<8x128xf32>
    %c0_16 = arith.constant 0 : index
    %c0_17 = arith.constant 0 : index
    %15 = vector.load %arg13[%c0_16, %c0_17] : memref<8x128xf32, #tpu.memory_space<vmem>>, vector<8x128xf32>
    tpu.vector_store %arg13[%c0_16, %c0_17], %14 {strides = array<i32>} : memref<8x128xf32, #tpu.memory_space<vmem>>, vector<8x128xf32>,
    %cst_18 = arith.constant 0.000000e+00 : f32
    %16 = vector.broadcast %cst_18 : f32 to vector<8x128xf32>
    %c0_19 = arith.constant 0 : index
    %c0_20 = arith.constant 0 : index
    %17 = vector.load %arg14[%c0_19, %c0_20] : memref<8x128xf32, #tpu.memory_space<vmem>>, vector<8x128xf32>
    tpu.vector_store %arg14[%c0_19, %c0_20], %16 {strides = array<i32>} : memref<8x128xf32, #tpu.memory_space<vmem>>, vector<8x128xf32>,
    %c0_i32 = arith.constant 0 : i32
    %c0_21 = arith.constant 0 : index
    %c0_22 = arith.constant 0 : index
    %18 = vector.load %arg13[%c0_21, %c0_22] : memref<8x128xf32, #tpu.memory_space<vmem>>, vector<8x128xf32>
    %c0_23 = arith.constant 0 : index
    %c0_24 = arith.constant 0 : index
    %19 = vector.load %arg14[%c0_23, %c0_24] : memref<8x128xf32, #tpu.memory_space<vmem>>, vector<8x128xf32>
    %20 = arith.index_cast %c0_i32 : i32 to index
    %c0_25 = arith.constant 0 : index
    %c0_26 = arith.constant 0 : index
    %21 = vector.load %arg11[%20, %c0_25, %c0_26] : memref<10x8x512xf32, #tpu.memory_space<vmem>>, vector<1x8x512xf32>
    %22 = vector.shape_cast %21 : vector<1x8x512xf32> to vector<8x512xf32>
    %23 = arith.truncf %18 : vector<8x128xf32> to vector<8x128xbf16>
    %c0_27 = arith.constant 0 : index
    %c0_28 = arith.constant 0 : index
    %c0_29 = arith.constant 0 : index
    %24 = vector.load %arg4[%c0_27, %c0_28, %c0_29] : memref<1x128x512xbf16, #tpu.memory_space<vmem>>, vector<1x128x512xbf16>
    %25 = vector.shape_cast %24 : vector<1x128x512xbf16> to vector<128x512xbf16>
    %cst_30 = arith.constant dense<0.000000e+00> : vector<8x512xf32>
    %26 = tpu.matmul %23, %25, %cst_30 {dimension_numbers = #tpu.dot_dimension_numbers<[1], [0], [0], [1], [0, 0, 1, 1], [], []>} : vector<8x128xbf16>, vector<128x512xbf16>, vector<8x512xf32> -> vector<8x512xf32>
    %27 = arith.addf %22, %26 : vector<8x512xf32>
    %28 = vector.extract_strided_slice %27 {offsets = [0, 0], sizes = [8, 128], strides = [1, 1]} : vector<8x512xf32> to vector<8x128xf32>
    %29 = arith.negf %28 : vector<8x128xf32>
    %30 = math.exp %29 : vector<8x128xf32>
    %cst_31 = arith.constant 1.000000e+00 : f32
    %31 = vector.broadcast %cst_31 : f32 to vector<8x128xf32>
    %32 = arith.addf %31, %30 : vector<8x128xf32>
    %33 = arith.divf %31, %32 : vector<8x128xf32>
    %34 = vector.extract_strided_slice %27 {offsets = [0, 128], sizes = [8, 128], strides = [1, 1]} : vector<8x512xf32> to vector<8x128xf32>
    %35 = arith.negf %34 : vector<8x128xf32>
    %36 = math.exp %35 : vector<8x128xf32>
    %cst_32 = arith.constant 1.000000e+00 : f32
    %37 = vector.broadcast %cst_32 : f32 to vector<8x128xf32>
    %38 = arith.addf %37, %36 : vector<8x128xf32>
    %39 = arith.divf %37, %38 : vector<8x128xf32>
    %40 = vector.extract_strided_slice %27 {offsets = [0, 256], sizes = [8, 128], strides = [1, 1]} : vector<8x512xf32> to vector<8x128xf32>
    %41 = math.tanh %40 : vector<8x128xf32>
    %42 = vector.extract_strided_slice %27 {offsets = [0, 384], sizes = [8, 128], strides = [1, 1]} : vector<8x512xf32> to vector<8x128xf32>
    %43 = arith.negf %42 : vector<8x128xf32>
    %44 = math.exp %43 : vector<8x128xf32>
    %cst_33 = arith.constant 1.000000e+00 : f32
    %45 = vector.broadcast %cst_33 : f32 to vector<8x128xf32>
    %46 = arith.addf %45, %44 : vector<8x128xf32>
    %47 = arith.divf %45, %46 : vector<8x128xf32>
    %48 = arith.mulf %39, %19 : vector<8x128xf32>
    %49 = arith.mulf %33, %41 : vector<8x128xf32>
    %50 = arith.addf %48, %49 : vector<8x128xf32>
    %51 = math.tanh %50 : vector<8x128xf32>
    %52 = arith.mulf %47, %51 : vector<8x128xf32>
    %53 = vector.broadcast %c0_i32 : i32 to vector<8x1xi32>
    %54 = arith.cmpi slt, %53, %1 : vector<8x1xi32>
    %55 = vector.shape_cast %54 : vector<8x1xi1> to vector<8x1xi1>
    %56 = vector.broadcast %55 : vector<8x1xi1> to vector<8x128xi1>
    %57 = arith.select %56, %52, %18 : vector<8x128xi1>, vector<8x128xf32>
    %58 = vector.shape_cast %54 : vector<8x1xi1> to vector<8x1xi1>
    %59 = vector.broadcast %58 : vector<8x1xi1> to vector<8x128xi1>
    %60 = arith.select %59, %50, %19 : vector<8x128xi1>, vector<8x128xf32>
    %c0_34 = arith.constant 0 : index
    %c0_35 = arith.constant 0 : index
    %61 = vector.load %arg13[%c0_34, %c0_35] : memref<8x128xf32, #tpu.memory_space<vmem>>, vector<8x128xf32>
    tpu.vector_store %arg13[%c0_34, %c0_35], %57 {strides = array<i32>} : memref<8x128xf32, #tpu.memory_space<vmem>>, vector<8x128xf32>,
    %c0_36 = arith.constant 0 : index
    %c0_37 = arith.constant 0 : index
    %62 = vector.load %arg14[%c0_36, %c0_37] : memref<8x128xf32, #tpu.memory_space<vmem>>, vector<8x128xf32>
    tpu.vector_store %arg14[%c0_36, %c0_37], %60 {strides = array<i32>} : memref<8x128xf32, #tpu.memory_space<vmem>>, vector<8x128xf32>,
    %63 = arith.index_cast %c0_i32 : i32 to index
    %c0_38 = arith.constant 0 : index
    %c0_39 = arith.constant 0 : index
    %64 = vector.load %arg12[%63, %c0_38, %c0_39] : memref<10x8x128xf32, #tpu.memory_space<vmem>>, vector<1x8x128xf32>
    %65 = vector.shape_cast %64 : vector<1x8x128xf32> to vector<8x128xf32>
    %66 = vector.shape_cast %57 : vector<8x128xf32> to vector<1x8x128xf32>
    tpu.vector_store %arg12[%63, %c0_38, %c0_39], %66 {strides = array<i32>} : memref<10x8x128xf32, #tpu.memory_space<vmem>>, vector<1x8x128xf32>,
    %c1_i32 = arith.constant 1 : i32
    %c0_40 = arith.constant 0 : index
    %c0_41 = arith.constant 0 : index
    %67 = vector.load %arg13[%c0_40, %c0_41] : memref<8x128xf32, #tpu.memory_space<vmem>>, vector<8x128xf32>
    %c0_42 = arith.constant 0 : index
    %c0_43 = arith.constant 0 : index
    %68 = vector.load %arg14[%c0_42, %c0_43] : memref<8x128xf32, #tpu.memory_space<vmem>>, vector<8x128xf32>
    %69 = arith.index_cast %c1_i32 : i32 to index
    %c0_44 = arith.constant 0 : index
    %c0_45 = arith.constant 0 : index
    %70 = vector.load %arg11[%69, %c0_44, %c0_45] : memref<10x8x512xf32, #tpu.memory_space<vmem>>, vector<1x8x512xf32>
    %71 = vector.shape_cast %70 : vector<1x8x512xf32> to vector<8x512xf32>
    %72 = arith.truncf %67 : vector<8x128xf32> to vector<8x128xbf16>
    %c0_46 = arith.constant 0 : index
    %c0_47 = arith.constant 0 : index
    %c0_48 = arith.constant 0 : index
    %73 = vector.load %arg4[%c0_46, %c0_47, %c0_48] : memref<1x128x512xbf16, #tpu.memory_space<vmem>>, vector<1x128x512xbf16>
    %74 = vector.shape_cast %73 : vector<1x128x512xbf16> to vector<128x512xbf16>
    %cst_49 = arith.constant dense<0.000000e+00> : vector<8x512xf32>
    %75 = tpu.matmul %72, %74, %cst_49 {dimension_numbers = #tpu.dot_dimension_numbers<[1], [0], [0], [1], [0, 0, 1, 1], [], []>} : vector<8x128xbf16>, vector<128x512xbf16>, vector<8x512xf32> -> vector<8x512xf32>
    %76 = arith.addf %71, %75 : vector<8x512xf32>
    %77 = vector.extract_strided_slice %76 {offsets = [0, 0], sizes = [8, 128], strides = [1, 1]} : vector<8x512xf32> to vector<8x128xf32>
    %78 = arith.negf %77 : vector<8x128xf32>
    %79 = math.exp %78 : vector<8x128xf32>
    %cst_50 = arith.constant 1.000000e+00 : f32
    %80 = vector.broadcast %cst_50 : f32 to vector<8x128xf32>
    %81 = arith.addf %80, %79 : vector<8x128xf32>
    %82 = arith.divf %80, %81 : vector<8x128xf32>
    %83 = vector.extract_strided_slice %76 {offsets = [0, 128], sizes = [8, 128], strides = [1, 1]} : vector<8x512xf32> to vector<8x128xf32>
    %84 = arith.negf %83 : vector<8x128xf32>
    %85 = math.exp %84 : vector<8x128xf32>
    %cst_51 = arith.constant 1.000000e+00 : f32
    %86 = vector.broadcast %cst_51 : f32 to vector<8x128xf32>
    %87 = arith.addf %86, %85 : vector<8x128xf32>
    %88 = arith.divf %86, %87 : vector<8x128xf32>
    %89 = vector.extract_strided_slice %76 {offsets = [0, 256], sizes = [8, 128], strides = [1, 1]} : vector<8x512xf32> to vector<8x128xf32>
    %90 = math.tanh %89 : vector<8x128xf32>
    %91 = vector.extract_strided_slice %76 {offsets = [0, 384], sizes = [8, 128], strides = [1, 1]} : vector<8x512xf32> to vector<8x128xf32>
    %92 = arith.negf %91 : vector<8x128xf32>
    %93 = math.exp %92 : vector<8x128xf32>
    %cst_52 = arith.constant 1.000000e+00 : f32
    %94 = vector.broadcast %cst_52 : f32 to vector<8x128xf32>
    %95 = arith.addf %94, %93 : vector<8x128xf32>
    %96 = arith.divf %94, %95 : vector<8x128xf32>
    %97 = arith.mulf %88, %68 : vector<8x128xf32>
    %98 = arith.mulf %82, %90 : vector<8x128xf32>
    %99 = arith.addf %97, %98 : vector<8x128xf32>
    %100 = math.tanh %99 : vector<8x128xf32>
    %101 = arith.mulf %96, %100 : vector<8x128xf32>
    %102 = vector.broadcast %c1_i32 : i32 to vector<8x1xi32>
    %103 = arith.cmpi slt, %102, %1 : vector<8x1xi32>
    %104 = vector.shape_cast %103 : vector<8x1xi1> to vector<8x1xi1>
    %105 = vector.broadcast %104 : vector<8x1xi1> to vector<8x128xi1>
    %106 = arith.select %105, %101, %67 : vector<8x128xi1>, vector<8x128xf32>
    %107 = vector.shape_cast %103 : vector<8x1xi1> to vector<8x1xi1>
    %108 = vector.broadcast %107 : vector<8x1xi1> to vector<8x128xi1>
    %109 = arith.select %108, %99, %68 : vector<8x128xi1>, vector<8x128xf32>
    %c0_53 = arith.constant 0 : index
    %c0_54 = arith.constant 0 : index
    %110 = vector.load %arg13[%c0_53, %c0_54] : memref<8x128xf32, #tpu.memory_space<vmem>>, vector<8x128xf32>
    tpu.vector_store %arg13[%c0_53, %c0_54], %106 {strides = array<i32>} : memref<8x128xf32, #tpu.memory_space<vmem>>, vector<8x128xf32>,
    %c0_55 = arith.constant 0 : index
    %c0_56 = arith.constant 0 : index
    %111 = vector.load %arg14[%c0_55, %c0_56] : memref<8x128xf32, #tpu.memory_space<vmem>>, vector<8x128xf32>
    tpu.vector_store %arg14[%c0_55, %c0_56], %109 {strides = array<i32>} : memref<8x128xf32, #tpu.memory_space<vmem>>, vector<8x128xf32>,
    %112 = arith.index_cast %c1_i32 : i32 to index
    %c0_57 = arith.constant 0 : index
    %c0_58 = arith.constant 0 : index
    %113 = vector.load %arg12[%112, %c0_57, %c0_58] : memref<10x8x128xf32, #tpu.memory_space<vmem>>, vector<1x8x128xf32>
    %114 = vector.shape_cast %113 : vector<1x8x128xf32> to vector<8x128xf32>
    %115 = vector.shape_cast %106 : vector<8x128xf32> to vector<1x8x128xf32>
    tpu.vector_store %arg12[%112, %c0_57, %c0_58], %115 {strides = array<i32>} : memref<10x8x128xf32, #tpu.memory_space<vmem>>, vector<1x8x128xf32>,
    %c2_i32 = arith.constant 2 : i32
    %c0_59 = arith.constant 0 : index
    %c0_60 = arith.constant 0 : index
    %116 = vector.load %arg13[%c0_59, %c0_60] : memref<8x128xf32, #tpu.memory_space<vmem>>, vector<8x128xf32>
    %c0_61 = arith.constant 0 : index
    %c0_62 = arith.constant 0 : index
    %117 = vector.load %arg14[%c0_61, %c0_62] : memref<8x128xf32, #tpu.memory_space<vmem>>, vector<8x128xf32>
    %118 = arith.index_cast %c2_i32 : i32 to index
    %c0_63 = arith.constant 0 : index
    %c0_64 = arith.constant 0 : index
    %119 = vector.load %arg11[%118, %c0_63, %c0_64] : memref<10x8x512xf32, #tpu.memory_space<vmem>>, vector<1x8x512xf32>
    %120 = vector.shape_cast %119 : vector<1x8x512xf32> to vector<8x512xf32>
    %121 = arith.truncf %116 : vector<8x128xf32> to vector<8x128xbf16>
    %c0_65 = arith.constant 0 : index
    %c0_66 = arith.constant 0 : index
    %c0_67 = arith.constant 0 : index
    %122 = vector.load %arg4[%c0_65, %c0_66, %c0_67] : memref<1x128x512xbf16, #tpu.memory_space<vmem>>, vector<1x128x512xbf16>
    %123 = vector.shape_cast %122 : vector<1x128x512xbf16> to vector<128x512xbf16>
    %cst_68 = arith.constant dense<0.000000e+00> : vector<8x512xf32>
    %124 = tpu.matmul %121, %123, %cst_68 {dimension_numbers = #tpu.dot_dimension_numbers<[1], [0], [0], [1], [0, 0, 1, 1], [], []>} : vector<8x128xbf16>, vector<128x512xbf16>, vector<8x512xf32> -> vector<8x512xf32>
    %125 = arith.addf %120, %124 : vector<8x512xf32>
    %126 = vector.extract_strided_slice %125 {offsets = [0, 0], sizes = [8, 128], strides = [1, 1]} : vector<8x512xf32> to vector<8x128xf32>
    %127 = arith.negf %126 : vector<8x128xf32>
    %128 = math.exp %127 : vector<8x128xf32>
    %cst_69 = arith.constant 1.000000e+00 : f32
    %129 = vector.broadcast %cst_69 : f32 to vector<8x128xf32>
    %130 = arith.addf %129, %128 : vector<8x128xf32>
    %131 = arith.divf %129, %130 : vector<8x128xf32>
    %132 = vector.extract_strided_slice %125 {offsets = [0, 128], sizes = [8, 128], strides = [1, 1]} : vector<8x512xf32> to vector<8x128xf32>
    %133 = arith.negf %132 : vector<8x128xf32>
    %134 = math.exp %133 : vector<8x128xf32>
    %cst_70 = arith.constant 1.000000e+00 : f32
    %135 = vector.broadcast %cst_70 : f32 to vector<8x128xf32>
    %136 = arith.addf %135, %134 : vector<8x128xf32>
    %137 = arith.divf %135, %136 : vector<8x128xf32>
    %138 = vector.extract_strided_slice %125 {offsets = [0, 256], sizes = [8, 128], strides = [1, 1]} : vector<8x512xf32> to vector<8x128xf32>
    %139 = math.tanh %138 : vector<8x128xf32>
    %140 = vector.extract_strided_slice %125 {offsets = [0, 384], sizes = [8, 128], strides = [1, 1]} : vector<8x512xf32> to vector<8x128xf32>
    %141 = arith.negf %140 : vector<8x128xf32>
    %142 = math.exp %141 : vector<8x128xf32>
    %cst_71 = arith.constant 1.000000e+00 : f32
    %143 = vector.broadcast %cst_71 : f32 to vector<8x128xf32>
    %144 = arith.addf %143, %142 : vector<8x128xf32>
    %145 = arith.divf %143, %144 : vector<8x128xf32>
    %146 = arith.mulf %137, %117 : vector<8x128xf32>
    %147 = arith.mulf %131, %139 : vector<8x128xf32>
    %148 = arith.addf %146, %147 : vector<8x128xf32>
    %149 = math.tanh %148 : vector<8x128xf32>
    %150 = arith.mulf %145, %149 : vector<8x128xf32>
    %151 = vector.broadcast %c2_i32 : i32 to vector<8x1xi32>
    %152 = arith.cmpi slt, %151, %1 : vector<8x1xi32>
    %153 = vector.shape_cast %152 : vector<8x1xi1> to vector<8x1xi1>
    %154 = vector.broadcast %153 : vector<8x1xi1> to vector<8x128xi1>
    %155 = arith.select %154, %150, %116 : vector<8x128xi1>, vector<8x128xf32>
    %156 = vector.shape_cast %152 : vector<8x1xi1> to vector<8x1xi1>
    %157 = vector.broadcast %156 : vector<8x1xi1> to vector<8x128xi1>
    %158 = arith.select %157, %148, %117 : vector<8x128xi1>, vector<8x128xf32>
    %c0_72 = arith.constant 0 : index
    %c0_73 = arith.constant 0 : index
    %159 = vector.load %arg13[%c0_72, %c0_73] : memref<8x128xf32, #tpu.memory_space<vmem>>, vector<8x128xf32>
    tpu.vector_store %arg13[%c0_72, %c0_73], %155 {strides = array<i32>} : memref<8x128xf32, #tpu.memory_space<vmem>>, vector<8x128xf32>,
    %c0_74 = arith.constant 0 : index
    %c0_75 = arith.constant 0 : index
    %160 = vector.load %arg14[%c0_74, %c0_75] : memref<8x128xf32, #tpu.memory_space<vmem>>, vector<8x128xf32>
    tpu.vector_store %arg14[%c0_74, %c0_75], %158 {strides = array<i32>} : memref<8x128xf32, #tpu.memory_space<vmem>>, vector<8x128xf32>,
    %161 = arith.index_cast %c2_i32 : i32 to index
    %c0_76 = arith.constant 0 : index
    %c0_77 = arith.constant 0 : index
    %162 = vector.load %arg12[%161, %c0_76, %c0_77] : memref<10x8x128xf32, #tpu.memory_space<vmem>>, vector<1x8x128xf32>
    %163 = vector.shape_cast %162 : vector<1x8x128xf32> to vector<8x128xf32>
    %164 = vector.shape_cast %155 : vector<8x128xf32> to vector<1x8x128xf32>
    tpu.vector_store %arg12[%161, %c0_76, %c0_77], %164 {strides = array<i32>} : memref<10x8x128xf32, #tpu.memory_space<vmem>>, vector<1x8x128xf32>,
    %c3_i32 = arith.constant 3 : i32
    %c0_78 = arith.constant 0 : index
    %c0_79 = arith.constant 0 : index
    %165 = vector.load %arg13[%c0_78, %c0_79] : memref<8x128xf32, #tpu.memory_space<vmem>>, vector<8x128xf32>
    %c0_80 = arith.constant 0 : index
    %c0_81 = arith.constant 0 : index
    %166 = vector.load %arg14[%c0_80, %c0_81] : memref<8x128xf32, #tpu.memory_space<vmem>>, vector<8x128xf32>
    %167 = arith.index_cast %c3_i32 : i32 to index
    %c0_82 = arith.constant 0 : index
    %c0_83 = arith.constant 0 : index
    %168 = vector.load %arg11[%167, %c0_82, %c0_83] : memref<10x8x512xf32, #tpu.memory_space<vmem>>, vector<1x8x512xf32>
    %169 = vector.shape_cast %168 : vector<1x8x512xf32> to vector<8x512xf32>
    %170 = arith.truncf %165 : vector<8x128xf32> to vector<8x128xbf16>
    %c0_84 = arith.constant 0 : index
    %c0_85 = arith.constant 0 : index
    %c0_86 = arith.constant 0 : index
    %171 = vector.load %arg4[%c0_84, %c0_85, %c0_86] : memref<1x128x512xbf16, #tpu.memory_space<vmem>>, vector<1x128x512xbf16>
    %172 = vector.shape_cast %171 : vector<1x128x512xbf16> to vector<128x512xbf16>
    %cst_87 = arith.constant dense<0.000000e+00> : vector<8x512xf32>
    %173 = tpu.matmul %170, %172, %cst_87 {dimension_numbers = #tpu.dot_dimension_numbers<[1], [0], [0], [1], [0, 0, 1, 1], [], []>} : vector<8x128xbf16>, vector<128x512xbf16>, vector<8x512xf32> -> vector<8x512xf32>
    %174 = arith.addf %169, %173 : vector<8x512xf32>
    %175 = vector.extract_strided_slice %174 {offsets = [0, 0], sizes = [8, 128], strides = [1, 1]} : vector<8x512xf32> to vector<8x128xf32>
    %176 = arith.negf %175 : vector<8x128xf32>
    %177 = math.exp %176 : vector<8x128xf32>
    %cst_88 = arith.constant 1.000000e+00 : f32
    %178 = vector.broadcast %cst_88 : f32 to vector<8x128xf32>
    %179 = arith.addf %178, %177 : vector<8x128xf32>
    %180 = arith.divf %178, %179 : vector<8x128xf32>
    %181 = vector.extract_strided_slice %174 {offsets = [0, 128], sizes = [8, 128], strides = [1, 1]} : vector<8x512xf32> to vector<8x128xf32>
    %182 = arith.negf %181 : vector<8x128xf32>
    %183 = math.exp %182 : vector<8x128xf32>
    %cst_89 = arith.constant 1.000000e+00 : f32
    %184 = vector.broadcast %cst_89 : f32 to vector<8x128xf32>
    %185 = arith.addf %184, %183 : vector<8x128xf32>
    %186 = arith.divf %184, %185 : vector<8x128xf32>
    %187 = vector.extract_strided_slice %174 {offsets = [0, 256], sizes = [8, 128], strides = [1, 1]} : vector<8x512xf32> to vector<8x128xf32>
    %188 = math.tanh %187 : vector<8x128xf32>
    %189 = vector.extract_strided_slice %174 {offsets = [0, 384], sizes = [8, 128], strides = [1, 1]} : vector<8x512xf32> to vector<8x128xf32>
    %190 = arith.negf %189 : vector<8x128xf32>
    %191 = math.exp %190 : vector<8x128xf32>
    %cst_90 = arith.constant 1.000000e+00 : f32
    %192 = vector.broadcast %cst_90 : f32 to vector<8x128xf32>
    %193 = arith.addf %192, %191 : vector<8x128xf32>
    %194 = arith.divf %192, %193 : vector<8x128xf32>
    %195 = arith.mulf %186, %166 : vector<8x128xf32>
    %196 = arith.mulf %180, %188 : vector<8x128xf32>
    %197 = arith.addf %195, %196 : vector<8x128xf32>
    %198 = math.tanh %197 : vector<8x128xf32>
    %199 = arith.mulf %194, %198 : vector<8x128xf32>
    %200 = vector.broadcast %c3_i32 : i32 to vector<8x1xi32>
    %201 = arith.cmpi slt, %200, %1 : vector<8x1xi32>
    %202 = vector.shape_cast %201 : vector<8x1xi1> to vector<8x1xi1>
    %203 = vector.broadcast %202 : vector<8x1xi1> to vector<8x128xi1>
    %204 = arith.select %203, %199, %165 : vector<8x128xi1>, vector<8x128xf32>
    %205 = vector.shape_cast %201 : vector<8x1xi1> to vector<8x1xi1>
    %206 = vector.broadcast %205 : vector<8x1xi1> to vector<8x128xi1>
    %207 = arith.select %206, %197, %166 : vector<8x128xi1>, vector<8x128xf32>
    %c0_91 = arith.constant 0 : index
    %c0_92 = arith.constant 0 : index
    %208 = vector.load %arg13[%c0_91, %c0_92] : memref<8x128xf32, #tpu.memory_space<vmem>>, vector<8x128xf32>
    tpu.vector_store %arg13[%c0_91, %c0_92], %204 {strides = array<i32>} : memref<8x128xf32, #tpu.memory_space<vmem>>, vector<8x128xf32>,
    %c0_93 = arith.constant 0 : index
    %c0_94 = arith.constant 0 : index
    %209 = vector.load %arg14[%c0_93, %c0_94] : memref<8x128xf32, #tpu.memory_space<vmem>>, vector<8x128xf32>
    tpu.vector_store %arg14[%c0_93, %c0_94], %207 {strides = array<i32>} : memref<8x128xf32, #tpu.memory_space<vmem>>, vector<8x128xf32>,
    %210 = arith.index_cast %c3_i32 : i32 to index
    %c0_95 = arith.constant 0 : index
    %c0_96 = arith.constant 0 : index
    %211 = vector.load %arg12[%210, %c0_95, %c0_96] : memref<10x8x128xf32, #tpu.memory_space<vmem>>, vector<1x8x128xf32>
    %212 = vector.shape_cast %211 : vector<1x8x128xf32> to vector<8x128xf32>
    %213 = vector.shape_cast %204 : vector<8x128xf32> to vector<1x8x128xf32>
    tpu.vector_store %arg12[%210, %c0_95, %c0_96], %213 {strides = array<i32>} : memref<10x8x128xf32, #tpu.memory_space<vmem>>, vector<1x8x128xf32>,
    %c4_i32 = arith.constant 4 : i32
    %c0_97 = arith.constant 0 : index
    %c0_98 = arith.constant 0 : index
    %214 = vector.load %arg13[%c0_97, %c0_98] : memref<8x128xf32, #tpu.memory_space<vmem>>, vector<8x128xf32>
    %c0_99 = arith.constant 0 : index
    %c0_100 = arith.constant 0 : index
    %215 = vector.load %arg14[%c0_99, %c0_100] : memref<8x128xf32, #tpu.memory_space<vmem>>, vector<8x128xf32>
    %216 = arith.index_cast %c4_i32 : i32 to index
    %c0_101 = arith.constant 0 : index
    %c0_102 = arith.constant 0 : index
    %217 = vector.load %arg11[%216, %c0_101, %c0_102] : memref<10x8x512xf32, #tpu.memory_space<vmem>>, vector<1x8x512xf32>
    %218 = vector.shape_cast %217 : vector<1x8x512xf32> to vector<8x512xf32>
    %219 = arith.truncf %214 : vector<8x128xf32> to vector<8x128xbf16>
    %c0_103 = arith.constant 0 : index
    %c0_104 = arith.constant 0 : index
    %c0_105 = arith.constant 0 : index
    %220 = vector.load %arg4[%c0_103, %c0_104, %c0_105] : memref<1x128x512xbf16, #tpu.memory_space<vmem>>, vector<1x128x512xbf16>
    %221 = vector.shape_cast %220 : vector<1x128x512xbf16> to vector<128x512xbf16>
    %cst_106 = arith.constant dense<0.000000e+00> : vector<8x512xf32>
    %222 = tpu.matmul %219, %221, %cst_106 {dimension_numbers = #tpu.dot_dimension_numbers<[1], [0], [0], [1], [0, 0, 1, 1], [], []>} : vector<8x128xbf16>, vector<128x512xbf16>, vector<8x512xf32> -> vector<8x512xf32>
    %223 = arith.addf %218, %222 : vector<8x512xf32>
    %224 = vector.extract_strided_slice %223 {offsets = [0, 0], sizes = [8, 128], strides = [1, 1]} : vector<8x512xf32> to vector<8x128xf32>
    %225 = arith.negf %224 : vector<8x128xf32>
    %226 = math.exp %225 : vector<8x128xf32>
    %cst_107 = arith.constant 1.000000e+00 : f32
    %227 = vector.broadcast %cst_107 : f32 to vector<8x128xf32>
    %228 = arith.addf %227, %226 : vector<8x128xf32>
    %229 = arith.divf %227, %228 : vector<8x128xf32>
    %230 = vector.extract_strided_slice %223 {offsets = [0, 128], sizes = [8, 128], strides = [1, 1]} : vector<8x512xf32> to vector<8x128xf32>
    %231 = arith.negf %230 : vector<8x128xf32>
    %232 = math.exp %231 : vector<8x128xf32>
    %cst_108 = arith.constant 1.000000e+00 : f32
    %233 = vector.broadcast %cst_108 : f32 to vector<8x128xf32>
    %234 = arith.addf %233, %232 : vector<8x128xf32>
    %235 = arith.divf %233, %234 : vector<8x128xf32>
    %236 = vector.extract_strided_slice %223 {offsets = [0, 256], sizes = [8, 128], strides = [1, 1]} : vector<8x512xf32> to vector<8x128xf32>
    %237 = math.tanh %236 : vector<8x128xf32>
    %238 = vector.extract_strided_slice %223 {offsets = [0, 384], sizes = [8, 128], strides = [1, 1]} : vector<8x512xf32> to vector<8x128xf32>
    %239 = arith.negf %238 : vector<8x128xf32>
    %240 = math.exp %239 : vector<8x128xf32>
    %cst_109 = arith.constant 1.000000e+00 : f32
    %241 = vector.broadcast %cst_109 : f32 to vector<8x128xf32>
    %242 = arith.addf %241, %240 : vector<8x128xf32>
    %243 = arith.divf %241, %242 : vector<8x128xf32>
    %244 = arith.mulf %235, %215 : vector<8x128xf32>
    %245 = arith.mulf %229, %237 : vector<8x128xf32>
    %246 = arith.addf %244, %245 : vector<8x128xf32>
    %247 = math.tanh %246 : vector<8x128xf32>
    %248 = arith.mulf %243, %247 : vector<8x128xf32>
    %249 = vector.broadcast %c4_i32 : i32 to vector<8x1xi32>
    %250 = arith.cmpi slt, %249, %1 : vector<8x1xi32>
    %251 = vector.shape_cast %250 : vector<8x1xi1> to vector<8x1xi1>
    %252 = vector.broadcast %251 : vector<8x1xi1> to vector<8x128xi1>
    %253 = arith.select %252, %248, %214 : vector<8x128xi1>, vector<8x128xf32>
    %254 = vector.shape_cast %250 : vector<8x1xi1> to vector<8x1xi1>
    %255 = vector.broadcast %254 : vector<8x1xi1> to vector<8x128xi1>
    %256 = arith.select %255, %246, %215 : vector<8x128xi1>, vector<8x128xf32>
    %c0_110 = arith.constant 0 : index
    %c0_111 = arith.constant 0 : index
    %257 = vector.load %arg13[%c0_110, %c0_111] : memref<8x128xf32, #tpu.memory_space<vmem>>, vector<8x128xf32>
    tpu.vector_store %arg13[%c0_110, %c0_111], %253 {strides = array<i32>} : memref<8x128xf32, #tpu.memory_space<vmem>>, vector<8x128xf32>,
    %c0_112 = arith.constant 0 : index
    %c0_113 = arith.constant 0 : index
    %258 = vector.load %arg14[%c0_112, %c0_113] : memref<8x128xf32, #tpu.memory_space<vmem>>, vector<8x128xf32>
    tpu.vector_store %arg14[%c0_112, %c0_113], %256 {strides = array<i32>} : memref<8x128xf32, #tpu.memory_space<vmem>>, vector<8x128xf32>,
    %259 = arith.index_cast %c4_i32 : i32 to index
    %c0_114 = arith.constant 0 : index
    %c0_115 = arith.constant 0 : index
    %260 = vector.load %arg12[%259, %c0_114, %c0_115] : memref<10x8x128xf32, #tpu.memory_space<vmem>>, vector<1x8x128xf32>
    %261 = vector.shape_cast %260 : vector<1x8x128xf32> to vector<8x128xf32>
    %262 = vector.shape_cast %253 : vector<8x128xf32> to vector<1x8x128xf32>
    tpu.vector_store %arg12[%259, %c0_114, %c0_115], %262 {strides = array<i32>} : memref<10x8x128xf32, #tpu.memory_space<vmem>>, vector<1x8x128xf32>,
    %c5_i32 = arith.constant 5 : i32
    %c0_116 = arith.constant 0 : index
    %c0_117 = arith.constant 0 : index
    %263 = vector.load %arg13[%c0_116, %c0_117] : memref<8x128xf32, #tpu.memory_space<vmem>>, vector<8x128xf32>
    %c0_118 = arith.constant 0 : index
    %c0_119 = arith.constant 0 : index
    %264 = vector.load %arg14[%c0_118, %c0_119] : memref<8x128xf32, #tpu.memory_space<vmem>>, vector<8x128xf32>
    %265 = arith.index_cast %c5_i32 : i32 to index
    %c0_120 = arith.constant 0 : index
    %c0_121 = arith.constant 0 : index
    %266 = vector.load %arg11[%265, %c0_120, %c0_121] : memref<10x8x512xf32, #tpu.memory_space<vmem>>, vector<1x8x512xf32>
    %267 = vector.shape_cast %266 : vector<1x8x512xf32> to vector<8x512xf32>
    %268 = arith.truncf %263 : vector<8x128xf32> to vector<8x128xbf16>
    %c0_122 = arith.constant 0 : index
    %c0_123 = arith.constant 0 : index
    %c0_124 = arith.constant 0 : index
    %269 = vector.load %arg4[%c0_122, %c0_123, %c0_124] : memref<1x128x512xbf16, #tpu.memory_space<vmem>>, vector<1x128x512xbf16>
    %270 = vector.shape_cast %269 : vector<1x128x512xbf16> to vector<128x512xbf16>
    %cst_125 = arith.constant dense<0.000000e+00> : vector<8x512xf32>
    %271 = tpu.matmul %268, %270, %cst_125 {dimension_numbers = #tpu.dot_dimension_numbers<[1], [0], [0], [1], [0, 0, 1, 1], [], []>} : vector<8x128xbf16>, vector<128x512xbf16>, vector<8x512xf32> -> vector<8x512xf32>
    %272 = arith.addf %267, %271 : vector<8x512xf32>
    %273 = vector.extract_strided_slice %272 {offsets = [0, 0], sizes = [8, 128], strides = [1, 1]} : vector<8x512xf32> to vector<8x128xf32>
    %274 = arith.negf %273 : vector<8x128xf32>
    %275 = math.exp %274 : vector<8x128xf32>
    %cst_126 = arith.constant 1.000000e+00 : f32
    %276 = vector.broadcast %cst_126 : f32 to vector<8x128xf32>
    %277 = arith.addf %276, %275 : vector<8x128xf32>
    %278 = arith.divf %276, %277 : vector<8x128xf32>
    %279 = vector.extract_strided_slice %272 {offsets = [0, 128], sizes = [8, 128], strides = [1, 1]} : vector<8x512xf32> to vector<8x128xf32>
    %280 = arith.negf %279 : vector<8x128xf32>
    %281 = math.exp %280 : vector<8x128xf32>
    %cst_127 = arith.constant 1.000000e+00 : f32
    %282 = vector.broadcast %cst_127 : f32 to vector<8x128xf32>
    %283 = arith.addf %282, %281 : vector<8x128xf32>
    %284 = arith.divf %282, %283 : vector<8x128xf32>
    %285 = vector.extract_strided_slice %272 {offsets = [0, 256], sizes = [8, 128], strides = [1, 1]} : vector<8x512xf32> to vector<8x128xf32>
    %286 = math.tanh %285 : vector<8x128xf32>
    %287 = vector.extract_strided_slice %272 {offsets = [0, 384], sizes = [8, 128], strides = [1, 1]} : vector<8x512xf32> to vector<8x128xf32>
    %288 = arith.negf %287 : vector<8x128xf32>
    %289 = math.exp %288 : vector<8x128xf32>
    %cst_128 = arith.constant 1.000000e+00 : f32
    %290 = vector.broadcast %cst_128 : f32 to vector<8x128xf32>
    %291 = arith.addf %290, %289 : vector<8x128xf32>
    %292 = arith.divf %290, %291 : vector<8x128xf32>
    %293 = arith.mulf %284, %264 : vector<8x128xf32>
    %294 = arith.mulf %278, %286 : vector<8x128xf32>
    %295 = arith.addf %293, %294 : vector<8x128xf32>
    %296 = math.tanh %295 : vector<8x128xf32>
    %297 = arith.mulf %292, %296 : vector<8x128xf32>
    %298 = vector.broadcast %c5_i32 : i32 to vector<8x1xi32>
    %299 = arith.cmpi slt, %298, %1 : vector<8x1xi32>
    %300 = vector.shape_cast %299 : vector<8x1xi1> to vector<8x1xi1>
    %301 = vector.broadcast %300 : vector<8x1xi1> to vector<8x128xi1>
    %302 = arith.select %301, %297, %263 : vector<8x128xi1>, vector<8x128xf32>
    %303 = vector.shape_cast %299 : vector<8x1xi1> to vector<8x1xi1>
    %304 = vector.broadcast %303 : vector<8x1xi1> to vector<8x128xi1>
    %305 = arith.select %304, %295, %264 : vector<8x128xi1>, vector<8x128xf32>
    %c0_129 = arith.constant 0 : index
    %c0_130 = arith.constant 0 : index
    %306 = vector.load %arg13[%c0_129, %c0_130] : memref<8x128xf32, #tpu.memory_space<vmem>>, vector<8x128xf32>
    tpu.vector_store %arg13[%c0_129, %c0_130], %302 {strides = array<i32>} : memref<8x128xf32, #tpu.memory_space<vmem>>, vector<8x128xf32>,
    %c0_131 = arith.constant 0 : index
    %c0_132 = arith.constant 0 : index
    %307 = vector.load %arg14[%c0_131, %c0_132] : memref<8x128xf32, #tpu.memory_space<vmem>>, vector<8x128xf32>
    tpu.vector_store %arg14[%c0_131, %c0_132], %305 {strides = array<i32>} : memref<8x128xf32, #tpu.memory_space<vmem>>, vector<8x128xf32>,
    %308 = arith.index_cast %c5_i32 : i32 to index
    %c0_133 = arith.constant 0 : index
    %c0_134 = arith.constant 0 : index
    %309 = vector.load %arg12[%308, %c0_133, %c0_134] : memref<10x8x128xf32, #tpu.memory_space<vmem>>, vector<1x8x128xf32>
    %310 = vector.shape_cast %309 : vector<1x8x128xf32> to vector<8x128xf32>
    %311 = vector.shape_cast %302 : vector<8x128xf32> to vector<1x8x128xf32>
    tpu.vector_store %arg12[%308, %c0_133, %c0_134], %311 {strides = array<i32>} : memref<10x8x128xf32, #tpu.memory_space<vmem>>, vector<1x8x128xf32>,
    %c6_i32 = arith.constant 6 : i32
    %c0_135 = arith.constant 0 : index
    %c0_136 = arith.constant 0 : index
    %312 = vector.load %arg13[%c0_135, %c0_136] : memref<8x128xf32, #tpu.memory_space<vmem>>, vector<8x128xf32>
    %c0_137 = arith.constant 0 : index
    %c0_138 = arith.constant 0 : index
    %313 = vector.load %arg14[%c0_137, %c0_138] : memref<8x128xf32, #tpu.memory_space<vmem>>, vector<8x128xf32>
    %314 = arith.index_cast %c6_i32 : i32 to index
    %c0_139 = arith.constant 0 : index
    %c0_140 = arith.constant 0 : index
    %315 = vector.load %arg11[%314, %c0_139, %c0_140] : memref<10x8x512xf32, #tpu.memory_space<vmem>>, vector<1x8x512xf32>
    %316 = vector.shape_cast %315 : vector<1x8x512xf32> to vector<8x512xf32>
    %317 = arith.truncf %312 : vector<8x128xf32> to vector<8x128xbf16>
    %c0_141 = arith.constant 0 : index
    %c0_142 = arith.constant 0 : index
    %c0_143 = arith.constant 0 : index
    %318 = vector.load %arg4[%c0_141, %c0_142, %c0_143] : memref<1x128x512xbf16, #tpu.memory_space<vmem>>, vector<1x128x512xbf16>
    %319 = vector.shape_cast %318 : vector<1x128x512xbf16> to vector<128x512xbf16>
    %cst_144 = arith.constant dense<0.000000e+00> : vector<8x512xf32>
    %320 = tpu.matmul %317, %319, %cst_144 {dimension_numbers = #tpu.dot_dimension_numbers<[1], [0], [0], [1], [0, 0, 1, 1], [], []>} : vector<8x128xbf16>, vector<128x512xbf16>, vector<8x512xf32> -> vector<8x512xf32>
    %321 = arith.addf %316, %320 : vector<8x512xf32>
    %322 = vector.extract_strided_slice %321 {offsets = [0, 0], sizes = [8, 128], strides = [1, 1]} : vector<8x512xf32> to vector<8x128xf32>
    %323 = arith.negf %322 : vector<8x128xf32>
    %324 = math.exp %323 : vector<8x128xf32>
    %cst_145 = arith.constant 1.000000e+00 : f32
    %325 = vector.broadcast %cst_145 : f32 to vector<8x128xf32>
    %326 = arith.addf %325, %324 : vector<8x128xf32>
    %327 = arith.divf %325, %326 : vector<8x128xf32>
    %328 = vector.extract_strided_slice %321 {offsets = [0, 128], sizes = [8, 128], strides = [1, 1]} : vector<8x512xf32> to vector<8x128xf32>
    %329 = arith.negf %328 : vector<8x128xf32>
    %330 = math.exp %329 : vector<8x128xf32>
    %cst_146 = arith.constant 1.000000e+00 : f32
    %331 = vector.broadcast %cst_146 : f32 to vector<8x128xf32>
    %332 = arith.addf %331, %330 : vector<8x128xf32>
    %333 = arith.divf %331, %332 : vector<8x128xf32>
    %334 = vector.extract_strided_slice %321 {offsets = [0, 256], sizes = [8, 128], strides = [1, 1]} : vector<8x512xf32> to vector<8x128xf32>
    %335 = math.tanh %334 : vector<8x128xf32>
    %336 = vector.extract_strided_slice %321 {offsets = [0, 384], sizes = [8, 128], strides = [1, 1]} : vector<8x512xf32> to vector<8x128xf32>
    %337 = arith.negf %336 : vector<8x128xf32>
    %338 = math.exp %337 : vector<8x128xf32>
    %cst_147 = arith.constant 1.000000e+00 : f32
    %339 = vector.broadcast %cst_147 : f32 to vector<8x128xf32>
    %340 = arith.addf %339, %338 : vector<8x128xf32>
    %341 = arith.divf %339, %340 : vector<8x128xf32>
    %342 = arith.mulf %333, %313 : vector<8x128xf32>
    %343 = arith.mulf %327, %335 : vector<8x128xf32>
    %344 = arith.addf %342, %343 : vector<8x128xf32>
    %345 = math.tanh %344 : vector<8x128xf32>
    %346 = arith.mulf %341, %345 : vector<8x128xf32>
    %347 = vector.broadcast %c6_i32 : i32 to vector<8x1xi32>
    %348 = arith.cmpi slt, %347, %1 : vector<8x1xi32>
    %349 = vector.shape_cast %348 : vector<8x1xi1> to vector<8x1xi1>
    %350 = vector.broadcast %349 : vector<8x1xi1> to vector<8x128xi1>
    %351 = arith.select %350, %346, %312 : vector<8x128xi1>, vector<8x128xf32>
    %352 = vector.shape_cast %348 : vector<8x1xi1> to vector<8x1xi1>
    %353 = vector.broadcast %352 : vector<8x1xi1> to vector<8x128xi1>
    %354 = arith.select %353, %344, %313 : vector<8x128xi1>, vector<8x128xf32>
    %c0_148 = arith.constant 0 : index
    %c0_149 = arith.constant 0 : index
    %355 = vector.load %arg13[%c0_148, %c0_149] : memref<8x128xf32, #tpu.memory_space<vmem>>, vector<8x128xf32>
    tpu.vector_store %arg13[%c0_148, %c0_149], %351 {strides = array<i32>} : memref<8x128xf32, #tpu.memory_space<vmem>>, vector<8x128xf32>,
    %c0_150 = arith.constant 0 : index
    %c0_151 = arith.constant 0 : index
    %356 = vector.load %arg14[%c0_150, %c0_151] : memref<8x128xf32, #tpu.memory_space<vmem>>, vector<8x128xf32>
    tpu.vector_store %arg14[%c0_150, %c0_151], %354 {strides = array<i32>} : memref<8x128xf32, #tpu.memory_space<vmem>>, vector<8x128xf32>,
    %357 = arith.index_cast %c6_i32 : i32 to index
    %c0_152 = arith.constant 0 : index
    %c0_153 = arith.constant 0 : index
    %358 = vector.load %arg12[%357, %c0_152, %c0_153] : memref<10x8x128xf32, #tpu.memory_space<vmem>>, vector<1x8x128xf32>
    %359 = vector.shape_cast %358 : vector<1x8x128xf32> to vector<8x128xf32>
    %360 = vector.shape_cast %351 : vector<8x128xf32> to vector<1x8x128xf32>
    tpu.vector_store %arg12[%357, %c0_152, %c0_153], %360 {strides = array<i32>} : memref<10x8x128xf32, #tpu.memory_space<vmem>>, vector<1x8x128xf32>,
    %c7_i32 = arith.constant 7 : i32
    %c0_154 = arith.constant 0 : index
    %c0_155 = arith.constant 0 : index
    %361 = vector.load %arg13[%c0_154, %c0_155] : memref<8x128xf32, #tpu.memory_space<vmem>>, vector<8x128xf32>
    %c0_156 = arith.constant 0 : index
    %c0_157 = arith.constant 0 : index
    %362 = vector.load %arg14[%c0_156, %c0_157] : memref<8x128xf32, #tpu.memory_space<vmem>>, vector<8x128xf32>
    %363 = arith.index_cast %c7_i32 : i32 to index
    %c0_158 = arith.constant 0 : index
    %c0_159 = arith.constant 0 : index
    %364 = vector.load %arg11[%363, %c0_158, %c0_159] : memref<10x8x512xf32, #tpu.memory_space<vmem>>, vector<1x8x512xf32>
    %365 = vector.shape_cast %364 : vector<1x8x512xf32> to vector<8x512xf32>
    %366 = arith.truncf %361 : vector<8x128xf32> to vector<8x128xbf16>
    %c0_160 = arith.constant 0 : index
    %c0_161 = arith.constant 0 : index
    %c0_162 = arith.constant 0 : index
    %367 = vector.load %arg4[%c0_160, %c0_161, %c0_162] : memref<1x128x512xbf16, #tpu.memory_space<vmem>>, vector<1x128x512xbf16>
    %368 = vector.shape_cast %367 : vector<1x128x512xbf16> to vector<128x512xbf16>
    %cst_163 = arith.constant dense<0.000000e+00> : vector<8x512xf32>
    %369 = tpu.matmul %366, %368, %cst_163 {dimension_numbers = #tpu.dot_dimension_numbers<[1], [0], [0], [1], [0, 0, 1, 1], [], []>} : vector<8x128xbf16>, vector<128x512xbf16>, vector<8x512xf32> -> vector<8x512xf32>
    %370 = arith.addf %365, %369 : vector<8x512xf32>
    %371 = vector.extract_strided_slice %370 {offsets = [0, 0], sizes = [8, 128], strides = [1, 1]} : vector<8x512xf32> to vector<8x128xf32>
    %372 = arith.negf %371 : vector<8x128xf32>
    %373 = math.exp %372 : vector<8x128xf32>
    %cst_164 = arith.constant 1.000000e+00 : f32
    %374 = vector.broadcast %cst_164 : f32 to vector<8x128xf32>
    %375 = arith.addf %374, %373 : vector<8x128xf32>
    %376 = arith.divf %374, %375 : vector<8x128xf32>
    %377 = vector.extract_strided_slice %370 {offsets = [0, 128], sizes = [8, 128], strides = [1, 1]} : vector<8x512xf32> to vector<8x128xf32>
    %378 = arith.negf %377 : vector<8x128xf32>
    %379 = math.exp %378 : vector<8x128xf32>
    %cst_165 = arith.constant 1.000000e+00 : f32
    %380 = vector.broadcast %cst_165 : f32 to vector<8x128xf32>
    %381 = arith.addf %380, %379 : vector<8x128xf32>
    %382 = arith.divf %380, %381 : vector<8x128xf32>
    %383 = vector.extract_strided_slice %370 {offsets = [0, 256], sizes = [8, 128], strides = [1, 1]} : vector<8x512xf32> to vector<8x128xf32>
    %384 = math.tanh %383 : vector<8x128xf32>
    %385 = vector.extract_strided_slice %370 {offsets = [0, 384], sizes = [8, 128], strides = [1, 1]} : vector<8x512xf32> to vector<8x128xf32>
    %386 = arith.negf %385 : vector<8x128xf32>
    %387 = math.exp %386 : vector<8x128xf32>
    %cst_166 = arith.constant 1.000000e+00 : f32
    %388 = vector.broadcast %cst_166 : f32 to vector<8x128xf32>
    %389 = arith.addf %388, %387 : vector<8x128xf32>
    %390 = arith.divf %388, %389 : vector<8x128xf32>
    %391 = arith.mulf %382, %362 : vector<8x128xf32>
    %392 = arith.mulf %376, %384 : vector<8x128xf32>
    %393 = arith.addf %391, %392 : vector<8x128xf32>
    %394 = math.tanh %393 : vector<8x128xf32>
    %395 = arith.mulf %390, %394 : vector<8x128xf32>
    %396 = vector.broadcast %c7_i32 : i32 to vector<8x1xi32>
    %397 = arith.cmpi slt, %396, %1 : vector<8x1xi32>
    %398 = vector.shape_cast %397 : vector<8x1xi1> to vector<8x1xi1>
    %399 = vector.broadcast %398 : vector<8x1xi1> to vector<8x128xi1>
    %400 = arith.select %399, %395, %361 : vector<8x128xi1>, vector<8x128xf32>
    %401 = vector.shape_cast %397 : vector<8x1xi1> to vector<8x1xi1>
    %402 = vector.broadcast %401 : vector<8x1xi1> to vector<8x128xi1>
    %403 = arith.select %402, %393, %362 : vector<8x128xi1>, vector<8x128xf32>
    %c0_167 = arith.constant 0 : index
    %c0_168 = arith.constant 0 : index
    %404 = vector.load %arg13[%c0_167, %c0_168] : memref<8x128xf32, #tpu.memory_space<vmem>>, vector<8x128xf32>
    tpu.vector_store %arg13[%c0_167, %c0_168], %400 {strides = array<i32>} : memref<8x128xf32, #tpu.memory_space<vmem>>, vector<8x128xf32>,
    %c0_169 = arith.constant 0 : index
    %c0_170 = arith.constant 0 : index
    %405 = vector.load %arg14[%c0_169, %c0_170] : memref<8x128xf32, #tpu.memory_space<vmem>>, vector<8x128xf32>
    tpu.vector_store %arg14[%c0_169, %c0_170], %403 {strides = array<i32>} : memref<8x128xf32, #tpu.memory_space<vmem>>, vector<8x128xf32>,
    %406 = arith.index_cast %c7_i32 : i32 to index
    %c0_171 = arith.constant 0 : index
    %c0_172 = arith.constant 0 : index
    %407 = vector.load %arg12[%406, %c0_171, %c0_172] : memref<10x8x128xf32, #tpu.memory_space<vmem>>, vector<1x8x128xf32>
    %408 = vector.shape_cast %407 : vector<1x8x128xf32> to vector<8x128xf32>
    %409 = vector.shape_cast %400 : vector<8x128xf32> to vector<1x8x128xf32>
    tpu.vector_store %arg12[%406, %c0_171, %c0_172], %409 {strides = array<i32>} : memref<10x8x128xf32, #tpu.memory_space<vmem>>, vector<1x8x128xf32>,
    %c8_i32 = arith.constant 8 : i32
    %c0_173 = arith.constant 0 : index
    %c0_174 = arith.constant 0 : index
    %410 = vector.load %arg13[%c0_173, %c0_174] : memref<8x128xf32, #tpu.memory_space<vmem>>, vector<8x128xf32>
    %c0_175 = arith.constant 0 : index
    %c0_176 = arith.constant 0 : index
    %411 = vector.load %arg14[%c0_175, %c0_176] : memref<8x128xf32, #tpu.memory_space<vmem>>, vector<8x128xf32>
    %412 = arith.index_cast %c8_i32 : i32 to index
    %c0_177 = arith.constant 0 : index
    %c0_178 = arith.constant 0 : index
    %413 = vector.load %arg11[%412, %c0_177, %c0_178] : memref<10x8x512xf32, #tpu.memory_space<vmem>>, vector<1x8x512xf32>
    %414 = vector.shape_cast %413 : vector<1x8x512xf32> to vector<8x512xf32>
    %415 = arith.truncf %410 : vector<8x128xf32> to vector<8x128xbf16>
    %c0_179 = arith.constant 0 : index
    %c0_180 = arith.constant 0 : index
    %c0_181 = arith.constant 0 : index
    %416 = vector.load %arg4[%c0_179, %c0_180, %c0_181] : memref<1x128x512xbf16, #tpu.memory_space<vmem>>, vector<1x128x512xbf16>
    %417 = vector.shape_cast %416 : vector<1x128x512xbf16> to vector<128x512xbf16>
    %cst_182 = arith.constant dense<0.000000e+00> : vector<8x512xf32>
    %418 = tpu.matmul %415, %417, %cst_182 {dimension_numbers = #tpu.dot_dimension_numbers<[1], [0], [0], [1], [0, 0, 1, 1], [], []>} : vector<8x128xbf16>, vector<128x512xbf16>, vector<8x512xf32> -> vector<8x512xf32>
    %419 = arith.addf %414, %418 : vector<8x512xf32>
    %420 = vector.extract_strided_slice %419 {offsets = [0, 0], sizes = [8, 128], strides = [1, 1]} : vector<8x512xf32> to vector<8x128xf32>
    %421 = arith.negf %420 : vector<8x128xf32>
    %422 = math.exp %421 : vector<8x128xf32>
    %cst_183 = arith.constant 1.000000e+00 : f32
    %423 = vector.broadcast %cst_183 : f32 to vector<8x128xf32>
    %424 = arith.addf %423, %422 : vector<8x128xf32>
    %425 = arith.divf %423, %424 : vector<8x128xf32>
    %426 = vector.extract_strided_slice %419 {offsets = [0, 128], sizes = [8, 128], strides = [1, 1]} : vector<8x512xf32> to vector<8x128xf32>
    %427 = arith.negf %426 : vector<8x128xf32>
    %428 = math.exp %427 : vector<8x128xf32>
    %cst_184 = arith.constant 1.000000e+00 : f32
    %429 = vector.broadcast %cst_184 : f32 to vector<8x128xf32>
    %430 = arith.addf %429, %428 : vector<8x128xf32>
    %431 = arith.divf %429, %430 : vector<8x128xf32>
    %432 = vector.extract_strided_slice %419 {offsets = [0, 256], sizes = [8, 128], strides = [1, 1]} : vector<8x512xf32> to vector<8x128xf32>
    %433 = math.tanh %432 : vector<8x128xf32>
    %434 = vector.extract_strided_slice %419 {offsets = [0, 384], sizes = [8, 128], strides = [1, 1]} : vector<8x512xf32> to vector<8x128xf32>
    %435 = arith.negf %434 : vector<8x128xf32>
    %436 = math.exp %435 : vector<8x128xf32>
    %cst_185 = arith.constant 1.000000e+00 : f32
    %437 = vector.broadcast %cst_185 : f32 to vector<8x128xf32>
    %438 = arith.addf %437, %436 : vector<8x128xf32>
    %439 = arith.divf %437, %438 : vector<8x128xf32>
    %440 = arith.mulf %431, %411 : vector<8x128xf32>
    %441 = arith.mulf %425, %433 : vector<8x128xf32>
    %442 = arith.addf %440, %441 : vector<8x128xf32>
    %443 = math.tanh %442 : vector<8x128xf32>
    %444 = arith.mulf %439, %443 : vector<8x128xf32>
    %445 = vector.broadcast %c8_i32 : i32 to vector<8x1xi32>
    %446 = arith.cmpi slt, %445, %1 : vector<8x1xi32>
    %447 = vector.shape_cast %446 : vector<8x1xi1> to vector<8x1xi1>
    %448 = vector.broadcast %447 : vector<8x1xi1> to vector<8x128xi1>
    %449 = arith.select %448, %444, %410 : vector<8x128xi1>, vector<8x128xf32>
    %450 = vector.shape_cast %446 : vector<8x1xi1> to vector<8x1xi1>
    %451 = vector.broadcast %450 : vector<8x1xi1> to vector<8x128xi1>
    %452 = arith.select %451, %442, %411 : vector<8x128xi1>, vector<8x128xf32>
    %c0_186 = arith.constant 0 : index
    %c0_187 = arith.constant 0 : index
    %453 = vector.load %arg13[%c0_186, %c0_187] : memref<8x128xf32, #tpu.memory_space<vmem>>, vector<8x128xf32>
    tpu.vector_store %arg13[%c0_186, %c0_187], %449 {strides = array<i32>} : memref<8x128xf32, #tpu.memory_space<vmem>>, vector<8x128xf32>,
    %c0_188 = arith.constant 0 : index
    %c0_189 = arith.constant 0 : index
    %454 = vector.load %arg14[%c0_188, %c0_189] : memref<8x128xf32, #tpu.memory_space<vmem>>, vector<8x128xf32>
    tpu.vector_store %arg14[%c0_188, %c0_189], %452 {strides = array<i32>} : memref<8x128xf32, #tpu.memory_space<vmem>>, vector<8x128xf32>,
    %455 = arith.index_cast %c8_i32 : i32 to index
    %c0_190 = arith.constant 0 : index
    %c0_191 = arith.constant 0 : index
    %456 = vector.load %arg12[%455, %c0_190, %c0_191] : memref<10x8x128xf32, #tpu.memory_space<vmem>>, vector<1x8x128xf32>
    %457 = vector.shape_cast %456 : vector<1x8x128xf32> to vector<8x128xf32>
    %458 = vector.shape_cast %449 : vector<8x128xf32> to vector<1x8x128xf32>
    tpu.vector_store %arg12[%455, %c0_190, %c0_191], %458 {strides = array<i32>} : memref<10x8x128xf32, #tpu.memory_space<vmem>>, vector<1x8x128xf32>,
    %c9_i32 = arith.constant 9 : i32
    %c0_192 = arith.constant 0 : index
    %c0_193 = arith.constant 0 : index
    %459 = vector.load %arg13[%c0_192, %c0_193] : memref<8x128xf32, #tpu.memory_space<vmem>>, vector<8x128xf32>
    %c0_194 = arith.constant 0 : index
    %c0_195 = arith.constant 0 : index
    %460 = vector.load %arg14[%c0_194, %c0_195] : memref<8x128xf32, #tpu.memory_space<vmem>>, vector<8x128xf32>
    %461 = arith.index_cast %c9_i32 : i32 to index
    %c0_196 = arith.constant 0 : index
    %c0_197 = arith.constant 0 : index
    %462 = vector.load %arg11[%461, %c0_196, %c0_197] : memref<10x8x512xf32, #tpu.memory_space<vmem>>, vector<1x8x512xf32>
    %463 = vector.shape_cast %462 : vector<1x8x512xf32> to vector<8x512xf32>
    %464 = arith.truncf %459 : vector<8x128xf32> to vector<8x128xbf16>
    %c0_198 = arith.constant 0 : index
    %c0_199 = arith.constant 0 : index
    %c0_200 = arith.constant 0 : index
    %465 = vector.load %arg4[%c0_198, %c0_199, %c0_200] : memref<1x128x512xbf16, #tpu.memory_space<vmem>>, vector<1x128x512xbf16>
    %466 = vector.shape_cast %465 : vector<1x128x512xbf16> to vector<128x512xbf16>
    %cst_201 = arith.constant dense<0.000000e+00> : vector<8x512xf32>
    %467 = tpu.matmul %464, %466, %cst_201 {dimension_numbers = #tpu.dot_dimension_numbers<[1], [0], [0], [1], [0, 0, 1, 1], [], []>} : vector<8x128xbf16>, vector<128x512xbf16>, vector<8x512xf32> -> vector<8x512xf32>
    %468 = arith.addf %463, %467 : vector<8x512xf32>
    %469 = vector.extract_strided_slice %468 {offsets = [0, 0], sizes = [8, 128], strides = [1, 1]} : vector<8x512xf32> to vector<8x128xf32>
    %470 = arith.negf %469 : vector<8x128xf32>
    %471 = math.exp %470 : vector<8x128xf32>
    %cst_202 = arith.constant 1.000000e+00 : f32
    %472 = vector.broadcast %cst_202 : f32 to vector<8x128xf32>
    %473 = arith.addf %472, %471 : vector<8x128xf32>
    %474 = arith.divf %472, %473 : vector<8x128xf32>
    %475 = vector.extract_strided_slice %468 {offsets = [0, 128], sizes = [8, 128], strides = [1, 1]} : vector<8x512xf32> to vector<8x128xf32>
    %476 = arith.negf %475 : vector<8x128xf32>
    %477 = math.exp %476 : vector<8x128xf32>
    %cst_203 = arith.constant 1.000000e+00 : f32
    %478 = vector.broadcast %cst_203 : f32 to vector<8x128xf32>
    %479 = arith.addf %478, %477 : vector<8x128xf32>
    %480 = arith.divf %478, %479 : vector<8x128xf32>
    %481 = vector.extract_strided_slice %468 {offsets = [0, 256], sizes = [8, 128], strides = [1, 1]} : vector<8x512xf32> to vector<8x128xf32>
    %482 = math.tanh %481 : vector<8x128xf32>
    %483 = vector.extract_strided_slice %468 {offsets = [0, 384], sizes = [8, 128], strides = [1, 1]} : vector<8x512xf32> to vector<8x128xf32>
    %484 = arith.negf %483 : vector<8x128xf32>
    %485 = math.exp %484 : vector<8x128xf32>
    %cst_204 = arith.constant 1.000000e+00 : f32
    %486 = vector.broadcast %cst_204 : f32 to vector<8x128xf32>
    %487 = arith.addf %486, %485 : vector<8x128xf32>
    %488 = arith.divf %486, %487 : vector<8x128xf32>
    %489 = arith.mulf %480, %460 : vector<8x128xf32>
    %490 = arith.mulf %474, %482 : vector<8x128xf32>
    %491 = arith.addf %489, %490 : vector<8x128xf32>
    %492 = math.tanh %491 : vector<8x128xf32>
    %493 = arith.mulf %488, %492 : vector<8x128xf32>
    %494 = vector.broadcast %c9_i32 : i32 to vector<8x1xi32>
    %495 = arith.cmpi slt, %494, %1 : vector<8x1xi32>
    %496 = vector.shape_cast %495 : vector<8x1xi1> to vector<8x1xi1>
    %497 = vector.broadcast %496 : vector<8x1xi1> to vector<8x128xi1>
    %498 = arith.select %497, %493, %459 : vector<8x128xi1>, vector<8x128xf32>
    %499 = vector.shape_cast %495 : vector<8x1xi1> to vector<8x1xi1>
    %500 = vector.broadcast %499 : vector<8x1xi1> to vector<8x128xi1>
    %501 = arith.select %500, %491, %460 : vector<8x128xi1>, vector<8x128xf32>
    %c0_205 = arith.constant 0 : index
    %c0_206 = arith.constant 0 : index
    %502 = vector.load %arg13[%c0_205, %c0_206] : memref<8x128xf32, #tpu.memory_space<vmem>>, vector<8x128xf32>
    tpu.vector_store %arg13[%c0_205, %c0_206], %498 {strides = array<i32>} : memref<8x128xf32, #tpu.memory_space<vmem>>, vector<8x128xf32>,
    %c0_207 = arith.constant 0 : index
    %c0_208 = arith.constant 0 : index
    %503 = vector.load %arg14[%c0_207, %c0_208] : memref<8x128xf32, #tpu.memory_space<vmem>>, vector<8x128xf32>
    tpu.vector_store %arg14[%c0_207, %c0_208], %501 {strides = array<i32>} : memref<8x128xf32, #tpu.memory_space<vmem>>, vector<8x128xf32>,
    %504 = arith.index_cast %c9_i32 : i32 to index
    %c0_209 = arith.constant 0 : index
    %c0_210 = arith.constant 0 : index
    %505 = vector.load %arg12[%504, %c0_209, %c0_210] : memref<10x8x128xf32, #tpu.memory_space<vmem>>, vector<1x8x128xf32>
    %506 = vector.shape_cast %505 : vector<1x8x128xf32> to vector<8x128xf32>
    %507 = vector.shape_cast %498 : vector<8x128xf32> to vector<1x8x128xf32>
    tpu.vector_store %arg12[%504, %c0_209, %c0_210], %507 {strides = array<i32>} : memref<10x8x128xf32, #tpu.memory_space<vmem>>, vector<1x8x128xf32>,
    %c10_i32 = arith.constant 10 : i32
    %c0_211 = arith.constant 0 : index
    %c0_212 = arith.constant 0 : index
    %c0_213 = arith.constant 0 : index
    %508 = vector.load %arg12[%c0_211, %c0_212, %c0_213] : memref<10x8x128xf32, #tpu.memory_space<vmem>>, vector<10x8x128xf32>
    %509 = vector.shape_cast %508 : vector<10x8x128xf32> to vector<80x128xf32>
    %510 = arith.truncf %509 : vector<80x128xf32> to vector<80x128xbf16>
    %c0_214 = arith.constant 0 : index
    %c0_215 = arith.constant 0 : index
    %c0_216 = arith.constant 0 : index
    %511 = vector.load %arg6[%c0_214, %c0_215, %c0_216] : memref<1x128x512xbf16, #tpu.memory_space<vmem>>, vector<1x128x512xbf16>
    %512 = vector.shape_cast %511 : vector<1x128x512xbf16> to vector<128x512xbf16>
    %cst_217 = arith.constant dense<0.000000e+00> : vector<80x512xf32>
    %513 = tpu.matmul %510, %512, %cst_217 {dimension_numbers = #tpu.dot_dimension_numbers<[1], [0], [0], [1], [0, 0, 1, 1], [], []>} : vector<80x128xbf16>, vector<128x512xbf16>, vector<80x512xf32> -> vector<80x512xf32>
    %c0_218 = arith.constant 0 : index
    %c0_219 = arith.constant 0 : index
    %c0_220 = arith.constant 0 : index
    %514 = vector.load %arg8[%c0_218, %c0_219, %c0_220] : memref<1x1x512xf32, #tpu.memory_space<vmem>>, vector<1x1x512xf32>
    %515 = vector.shape_cast %514 : vector<1x1x512xf32> to vector<1x512xf32>
    %516 = vector.broadcast %515 : vector<1x512xf32> to vector<80x512xf32>
    %517 = arith.addf %513, %516 : vector<80x512xf32>
    %518 = vector.shape_cast %517 : vector<80x512xf32> to vector<10x8x512xf32>
    %c0_221 = arith.constant 0 : index
    %c0_222 = arith.constant 0 : index
    %c0_223 = arith.constant 0 : index
    %519 = vector.load %arg11[%c0_221, %c0_222, %c0_223] : memref<10x8x512xf32, #tpu.memory_space<vmem>>, vector<10x8x512xf32>
    tpu.vector_store %arg11[%c0_221, %c0_222, %c0_223], %518 {strides = array<i32>} : memref<10x8x512xf32, #tpu.memory_space<vmem>>, vector<10x8x512xf32>,
    %cst_224 = arith.constant 0.000000e+00 : f32
    %520 = vector.broadcast %cst_224 : f32 to vector<8x128xf32>
    %c0_225 = arith.constant 0 : index
    %c0_226 = arith.constant 0 : index
    %521 = vector.load %arg13[%c0_225, %c0_226] : memref<8x128xf32, #tpu.memory_space<vmem>>, vector<8x128xf32>
    tpu.vector_store %arg13[%c0_225, %c0_226], %520 {strides = array<i32>} : memref<8x128xf32, #tpu.memory_space<vmem>>, vector<8x128xf32>,
    %cst_227 = arith.constant 0.000000e+00 : f32
    %522 = vector.broadcast %cst_227 : f32 to vector<8x128xf32>
    %c0_228 = arith.constant 0 : index
    %c0_229 = arith.constant 0 : index
    %523 = vector.load %arg14[%c0_228, %c0_229] : memref<8x128xf32, #tpu.memory_space<vmem>>, vector<8x128xf32>
    tpu.vector_store %arg14[%c0_228, %c0_229], %522 {strides = array<i32>} : memref<8x128xf32, #tpu.memory_space<vmem>>, vector<8x128xf32>,
    %c0_i32_230 = arith.constant 0 : i32
    %c0_231 = arith.constant 0 : index
    %c0_232 = arith.constant 0 : index
    %524 = vector.load %arg13[%c0_231, %c0_232] : memref<8x128xf32, #tpu.memory_space<vmem>>, vector<8x128xf32>
    %c0_233 = arith.constant 0 : index
    %c0_234 = arith.constant 0 : index
    %525 = vector.load %arg14[%c0_233, %c0_234] : memref<8x128xf32, #tpu.memory_space<vmem>>, vector<8x128xf32>
    %526 = arith.index_cast %c0_i32_230 : i32 to index
    %c0_235 = arith.constant 0 : index
    %c0_236 = arith.constant 0 : index
    %527 = vector.load %arg11[%526, %c0_235, %c0_236] : memref<10x8x512xf32, #tpu.memory_space<vmem>>, vector<1x8x512xf32>
    %528 = vector.shape_cast %527 : vector<1x8x512xf32> to vector<8x512xf32>
    %529 = arith.truncf %524 : vector<8x128xf32> to vector<8x128xbf16>
    %c0_237 = arith.constant 0 : index
    %c0_238 = arith.constant 0 : index
    %c0_239 = arith.constant 0 : index
    %530 = vector.load %arg7[%c0_237, %c0_238, %c0_239] : memref<1x128x512xbf16, #tpu.memory_space<vmem>>, vector<1x128x512xbf16>
    %531 = vector.shape_cast %530 : vector<1x128x512xbf16> to vector<128x512xbf16>
    %cst_240 = arith.constant dense<0.000000e+00> : vector<8x512xf32>
    %532 = tpu.matmul %529, %531, %cst_240 {dimension_numbers = #tpu.dot_dimension_numbers<[1], [0], [0], [1], [0, 0, 1, 1], [], []>} : vector<8x128xbf16>, vector<128x512xbf16>, vector<8x512xf32> -> vector<8x512xf32>
    %533 = arith.addf %528, %532 : vector<8x512xf32>
    %534 = vector.extract_strided_slice %533 {offsets = [0, 0], sizes = [8, 128], strides = [1, 1]} : vector<8x512xf32> to vector<8x128xf32>
    %535 = arith.negf %534 : vector<8x128xf32>
    %536 = math.exp %535 : vector<8x128xf32>
    %cst_241 = arith.constant 1.000000e+00 : f32
    %537 = vector.broadcast %cst_241 : f32 to vector<8x128xf32>
    %538 = arith.addf %537, %536 : vector<8x128xf32>
    %539 = arith.divf %537, %538 : vector<8x128xf32>
    %540 = vector.extract_strided_slice %533 {offsets = [0, 128], sizes = [8, 128], strides = [1, 1]} : vector<8x512xf32> to vector<8x128xf32>
    %541 = arith.negf %540 : vector<8x128xf32>
    %542 = math.exp %541 : vector<8x128xf32>
    %cst_242 = arith.constant 1.000000e+00 : f32
    %543 = vector.broadcast %cst_242 : f32 to vector<8x128xf32>
    %544 = arith.addf %543, %542 : vector<8x128xf32>
    %545 = arith.divf %543, %544 : vector<8x128xf32>
    %546 = vector.extract_strided_slice %533 {offsets = [0, 256], sizes = [8, 128], strides = [1, 1]} : vector<8x512xf32> to vector<8x128xf32>
    %547 = math.tanh %546 : vector<8x128xf32>
    %548 = vector.extract_strided_slice %533 {offsets = [0, 384], sizes = [8, 128], strides = [1, 1]} : vector<8x512xf32> to vector<8x128xf32>
    %549 = arith.negf %548 : vector<8x128xf32>
    %550 = math.exp %549 : vector<8x128xf32>
    %cst_243 = arith.constant 1.000000e+00 : f32
    %551 = vector.broadcast %cst_243 : f32 to vector<8x128xf32>
    %552 = arith.addf %551, %550 : vector<8x128xf32>
    %553 = arith.divf %551, %552 : vector<8x128xf32>
    %554 = arith.mulf %545, %525 : vector<8x128xf32>
    %555 = arith.mulf %539, %547 : vector<8x128xf32>
    %556 = arith.addf %554, %555 : vector<8x128xf32>
    %557 = math.tanh %556 : vector<8x128xf32>
    %558 = arith.mulf %553, %557 : vector<8x128xf32>
    %559 = vector.broadcast %c0_i32_230 : i32 to vector<8x1xi32>
    %560 = arith.cmpi slt, %559, %1 : vector<8x1xi32>
    %561 = vector.shape_cast %560 : vector<8x1xi1> to vector<8x1xi1>
    %562 = vector.broadcast %561 : vector<8x1xi1> to vector<8x128xi1>
    %563 = arith.select %562, %558, %524 : vector<8x128xi1>, vector<8x128xf32>
    %564 = vector.shape_cast %560 : vector<8x1xi1> to vector<8x1xi1>
    %565 = vector.broadcast %564 : vector<8x1xi1> to vector<8x128xi1>
    %566 = arith.select %565, %556, %525 : vector<8x128xi1>, vector<8x128xf32>
    %c0_244 = arith.constant 0 : index
    %c0_245 = arith.constant 0 : index
    %567 = vector.load %arg13[%c0_244, %c0_245] : memref<8x128xf32, #tpu.memory_space<vmem>>, vector<8x128xf32>
    tpu.vector_store %arg13[%c0_244, %c0_245], %563 {strides = array<i32>} : memref<8x128xf32, #tpu.memory_space<vmem>>, vector<8x128xf32>,
    %c0_246 = arith.constant 0 : index
    %c0_247 = arith.constant 0 : index
    %568 = vector.load %arg14[%c0_246, %c0_247] : memref<8x128xf32, #tpu.memory_space<vmem>>, vector<8x128xf32>
    tpu.vector_store %arg14[%c0_246, %c0_247], %566 {strides = array<i32>} : memref<8x128xf32, #tpu.memory_space<vmem>>, vector<8x128xf32>,
    %c1_i32_248 = arith.constant 1 : i32
    %c0_249 = arith.constant 0 : index
    %c0_250 = arith.constant 0 : index
    %569 = vector.load %arg13[%c0_249, %c0_250] : memref<8x128xf32, #tpu.memory_space<vmem>>, vector<8x128xf32>
    %c0_251 = arith.constant 0 : index
    %c0_252 = arith.constant 0 : index
    %570 = vector.load %arg14[%c0_251, %c0_252] : memref<8x128xf32, #tpu.memory_space<vmem>>, vector<8x128xf32>
    %571 = arith.index_cast %c1_i32_248 : i32 to index
    %c0_253 = arith.constant 0 : index
    %c0_254 = arith.constant 0 : index
    %572 = vector.load %arg11[%571, %c0_253, %c0_254] : memref<10x8x512xf32, #tpu.memory_space<vmem>>, vector<1x8x512xf32>
    %573 = vector.shape_cast %572 : vector<1x8x512xf32> to vector<8x512xf32>
    %574 = arith.truncf %569 : vector<8x128xf32> to vector<8x128xbf16>
    %c0_255 = arith.constant 0 : index
    %c0_256 = arith.constant 0 : index
    %c0_257 = arith.constant 0 : index
    %575 = vector.load %arg7[%c0_255, %c0_256, %c0_257] : memref<1x128x512xbf16, #tpu.memory_space<vmem>>, vector<1x128x512xbf16>
    %576 = vector.shape_cast %575 : vector<1x128x512xbf16> to vector<128x512xbf16>
    %cst_258 = arith.constant dense<0.000000e+00> : vector<8x512xf32>
    %577 = tpu.matmul %574, %576, %cst_258 {dimension_numbers = #tpu.dot_dimension_numbers<[1], [0], [0], [1], [0, 0, 1, 1], [], []>} : vector<8x128xbf16>, vector<128x512xbf16>, vector<8x512xf32> -> vector<8x512xf32>
    %578 = arith.addf %573, %577 : vector<8x512xf32>
    %579 = vector.extract_strided_slice %578 {offsets = [0, 0], sizes = [8, 128], strides = [1, 1]} : vector<8x512xf32> to vector<8x128xf32>
    %580 = arith.negf %579 : vector<8x128xf32>
    %581 = math.exp %580 : vector<8x128xf32>
    %cst_259 = arith.constant 1.000000e+00 : f32
    %582 = vector.broadcast %cst_259 : f32 to vector<8x128xf32>
    %583 = arith.addf %582, %581 : vector<8x128xf32>
    %584 = arith.divf %582, %583 : vector<8x128xf32>
    %585 = vector.extract_strided_slice %578 {offsets = [0, 128], sizes = [8, 128], strides = [1, 1]} : vector<8x512xf32> to vector<8x128xf32>
    %586 = arith.negf %585 : vector<8x128xf32>
    %587 = math.exp %586 : vector<8x128xf32>
    %cst_260 = arith.constant 1.000000e+00 : f32
    %588 = vector.broadcast %cst_260 : f32 to vector<8x128xf32>
    %589 = arith.addf %588, %587 : vector<8x128xf32>
    %590 = arith.divf %588, %589 : vector<8x128xf32>
    %591 = vector.extract_strided_slice %578 {offsets = [0, 256], sizes = [8, 128], strides = [1, 1]} : vector<8x512xf32> to vector<8x128xf32>
    %592 = math.tanh %591 : vector<8x128xf32>
    %593 = vector.extract_strided_slice %578 {offsets = [0, 384], sizes = [8, 128], strides = [1, 1]} : vector<8x512xf32> to vector<8x128xf32>
    %594 = arith.negf %593 : vector<8x128xf32>
    %595 = math.exp %594 : vector<8x128xf32>
    %cst_261 = arith.constant 1.000000e+00 : f32
    %596 = vector.broadcast %cst_261 : f32 to vector<8x128xf32>
    %597 = arith.addf %596, %595 : vector<8x128xf32>
    %598 = arith.divf %596, %597 : vector<8x128xf32>
    %599 = arith.mulf %590, %570 : vector<8x128xf32>
    %600 = arith.mulf %584, %592 : vector<8x128xf32>
    %601 = arith.addf %599, %600 : vector<8x128xf32>
    %602 = math.tanh %601 : vector<8x128xf32>
    %603 = arith.mulf %598, %602 : vector<8x128xf32>
    %604 = vector.broadcast %c1_i32_248 : i32 to vector<8x1xi32>
    %605 = arith.cmpi slt, %604, %1 : vector<8x1xi32>
    %606 = vector.shape_cast %605 : vector<8x1xi1> to vector<8x1xi1>
    %607 = vector.broadcast %606 : vector<8x1xi1> to vector<8x128xi1>
    %608 = arith.select %607, %603, %569 : vector<8x128xi1>, vector<8x128xf32>
    %609 = vector.shape_cast %605 : vector<8x1xi1> to vector<8x1xi1>
    %610 = vector.broadcast %609 : vector<8x1xi1> to vector<8x128xi1>
    %611 = arith.select %610, %601, %570 : vector<8x128xi1>, vector<8x128xf32>
    %c0_262 = arith.constant 0 : index
    %c0_263 = arith.constant 0 : index
    %612 = vector.load %arg13[%c0_262, %c0_263] : memref<8x128xf32, #tpu.memory_space<vmem>>, vector<8x128xf32>
    tpu.vector_store %arg13[%c0_262, %c0_263], %608 {strides = array<i32>} : memref<8x128xf32, #tpu.memory_space<vmem>>, vector<8x128xf32>,
    %c0_264 = arith.constant 0 : index
    %c0_265 = arith.constant 0 : index
    %613 = vector.load %arg14[%c0_264, %c0_265] : memref<8x128xf32, #tpu.memory_space<vmem>>, vector<8x128xf32>
    tpu.vector_store %arg14[%c0_264, %c0_265], %611 {strides = array<i32>} : memref<8x128xf32, #tpu.memory_space<vmem>>, vector<8x128xf32>,
    %c2_i32_266 = arith.constant 2 : i32
    %c0_267 = arith.constant 0 : index
    %c0_268 = arith.constant 0 : index
    %614 = vector.load %arg13[%c0_267, %c0_268] : memref<8x128xf32, #tpu.memory_space<vmem>>, vector<8x128xf32>
    %c0_269 = arith.constant 0 : index
    %c0_270 = arith.constant 0 : index
    %615 = vector.load %arg14[%c0_269, %c0_270] : memref<8x128xf32, #tpu.memory_space<vmem>>, vector<8x128xf32>
    %616 = arith.index_cast %c2_i32_266 : i32 to index
    %c0_271 = arith.constant 0 : index
    %c0_272 = arith.constant 0 : index
    %617 = vector.load %arg11[%616, %c0_271, %c0_272] : memref<10x8x512xf32, #tpu.memory_space<vmem>>, vector<1x8x512xf32>
    %618 = vector.shape_cast %617 : vector<1x8x512xf32> to vector<8x512xf32>
    %619 = arith.truncf %614 : vector<8x128xf32> to vector<8x128xbf16>
    %c0_273 = arith.constant 0 : index
    %c0_274 = arith.constant 0 : index
    %c0_275 = arith.constant 0 : index
    %620 = vector.load %arg7[%c0_273, %c0_274, %c0_275] : memref<1x128x512xbf16, #tpu.memory_space<vmem>>, vector<1x128x512xbf16>
    %621 = vector.shape_cast %620 : vector<1x128x512xbf16> to vector<128x512xbf16>
    %cst_276 = arith.constant dense<0.000000e+00> : vector<8x512xf32>
    %622 = tpu.matmul %619, %621, %cst_276 {dimension_numbers = #tpu.dot_dimension_numbers<[1], [0], [0], [1], [0, 0, 1, 1], [], []>} : vector<8x128xbf16>, vector<128x512xbf16>, vector<8x512xf32> -> vector<8x512xf32>
    %623 = arith.addf %618, %622 : vector<8x512xf32>
    %624 = vector.extract_strided_slice %623 {offsets = [0, 0], sizes = [8, 128], strides = [1, 1]} : vector<8x512xf32> to vector<8x128xf32>
    %625 = arith.negf %624 : vector<8x128xf32>
    %626 = math.exp %625 : vector<8x128xf32>
    %cst_277 = arith.constant 1.000000e+00 : f32
    %627 = vector.broadcast %cst_277 : f32 to vector<8x128xf32>
    %628 = arith.addf %627, %626 : vector<8x128xf32>
    %629 = arith.divf %627, %628 : vector<8x128xf32>
    %630 = vector.extract_strided_slice %623 {offsets = [0, 128], sizes = [8, 128], strides = [1, 1]} : vector<8x512xf32> to vector<8x128xf32>
    %631 = arith.negf %630 : vector<8x128xf32>
    %632 = math.exp %631 : vector<8x128xf32>
    %cst_278 = arith.constant 1.000000e+00 : f32
    %633 = vector.broadcast %cst_278 : f32 to vector<8x128xf32>
    %634 = arith.addf %633, %632 : vector<8x128xf32>
    %635 = arith.divf %633, %634 : vector<8x128xf32>
    %636 = vector.extract_strided_slice %623 {offsets = [0, 256], sizes = [8, 128], strides = [1, 1]} : vector<8x512xf32> to vector<8x128xf32>
    %637 = math.tanh %636 : vector<8x128xf32>
    %638 = vector.extract_strided_slice %623 {offsets = [0, 384], sizes = [8, 128], strides = [1, 1]} : vector<8x512xf32> to vector<8x128xf32>
    %639 = arith.negf %638 : vector<8x128xf32>
    %640 = math.exp %639 : vector<8x128xf32>
    %cst_279 = arith.constant 1.000000e+00 : f32
    %641 = vector.broadcast %cst_279 : f32 to vector<8x128xf32>
    %642 = arith.addf %641, %640 : vector<8x128xf32>
    %643 = arith.divf %641, %642 : vector<8x128xf32>
    %644 = arith.mulf %635, %615 : vector<8x128xf32>
    %645 = arith.mulf %629, %637 : vector<8x128xf32>
    %646 = arith.addf %644, %645 : vector<8x128xf32>
    %647 = math.tanh %646 : vector<8x128xf32>
    %648 = arith.mulf %643, %647 : vector<8x128xf32>
    %649 = vector.broadcast %c2_i32_266 : i32 to vector<8x1xi32>
    %650 = arith.cmpi slt, %649, %1 : vector<8x1xi32>
    %651 = vector.shape_cast %650 : vector<8x1xi1> to vector<8x1xi1>
    %652 = vector.broadcast %651 : vector<8x1xi1> to vector<8x128xi1>
    %653 = arith.select %652, %648, %614 : vector<8x128xi1>, vector<8x128xf32>
    %654 = vector.shape_cast %650 : vector<8x1xi1> to vector<8x1xi1>
    %655 = vector.broadcast %654 : vector<8x1xi1> to vector<8x128xi1>
    %656 = arith.select %655, %646, %615 : vector<8x128xi1>, vector<8x128xf32>
    %c0_280 = arith.constant 0 : index
    %c0_281 = arith.constant 0 : index
    %657 = vector.load %arg13[%c0_280, %c0_281] : memref<8x128xf32, #tpu.memory_space<vmem>>, vector<8x128xf32>
    tpu.vector_store %arg13[%c0_280, %c0_281], %653 {strides = array<i32>} : memref<8x128xf32, #tpu.memory_space<vmem>>, vector<8x128xf32>,
    %c0_282 = arith.constant 0 : index
    %c0_283 = arith.constant 0 : index
    %658 = vector.load %arg14[%c0_282, %c0_283] : memref<8x128xf32, #tpu.memory_space<vmem>>, vector<8x128xf32>
    tpu.vector_store %arg14[%c0_282, %c0_283], %656 {strides = array<i32>} : memref<8x128xf32, #tpu.memory_space<vmem>>, vector<8x128xf32>,
    %c3_i32_284 = arith.constant 3 : i32
    %c0_285 = arith.constant 0 : index
    %c0_286 = arith.constant 0 : index
    %659 = vector.load %arg13[%c0_285, %c0_286] : memref<8x128xf32, #tpu.memory_space<vmem>>, vector<8x128xf32>
    %c0_287 = arith.constant 0 : index
    %c0_288 = arith.constant 0 : index
    %660 = vector.load %arg14[%c0_287, %c0_288] : memref<8x128xf32, #tpu.memory_space<vmem>>, vector<8x128xf32>
    %661 = arith.index_cast %c3_i32_284 : i32 to index
    %c0_289 = arith.constant 0 : index
    %c0_290 = arith.constant 0 : index
    %662 = vector.load %arg11[%661, %c0_289, %c0_290] : memref<10x8x512xf32, #tpu.memory_space<vmem>>, vector<1x8x512xf32>
    %663 = vector.shape_cast %662 : vector<1x8x512xf32> to vector<8x512xf32>
    %664 = arith.truncf %659 : vector<8x128xf32> to vector<8x128xbf16>
    %c0_291 = arith.constant 0 : index
    %c0_292 = arith.constant 0 : index
    %c0_293 = arith.constant 0 : index
    %665 = vector.load %arg7[%c0_291, %c0_292, %c0_293] : memref<1x128x512xbf16, #tpu.memory_space<vmem>>, vector<1x128x512xbf16>
    %666 = vector.shape_cast %665 : vector<1x128x512xbf16> to vector<128x512xbf16>
    %cst_294 = arith.constant dense<0.000000e+00> : vector<8x512xf32>
    %667 = tpu.matmul %664, %666, %cst_294 {dimension_numbers = #tpu.dot_dimension_numbers<[1], [0], [0], [1], [0, 0, 1, 1], [], []>} : vector<8x128xbf16>, vector<128x512xbf16>, vector<8x512xf32> -> vector<8x512xf32>
    %668 = arith.addf %663, %667 : vector<8x512xf32>
    %669 = vector.extract_strided_slice %668 {offsets = [0, 0], sizes = [8, 128], strides = [1, 1]} : vector<8x512xf32> to vector<8x128xf32>
    %670 = arith.negf %669 : vector<8x128xf32>
    %671 = math.exp %670 : vector<8x128xf32>
    %cst_295 = arith.constant 1.000000e+00 : f32
    %672 = vector.broadcast %cst_295 : f32 to vector<8x128xf32>
    %673 = arith.addf %672, %671 : vector<8x128xf32>
    %674 = arith.divf %672, %673 : vector<8x128xf32>
    %675 = vector.extract_strided_slice %668 {offsets = [0, 128], sizes = [8, 128], strides = [1, 1]} : vector<8x512xf32> to vector<8x128xf32>
    %676 = arith.negf %675 : vector<8x128xf32>
    %677 = math.exp %676 : vector<8x128xf32>
    %cst_296 = arith.constant 1.000000e+00 : f32
    %678 = vector.broadcast %cst_296 : f32 to vector<8x128xf32>
    %679 = arith.addf %678, %677 : vector<8x128xf32>
    %680 = arith.divf %678, %679 : vector<8x128xf32>
    %681 = vector.extract_strided_slice %668 {offsets = [0, 256], sizes = [8, 128], strides = [1, 1]} : vector<8x512xf32> to vector<8x128xf32>
    %682 = math.tanh %681 : vector<8x128xf32>
    %683 = vector.extract_strided_slice %668 {offsets = [0, 384], sizes = [8, 128], strides = [1, 1]} : vector<8x512xf32> to vector<8x128xf32>
    %684 = arith.negf %683 : vector<8x128xf32>
    %685 = math.exp %684 : vector<8x128xf32>
    %cst_297 = arith.constant 1.000000e+00 : f32
    %686 = vector.broadcast %cst_297 : f32 to vector<8x128xf32>
    %687 = arith.addf %686, %685 : vector<8x128xf32>
    %688 = arith.divf %686, %687 : vector<8x128xf32>
    %689 = arith.mulf %680, %660 : vector<8x128xf32>
    %690 = arith.mulf %674, %682 : vector<8x128xf32>
    %691 = arith.addf %689, %690 : vector<8x128xf32>
    %692 = math.tanh %691 : vector<8x128xf32>
    %693 = arith.mulf %688, %692 : vector<8x128xf32>
    %694 = vector.broadcast %c3_i32_284 : i32 to vector<8x1xi32>
    %695 = arith.cmpi slt, %694, %1 : vector<8x1xi32>
    %696 = vector.shape_cast %695 : vector<8x1xi1> to vector<8x1xi1>
    %697 = vector.broadcast %696 : vector<8x1xi1> to vector<8x128xi1>
    %698 = arith.select %697, %693, %659 : vector<8x128xi1>, vector<8x128xf32>
    %699 = vector.shape_cast %695 : vector<8x1xi1> to vector<8x1xi1>
    %700 = vector.broadcast %699 : vector<8x1xi1> to vector<8x128xi1>
    %701 = arith.select %700, %691, %660 : vector<8x128xi1>, vector<8x128xf32>
    %c0_298 = arith.constant 0 : index
    %c0_299 = arith.constant 0 : index
    %702 = vector.load %arg13[%c0_298, %c0_299] : memref<8x128xf32, #tpu.memory_space<vmem>>, vector<8x128xf32>
    tpu.vector_store %arg13[%c0_298, %c0_299], %698 {strides = array<i32>} : memref<8x128xf32, #tpu.memory_space<vmem>>, vector<8x128xf32>,
    %c0_300 = arith.constant 0 : index
    %c0_301 = arith.constant 0 : index
    %703 = vector.load %arg14[%c0_300, %c0_301] : memref<8x128xf32, #tpu.memory_space<vmem>>, vector<8x128xf32>
    tpu.vector_store %arg14[%c0_300, %c0_301], %701 {strides = array<i32>} : memref<8x128xf32, #tpu.memory_space<vmem>>, vector<8x128xf32>,
    %c4_i32_302 = arith.constant 4 : i32
    %c0_303 = arith.constant 0 : index
    %c0_304 = arith.constant 0 : index
    %704 = vector.load %arg13[%c0_303, %c0_304] : memref<8x128xf32, #tpu.memory_space<vmem>>, vector<8x128xf32>
    %c0_305 = arith.constant 0 : index
    %c0_306 = arith.constant 0 : index
    %705 = vector.load %arg14[%c0_305, %c0_306] : memref<8x128xf32, #tpu.memory_space<vmem>>, vector<8x128xf32>
    %706 = arith.index_cast %c4_i32_302 : i32 to index
    %c0_307 = arith.constant 0 : index
    %c0_308 = arith.constant 0 : index
    %707 = vector.load %arg11[%706, %c0_307, %c0_308] : memref<10x8x512xf32, #tpu.memory_space<vmem>>, vector<1x8x512xf32>
    %708 = vector.shape_cast %707 : vector<1x8x512xf32> to vector<8x512xf32>
    %709 = arith.truncf %704 : vector<8x128xf32> to vector<8x128xbf16>
    %c0_309 = arith.constant 0 : index
    %c0_310 = arith.constant 0 : index
    %c0_311 = arith.constant 0 : index
    %710 = vector.load %arg7[%c0_309, %c0_310, %c0_311] : memref<1x128x512xbf16, #tpu.memory_space<vmem>>, vector<1x128x512xbf16>
    %711 = vector.shape_cast %710 : vector<1x128x512xbf16> to vector<128x512xbf16>
    %cst_312 = arith.constant dense<0.000000e+00> : vector<8x512xf32>
    %712 = tpu.matmul %709, %711, %cst_312 {dimension_numbers = #tpu.dot_dimension_numbers<[1], [0], [0], [1], [0, 0, 1, 1], [], []>} : vector<8x128xbf16>, vector<128x512xbf16>, vector<8x512xf32> -> vector<8x512xf32>
    %713 = arith.addf %708, %712 : vector<8x512xf32>
    %714 = vector.extract_strided_slice %713 {offsets = [0, 0], sizes = [8, 128], strides = [1, 1]} : vector<8x512xf32> to vector<8x128xf32>
    %715 = arith.negf %714 : vector<8x128xf32>
    %716 = math.exp %715 : vector<8x128xf32>
    %cst_313 = arith.constant 1.000000e+00 : f32
    %717 = vector.broadcast %cst_313 : f32 to vector<8x128xf32>
    %718 = arith.addf %717, %716 : vector<8x128xf32>
    %719 = arith.divf %717, %718 : vector<8x128xf32>
    %720 = vector.extract_strided_slice %713 {offsets = [0, 128], sizes = [8, 128], strides = [1, 1]} : vector<8x512xf32> to vector<8x128xf32>
    %721 = arith.negf %720 : vector<8x128xf32>
    %722 = math.exp %721 : vector<8x128xf32>
    %cst_314 = arith.constant 1.000000e+00 : f32
    %723 = vector.broadcast %cst_314 : f32 to vector<8x128xf32>
    %724 = arith.addf %723, %722 : vector<8x128xf32>
    %725 = arith.divf %723, %724 : vector<8x128xf32>
    %726 = vector.extract_strided_slice %713 {offsets = [0, 256], sizes = [8, 128], strides = [1, 1]} : vector<8x512xf32> to vector<8x128xf32>
    %727 = math.tanh %726 : vector<8x128xf32>
    %728 = vector.extract_strided_slice %713 {offsets = [0, 384], sizes = [8, 128], strides = [1, 1]} : vector<8x512xf32> to vector<8x128xf32>
    %729 = arith.negf %728 : vector<8x128xf32>
    %730 = math.exp %729 : vector<8x128xf32>
    %cst_315 = arith.constant 1.000000e+00 : f32
    %731 = vector.broadcast %cst_315 : f32 to vector<8x128xf32>
    %732 = arith.addf %731, %730 : vector<8x128xf32>
    %733 = arith.divf %731, %732 : vector<8x128xf32>
    %734 = arith.mulf %725, %705 : vector<8x128xf32>
    %735 = arith.mulf %719, %727 : vector<8x128xf32>
    %736 = arith.addf %734, %735 : vector<8x128xf32>
    %737 = math.tanh %736 : vector<8x128xf32>
    %738 = arith.mulf %733, %737 : vector<8x128xf32>
    %739 = vector.broadcast %c4_i32_302 : i32 to vector<8x1xi32>
    %740 = arith.cmpi slt, %739, %1 : vector<8x1xi32>
    %741 = vector.shape_cast %740 : vector<8x1xi1> to vector<8x1xi1>
    %742 = vector.broadcast %741 : vector<8x1xi1> to vector<8x128xi1>
    %743 = arith.select %742, %738, %704 : vector<8x128xi1>, vector<8x128xf32>
    %744 = vector.shape_cast %740 : vector<8x1xi1> to vector<8x1xi1>
    %745 = vector.broadcast %744 : vector<8x1xi1> to vector<8x128xi1>
    %746 = arith.select %745, %736, %705 : vector<8x128xi1>, vector<8x128xf32>
    %c0_316 = arith.constant 0 : index
    %c0_317 = arith.constant 0 : index
    %747 = vector.load %arg13[%c0_316, %c0_317] : memref<8x128xf32, #tpu.memory_space<vmem>>, vector<8x128xf32>
    tpu.vector_store %arg13[%c0_316, %c0_317], %743 {strides = array<i32>} : memref<8x128xf32, #tpu.memory_space<vmem>>, vector<8x128xf32>,
    %c0_318 = arith.constant 0 : index
    %c0_319 = arith.constant 0 : index
    %748 = vector.load %arg14[%c0_318, %c0_319] : memref<8x128xf32, #tpu.memory_space<vmem>>, vector<8x128xf32>
    tpu.vector_store %arg14[%c0_318, %c0_319], %746 {strides = array<i32>} : memref<8x128xf32, #tpu.memory_space<vmem>>, vector<8x128xf32>,
    %c5_i32_320 = arith.constant 5 : i32
    %c0_321 = arith.constant 0 : index
    %c0_322 = arith.constant 0 : index
    %749 = vector.load %arg13[%c0_321, %c0_322] : memref<8x128xf32, #tpu.memory_space<vmem>>, vector<8x128xf32>
    %c0_323 = arith.constant 0 : index
    %c0_324 = arith.constant 0 : index
    %750 = vector.load %arg14[%c0_323, %c0_324] : memref<8x128xf32, #tpu.memory_space<vmem>>, vector<8x128xf32>
    %751 = arith.index_cast %c5_i32_320 : i32 to index
    %c0_325 = arith.constant 0 : index
    %c0_326 = arith.constant 0 : index
    %752 = vector.load %arg11[%751, %c0_325, %c0_326] : memref<10x8x512xf32, #tpu.memory_space<vmem>>, vector<1x8x512xf32>
    %753 = vector.shape_cast %752 : vector<1x8x512xf32> to vector<8x512xf32>
    %754 = arith.truncf %749 : vector<8x128xf32> to vector<8x128xbf16>
    %c0_327 = arith.constant 0 : index
    %c0_328 = arith.constant 0 : index
    %c0_329 = arith.constant 0 : index
    %755 = vector.load %arg7[%c0_327, %c0_328, %c0_329] : memref<1x128x512xbf16, #tpu.memory_space<vmem>>, vector<1x128x512xbf16>
    %756 = vector.shape_cast %755 : vector<1x128x512xbf16> to vector<128x512xbf16>
    %cst_330 = arith.constant dense<0.000000e+00> : vector<8x512xf32>
    %757 = tpu.matmul %754, %756, %cst_330 {dimension_numbers = #tpu.dot_dimension_numbers<[1], [0], [0], [1], [0, 0, 1, 1], [], []>} : vector<8x128xbf16>, vector<128x512xbf16>, vector<8x512xf32> -> vector<8x512xf32>
    %758 = arith.addf %753, %757 : vector<8x512xf32>
    %759 = vector.extract_strided_slice %758 {offsets = [0, 0], sizes = [8, 128], strides = [1, 1]} : vector<8x512xf32> to vector<8x128xf32>
    %760 = arith.negf %759 : vector<8x128xf32>
    %761 = math.exp %760 : vector<8x128xf32>
    %cst_331 = arith.constant 1.000000e+00 : f32
    %762 = vector.broadcast %cst_331 : f32 to vector<8x128xf32>
    %763 = arith.addf %762, %761 : vector<8x128xf32>
    %764 = arith.divf %762, %763 : vector<8x128xf32>
    %765 = vector.extract_strided_slice %758 {offsets = [0, 128], sizes = [8, 128], strides = [1, 1]} : vector<8x512xf32> to vector<8x128xf32>
    %766 = arith.negf %765 : vector<8x128xf32>
    %767 = math.exp %766 : vector<8x128xf32>
    %cst_332 = arith.constant 1.000000e+00 : f32
    %768 = vector.broadcast %cst_332 : f32 to vector<8x128xf32>
    %769 = arith.addf %768, %767 : vector<8x128xf32>
    %770 = arith.divf %768, %769 : vector<8x128xf32>
    %771 = vector.extract_strided_slice %758 {offsets = [0, 256], sizes = [8, 128], strides = [1, 1]} : vector<8x512xf32> to vector<8x128xf32>
    %772 = math.tanh %771 : vector<8x128xf32>
    %773 = vector.extract_strided_slice %758 {offsets = [0, 384], sizes = [8, 128], strides = [1, 1]} : vector<8x512xf32> to vector<8x128xf32>
    %774 = arith.negf %773 : vector<8x128xf32>
    %775 = math.exp %774 : vector<8x128xf32>
    %cst_333 = arith.constant 1.000000e+00 : f32
    %776 = vector.broadcast %cst_333 : f32 to vector<8x128xf32>
    %777 = arith.addf %776, %775 : vector<8x128xf32>
    %778 = arith.divf %776, %777 : vector<8x128xf32>
    %779 = arith.mulf %770, %750 : vector<8x128xf32>
    %780 = arith.mulf %764, %772 : vector<8x128xf32>
    %781 = arith.addf %779, %780 : vector<8x128xf32>
    %782 = math.tanh %781 : vector<8x128xf32>
    %783 = arith.mulf %778, %782 : vector<8x128xf32>
    %784 = vector.broadcast %c5_i32_320 : i32 to vector<8x1xi32>
    %785 = arith.cmpi slt, %784, %1 : vector<8x1xi32>
    %786 = vector.shape_cast %785 : vector<8x1xi1> to vector<8x1xi1>
    %787 = vector.broadcast %786 : vector<8x1xi1> to vector<8x128xi1>
    %788 = arith.select %787, %783, %749 : vector<8x128xi1>, vector<8x128xf32>
    %789 = vector.shape_cast %785 : vector<8x1xi1> to vector<8x1xi1>
    %790 = vector.broadcast %789 : vector<8x1xi1> to vector<8x128xi1>
    %791 = arith.select %790, %781, %750 : vector<8x128xi1>, vector<8x128xf32>
    %c0_334 = arith.constant 0 : index
    %c0_335 = arith.constant 0 : index
    %792 = vector.load %arg13[%c0_334, %c0_335] : memref<8x128xf32, #tpu.memory_space<vmem>>, vector<8x128xf32>
    tpu.vector_store %arg13[%c0_334, %c0_335], %788 {strides = array<i32>} : memref<8x128xf32, #tpu.memory_space<vmem>>, vector<8x128xf32>,
    %c0_336 = arith.constant 0 : index
    %c0_337 = arith.constant 0 : index
    %793 = vector.load %arg14[%c0_336, %c0_337] : memref<8x128xf32, #tpu.memory_space<vmem>>, vector<8x128xf32>
    tpu.vector_store %arg14[%c0_336, %c0_337], %791 {strides = array<i32>} : memref<8x128xf32, #tpu.memory_space<vmem>>, vector<8x128xf32>,
    %c6_i32_338 = arith.constant 6 : i32
    %c0_339 = arith.constant 0 : index
    %c0_340 = arith.constant 0 : index
    %794 = vector.load %arg13[%c0_339, %c0_340] : memref<8x128xf32, #tpu.memory_space<vmem>>, vector<8x128xf32>
    %c0_341 = arith.constant 0 : index
    %c0_342 = arith.constant 0 : index
    %795 = vector.load %arg14[%c0_341, %c0_342] : memref<8x128xf32, #tpu.memory_space<vmem>>, vector<8x128xf32>
    %796 = arith.index_cast %c6_i32_338 : i32 to index
    %c0_343 = arith.constant 0 : index
    %c0_344 = arith.constant 0 : index
    %797 = vector.load %arg11[%796, %c0_343, %c0_344] : memref<10x8x512xf32, #tpu.memory_space<vmem>>, vector<1x8x512xf32>
    %798 = vector.shape_cast %797 : vector<1x8x512xf32> to vector<8x512xf32>
    %799 = arith.truncf %794 : vector<8x128xf32> to vector<8x128xbf16>
    %c0_345 = arith.constant 0 : index
    %c0_346 = arith.constant 0 : index
    %c0_347 = arith.constant 0 : index
    %800 = vector.load %arg7[%c0_345, %c0_346, %c0_347] : memref<1x128x512xbf16, #tpu.memory_space<vmem>>, vector<1x128x512xbf16>
    %801 = vector.shape_cast %800 : vector<1x128x512xbf16> to vector<128x512xbf16>
    %cst_348 = arith.constant dense<0.000000e+00> : vector<8x512xf32>
    %802 = tpu.matmul %799, %801, %cst_348 {dimension_numbers = #tpu.dot_dimension_numbers<[1], [0], [0], [1], [0, 0, 1, 1], [], []>} : vector<8x128xbf16>, vector<128x512xbf16>, vector<8x512xf32> -> vector<8x512xf32>
    %803 = arith.addf %798, %802 : vector<8x512xf32>
    %804 = vector.extract_strided_slice %803 {offsets = [0, 0], sizes = [8, 128], strides = [1, 1]} : vector<8x512xf32> to vector<8x128xf32>
    %805 = arith.negf %804 : vector<8x128xf32>
    %806 = math.exp %805 : vector<8x128xf32>
    %cst_349 = arith.constant 1.000000e+00 : f32
    %807 = vector.broadcast %cst_349 : f32 to vector<8x128xf32>
    %808 = arith.addf %807, %806 : vector<8x128xf32>
    %809 = arith.divf %807, %808 : vector<8x128xf32>
    %810 = vector.extract_strided_slice %803 {offsets = [0, 128], sizes = [8, 128], strides = [1, 1]} : vector<8x512xf32> to vector<8x128xf32>
    %811 = arith.negf %810 : vector<8x128xf32>
    %812 = math.exp %811 : vector<8x128xf32>
    %cst_350 = arith.constant 1.000000e+00 : f32
    %813 = vector.broadcast %cst_350 : f32 to vector<8x128xf32>
    %814 = arith.addf %813, %812 : vector<8x128xf32>
    %815 = arith.divf %813, %814 : vector<8x128xf32>
    %816 = vector.extract_strided_slice %803 {offsets = [0, 256], sizes = [8, 128], strides = [1, 1]} : vector<8x512xf32> to vector<8x128xf32>
    %817 = math.tanh %816 : vector<8x128xf32>
    %818 = vector.extract_strided_slice %803 {offsets = [0, 384], sizes = [8, 128], strides = [1, 1]} : vector<8x512xf32> to vector<8x128xf32>
    %819 = arith.negf %818 : vector<8x128xf32>
    %820 = math.exp %819 : vector<8x128xf32>
    %cst_351 = arith.constant 1.000000e+00 : f32
    %821 = vector.broadcast %cst_351 : f32 to vector<8x128xf32>
    %822 = arith.addf %821, %820 : vector<8x128xf32>
    %823 = arith.divf %821, %822 : vector<8x128xf32>
    %824 = arith.mulf %815, %795 : vector<8x128xf32>
    %825 = arith.mulf %809, %817 : vector<8x128xf32>
    %826 = arith.addf %824, %825 : vector<8x128xf32>
    %827 = math.tanh %826 : vector<8x128xf32>
    %828 = arith.mulf %823, %827 : vector<8x128xf32>
    %829 = vector.broadcast %c6_i32_338 : i32 to vector<8x1xi32>
    %830 = arith.cmpi slt, %829, %1 : vector<8x1xi32>
    %831 = vector.shape_cast %830 : vector<8x1xi1> to vector<8x1xi1>
    %832 = vector.broadcast %831 : vector<8x1xi1> to vector<8x128xi1>
    %833 = arith.select %832, %828, %794 : vector<8x128xi1>, vector<8x128xf32>
    %834 = vector.shape_cast %830 : vector<8x1xi1> to vector<8x1xi1>
    %835 = vector.broadcast %834 : vector<8x1xi1> to vector<8x128xi1>
    %836 = arith.select %835, %826, %795 : vector<8x128xi1>, vector<8x128xf32>
    %c0_352 = arith.constant 0 : index
    %c0_353 = arith.constant 0 : index
    %837 = vector.load %arg13[%c0_352, %c0_353] : memref<8x128xf32, #tpu.memory_space<vmem>>, vector<8x128xf32>
    tpu.vector_store %arg13[%c0_352, %c0_353], %833 {strides = array<i32>} : memref<8x128xf32, #tpu.memory_space<vmem>>, vector<8x128xf32>,
    %c0_354 = arith.constant 0 : index
    %c0_355 = arith.constant 0 : index
    %838 = vector.load %arg14[%c0_354, %c0_355] : memref<8x128xf32, #tpu.memory_space<vmem>>, vector<8x128xf32>
    tpu.vector_store %arg14[%c0_354, %c0_355], %836 {strides = array<i32>} : memref<8x128xf32, #tpu.memory_space<vmem>>, vector<8x128xf32>,
    %c7_i32_356 = arith.constant 7 : i32
    %c0_357 = arith.constant 0 : index
    %c0_358 = arith.constant 0 : index
    %839 = vector.load %arg13[%c0_357, %c0_358] : memref<8x128xf32, #tpu.memory_space<vmem>>, vector<8x128xf32>
    %c0_359 = arith.constant 0 : index
    %c0_360 = arith.constant 0 : index
    %840 = vector.load %arg14[%c0_359, %c0_360] : memref<8x128xf32, #tpu.memory_space<vmem>>, vector<8x128xf32>
    %841 = arith.index_cast %c7_i32_356 : i32 to index
    %c0_361 = arith.constant 0 : index
    %c0_362 = arith.constant 0 : index
    %842 = vector.load %arg11[%841, %c0_361, %c0_362] : memref<10x8x512xf32, #tpu.memory_space<vmem>>, vector<1x8x512xf32>
    %843 = vector.shape_cast %842 : vector<1x8x512xf32> to vector<8x512xf32>
    %844 = arith.truncf %839 : vector<8x128xf32> to vector<8x128xbf16>
    %c0_363 = arith.constant 0 : index
    %c0_364 = arith.constant 0 : index
    %c0_365 = arith.constant 0 : index
    %845 = vector.load %arg7[%c0_363, %c0_364, %c0_365] : memref<1x128x512xbf16, #tpu.memory_space<vmem>>, vector<1x128x512xbf16>
    %846 = vector.shape_cast %845 : vector<1x128x512xbf16> to vector<128x512xbf16>
    %cst_366 = arith.constant dense<0.000000e+00> : vector<8x512xf32>
    %847 = tpu.matmul %844, %846, %cst_366 {dimension_numbers = #tpu.dot_dimension_numbers<[1], [0], [0], [1], [0, 0, 1, 1], [], []>} : vector<8x128xbf16>, vector<128x512xbf16>, vector<8x512xf32> -> vector<8x512xf32>
    %848 = arith.addf %843, %847 : vector<8x512xf32>
    %849 = vector.extract_strided_slice %848 {offsets = [0, 0], sizes = [8, 128], strides = [1, 1]} : vector<8x512xf32> to vector<8x128xf32>
    %850 = arith.negf %849 : vector<8x128xf32>
    %851 = math.exp %850 : vector<8x128xf32>
    %cst_367 = arith.constant 1.000000e+00 : f32
    %852 = vector.broadcast %cst_367 : f32 to vector<8x128xf32>
    %853 = arith.addf %852, %851 : vector<8x128xf32>
    %854 = arith.divf %852, %853 : vector<8x128xf32>
    %855 = vector.extract_strided_slice %848 {offsets = [0, 128], sizes = [8, 128], strides = [1, 1]} : vector<8x512xf32> to vector<8x128xf32>
    %856 = arith.negf %855 : vector<8x128xf32>
    %857 = math.exp %856 : vector<8x128xf32>
    %cst_368 = arith.constant 1.000000e+00 : f32
    %858 = vector.broadcast %cst_368 : f32 to vector<8x128xf32>
    %859 = arith.addf %858, %857 : vector<8x128xf32>
    %860 = arith.divf %858, %859 : vector<8x128xf32>
    %861 = vector.extract_strided_slice %848 {offsets = [0, 256], sizes = [8, 128], strides = [1, 1]} : vector<8x512xf32> to vector<8x128xf32>
    %862 = math.tanh %861 : vector<8x128xf32>
    %863 = vector.extract_strided_slice %848 {offsets = [0, 384], sizes = [8, 128], strides = [1, 1]} : vector<8x512xf32> to vector<8x128xf32>
    %864 = arith.negf %863 : vector<8x128xf32>
    %865 = math.exp %864 : vector<8x128xf32>
    %cst_369 = arith.constant 1.000000e+00 : f32
    %866 = vector.broadcast %cst_369 : f32 to vector<8x128xf32>
    %867 = arith.addf %866, %865 : vector<8x128xf32>
    %868 = arith.divf %866, %867 : vector<8x128xf32>
    %869 = arith.mulf %860, %840 : vector<8x128xf32>
    %870 = arith.mulf %854, %862 : vector<8x128xf32>
    %871 = arith.addf %869, %870 : vector<8x128xf32>
    %872 = math.tanh %871 : vector<8x128xf32>
    %873 = arith.mulf %868, %872 : vector<8x128xf32>
    %874 = vector.broadcast %c7_i32_356 : i32 to vector<8x1xi32>
    %875 = arith.cmpi slt, %874, %1 : vector<8x1xi32>
    %876 = vector.shape_cast %875 : vector<8x1xi1> to vector<8x1xi1>
    %877 = vector.broadcast %876 : vector<8x1xi1> to vector<8x128xi1>
    %878 = arith.select %877, %873, %839 : vector<8x128xi1>, vector<8x128xf32>
    %879 = vector.shape_cast %875 : vector<8x1xi1> to vector<8x1xi1>
    %880 = vector.broadcast %879 : vector<8x1xi1> to vector<8x128xi1>
    %881 = arith.select %880, %871, %840 : vector<8x128xi1>, vector<8x128xf32>
    %c0_370 = arith.constant 0 : index
    %c0_371 = arith.constant 0 : index
    %882 = vector.load %arg13[%c0_370, %c0_371] : memref<8x128xf32, #tpu.memory_space<vmem>>, vector<8x128xf32>
    tpu.vector_store %arg13[%c0_370, %c0_371], %878 {strides = array<i32>} : memref<8x128xf32, #tpu.memory_space<vmem>>, vector<8x128xf32>,
    %c0_372 = arith.constant 0 : index
    %c0_373 = arith.constant 0 : index
    %883 = vector.load %arg14[%c0_372, %c0_373] : memref<8x128xf32, #tpu.memory_space<vmem>>, vector<8x128xf32>
    tpu.vector_store %arg14[%c0_372, %c0_373], %881 {strides = array<i32>} : memref<8x128xf32, #tpu.memory_space<vmem>>, vector<8x128xf32>,
    %c8_i32_374 = arith.constant 8 : i32
    %c0_375 = arith.constant 0 : index
    %c0_376 = arith.constant 0 : index
    %884 = vector.load %arg13[%c0_375, %c0_376] : memref<8x128xf32, #tpu.memory_space<vmem>>, vector<8x128xf32>
    %c0_377 = arith.constant 0 : index
    %c0_378 = arith.constant 0 : index
    %885 = vector.load %arg14[%c0_377, %c0_378] : memref<8x128xf32, #tpu.memory_space<vmem>>, vector<8x128xf32>
    %886 = arith.index_cast %c8_i32_374 : i32 to index
    %c0_379 = arith.constant 0 : index
    %c0_380 = arith.constant 0 : index
    %887 = vector.load %arg11[%886, %c0_379, %c0_380] : memref<10x8x512xf32, #tpu.memory_space<vmem>>, vector<1x8x512xf32>
    %888 = vector.shape_cast %887 : vector<1x8x512xf32> to vector<8x512xf32>
    %889 = arith.truncf %884 : vector<8x128xf32> to vector<8x128xbf16>
    %c0_381 = arith.constant 0 : index
    %c0_382 = arith.constant 0 : index
    %c0_383 = arith.constant 0 : index
    %890 = vector.load %arg7[%c0_381, %c0_382, %c0_383] : memref<1x128x512xbf16, #tpu.memory_space<vmem>>, vector<1x128x512xbf16>
    %891 = vector.shape_cast %890 : vector<1x128x512xbf16> to vector<128x512xbf16>
    %cst_384 = arith.constant dense<0.000000e+00> : vector<8x512xf32>
    %892 = tpu.matmul %889, %891, %cst_384 {dimension_numbers = #tpu.dot_dimension_numbers<[1], [0], [0], [1], [0, 0, 1, 1], [], []>} : vector<8x128xbf16>, vector<128x512xbf16>, vector<8x512xf32> -> vector<8x512xf32>
    %893 = arith.addf %888, %892 : vector<8x512xf32>
    %894 = vector.extract_strided_slice %893 {offsets = [0, 0], sizes = [8, 128], strides = [1, 1]} : vector<8x512xf32> to vector<8x128xf32>
    %895 = arith.negf %894 : vector<8x128xf32>
    %896 = math.exp %895 : vector<8x128xf32>
    %cst_385 = arith.constant 1.000000e+00 : f32
    %897 = vector.broadcast %cst_385 : f32 to vector<8x128xf32>
    %898 = arith.addf %897, %896 : vector<8x128xf32>
    %899 = arith.divf %897, %898 : vector<8x128xf32>
    %900 = vector.extract_strided_slice %893 {offsets = [0, 128], sizes = [8, 128], strides = [1, 1]} : vector<8x512xf32> to vector<8x128xf32>
    %901 = arith.negf %900 : vector<8x128xf32>
    %902 = math.exp %901 : vector<8x128xf32>
    %cst_386 = arith.constant 1.000000e+00 : f32
    %903 = vector.broadcast %cst_386 : f32 to vector<8x128xf32>
    %904 = arith.addf %903, %902 : vector<8x128xf32>
    %905 = arith.divf %903, %904 : vector<8x128xf32>
    %906 = vector.extract_strided_slice %893 {offsets = [0, 256], sizes = [8, 128], strides = [1, 1]} : vector<8x512xf32> to vector<8x128xf32>
    %907 = math.tanh %906 : vector<8x128xf32>
    %908 = vector.extract_strided_slice %893 {offsets = [0, 384], sizes = [8, 128], strides = [1, 1]} : vector<8x512xf32> to vector<8x128xf32>
    %909 = arith.negf %908 : vector<8x128xf32>
    %910 = math.exp %909 : vector<8x128xf32>
    %cst_387 = arith.constant 1.000000e+00 : f32
    %911 = vector.broadcast %cst_387 : f32 to vector<8x128xf32>
    %912 = arith.addf %911, %910 : vector<8x128xf32>
    %913 = arith.divf %911, %912 : vector<8x128xf32>
    %914 = arith.mulf %905, %885 : vector<8x128xf32>
    %915 = arith.mulf %899, %907 : vector<8x128xf32>
    %916 = arith.addf %914, %915 : vector<8x128xf32>
    %917 = math.tanh %916 : vector<8x128xf32>
    %918 = arith.mulf %913, %917 : vector<8x128xf32>
    %919 = vector.broadcast %c8_i32_374 : i32 to vector<8x1xi32>
    %920 = arith.cmpi slt, %919, %1 : vector<8x1xi32>
    %921 = vector.shape_cast %920 : vector<8x1xi1> to vector<8x1xi1>
    %922 = vector.broadcast %921 : vector<8x1xi1> to vector<8x128xi1>
    %923 = arith.select %922, %918, %884 : vector<8x128xi1>, vector<8x128xf32>
    %924 = vector.shape_cast %920 : vector<8x1xi1> to vector<8x1xi1>
    %925 = vector.broadcast %924 : vector<8x1xi1> to vector<8x128xi1>
    %926 = arith.select %925, %916, %885 : vector<8x128xi1>, vector<8x128xf32>
    %c0_388 = arith.constant 0 : index
    %c0_389 = arith.constant 0 : index
    %927 = vector.load %arg13[%c0_388, %c0_389] : memref<8x128xf32, #tpu.memory_space<vmem>>, vector<8x128xf32>
    tpu.vector_store %arg13[%c0_388, %c0_389], %923 {strides = array<i32>} : memref<8x128xf32, #tpu.memory_space<vmem>>, vector<8x128xf32>,
    %c0_390 = arith.constant 0 : index
    %c0_391 = arith.constant 0 : index
    %928 = vector.load %arg14[%c0_390, %c0_391] : memref<8x128xf32, #tpu.memory_space<vmem>>, vector<8x128xf32>
    tpu.vector_store %arg14[%c0_390, %c0_391], %926 {strides = array<i32>} : memref<8x128xf32, #tpu.memory_space<vmem>>, vector<8x128xf32>,
    %c9_i32_392 = arith.constant 9 : i32
    %c0_393 = arith.constant 0 : index
    %c0_394 = arith.constant 0 : index
    %929 = vector.load %arg13[%c0_393, %c0_394] : memref<8x128xf32, #tpu.memory_space<vmem>>, vector<8x128xf32>
    %c0_395 = arith.constant 0 : index
    %c0_396 = arith.constant 0 : index
    %930 = vector.load %arg14[%c0_395, %c0_396] : memref<8x128xf32, #tpu.memory_space<vmem>>, vector<8x128xf32>
    %931 = arith.index_cast %c9_i32_392 : i32 to index
    %c0_397 = arith.constant 0 : index
    %c0_398 = arith.constant 0 : index
    %932 = vector.load %arg11[%931, %c0_397, %c0_398] : memref<10x8x512xf32, #tpu.memory_space<vmem>>, vector<1x8x512xf32>
    %933 = vector.shape_cast %932 : vector<1x8x512xf32> to vector<8x512xf32>
    %934 = arith.truncf %929 : vector<8x128xf32> to vector<8x128xbf16>
    %c0_399 = arith.constant 0 : index
    %c0_400 = arith.constant 0 : index
    %c0_401 = arith.constant 0 : index
    %935 = vector.load %arg7[%c0_399, %c0_400, %c0_401] : memref<1x128x512xbf16, #tpu.memory_space<vmem>>, vector<1x128x512xbf16>
    %936 = vector.shape_cast %935 : vector<1x128x512xbf16> to vector<128x512xbf16>
    %cst_402 = arith.constant dense<0.000000e+00> : vector<8x512xf32>
    %937 = tpu.matmul %934, %936, %cst_402 {dimension_numbers = #tpu.dot_dimension_numbers<[1], [0], [0], [1], [0, 0, 1, 1], [], []>} : vector<8x128xbf16>, vector<128x512xbf16>, vector<8x512xf32> -> vector<8x512xf32>
    %938 = arith.addf %933, %937 : vector<8x512xf32>
    %939 = vector.extract_strided_slice %938 {offsets = [0, 0], sizes = [8, 128], strides = [1, 1]} : vector<8x512xf32> to vector<8x128xf32>
    %940 = arith.negf %939 : vector<8x128xf32>
    %941 = math.exp %940 : vector<8x128xf32>
    %cst_403 = arith.constant 1.000000e+00 : f32
    %942 = vector.broadcast %cst_403 : f32 to vector<8x128xf32>
    %943 = arith.addf %942, %941 : vector<8x128xf32>
    %944 = arith.divf %942, %943 : vector<8x128xf32>
    %945 = vector.extract_strided_slice %938 {offsets = [0, 128], sizes = [8, 128], strides = [1, 1]} : vector<8x512xf32> to vector<8x128xf32>
    %946 = arith.negf %945 : vector<8x128xf32>
    %947 = math.exp %946 : vector<8x128xf32>
    %cst_404 = arith.constant 1.000000e+00 : f32
    %948 = vector.broadcast %cst_404 : f32 to vector<8x128xf32>
    %949 = arith.addf %948, %947 : vector<8x128xf32>
    %950 = arith.divf %948, %949 : vector<8x128xf32>
    %951 = vector.extract_strided_slice %938 {offsets = [0, 256], sizes = [8, 128], strides = [1, 1]} : vector<8x512xf32> to vector<8x128xf32>
    %952 = math.tanh %951 : vector<8x128xf32>
    %953 = vector.extract_strided_slice %938 {offsets = [0, 384], sizes = [8, 128], strides = [1, 1]} : vector<8x512xf32> to vector<8x128xf32>
    %954 = arith.negf %953 : vector<8x128xf32>
    %955 = math.exp %954 : vector<8x128xf32>
    %cst_405 = arith.constant 1.000000e+00 : f32
    %956 = vector.broadcast %cst_405 : f32 to vector<8x128xf32>
    %957 = arith.addf %956, %955 : vector<8x128xf32>
    %958 = arith.divf %956, %957 : vector<8x128xf32>
    %959 = arith.mulf %950, %930 : vector<8x128xf32>
    %960 = arith.mulf %944, %952 : vector<8x128xf32>
    %961 = arith.addf %959, %960 : vector<8x128xf32>
    %962 = math.tanh %961 : vector<8x128xf32>
    %963 = arith.mulf %958, %962 : vector<8x128xf32>
    %964 = vector.broadcast %c9_i32_392 : i32 to vector<8x1xi32>
    %965 = arith.cmpi slt, %964, %1 : vector<8x1xi32>
    %966 = vector.shape_cast %965 : vector<8x1xi1> to vector<8x1xi1>
    %967 = vector.broadcast %966 : vector<8x1xi1> to vector<8x128xi1>
    %968 = arith.select %967, %963, %929 : vector<8x128xi1>, vector<8x128xf32>
    %969 = vector.shape_cast %965 : vector<8x1xi1> to vector<8x1xi1>
    %970 = vector.broadcast %969 : vector<8x1xi1> to vector<8x128xi1>
    %971 = arith.select %970, %961, %930 : vector<8x128xi1>, vector<8x128xf32>
    %c0_406 = arith.constant 0 : index
    %c0_407 = arith.constant 0 : index
    %972 = vector.load %arg13[%c0_406, %c0_407] : memref<8x128xf32, #tpu.memory_space<vmem>>, vector<8x128xf32>
    tpu.vector_store %arg13[%c0_406, %c0_407], %968 {strides = array<i32>} : memref<8x128xf32, #tpu.memory_space<vmem>>, vector<8x128xf32>,
    %c0_408 = arith.constant 0 : index
    %c0_409 = arith.constant 0 : index
    %973 = vector.load %arg14[%c0_408, %c0_409] : memref<8x128xf32, #tpu.memory_space<vmem>>, vector<8x128xf32>
    tpu.vector_store %arg14[%c0_408, %c0_409], %971 {strides = array<i32>} : memref<8x128xf32, #tpu.memory_space<vmem>>, vector<8x128xf32>,
    %c10_i32_410 = arith.constant 10 : i32
    %c0_411 = arith.constant 0 : index
    %c0_412 = arith.constant 0 : index
    %974 = vector.load %arg13[%c0_411, %c0_412] : memref<8x128xf32, #tpu.memory_space<vmem>>, vector<8x128xf32>
    %c0_413 = arith.constant 0 : index
    %c0_414 = arith.constant 0 : index
    %c0_415 = arith.constant 0 : index
    %975 = vector.load %arg9[%c0_413, %c0_414, %c0_415] : memref<1x128x128xf32, #tpu.memory_space<vmem>>, vector<1x128x128xf32>
    %976 = vector.shape_cast %975 : vector<1x128x128xf32> to vector<128x128xf32>
    %cst_416 = arith.constant dense<0.000000e+00> : vector<8x128xf32>
    %977 = tpu.matmul %974, %976, %cst_416 {dimension_numbers = #tpu.dot_dimension_numbers<[1], [0], [0], [1], [0, 0, 1, 1], [], []>} : vector<8x128xf32>, vector<128x128xf32>, vector<8x128xf32> -> vector<8x128xf32>
    %c0_417 = arith.constant 0 : index
    %c0_418 = arith.constant 0 : index
    %c0_419 = arith.constant 0 : index
    %978 = vector.load %arg10[%c0_417, %c0_418, %c0_419] : memref<1x8x128xf32, #tpu.memory_space<vmem>>, vector<1x8x128xf32>
    %979 = vector.shape_cast %978 : vector<1x8x128xf32> to vector<8x128xf32>
    %980 = vector.shape_cast %977 : vector<8x128xf32> to vector<1x8x128xf32>
    tpu.vector_store %arg10[%c0_417, %c0_418, %c0_419], %980 {strides = array<i32>} : memref<1x8x128xf32, #tpu.memory_space<vmem>>, vector<1x8x128xf32>,
    return
  }
  func.func @transform_0(%arg0: i32) -> (i32, i32, i32, i32) {
    %c0_i32 = arith.constant 0 : i32
    %c0_i32_0 = arith.constant 0 : i32
    %c0_i32_1 = arith.constant 0 : i32
    %c0_i32_2 = arith.constant 0 : i32
    return %arg0, %c0_i32, %c0_i32_0, %c0_i32_1 : i32, i32, i32, i32
  }
  func.func @transform_1(%arg0: i32) -> (i32, i32, i32) {
    %c0_i32 = arith.constant 0 : i32
    %c0_i32_0 = arith.constant 0 : i32
    %c0_i32_1 = arith.constant 0 : i32
    return %arg0, %c0_i32, %c0_i32_0 : i32, i32, i32
  }
  func.func @transform_2(%arg0: i32) -> (i32, i32, i32) {
    %c0_i32 = arith.constant 0 : i32
    %c0_i32_0 = arith.constant 0 : i32
    %c0_i32_1 = arith.constant 0 : i32
    return %arg0, %c0_i32, %c0_i32_0 : i32, i32, i32
  }
  func.func @transform_3(%arg0: i32) -> (i32, i32, i32) {
    %c0_i32 = arith.constant 0 : i32
    %c0_i32_0 = arith.constant 0 : i32
    %c0_i32_1 = arith.constant 0 : i32
    return %arg0, %c0_i32, %c0_i32_0 : i32, i32, i32
  }
  func.func @transform_4(%arg0: i32) -> (i32, i32, i32) {
    %c0_i32 = arith.constant 0 : i32
    %c0_i32_0 = arith.constant 0 : i32
    %c0_i32_1 = arith.constant 0 : i32
    return %arg0, %c0_i32, %c0_i32_0 : i32, i32, i32
  }
  func.func @transform_5(%arg0: i32) -> (i32, i32, i32) {
    %c0_i32 = arith.constant 0 : i32
    %c0_i32_0 = arith.constant 0 : i32
    %c0_i32_1 = arith.constant 0 : i32
    return %arg0, %c0_i32, %c0_i32_0 : i32, i32, i32
  }
  func.func @transform_6(%arg0: i32) -> (i32, i32, i32) {
    %c0_i32 = arith.constant 0 : i32
    %c0_i32_0 = arith.constant 0 : i32
    %c0_i32_1 = arith.constant 0 : i32
    return %arg0, %c0_i32, %c0_i32_0 : i32, i32, i32
  }
  func.func @transform_7(%arg0: i32) -> (i32, i32, i32) {
    %c0_i32 = arith.constant 0 : i32
    %c0_i32_0 = arith.constant 0 : i32
    %c0_i32_1 = arith.constant 0 : i32
    return %arg0, %c0_i32, %c0_i32_0 : i32, i32, i32
  }
  func.func @transform_8(%arg0: i32) -> (i32, i32, i32) {
    %c0_i32 = arith.constant 0 : i32
    %c0_i32_0 = arith.constant 0 : i32
    %c0_i32_1 = arith.constant 0 : i32
    return %arg0, %c0_i32, %c0_i32_0 : i32, i32, i32
  }
  func.func @transform_9(%arg0: i32) -> (i32, i32, i32) {
    %c0_i32 = arith.constant 0 : i32
    %c0_i32_0 = arith.constant 0 : i32
    %c0_i32_1 = arith.constant 0 : i32
    return %arg0, %c0_i32, %c0_i32_0 : i32, i32, i32
  }
}

</mosaic_0001>

<llo_original>
// kernel: tpu_custom_call.1
$region0: #{tpu_custom_call.1}
  #allocation0 [shape = 'u32[]', space=smem, size = 0x4, offset = 0x4, fixed_abs, tag = 'smem constant byte address 0x4 - core index']
  #allocation1 [shape = 'u32[144,128]{1,0:T(1,128)}', space=vmem, size = 0x12000, scoped, tag = 'internal scratch']
  #allocation2 [shape = 'f32[10,8,512]{2,1,0:T(8,128)}', space=vmem, size = 0x28000, scoped, tag = 'scratch operand']
  #allocation3 [shape = 'f32[10,8,128]{2,1,0:T(8,128)}', space=vmem, size = 0xa000, scoped, tag = 'scratch operand']
  #allocation4 [shape = 'f32[8,128]{1,0:T(8,128)}', space=vmem, size = 0x1000, scoped, tag = 'scratch operand']
  #allocation5 [shape = 'f32[8,128]{1,0:T(8,128)}', space=vmem, size = 0x1000, scoped, tag = 'scratch operand']
  %s0 = inlined_call_operand.hbm [shape: bf16[2,10,8,64], index: 0, kind: input, shape index: {}]
  %s1 = inlined_call_operand.vmem [shape: s32[2,8,1], index: 1, kind: input, shape index: {}]
  %s2 = inlined_call_operand.hbm [shape: bf16[2,64,512], index: 2, kind: input, shape index: {}]
  %s3 = inlined_call_operand.hbm [shape: bf16[2,128,512], index: 3, kind: input, shape index: {}]
  %s4 = inlined_call_operand.vmem [shape: f32[2,1,512], index: 4, kind: input, shape index: {}]
  %s5 = inlined_call_operand.hbm [shape: bf16[2,128,512], index: 5, kind: input, shape index: {}]
  %s6 = inlined_call_operand.hbm [shape: bf16[2,128,512], index: 6, kind: input, shape index: {}]
  %s7 = inlined_call_operand.vmem [shape: f32[2,1,512], index: 7, kind: input, shape index: {}]
  %s8 = inlined_call_operand.hbm [shape: f32[2,128,128], index: 8, kind: input, shape index: {}]
  %s9 = inlined_call_operand.hbm [shape: f32[2,8,128], index: 9, kind: output, shape index: {}]
  %s10 = sld [smem:[#allocation0]]
  $region93: #{tpu_custom_call.1} parent=0
    _
  %s12 = ssub.s32 1, %s10
  %s13 = scalar_select 0, %s12, %s10
  $region1: #{tpu_custom_call.1} parent=0
    #allocation6 [shape = 'u8[40960]{0}', space=vmem, size = 0xa000, scoped, tag = 'input window, operand 0']
    #allocation7 [shape = 's32[2]{0}', space=sflag, size = 0x8, scoped, tag = 'scoped memory for tpu_custom_call.1']
    #allocation8 [shape = 's32[2]{0}', space=sflag, size = 0x8, scoped, tag = 'scoped memory for tpu_custom_call.1']
    #allocation9 [shape = 'u8[131072]{0}', space=vmem, size = 0x20000, scoped, tag = 'input window, operand 2']
    #allocation10 [shape = 's32[2]{0}', space=sflag, size = 0x8, scoped, tag = 'scoped memory for tpu_custom_call.1']
    #allocation11 [shape = 'u8[262144]{0}', space=vmem, size = 0x40000, scoped, tag = 'input window, operand 3']
    #allocation12 [shape = 'u8[262144]{0}', space=vmem, size = 0x40000, scoped, tag = 'input window, operand 5']
    #allocation13 [shape = 's32[2]{0}', space=sflag, size = 0x8, scoped, tag = 'scoped memory for tpu_custom_call.1']
    #allocation14 [shape = 'u8[262144]{0}', space=vmem, size = 0x40000, scoped, tag = 'input window, operand 6']
    #allocation15 [shape = 'u8[131072]{0}', space=vmem, size = 0x20000, scoped, tag = 'input window, operand 8']
    #allocation16 [shape = 's32[2]{0}', space=sflag, size = 0x8, scoped, tag = 'scoped memory for tpu_custom_call.1']
    #allocation17 [shape = 'u8[8192]{0}', space=vmem, size = 0x2000, scoped, tag = 'output window, operand 0']
    %14 = vsyncpa [#allocation7], 0
    %s15 = scalar_lea.sflag [#allocation7], 1
    %16 = vsyncpa %s15, 0
    %17 = vsyncpa [#allocation10], 0
    %s18 = scalar_lea.sflag [#allocation10], 1
    %19 = vsyncpa %s18, 0
    %20 = vsyncpa [#allocation13], 0
    %s21 = scalar_lea.sflag [#allocation13], 1
    %22 = vsyncpa %s21, 0
    %23 = vsyncpa [#allocation16], 0
    %s24 = scalar_lea.sflag [#allocation16], 1
    %25 = vsyncpa %s24, 0
    %26 = vsyncpa [#allocation8], 0
    %s27 = scalar_lea.sflag [#allocation8], 1
    %28 = vsyncpa %s27, 0
    loop: start=0, step=1, limit=4
    $region2: #{tpu_custom_call.1} parent=1 // loop_pre_header
      _
    $region3: #{tpu_custom_call.1} parent=1 // loop_header
      %s30 = sphi 0, %s34
      %p31 = scmp.ge.s32.totalorder %s30, 4
      %s40 = sphi 0, %s42
      %s43 = sphi 0, %s40
      %s44 = sphi 0, %s43
      %s60 = sphi 0, %s44
      %s66 = sphi 0, %s68
      %s69 = sphi 0, %s66
      %s70 = sphi 0, %s69
      %s86 = sphi 0, %s70
      %s92 = sphi 0, %s94
      %s95 = sphi 0, %s92
      %s96 = sphi 0, %s95
      %s112 = sphi 0, %s96
      %s118 = sphi 0, %s120
      %s121 = sphi 0, %s118
      %s122 = sphi 0, %s121
      %s138 = sphi 0, %s122
      %s144 = sphi 0, %s146
      %s147 = sphi 0, %s144
      %s148 = sphi 0, %s147
      %s164 = sphi 0, %s148
      %s170 = sphi 0, %s172
      %s173 = sphi 0, %s170
      %s174 = sphi 0, %s173
      %s190 = sphi 0, %s174
      %s196 = sphi 0, %s198
      %s199 = sphi 0, %s196
      %s200 = sphi 0, %s199
      %s216 = sphi 0, %s200
      %s222 = sphi 0, %s224
      %s225 = sphi 0, %s222
      %s226 = sphi 0, %s225
      %s242 = sphi 0, %s226
      %s248 = sphi 0, %s250
      %s251 = sphi 0, %s248
      %s252 = sphi 0, %s251
      %s268 = sphi 0, %s252
      %s274 = sphi 0, %s276
      %s277 = sphi 0, %s274
      %s278 = sphi 0, %s277
      %s294 = sphi 0, %s278
    $region4: #{tpu_custom_call.1} parent=1 // loop_header_branch
      %33 = sbr.rel (%p31) target = $region8
    $region5: #{tpu_custom_call.1} parent=1 // loop_body
      %s35 = ssub.s32 %s30, 1
      %s36 = ssub.s32 %s30, 2
      %s37 = sadd.s32 %s30, 1
      %s38 = ssub.s32 %s30, %s37
      %p39 = scmp.eq.s32.totalorder %s38, 0
      %s41 = sadd.s32 %s40, 1
      %s42 = scalar_select %p39, %s40, %s41
      %p45 = pneg %p39
      %p46 = scmp.eq.s32.totalorder %s30, 1
      %p47 = por %p45, %p46
      %p48 = scmp.ne.s32.totalorder %s40, %s43
      %p49 = scmp.eq.s32.totalorder %s30, 0
      %p50 = por %p48, %p49
      %p51 = scmp.ne.s32.totalorder %s40, %s43
      %p52 = scmp.eq.s32.totalorder %s35, 1
      %p53 = por %p51, %p52
      %p54 = scmp.ne.s32.totalorder %s43, %s44
      %p55 = scmp.eq.s32.totalorder %s35, 0
      %p56 = por %p54, %p55
      %p57 = scmp.ne.s32.totalorder %s43, %s44
      %p58 = scmp.eq.s32.totalorder %s36, 1
      %p59 = por %p57, %p58
      %p61 = scmp.ne.s32.totalorder %s44, %s60
      %p62 = scmp.eq.s32.totalorder %s36, 0
      %p63 = por %p61, %p62
      %s64 = ssub.s32 %s30, %s37
      %p65 = scmp.eq.s32.totalorder %s64, 0
      %s67 = sadd.s32 %s66, 1
      %s68 = scalar_select %p65, %s66, %s67
      %p71 = pneg %p65
      %p72 = scmp.eq.s32.totalorder %s30, 1
      %p73 = por %p71, %p72
      %p74 = scmp.ne.s32.totalorder %s66, %s69
      %p75 = scmp.eq.s32.totalorder %s30, 0
      %p76 = por %p74, %p75
      %p77 = scmp.ne.s32.totalorder %s66, %s69
      %p78 = scmp.eq.s32.totalorder %s35, 1
      %p79 = por %p77, %p78
      %p80 = scmp.ne.s32.totalorder %s69, %s70
      %p81 = scmp.eq.s32.totalorder %s35, 0
      %p82 = por %p80, %p81
      %p83 = scmp.ne.s32.totalorder %s69, %s70
      %p84 = scmp.eq.s32.totalorder %s36, 1
      %p85 = por %p83, %p84
      %p87 = scmp.ne.s32.totalorder %s70, %s86
      %p88 = scmp.eq.s32.totalorder %s36, 0
      %p89 = por %p87, %p88
      %s90 = ssub.s32 %s30, %s37
      %p91 = scmp.eq.s32.totalorder %s90, 0
      %s93 = sadd.s32 %s92, 1
      %s94 = scalar_select %p91, %s92, %s93
      %p97 = pneg %p91
      %p98 = scmp.eq.s32.totalorder %s30, 1
      %p99 = por %p97, %p98
      %p100 = scmp.ne.s32.totalorder %s92, %s95
      %p101 = scmp.eq.s32.totalorder %s30, 0
      %p102 = por %p100, %p101
      %p103 = scmp.ne.s32.totalorder %s92, %s95
      %p104 = scmp.eq.s32.totalorder %s35, 1
      %p105 = por %p103, %p104
      %p106 = scmp.ne.s32.totalorder %s95, %s96
      %p107 = scmp.eq.s32.totalorder %s35, 0
      %p108 = por %p106, %p107
      %p109 = scmp.ne.s32.totalorder %s95, %s96
      %p110 = scmp.eq.s32.totalorder %s36, 1
      %p111 = por %p109, %p110
      %p113 = scmp.ne.s32.totalorder %s96, %s112
      %p114 = scmp.eq.s32.totalorder %s36, 0
      %p115 = por %p113, %p114
      %s116 = ssub.s32 %s30, %s37
      %p117 = scmp.eq.s32.totalorder %s116, 0
      %s119 = sadd.s32 %s118, 1
      %s120 = scalar_select %p117, %s118, %s119
      %p123 = pneg %p117
      %p124 = scmp.eq.s32.totalorder %s30, 1
      %p125 = por %p123, %p124
      %p126 = scmp.ne.s32.totalorder %s118, %s121
      %p127 = scmp.eq.s32.totalorder %s30, 0
      %p128 = por %p126, %p127
      %p129 = scmp.ne.s32.totalorder %s118, %s121
      %p130 = scmp.eq.s32.totalorder %s35, 1
      %p131 = por %p129, %p130
      %p132 = scmp.ne.s32.totalorder %s121, %s122
      %p133 = scmp.eq.s32.totalorder %s35, 0
      %p134 = por %p132, %p133
      %p135 = scmp.ne.s32.totalorder %s121, %s122
      %p136 = scmp.eq.s32.totalorder %s36, 1
      %p137 = por %p135, %p136
      %p139 = scmp.ne.s32.totalorder %s122, %s138
      %p140 = scmp.eq.s32.totalorder %s36, 0
      %p141 = por %p139, %p140
      %s142 = ssub.s32 %s30, %s37
      %p143 = scmp.eq.s32.totalorder %s142, 0
      %s145 = sadd.s32 %s144, 1
      %s146 = scalar_select %p143, %s144, %s145
      %p149 = pneg %p143
      %p150 = scmp.eq.s32.totalorder %s30, 1
      %p151 = por %p149, %p150
      %p152 = scmp.ne.s32.totalorder %s144, %s147
      %p153 = scmp.eq.s32.totalorder %s30, 0
      %p154 = por %p152, %p153
      %p155 = scmp.ne.s32.totalorder %s144, %s147
      %p156 = scmp.eq.s32.totalorder %s35, 1
      %p157 = por %p155, %p156
      %p158 = scmp.ne.s32.totalorder %s147, %s148
      %p159 = scmp.eq.s32.totalorder %s35, 0
      %p160 = por %p158, %p159
      %p161 = scmp.ne.s32.totalorder %s147, %s148
      %p162 = scmp.eq.s32.totalorder %s36, 1
      %p163 = por %p161, %p162
      %p165 = scmp.ne.s32.totalorder %s148, %s164
      %p166 = scmp.eq.s32.totalorder %s36, 0
      %p167 = por %p165, %p166
      %s168 = ssub.s32 %s30, %s37
      %p169 = scmp.eq.s32.totalorder %s168, 0
      %s171 = sadd.s32 %s170, 1
      %s172 = scalar_select %p169, %s170, %s171
      %p175 = pneg %p169
      %p176 = scmp.eq.s32.totalorder %s30, 1
      %p177 = por %p175, %p176
      %p178 = scmp.ne.s32.totalorder %s170, %s173
      %p179 = scmp.eq.s32.totalorder %s30, 0
      %p180 = por %p178, %p179
      %p181 = scmp.ne.s32.totalorder %s170, %s173
      %p182 = scmp.eq.s32.totalorder %s35, 1
      %p183 = por %p181, %p182
      %p184 = scmp.ne.s32.totalorder %s173, %s174
      %p185 = scmp.eq.s32.totalorder %s35, 0
      %p186 = por %p184, %p185
      %p187 = scmp.ne.s32.totalorder %s173, %s174
      %p188 = scmp.eq.s32.totalorder %s36, 1
      %p189 = por %p187, %p188
      %p191 = scmp.ne.s32.totalorder %s174, %s190
      %p192 = scmp.eq.s32.totalorder %s36, 0
      %p193 = por %p191, %p192
      %s194 = ssub.s32 %s30, %s37
      %p195 = scmp.eq.s32.totalorder %s194, 0
      %s197 = sadd.s32 %s196, 1
      %s198 = scalar_select %p195, %s196, %s197
      %p201 = pneg %p195
      %p202 = scmp.eq.s32.totalorder %s30, 1
      %p203 = por %p201, %p202
      %p204 = scmp.ne.s32.totalorder %s196, %s199
      %p205 = scmp.eq.s32.totalorder %s30, 0
      %p206 = por %p204, %p205
      %p207 = scmp.ne.s32.totalorder %s196, %s199
      %p208 = scmp.eq.s32.totalorder %s35, 1
      %p209 = por %p207, %p208
      %p210 = scmp.ne.s32.totalorder %s199, %s200
      %p211 = scmp.eq.s32.totalorder %s35, 0
      %p212 = por %p210, %p211
      %p213 = scmp.ne.s32.totalorder %s199, %s200
      %p214 = scmp.eq.s32.totalorder %s36, 1
      %p215 = por %p213, %p214
      %p217 = scmp.ne.s32.totalorder %s200, %s216
      %p218 = scmp.eq.s32.totalorder %s36, 0
      %p219 = por %p217, %p218
      %s220 = ssub.s32 %s30, %s37
      %p221 = scmp.eq.s32.totalorder %s220, 0
      %s223 = sadd.s32 %s222, 1
      %s224 = scalar_select %p221, %s222, %s223
      %p227 = pneg %p221
      %p228 = scmp.eq.s32.totalorder %s30, 1
      %p229 = por %p227, %p228
      %p230 = scmp.ne.s32.totalorder %s222, %s225
      %p231 = scmp.eq.s32.totalorder %s30, 0
      %p232 = por %p230, %p231
      %p233 = scmp.ne.s32.totalorder %s222, %s225
      %p234 = scmp.eq.s32.totalorder %s35, 1
      %p235 = por %p233, %p234
      %p236 = scmp.ne.s32.totalorder %s225, %s226
      %p237 = scmp.eq.s32.totalorder %s35, 0
      %p238 = por %p236, %p237
      %p239 = scmp.ne.s32.totalorder %s225, %s226
      %p240 = scmp.eq.s32.totalorder %s36, 1
      %p241 = por %p239, %p240
      %p243 = scmp.ne.s32.totalorder %s226, %s242
      %p244 = scmp.eq.s32.totalorder %s36, 0
      %p245 = por %p243, %p244
      %s246 = ssub.s32 %s30, %s37
      %p247 = scmp.eq.s32.totalorder %s246, 0
      %s249 = sadd.s32 %s248, 1
      %s250 = scalar_select %p247, %s248, %s249
      %p253 = pneg %p247
      %p254 = scmp.eq.s32.totalorder %s30, 1
      %p255 = por %p253, %p254
      %p256 = scmp.ne.s32.totalorder %s248, %s251
      %p257 = scmp.eq.s32.totalorder %s30, 0
      %p258 = por %p256, %p257
      %p259 = scmp.ne.s32.totalorder %s248, %s251
      %p260 = scmp.eq.s32.totalorder %s35, 1
      %p261 = por %p259, %p260
      %p262 = scmp.ne.s32.totalorder %s251, %s252
      %p263 = scmp.eq.s32.totalorder %s35, 0
      %p264 = por %p262, %p263
      %p265 = scmp.ne.s32.totalorder %s251, %s252
      %p266 = scmp.eq.s32.totalorder %s36, 1
      %p267 = por %p265, %p266
      %p269 = scmp.ne.s32.totalorder %s252, %s268
      %p270 = scmp.eq.s32.totalorder %s36, 0
      %p271 = por %p269, %p270
      %s272 = ssub.s32 %s30, %s37
      %p273 = scmp.eq.s32.totalorder %s272, 0
      %s275 = sadd.s32 %s274, 1
      %s276 = scalar_select %p273, %s274, %s275
      %p279 = pneg %p273
      %p280 = scmp.eq.s32.totalorder %s30, 1
      %p281 = por %p279, %p280
      %p282 = scmp.ne.s32.totalorder %s274, %s277
      %p283 = scmp.eq.s32.totalorder %s30, 0
      %p284 = por %p282, %p283
      %p285 = scmp.ne.s32.totalorder %s274, %s277
      %p286 = scmp.eq.s32.totalorder %s35, 1
      %p287 = por %p285, %p286
      %p288 = scmp.ne.s32.totalorder %s277, %s278
      %p289 = scmp.eq.s32.totalorder %s35, 0
      %p290 = por %p288, %p289
      %p291 = scmp.ne.s32.totalorder %s277, %s278
      %p292 = scmp.eq.s32.totalorder %s36, 1
      %p293 = por %p291, %p292
      %p295 = scmp.ne.s32.totalorder %s278, %s294
      %p296 = scmp.eq.s32.totalorder %s36, 0
      %p297 = por %p295, %p296
      %p298 = scmp.le.s32.totalorder 1, %s30
      %p299 = scmp.lt.s32.totalorder %s30, 3
      %p300 = pnand %p298, %p299
      %p301 = pneg %p300
      // Predicated region
      $region9: #{tpu_custom_call.1} parent=5 // pred_check
        _
      $region10: #{tpu_custom_call.1} parent=5 // pred_check_branch
        %303 = sbr.rel (%p300) target = $region12
      $region11: #{tpu_custom_call.1} parent=5 // pred_region
        %s304 = ssub.s32 %s30, 1
      $region12: #{tpu_custom_call.1} parent=5 // pred_fallthru
        _
      %p305 = scmp.lt.s32.totalorder %s30, 2
      // Predicated region
      $region13: #{tpu_custom_call.1} parent=5 // pred_check
        %p306 = pneg %p305
      $region14: #{tpu_custom_call.1} parent=5 // pred_check_branch
        %308 = sbr.rel (%p306) target = $region16
      $region15: #{tpu_custom_call.1} parent=5 // pred_region
        // Predicated region
        $region17: #{tpu_custom_call.1} parent=15 // pred_check
          %p309 = pneg %p50
        $region18: #{tpu_custom_call.1} parent=15 // pred_check_branch
          %311 = sbr.rel (%p309) target = $region20
        $region19: #{tpu_custom_call.1} parent=15 // pred_region
          %s312 = sand.u32 %s40, 1
          %s313 = scalar_lea.sflag [#allocation7], %s312
          %s314 = sand.u32 %s40, 1
          %s315 = smul.addr %s314, 40
          %s316 = scalar_lea.vmem [#allocation6], %s315
          %s318 = ssub.s32 640, 640
          %319 = vsyncadd %s313, %s318
          %s320 = smul.addr %s30, 10
          %s321 = smul.addr %s320, 64
          %s322 = scalar_lea.hbm %s0, %s321
          %s323 = sshll.u32 %s316, 4
          %s324 = int_to_ptr.vmem [resolvable:$true] %s323
          %329 = dma.hbm_to_vmem [thread:$0]  %s322, 640, %s324, %s313, 64, 64, 4
        $region20: #{tpu_custom_call.1} parent=15 // pred_fallthru
          _
        // Predicated region
        $region21: #{tpu_custom_call.1} parent=15 // pred_check
          %p330 = pneg %p76
        $region22: #{tpu_custom_call.1} parent=15 // pred_check_branch
          %332 = sbr.rel (%p330) target = $region24
        $region23: #{tpu_custom_call.1} parent=15 // pred_region
          %p333 = scmp.lt.s32.totalorder %s30, 1
          %s334 = scalar_select %p333, %s30, 1
          %s335 = smul.addr %s334, 8
          %s336 = scalar_lea.vmem %s1, %s335
        $region24: #{tpu_custom_call.1} parent=15 // pred_fallthru
          _
        // Predicated region
        $region25: #{tpu_custom_call.1} parent=15 // pred_check
          %p337 = pneg %p102
        $region26: #{tpu_custom_call.1} parent=15 // pred_check_branch
          %339 = sbr.rel (%p337) target = $region28
        $region27: #{tpu_custom_call.1} parent=15 // pred_region
          %s340 = sand.u32 %s30, 1
          %s341 = scalar_lea.sflag [#allocation10], %s340
          %s342 = sand.u32 %s92, 1
          %s343 = smul.addr %s342, 128
          %s344 = scalar_lea.vmem [#allocation9], %s343
          %s346 = ssub.s32 2048, 2048
          %347 = vsyncadd %s341, %s346
          %s348 = smul.addr %s30, 32
          %s349 = smul.addr %s348, 64
          %s350 = scalar_lea.hbm %s2, %s349
          %s351 = sshll.u32 %s344, 4
          %s352 = int_to_ptr.vmem [resolvable:$true] %s351
          %357 = dma.hbm_to_vmem [thread:$0]  %s350, 2048, %s352, %s341, 256, 256, 16
        $region28: #{tpu_custom_call.1} parent=15 // pred_fallthru
          _
        // Predicated region
        $region29: #{tpu_custom_call.1} parent=15 // pred_check
          %p358 = pneg %p128
        $region30: #{tpu_custom_call.1} parent=15 // pred_check_branch
          %360 = sbr.rel (%p358) target = $region32
        $region31: #{tpu_custom_call.1} parent=15 // pred_region
          %s361 = sand.u32 %s30, 1
          %s362 = scalar_lea.sflag [#allocation10], %s361
          %s363 = sand.u32 %s118, 1
          %s364 = smul.addr %s363, 256
          %s365 = scalar_lea.vmem [#allocation11], %s364
          %s367 = ssub.s32 4096, 4096
          %368 = vsyncadd %s362, %s367
          %s369 = smul.addr %s30, 64
          %s370 = smul.addr %s369, 64
          %s371 = scalar_lea.hbm %s3, %s370
          %s372 = sshll.u32 %s365, 4
          %s373 = int_to_ptr.vmem [resolvable:$true] %s372
          %378 = dma.hbm_to_vmem [thread:$0]  %s371, 4096, %s373, %s362, 256, 256, 16
        $region32: #{tpu_custom_call.1} parent=15 // pred_fallthru
          _
        // Predicated region
        $region33: #{tpu_custom_call.1} parent=15 // pred_check
          %p379 = pneg %p154
        $region34: #{tpu_custom_call.1} parent=15 // pred_check_branch
          %381 = sbr.rel (%p379) target = $region36
        $region35: #{tpu_custom_call.1} parent=15 // pred_region
          %p382 = scmp.lt.s32.totalorder %s30, 1
          %s383 = scalar_select %p382, %s30, 1
          %s384 = smul.addr %s383, 4
          %s385 = scalar_lea.vmem %s4, %s384
        $region36: #{tpu_custom_call.1} parent=15 // pred_fallthru
          _
        // Predicated region
        $region37: #{tpu_custom_call.1} parent=15 // pred_check
          %p386 = pneg %p180
        $region38: #{tpu_custom_call.1} parent=15 // pred_check_branch
          %388 = sbr.rel (%p386) target = $region40
        $region39: #{tpu_custom_call.1} parent=15 // pred_region
          %s389 = sand.u32 %s30, 1
          %s390 = scalar_lea.sflag [#allocation13], %s389
          %s391 = sand.u32 %s170, 1
          %s392 = smul.addr %s391, 256
          %s393 = scalar_lea.vmem [#allocation12], %s392
          %s395 = ssub.s32 4096, 4096
          %396 = vsyncadd %s390, %s395
          %s397 = smul.addr %s30, 64
          %s398 = smul.addr %s397, 64
          %s399 = scalar_lea.hbm %s5, %s398
          %s400 = sshll.u32 %s393, 4
          %s401 = int_to_ptr.vmem [resolvable:$true] %s400
          %406 = dma.hbm_to_vmem [thread:$0]  %s399, 4096, %s401, %s390, 256, 256, 16
        $region40: #{tpu_custom_call.1} parent=15 // pred_fallthru
          _
        // Predicated region
        $region41: #{tpu_custom_call.1} parent=15 // pred_check
          %p407 = pneg %p206
        $region42: #{tpu_custom_call.1} parent=15 // pred_check_branch
          %409 = sbr.rel (%p407) target = $region44
        $region43: #{tpu_custom_call.1} parent=15 // pred_region
          %s410 = sand.u32 %s30, 1
          %s411 = scalar_lea.sflag [#allocation13], %s410
          %s412 = sand.u32 %s196, 1
          %s413 = smul.addr %s412, 256
          %s414 = scalar_lea.vmem [#allocation14], %s413
          %s416 = ssub.s32 4096, 4096
          %417 = vsyncadd %s411, %s416
          %s418 = smul.addr %s30, 64
          %s419 = smul.addr %s418, 64
          %s420 = scalar_lea.hbm %s6, %s419
          %s421 = sshll.u32 %s414, 4
          %s422 = int_to_ptr.vmem [resolvable:$true] %s421
          %427 = dma.hbm_to_vmem [thread:$0]  %s420, 4096, %s422, %s411, 256, 256, 16
        $region44: #{tpu_custom_call.1} parent=15 // pred_fallthru
          _
        // Predicated region
        $region45: #{tpu_custom_call.1} parent=15 // pred_check
          %p428 = pneg %p232
        $region46: #{tpu_custom_call.1} parent=15 // pred_check_branch
          %430 = sbr.rel (%p428) target = $region48
        $region47: #{tpu_custom_call.1} parent=15 // pred_region
          %p431 = scmp.lt.s32.totalorder %s30, 1
          %s432 = scalar_select %p431, %s30, 1
          %s433 = smul.addr %s432, 4
          %s434 = scalar_lea.vmem %s7, %s433
        $region48: #{tpu_custom_call.1} parent=15 // pred_fallthru
          _
        // Predicated region
        $region49: #{tpu_custom_call.1} parent=15 // pred_check
          %p435 = pneg %p258
        $region50: #{tpu_custom_call.1} parent=15 // pred_check_branch
          %437 = sbr.rel (%p435) target = $region52
        $region51: #{tpu_custom_call.1} parent=15 // pred_region
          %s438 = sand.u32 %s248, 1
          %s439 = scalar_lea.sflag [#allocation16], %s438
          %s440 = sand.u32 %s248, 1
          %s441 = smul.addr %s440, 128
          %s442 = scalar_lea.vmem [#allocation15], %s441
          %s444 = ssub.s32 2048, 2048
          %445 = vsyncadd %s439, %s444
          %s446 = smul.addr %s30, 16
          %s447 = smul.addr %s446, 128
          %s448 = scalar_lea.hbm %s8, %s447
          %s449 = sshll.u32 %s442, 4
          %s450 = int_to_ptr.vmem [resolvable:$true] %s449
          %455 = dma.hbm_to_vmem [thread:$0]  %s448, 2048, %s450, %s439, 128, 128, 8
        $region52: #{tpu_custom_call.1} parent=15 // pred_fallthru
          _
      $region16: #{tpu_custom_call.1} parent=5 // pred_fallthru
        _
      %p456 = scmp.le.s32.totalorder 1, %s30
      %p457 = scmp.lt.s32.totalorder %s30, 3
      %p458 = pnand %p456, %p457
      %p459 = pneg %p458
      // Predicated region
      $region53: #{tpu_custom_call.1} parent=5 // pred_check
        _
      $region54: #{tpu_custom_call.1} parent=5 // pred_check_branch
        %461 = sbr.rel (%p458) target = $region56
      $region55: #{tpu_custom_call.1} parent=5 // pred_region
        %s462 = ssub.s32 %s30, 1
        %s463 = sand.u32 %s43, 1
        %s464 = scalar_lea.sflag [#allocation7], %s463
        %s465 = sand.u32 %s43, 1
        %s466 = smul.addr %s465, 40
        %s467 = scalar_lea.vmem [#allocation6], %s466
        // Predicated region
        $region57: #{tpu_custom_call.1} parent=55 // pred_check
          %p468 = pneg %p56
        $region58: #{tpu_custom_call.1} parent=55 // pred_check_branch
          %470 = sbr.rel (%p468) target = $region60
        $region59: #{tpu_custom_call.1} parent=55 // pred_region
          %471 = dma.done %s464, 640
        $region60: #{tpu_custom_call.1} parent=55 // pred_fallthru
          _
        %s472 = sand.u32 %s35, 1
        %s473 = scalar_lea.sflag [#allocation10], %s472
        %s474 = sand.u32 %s95, 1
        %s475 = smul.addr %s474, 128
        %s476 = scalar_lea.vmem [#allocation9], %s475
        // Predicated region
        $region61: #{tpu_custom_call.1} parent=55 // pred_check
          %p477 = pneg %p108
        $region62: #{tpu_custom_call.1} parent=55 // pred_check_branch
          %479 = sbr.rel (%p477) target = $region64
        $region63: #{tpu_custom_call.1} parent=55 // pred_region
          %480 = dma.done %s473, 2048
        $region64: #{tpu_custom_call.1} parent=55 // pred_fallthru
          _
        %s481 = sand.u32 %s35, 1
        %s482 = scalar_lea.sflag [#allocation10], %s481
        %s483 = sand.u32 %s121, 1
        %s484 = smul.addr %s483, 256
        %s485 = scalar_lea.vmem [#allocation11], %s484
        // Predicated region
        $region65: #{tpu_custom_call.1} parent=55 // pred_check
          %p486 = pneg %p134
        $region66: #{tpu_custom_call.1} parent=55 // pred_check_branch
          %488 = sbr.rel (%p486) target = $region68
        $region67: #{tpu_custom_call.1} parent=55 // pred_region
          %489 = dma.done %s482, 4096
        $region68: #{tpu_custom_call.1} parent=55 // pred_fallthru
          _
        %s490 = sand.u32 %s35, 1
        %s491 = scalar_lea.sflag [#allocation13], %s490
        %s492 = sand.u32 %s173, 1
        %s493 = smul.addr %s492, 256
        %s494 = scalar_lea.vmem [#allocation12], %s493
        // Predicated region
        $region69: #{tpu_custom_call.1} parent=55 // pred_check
          %p495 = pneg %p186
        $region70: #{tpu_custom_call.1} parent=55 // pred_check_branch
          %497 = sbr.rel (%p495) target = $region72
        $region71: #{tpu_custom_call.1} parent=55 // pred_region
          %498 = dma.done %s491, 4096
        $region72: #{tpu_custom_call.1} parent=55 // pred_fallthru
          _
        %s499 = sand.u32 %s35, 1
        %s500 = scalar_lea.sflag [#allocation13], %s499
        %s501 = sand.u32 %s199, 1
        %s502 = smul.addr %s501, 256
        %s503 = scalar_lea.vmem [#allocation14], %s502
        // Predicated region
        $region73: #{tpu_custom_call.1} parent=55 // pred_check
          %p504 = pneg %p212
        $region74: #{tpu_custom_call.1} parent=55 // pred_check_branch
          %506 = sbr.rel (%p504) target = $region76
        $region75: #{tpu_custom_call.1} parent=55 // pred_region
          %507 = dma.done %s500, 4096
        $region76: #{tpu_custom_call.1} parent=55 // pred_fallthru
          _
        %s508 = sand.u32 %s251, 1
        %s509 = scalar_lea.sflag [#allocation16], %s508
        %s510 = sand.u32 %s251, 1
        %s511 = smul.addr %s510, 128
        %s512 = scalar_lea.vmem [#allocation15], %s511
        // Predicated region
        $region77: #{tpu_custom_call.1} parent=55 // pred_check
          %p513 = pneg %p264
        $region78: #{tpu_custom_call.1} parent=55 // pred_check_branch
          %515 = sbr.rel (%p513) target = $region80
        $region79: #{tpu_custom_call.1} parent=55 // pred_region
          %516 = dma.done %s509, 2048
        $region80: #{tpu_custom_call.1} parent=55 // pred_fallthru
          _
        %s517 = sand.u32 %s43, 1
        %s518 = scalar_lea.sflag [#allocation7], %s517
        %s519 = sand.u32 %s43, 1
        %s520 = smul.addr %s519, 40
        %s521 = scalar_lea.vmem [#allocation6], %s520
        %p522 = pneg %p56
        %p523 = pneg %p53
        %p524 = scmp.lt.s32.totalorder %s35, 1
        %s525 = scalar_select %p524, %s35, 1
        %s526 = smul.addr %s525, 8
        %s527 = scalar_lea.vmem %s1, %s526
        %p528 = pneg %p82
        %p529 = pneg %p79
        %s530 = sand.u32 %s35, 1
        %s531 = scalar_lea.sflag [#allocation10], %s530
        %s532 = sand.u32 %s95, 1
        %s533 = smul.addr %s532, 128
        %s534 = scalar_lea.vmem [#allocation9], %s533
        %p535 = pneg %p108
        %p536 = pneg %p105
        %s537 = sand.u32 %s35, 1
        %s538 = scalar_lea.sflag [#allocation10], %s537
        %s539 = sand.u32 %s121, 1
        %s540 = smul.addr %s539, 256
        %s541 = scalar_lea.vmem [#allocation11], %s540
        %p542 = pneg %p134
        %p543 = pneg %p131
        %p544 = scmp.lt.s32.totalorder %s35, 1
        %s545 = scalar_select %p544, %s35, 1
        %s546 = smul.addr %s545, 4
        %s547 = scalar_lea.vmem %s4, %s546
        %p548 = pneg %p160
        %p549 = pneg %p157
        %s550 = sand.u32 %s35, 1
        %s551 = scalar_lea.sflag [#allocation13], %s550
        %s552 = sand.u32 %s173, 1
        %s553 = smul.addr %s552, 256
        %s554 = scalar_lea.vmem [#allocation12], %s553
        %p555 = pneg %p186
        %p556 = pneg %p183
        %s557 = sand.u32 %s35, 1
        %s558 = scalar_lea.sflag [#allocation13], %s557
        %s559 = sand.u32 %s199, 1
        %s560 = smul.addr %s559, 256
        %s561 = scalar_lea.vmem [#allocation14], %s560
        %p562 = pneg %p212
        %p563 = pneg %p209
        %p564 = scmp.lt.s32.totalorder %s35, 1
        %s565 = scalar_select %p564, %s35, 1
        %s566 = smul.addr %s565, 4
        %s567 = scalar_lea.vmem %s7, %s566
        %p568 = pneg %p238
        %p569 = pneg %p235
        %s570 = sand.u32 %s251, 1
        %s571 = scalar_lea.sflag [#allocation16], %s570
        %s572 = sand.u32 %s251, 1
        %s573 = smul.addr %s572, 128
        %s574 = scalar_lea.vmem [#allocation15], %s573
        %p575 = pneg %p264
        %p576 = pneg %p261
        %p577 = pneg %p290
        %p578 = pneg %p287
        %s579 = sand.u32 %s277, 1
        %s580 = scalar_lea.sflag [#allocation8], %s579
        %s581 = sand.u32 %s277, 1
        %s582 = smul.addr %s581, 8
        %s583 = scalar_lea.vmem [#allocation17], %s582
        %p584 = scmp.lt.s32.totalorder %s35, 1
        %s585 = scalar_select %p584, %s35, 1
        %s586 = smul.addr %s585, 8
        %s587 = scalar_lea.vmem %s1, %s586
        %p588 = scmp.lt.s32.totalorder %s35, 1
        %s589 = scalar_select %p588, %s35, 1
        %s590 = smul.addr %s589, 4
        %s591 = scalar_lea.vmem %s4, %s590
        %p592 = scmp.lt.s32.totalorder %s35, 1
        %s593 = scalar_select %p592, %s35, 1
        %s594 = smul.addr %s593, 4
        %s595 = scalar_lea.vmem %s7, %s594
        %v597 = vld [vmem:[%s587] sm:$0xff]
        %v598 = vld [vmem:[%s467] sm:$0xf]
        %v599 = vld [vmem:[%s467 + $0x4] sm:$0xf]
        %v600 = vld [vmem:[%s467 + $0x8] sm:$0xf]
        %v601 = vld [vmem:[%s467 + $0xc] sm:$0xf]
        %v602 = vld [vmem:[%s467 + $0x10] sm:$0xf]
        %v603 = vld [vmem:[%s467 + $0x14] sm:$0xf]
        %v604 = vld [vmem:[%s467 + $0x18] sm:$0xf]
        %v605 = vld [vmem:[%s467 + $0x1c] sm:$0xf]
        %v606 = vld [vmem:[%s467 + $0x20] sm:$0xf]
        %v607 = vld [vmem:[%s467 + $0x24] sm:$0xf]
        %v608 = vld [vmem:[%s476] sm:$0xff]
        %v609 = vld [vmem:[%s476 + $0x8] sm:$0xff]
        %v610 = vld [vmem:[%s476 + $0x10] sm:$0xff]
        %v611 = vld [vmem:[%s476 + $0x18] sm:$0xff]
        %v612 = vld [vmem:[%s476 + $0x20] sm:$0xff]
        %v613 = vld [vmem:[%s476 + $0x28] sm:$0xff]
        %v614 = vld [vmem:[%s476 + $0x30] sm:$0xff]
        %v615 = vld [vmem:[%s476 + $0x38] sm:$0xff]
        %v616 = vld [vmem:[%s476 + $0x40] sm:$0xff]
        %v617 = vld [vmem:[%s476 + $0x48] sm:$0xff]
        %v618 = vld [vmem:[%s476 + $0x50] sm:$0xff]
        %v619 = vld [vmem:[%s476 + $0x58] sm:$0xff]
        %v620 = vld [vmem:[%s476 + $0x60] sm:$0xff]
        %v621 = vld [vmem:[%s476 + $0x68] sm:$0xff]
        %v622 = vld [vmem:[%s476 + $0x70] sm:$0xff]
        %v623 = vld [vmem:[%s476 + $0x78] sm:$0xff]
        %v624 = vld [vmem:[%s591] sm:$0xf]
        %v626 = vlaneseq
        %v627 = vshrl.u32 %v626, 7
        %v628 = vsub.s32 0, %v627
        %v629 = vrot.slane %v624, %v628
        %v630 = vlaneseq
        %v631 = vshrl.u32 %v630, 7
        %v632 = vsub.s32 1, %v631
        %v633 = vrot.slane %v624, %v632
        %v634 = vlaneseq
        %v635 = vshrl.u32 %v634, 7
        %v636 = vsub.s32 2, %v635
        %v637 = vrot.slane %v624, %v636
        %v638 = vlaneseq
        %v639 = vshrl.u32 %v638, 7
        %v640 = vsub.s32 3, %v639
        %v641 = vrot.slane %v624, %v640
        %v656 = vunpack.c.l.b16 %v598
        %v657 = vunpack.c.l.b16 %v599
        %v658 = vunpack.c.l.b16 %v600
        %v659 = vunpack.c.l.b16 %v601
        %v660 = vunpack.c.l.b16 %v602
        %v661 = vunpack.c.l.b16 %v603
        %v662 = vunpack.c.l.b16 %v604
        %v663 = vunpack.c.l.b16 %v605
        %v664 = vunpack.c.l.b16 %v606
        %v665 = vunpack.c.l.b16 %v607
        %v666 = vpack.c.b16 %v657, %v656
        %v667 = vpack.c.b16 %v659, %v658
        %v668 = vpack.c.b16 %v661, %v660
        %v669 = vpack.c.b16 %v663, %v662
        %v670 = vpack.c.b16 %v665, %v664
        %v687 = vunpack.c.l.b16 %v608
        %v688 = vunpack.c.h.b16 %v608
        %v689 = vunpack.c.l.b16 %v609
        %v690 = vunpack.c.h.b16 %v609
        %v691 = vunpack.c.l.b16 %v610
        %v692 = vunpack.c.h.b16 %v610
        %v693 = vunpack.c.l.b16 %v611
        %v694 = vunpack.c.h.b16 %v611
        %v695 = vunpack.c.l.b16 %v612
        %v696 = vunpack.c.h.b16 %v612
        %v697 = vunpack.c.l.b16 %v613
        %v698 = vunpack.c.h.b16 %v613
        %v699 = vunpack.c.l.b16 %v614
        %v700 = vunpack.c.h.b16 %v614
        %v701 = vunpack.c.l.b16 %v615
        %v702 = vunpack.c.h.b16 %v615
        %v703 = vunpack.c.l.b16 %v616
        %v704 = vunpack.c.h.b16 %v616
        %v705 = vunpack.c.l.b16 %v617
        %v706 = vunpack.c.h.b16 %v617
        %v707 = vunpack.c.l.b16 %v618
        %v708 = vunpack.c.h.b16 %v618
        %v709 = vunpack.c.l.b16 %v619
        %v710 = vunpack.c.h.b16 %v619
        %v711 = vunpack.c.l.b16 %v620
        %v712 = vunpack.c.h.b16 %v620
        %v713 = vunpack.c.l.b16 %v621
        %v714 = vunpack.c.h.b16 %v621
        %v715 = vunpack.c.l.b16 %v622
        %v716 = vunpack.c.h.b16 %v622
        %v717 = vunpack.c.l.b16 %v623
        %v718 = vunpack.c.h.b16 %v623
        %v719 = vpack.c.b16 %v691, %v687
        %v720 = vpack.c.b16 %v692, %v688
        %v721 = vpack.c.b16 %v693, %v689
        %v722 = vpack.c.b16 %v694, %v690
        %v723 = vpack.c.b16 %v699, %v695
        %v724 = vpack.c.b16 %v700, %v696
        %v725 = vpack.c.b16 %v701, %v697
        %v726 = vpack.c.b16 %v702, %v698
        %v727 = vpack.c.b16 %v707, %v703
        %v728 = vpack.c.b16 %v708, %v704
        %v729 = vpack.c.b16 %v709, %v705
        %v730 = vpack.c.b16 %v710, %v706
        %v731 = vpack.c.b16 %v715, %v711
        %v732 = vpack.c.b16 %v716, %v712
        %v733 = vpack.c.b16 %v717, %v713
        %v734 = vpack.c.b16 %v718, %v714
        %vm751 = vcmask 523264
        %v753 = vsel %vm751, %v666, 0
        %v756 = vsel %vm751, %v667, 0
        %v759 = vsel %vm751, %v668, 0
        %v762 = vsel %vm751, %v669, 0
        %v765 = vsel %vm751, %v670, 0
        %767 = vmatprep.subr.bf16.mxu0 %v720
        %768 = vmatpush1.bf16.msra.mxu0 %v719
        %769 = vmatprep.subr.bf16.mxu0 %v724
        %770 = vmatpush1.bf16.msra.mxu0 %v723
        %771 = vmatprep.subr.bf16.mxu0 %v728
        %772 = vmatpush1.bf16.msra.mxu0 %v727
        %773 = vmatprep.subr.bf16.mxu0 %v732
        %774 = vmatpush1.bf16.msra.mxu0 %v731
        %775 = vmatprep.subr.bf16.mxu0 0
        %776 = vmatpush1.bf16.msra.mxu0 0
        %777 = vmatprep.subr.bf16.mxu0 0
        %778 = vmatpush1.bf16.msra.mxu0 0
        %779 = vmatprep.subr.bf16.mxu0 0
        %780 = vmatpush1.bf16.msra.mxu0 0
        %781 = vmatprep.subr.bf16.mxu0 0
        %782 = vmatpush1.bf16.msra.mxu0 0
        %783 = vmatprep.subr.bf16.mxu0 0
        %784 = vmatpush1.bf16.msra.mxu0 0
        %785 = vmatprep.subr.bf16.mxu0 0
        %786 = vmatpush1.bf16.msra.mxu0 0
        %787 = vmatprep.subr.bf16.mxu0 0
        %788 = vmatpush1.bf16.msra.mxu0 0
        %789 = vmatprep.subr.bf16.mxu0 0
        %790 = vmatpush1.bf16.msra.mxu0 0
        %791 = vmatprep.subr.bf16.mxu0 0
        %792 = vmatpush1.bf16.msra.mxu0 0
        %793 = vmatprep.subr.bf16.mxu0 0
        %794 = vmatpush1.bf16.msra.mxu0 0
        %795 = vmatprep.subr.bf16.mxu0 0
        %796 = vmatpush1.bf16.msra.mxu0 0
        %797 = vmatprep.subr.bf16.mxu0 0
        %798 = vmatpush1.bf16.msra.mxu0 0
        %799 = vmatprep.mubr.bf16.mxu0 0
        %800 = vmatmul.mubr.bf16.gmra.mrb[0].mxu0 %v753
        %v801 = vpop.f32.mrb[0].mxu0
        %v802 = vadd.f32 %v629, %v801
        %v803 = vpop.f32.mrb[0].mxu0
        %v804 = vadd.f32 %v633, %v803
        %v805 = vpop.f32.mrb[0].mxu0
        %v806 = vadd.f32 %v629, %v805
        %v807 = vpop.f32.mrb[0].mxu0
        %v808 = vadd.f32 %v633, %v807
        %809 = vmatprep.mubr.bf16.mxu0 0
        %810 = vmatmul.mubr.bf16.gmra.mrb[0].mxu0 %v756
        %v811 = vpop.f32.mrb[0].mxu0
        %v812 = vadd.f32 %v629, %v811
        %v813 = vpop.f32.mrb[0].mxu0
        %v814 = vadd.f32 %v633, %v813
        %v815 = vpop.f32.mrb[0].mxu0
        %v816 = vadd.f32 %v629, %v815
        %v817 = vpop.f32.mrb[0].mxu0
        %v818 = vadd.f32 %v633, %v817
        %819 = vmatprep.mubr.bf16.mxu0 0
        %820 = vmatmul.mubr.bf16.gmra.mrb[0].mxu0 %v759
        %v821 = vpop.f32.mrb[0].mxu0
        %v822 = vadd.f32 %v629, %v821
        %v823 = vpop.f32.mrb[0].mxu0
        %v824 = vadd.f32 %v633, %v823
        %v825 = vpop.f32.mrb[0].mxu0
        %v826 = vadd.f32 %v629, %v825
        %v827 = vpop.f32.mrb[0].mxu0
        %v828 = vadd.f32 %v633, %v827
        %829 = vmatprep.mubr.bf16.mxu0 0
        %830 = vmatmul.mubr.bf16.gmra.mrb[0].mxu0 %v762
        %v831 = vpop.f32.mrb[0].mxu0
        %v832 = vadd.f32 %v629, %v831
        %v833 = vpop.f32.mrb[0].mxu0
        %v834 = vadd.f32 %v633, %v833
        %v835 = vpop.f32.mrb[0].mxu0
        %v836 = vadd.f32 %v629, %v835
        %v837 = vpop.f32.mrb[0].mxu0
        %v838 = vadd.f32 %v633, %v837
        %839 = vmatprep.mubr.bf16.mxu0 0
        %840 = vmatmul.mubr.bf16.gmra.mrb[0].mxu0 %v765
        %v841 = vpop.f32.mrb[0].mxu0
        %v842 = vadd.f32 %v629, %v841
        %v843 = vpop.f32.mrb[0].mxu0
        %v844 = vadd.f32 %v633, %v843
        %v845 = vpop.f32.mrb[0].mxu0
        %v846 = vadd.f32 %v629, %v845
        %v847 = vpop.f32.mrb[0].mxu0
        %v848 = vadd.f32 %v633, %v847
        %849 = vdwg.mxu0
        %850 = vmatprep.subr.bf16.mxu0 %v722
        %851 = vmatpush1.bf16.msra.mxu0 %v721
        %852 = vmatprep.subr.bf16.mxu0 %v726
        %853 = vmatpush1.bf16.msra.mxu0 %v725
        %854 = vmatprep.subr.bf16.mxu0 %v730
        %855 = vmatpush1.bf16.msra.mxu0 %v729
        %856 = vmatprep.subr.bf16.mxu0 %v734
        %857 = vmatpush1.bf16.msra.mxu0 %v733
        %858 = vmatprep.subr.bf16.mxu0 0
        %859 = vmatpush1.bf16.msra.mxu0 0
        %860 = vmatprep.subr.bf16.mxu0 0
        %861 = vmatpush1.bf16.msra.mxu0 0
        %862 = vmatprep.subr.bf16.mxu0 0
        %863 = vmatpush1.bf16.msra.mxu0 0
        %864 = vmatprep.subr.bf16.mxu0 0
        %865 = vmatpush1.bf16.msra.mxu0 0
        %866 = vmatprep.subr.bf16.mxu0 0
        %867 = vmatpush1.bf16.msra.mxu0 0
        %868 = vmatprep.subr.bf16.mxu0 0
        %869 = vmatpush1.bf16.msra.mxu0 0
        %870 = vmatprep.subr.bf16.mxu0 0
        %871 = vmatpush1.bf16.msra.mxu0 0
        %872 = vmatprep.subr.bf16.mxu0 0
        %873 = vmatpush1.bf16.msra.mxu0 0
        %874 = vmatprep.subr.bf16.mxu0 0
        %875 = vmatpush1.bf16.msra.mxu0 0
        %876 = vmatprep.subr.bf16.mxu0 0
        %877 = vmatpush1.bf16.msra.mxu0 0
        %878 = vmatprep.subr.bf16.mxu0 0
        %879 = vmatpush1.bf16.msra.mxu0 0
        %880 = vmatprep.subr.bf16.mxu0 0
        %881 = vmatpush1.bf16.msra.mxu0 0
        %882 = vmatprep.mubr.bf16.mxu0 0
        %883 = vmatmul.mubr.bf16.gmra.mrb[0].mxu0 %v753
        %v884 = vpop.f32.mrb[0].mxu0
        %v885 = vadd.f32 %v637, %v884
        %v886 = vpop.f32.mrb[0].mxu0
        %v887 = vadd.f32 %v641, %v886
        %v888 = vpop.f32.mrb[0].mxu0
        %v889 = vadd.f32 %v637, %v888
        %v890 = vpop.f32.mrb[0].mxu0
        %v891 = vadd.f32 %v641, %v890
        %892 = vmatprep.mubr.bf16.mxu0 0
        %893 = vmatmul.mubr.bf16.gmra.mrb[0].mxu0 %v756
        %v894 = vpop.f32.mrb[0].mxu0
        %v895 = vadd.f32 %v637, %v894
        %v896 = vpop.f32.mrb[0].mxu0
        %v897 = vadd.f32 %v641, %v896
        %v898 = vpop.f32.mrb[0].mxu0
        %v899 = vadd.f32 %v637, %v898
        %v900 = vpop.f32.mrb[0].mxu0
        %v901 = vadd.f32 %v641, %v900
        %902 = vmatprep.mubr.bf16.mxu0 0
        %903 = vmatmul.mubr.bf16.gmra.mrb[0].mxu0 %v759
        %v904 = vpop.f32.mrb[0].mxu0
        %v905 = vadd.f32 %v637, %v904
        %v906 = vpop.f32.mrb[0].mxu0
        %v907 = vadd.f32 %v641, %v906
        %v908 = vpop.f32.mrb[0].mxu0
        %v909 = vadd.f32 %v637, %v908
        %v910 = vpop.f32.mrb[0].mxu0
        %v911 = vadd.f32 %v641, %v910
        %912 = vmatprep.mubr.bf16.mxu0 0
        %913 = vmatmul.mubr.bf16.gmra.mrb[0].mxu0 %v762
        %v914 = vpop.f32.mrb[0].mxu0
        %v915 = vadd.f32 %v637, %v914
        %v916 = vpop.f32.mrb[0].mxu0
        %v917 = vadd.f32 %v641, %v916
        %v918 = vpop.f32.mrb[0].mxu0
        %v919 = vadd.f32 %v637, %v918
        %v920 = vpop.f32.mrb[0].mxu0
        %v921 = vadd.f32 %v641, %v920
        %922 = vmatprep.mubr.bf16.mxu0 0
        %923 = vmatmul.mubr.bf16.gmra.mrb[0].mxu0 %v765
        %v924 = vpop.f32.mrb[0].mxu0
        %v925 = vadd.f32 %v637, %v924
        %v926 = vpop.f32.mrb[0].mxu0
        %v927 = vadd.f32 %v641, %v926
        %v928 = vpop.f32.mrb[0].mxu0
        %v929 = vadd.f32 %v637, %v928
        %v930 = vpop.f32.mrb[0].mxu0
        %v931 = vadd.f32 %v641, %v930
        %932 = vdwg.mxu0
        %933 = vst [vmem:[#allocation2] sm:$0xff] %v802
        %934 = vst [vmem:[#allocation2 + $0x8] sm:$0xff] %v804
        %935 = vst [vmem:[#allocation2 + $0x10] sm:$0xff] %v885
        %936 = vst [vmem:[#allocation2 + $0x18] sm:$0xff] %v887
        %937 = vst [vmem:[#allocation2 + $0x20] sm:$0xff] %v806
        %938 = vst [vmem:[#allocation2 + $0x28] sm:$0xff] %v808
        %939 = vst [vmem:[#allocation2 + $0x30] sm:$0xff] %v889
        %940 = vst [vmem:[#allocation2 + $0x38] sm:$0xff] %v891
        %941 = vst [vmem:[#allocation2 + $0x40] sm:$0xff] %v812
        %942 = vst [vmem:[#allocation2 + $0x48] sm:$0xff] %v814
        %943 = vst [vmem:[#allocation2 + $0x50] sm:$0xff] %v895
        %944 = vst [vmem:[#allocation2 + $0x58] sm:$0xff] %v897
        %945 = vst [vmem:[#allocation2 + $0x60] sm:$0xff] %v816
        %946 = vst [vmem:[#allocation2 + $0x68] sm:$0xff] %v818
        %947 = vst [vmem:[#allocation2 + $0x70] sm:$0xff] %v899
        %948 = vst [vmem:[#allocation2 + $0x78] sm:$0xff] %v901
        %949 = vst [vmem:[#allocation2 + $0x80] sm:$0xff] %v822
        %950 = vst [vmem:[#allocation2 + $0x88] sm:$0xff] %v824
        %951 = vst [vmem:[#allocation2 + $0x90] sm:$0xff] %v905
        %952 = vst [vmem:[#allocation2 + $0x98] sm:$0xff] %v907
        %953 = vst [vmem:[#allocation2 + $0xa0] sm:$0xff] %v826
        %954 = vst [vmem:[#allocation2 + $0xa8] sm:$0xff] %v828
        %955 = vst [vmem:[#allocation2 + $0xb0] sm:$0xff] %v909
        %956 = vst [vmem:[#allocation2 + $0xb8] sm:$0xff] %v911
        %957 = vst [vmem:[#allocation2 + $0xc0] sm:$0xff] %v832
        %958 = vst [vmem:[#allocation2 + $0xc8] sm:$0xff] %v834
        %959 = vst [vmem:[#allocation2 + $0xd0] sm:$0xff] %v915
        %960 = vst [vmem:[#allocation2 + $0xd8] sm:$0xff] %v917
        %961 = vst [vmem:[#allocation2 + $0xe0] sm:$0xff] %v836
        %962 = vst [vmem:[#allocation2 + $0xe8] sm:$0xff] %v838
        %963 = vst [vmem:[#allocation2 + $0xf0] sm:$0xff] %v919
        %964 = vst [vmem:[#allocation2 + $0xf8] sm:$0xff] %v921
        %965 = vst [vmem:[#allocation2 + $0x100] sm:$0xff] %v842
        %966 = vst [vmem:[#allocation2 + $0x108] sm:$0xff] %v844
        %967 = vst [vmem:[#allocation2 + $0x110] sm:$0xff] %v925
        %968 = vst [vmem:[#allocation2 + $0x118] sm:$0xff] %v927
        %969 = vst [vmem:[#allocation2 + $0x120] sm:$0xff] %v846
        %970 = vst [vmem:[#allocation2 + $0x128] sm:$0xff] %v848
        %971 = vst [vmem:[#allocation2 + $0x130] sm:$0xff] %v929
        %972 = vst [vmem:[#allocation2 + $0x138] sm:$0xff] %v931
        %973 = vst [vmem:[#allocation4] sm:$0xff] 0.0
        %974 = vst [vmem:[#allocation5] sm:$0xff] 0.0
        %v975 = vld [vmem:[#allocation4] sm:$0xff]
        %v976 = vld [vmem:[#allocation5] sm:$0xff]
        %v977 = vld [vmem:[#allocation2] sm:$0xff]
        %v978 = vld [vmem:[#allocation2 + $0x8] sm:$0xff]
        %v979 = vld [vmem:[#allocation2 + $0x10] sm:$0xff]
        %v980 = vld [vmem:[#allocation2 + $0x18] sm:$0xff]
        %v981 = vpack.c.bf16 %v975, %v975
        %v982 = vld [vmem:[%s485] sm:$0xff]
        %v983 = vld [vmem:[%s485 + $0x8] sm:$0xff]
        %v984 = vld [vmem:[%s485 + $0x10] sm:$0xff]
        %v985 = vld [vmem:[%s485 + $0x18] sm:$0xff]
        %v986 = vld [vmem:[%s485 + $0x20] sm:$0xff]
        %v987 = vld [vmem:[%s485 + $0x28] sm:$0xff]
        %v988 = vld [vmem:[%s485 + $0x30] sm:$0xff]
        %v989 = vld [vmem:[%s485 + $0x38] sm:$0xff]
        %v990 = vld [vmem:[%s485 + $0x40] sm:$0xff]
        %v991 = vld [vmem:[%s485 + $0x48] sm:$0xff]
        %v992 = vld [vmem:[%s485 + $0x50] sm:$0xff]
        %v993 = vld [vmem:[%s485 + $0x58] sm:$0xff]
        %v994 = vld [vmem:[%s485 + $0x60] sm:$0xff]
        %v995 = vld [vmem:[%s485 + $0x68] sm:$0xff]
        %v996 = vld [vmem:[%s485 + $0x70] sm:$0xff]
        %v997 = vld [vmem:[%s485 + $0x78] sm:$0xff]
        %v998 = vld [vmem:[%s485 + $0x80] sm:$0xff]
        %v999 = vld [vmem:[%s485 + $0x88] sm:$0xff]
        %v1000 = vld [vmem:[%s485 + $0x90] sm:$0xff]
        %v1001 = vld [vmem:[%s485 + $0x98] sm:$0xff]
        %v1002 = vld [vmem:[%s485 + $0xa0] sm:$0xff]
        %v1003 = vld [vmem:[%s485 + $0xa8] sm:$0xff]
        %v1004 = vld [vmem:[%s485 + $0xb0] sm:$0xff]
        %v1005 = vld [vmem:[%s485 + $0xb8] sm:$0xff]
        %v1006 = vld [vmem:[%s485 + $0xc0] sm:$0xff]
        %v1007 = vld [vmem:[%s485 + $0xc8] sm:$0xff]
        %v1008 = vld [vmem:[%s485 + $0xd0] sm:$0xff]
        %v1009 = vld [vmem:[%s485 + $0xd8] sm:$0xff]
        %v1010 = vld [vmem:[%s485 + $0xe0] sm:$0xff]
        %v1011 = vld [vmem:[%s485 + $0xe8] sm:$0xff]
        %v1012 = vld [vmem:[%s485 + $0xf0] sm:$0xff]
        %v1013 = vld [vmem:[%s485 + $0xf8] sm:$0xff]
        %v1046 = vunpack.c.l.b16 %v982
        %v1047 = vunpack.c.h.b16 %v982
        %v1048 = vunpack.c.l.b16 %v983
        %v1049 = vunpack.c.h.b16 %v983
        %v1050 = vunpack.c.l.b16 %v984
        %v1051 = vunpack.c.h.b16 %v984
        %v1052 = vunpack.c.l.b16 %v985
        %v1053 = vunpack.c.h.b16 %v985
        %v1054 = vunpack.c.l.b16 %v986
        %v1055 = vunpack.c.h.b16 %v986
        %v1056 = vunpack.c.l.b16 %v987
        %v1057 = vunpack.c.h.b16 %v987
        %v1058 = vunpack.c.l.b16 %v988
        %v1059 = vunpack.c.h.b16 %v988
        %v1060 = vunpack.c.l.b16 %v989
        %v1061 = vunpack.c.h.b16 %v989
        %v1062 = vunpack.c.l.b16 %v990
        %v1063 = vunpack.c.h.b16 %v990
        %v1064 = vunpack.c.l.b16 %v991
        %v1065 = vunpack.c.h.b16 %v991
        %v1066 = vunpack.c.l.b16 %v992
        %v1067 = vunpack.c.h.b16 %v992
        %v1068 = vunpack.c.l.b16 %v993
        %v1069 = vunpack.c.h.b16 %v993
        %v1070 = vunpack.c.l.b16 %v994
        %v1071 = vunpack.c.h.b16 %v994
        %v1072 = vunpack.c.l.b16 %v995
        %v1073 = vunpack.c.h.b16 %v995
        %v1074 = vunpack.c.l.b16 %v996
        %v1075 = vunpack.c.h.b16 %v996
        %v1076 = vunpack.c.l.b16 %v997
        %v1077 = vunpack.c.h.b16 %v997
        %v1078 = vunpack.c.l.b16 %v998
        %v1079 = vunpack.c.h.b16 %v998
        %v1080 = vunpack.c.l.b16 %v999
        %v1081 = vunpack.c.h.b16 %v999
        %v1082 = vunpack.c.l.b16 %v1000
        %v1083 = vunpack.c.h.b16 %v1000
        %v1084 = vunpack.c.l.b16 %v1001
        %v1085 = vunpack.c.h.b16 %v1001
        %v1086 = vunpack.c.l.b16 %v1002
        %v1087 = vunpack.c.h.b16 %v1002
        %v1088 = vunpack.c.l.b16 %v1003
        %v1089 = vunpack.c.h.b16 %v1003
        %v1090 = vunpack.c.l.b16 %v1004
        %v1091 = vunpack.c.h.b16 %v1004
        %v1092 = vunpack.c.l.b16 %v1005
        %v1093 = vunpack.c.h.b16 %v1005
        %v1094 = vunpack.c.l.b16 %v1006
        %v1095 = vunpack.c.h.b16 %v1006
        %v1096 = vunpack.c.l.b16 %v1007
        %v1097 = vunpack.c.h.b16 %v1007
        %v1098 = vunpack.c.l.b16 %v1008
        %v1099 = vunpack.c.h.b16 %v1008
        %v1100 = vunpack.c.l.b16 %v1009
        %v1101 = vunpack.c.h.b16 %v1009
        %v1102 = vunpack.c.l.b16 %v1010
        %v1103 = vunpack.c.h.b16 %v1010
        %v1104 = vunpack.c.l.b16 %v1011
        %v1105 = vunpack.c.h.b16 %v1011
        %v1106 = vunpack.c.l.b16 %v1012
        %v1107 = vunpack.c.h.b16 %v1012
        %v1108 = vunpack.c.l.b16 %v1013
        %v1109 = vunpack.c.h.b16 %v1013
        %v1110 = vpack.c.b16 %v1050, %v1046
        %v1111 = vpack.c.b16 %v1051, %v1047
        %v1112 = vpack.c.b16 %v1052, %v1048
        %v1113 = vpack.c.b16 %v1053, %v1049
        %v1114 = vpack.c.b16 %v1058, %v1054
        %v1115 = vpack.c.b16 %v1059, %v1055
        %v1116 = vpack.c.b16 %v1060, %v1056
        %v1117 = vpack.c.b16 %v1061, %v1057
        %v1118 = vpack.c.b16 %v1066, %v1062
        %v1119 = vpack.c.b16 %v1067, %v1063
        %v1120 = vpack.c.b16 %v1068, %v1064
        %v1121 = vpack.c.b16 %v1069, %v1065
        %v1122 = vpack.c.b16 %v1074, %v1070
        %v1123 = vpack.c.b16 %v1075, %v1071
        %v1124 = vpack.c.b16 %v1076, %v1072
        %v1125 = vpack.c.b16 %v1077, %v1073
        %v1126 = vpack.c.b16 %v1082, %v1078
        %v1127 = vpack.c.b16 %v1083, %v1079
        %v1128 = vpack.c.b16 %v1084, %v1080
        %v1129 = vpack.c.b16 %v1085, %v1081
        %v1130 = vpack.c.b16 %v1090, %v1086
        %v1131 = vpack.c.b16 %v1091, %v1087
        %v1132 = vpack.c.b16 %v1092, %v1088
        %v1133 = vpack.c.b16 %v1093, %v1089
        %v1134 = vpack.c.b16 %v1098, %v1094
        %v1135 = vpack.c.b16 %v1099, %v1095
        %v1136 = vpack.c.b16 %v1100, %v1096
        %v1137 = vpack.c.b16 %v1101, %v1097
        %v1138 = vpack.c.b16 %v1106, %v1102
        %v1139 = vpack.c.b16 %v1107, %v1103
        %v1140 = vpack.c.b16 %v1108, %v1104
        %v1141 = vpack.c.b16 %v1109, %v1105
        %1174 = vmatprep.subr.bf16.mxu0 %v1111
        %1175 = vmatpush1.bf16.msra.mxu0 %v1110
        %1176 = vmatprep.subr.bf16.mxu0 %v1115
        %1177 = vmatpush1.bf16.msra.mxu0 %v1114
        %1178 = vmatprep.subr.bf16.mxu0 %v1119
        %1179 = vmatpush1.bf16.msra.mxu0 %v1118
        %1180 = vmatprep.subr.bf16.mxu0 %v1123
        %1181 = vmatpush1.bf16.msra.mxu0 %v1122
        %1182 = vmatprep.subr.bf16.mxu0 %v1127
        %1183 = vmatpush1.bf16.msra.mxu0 %v1126
        %1184 = vmatprep.subr.bf16.mxu0 %v1131
        %1185 = vmatpush1.bf16.msra.mxu0 %v1130
        %1186 = vmatprep.subr.bf16.mxu0 %v1135
        %1187 = vmatpush1.bf16.msra.mxu0 %v1134
        %1188 = vmatprep.subr.bf16.mxu0 %v1139
        %1189 = vmatpush1.bf16.msra.mxu0 %v1138
        %1190 = vmatprep.subr.bf16.mxu0 0
        %1191 = vmatpush1.bf16.msra.mxu0 0
        %1192 = vmatprep.subr.bf16.mxu0 0
        %1193 = vmatpush1.bf16.msra.mxu0 0
        %1194 = vmatprep.subr.bf16.mxu0 0
        %1195 = vmatpush1.bf16.msra.mxu0 0
        %1196 = vmatprep.subr.bf16.mxu0 0
        %1197 = vmatpush1.bf16.msra.mxu0 0
        %1198 = vmatprep.subr.bf16.mxu0 0
        %1199 = vmatpush1.bf16.msra.mxu0 0
        %1200 = vmatprep.subr.bf16.mxu0 0
        %1201 = vmatpush1.bf16.msra.mxu0 0
        %1202 = vmatprep.subr.bf16.mxu0 0
        %1203 = vmatpush1.bf16.msra.mxu0 0
        %1204 = vmatprep.subr.bf16.mxu0 0
        %1205 = vmatpush1.bf16.msra.mxu0 0
        %1206 = vmatprep.mubr.bf16.mxu0 0
        %1207 = vmatmul.mubr.bf16.gmra.mrb[0].mxu0 %v981
        %v1208 = vpop.f32.mrb[0].mxu0
        %v1209 = vadd.f32 0.0, %v1208
        %v1210 = vpop.f32.mrb[0].mxu0
        %v1211 = vadd.f32 0.0, %v1210
        %v1212 = vpop.f32.mrb[0].mxu0
        %v1213 = vpop.f32.mrb[0].mxu0
        %1214 = vdwg.mxu0
        %1215 = vmatprep.subr.bf16.mxu0 %v1113
        %1216 = vmatpush1.bf16.msra.mxu0 %v1112
        %1217 = vmatprep.subr.bf16.mxu0 %v1117
        %1218 = vmatpush1.bf16.msra.mxu0 %v1116
        %1219 = vmatprep.subr.bf16.mxu0 %v1121
        %1220 = vmatpush1.bf16.msra.mxu0 %v1120
        %1221 = vmatprep.subr.bf16.mxu0 %v1125
        %1222 = vmatpush1.bf16.msra.mxu0 %v1124
        %1223 = vmatprep.subr.bf16.mxu0 %v1129
        %1224 = vmatpush1.bf16.msra.mxu0 %v1128
        %1225 = vmatprep.subr.bf16.mxu0 %v1133
        %1226 = vmatpush1.bf16.msra.mxu0 %v1132
        %1227 = vmatprep.subr.bf16.mxu0 %v1137
        %1228 = vmatpush1.bf16.msra.mxu0 %v1136
        %1229 = vmatprep.subr.bf16.mxu0 %v1141
        %1230 = vmatpush1.bf16.msra.mxu0 %v1140
        %1231 = vmatprep.subr.bf16.mxu0 0
        %1232 = vmatpush1.bf16.msra.mxu0 0
        %1233 = vmatprep.subr.bf16.mxu0 0
        %1234 = vmatpush1.bf16.msra.mxu0 0
        %1235 = vmatprep.subr.bf16.mxu0 0
        %1236 = vmatpush1.bf16.msra.mxu0 0
        %1237 = vmatprep.subr.bf16.mxu0 0
        %1238 = vmatpush1.bf16.msra.mxu0 0
        %1239 = vmatprep.subr.bf16.mxu0 0
        %1240 = vmatpush1.bf16.msra.mxu0 0
        %1241 = vmatprep.subr.bf16.mxu0 0
        %1242 = vmatpush1.bf16.msra.mxu0 0
        %1243 = vmatprep.subr.bf16.mxu0 0
        %1244 = vmatpush1.bf16.msra.mxu0 0
        %1245 = vmatprep.subr.bf16.mxu0 0
        %1246 = vmatpush1.bf16.msra.mxu0 0
        %1247 = vmatprep.mubr.bf16.mxu0 0
        %1248 = vmatmul.mubr.bf16.gmra.mrb[0].mxu0 %v981
        %v1249 = vpop.f32.mrb[0].mxu0
        %v1250 = vadd.f32 0.0, %v1249
        %v1251 = vpop.f32.mrb[0].mxu0
        %v1252 = vadd.f32 0.0, %v1251
        %v1253 = vpop.f32.mrb[0].mxu0
        %v1254 = vpop.f32.mrb[0].mxu0
        %1255 = vdwg.mxu0
        %v1256 = vadd.f32 %v977, %v1209
        %v1257 = vadd.f32 %v978, %v1211
        %v1258 = vadd.f32 %v979, %v1250
        %v1259 = vadd.f32 %v980, %v1252
        %v1260 = vxor.u32 %v1256, 2147483648
        %v1261 = vmul.f32 %v1260, 1.442695
        %v1262 = vpow.pop %v1261
        %v1263 = vadd.f32 %v1262, 1.0
        %v1264 = vrcp.pop %v1263
        %v1265 = vmul.f32 1.0, %v1264
        %v1266 = vxor.u32 %v1257, 2147483648
        %v1267 = vmul.f32 %v1266, 1.442695
        %v1268 = vpow.pop %v1267
        %v1269 = vadd.f32 %v1268, 1.0
        %v1270 = vrcp.pop %v1269
        %v1271 = vmul.f32 1.0, %v1270
        %v1272 = vtanh.pop %v1258
        %v1273 = vxor.u32 %v1259, 2147483648
        %v1274 = vmul.f32 %v1273, 1.442695
        %v1275 = vpow.pop %v1274
        %v1276 = vadd.f32 %v1275, 1.0
        %v1277 = vrcp.pop %v1276
        %v1278 = vmul.f32 1.0, %v1277
        %v1279 = vmul.f32 %v1271, %v976
        %v1280 = vmul.f32 %v1265, %v1272
        %v1281 = vadd.f32 %v1279, %v1280
        %v1282 = vtanh.pop %v1281
        %v1283 = vmul.f32 %v1278, %v1282
        %vm1284 = vcmp.gt.s32.totalorder %v597, 0
        %v1285 = vsel %vm1284, 1, 0
        %1286 = vset.pattern.permute.xlu0 0
        %1287 = vperm.xlu0 %1286, %v1285
        %v1288 = vpop.permute.xlu0 %1287
        %vm1289 = vcmp.eq.s32.totalorder %v1288, 1
        %v1290 = vsel %vm1289, %v1283, %v975
        %v1291 = vsel %vm1289, %v1281, %v976
        %1292 = vst [vmem:[#allocation4] sm:$0xff] %v1290
        %1293 = vst [vmem:[#allocation5] sm:$0xff] %v1291
        %1294 = vst [vmem:[#allocation3] sm:$0xff] %v1290
        %v1295 = vld [vmem:[#allocation4] sm:$0xff]
        %v1296 = vld [vmem:[#allocation5] sm:$0xff]
        %s1297 = scalar_lea.vmem [#allocation2], 32
        %v1298 = vld [vmem:[%s1297] sm:$0xff]
        %v1299 = vld [vmem:[%s1297 + $0x8] sm:$0xff]
        %v1300 = vld [vmem:[%s1297 + $0x10] sm:$0xff]
        %v1301 = vld [vmem:[%s1297 + $0x18] sm:$0xff]
        %v1302 = vpack.c.bf16 %v1295, %v1295
        %v1303 = vld [vmem:[%s485] sm:$0xff]
        %v1304 = vld [vmem:[%s485 + $0x8] sm:$0xff]
        %v1305 = vld [vmem:[%s485 + $0x10] sm:$0xff]
        %v1306 = vld [vmem:[%s485 + $0x18] sm:$0xff]
        %v1307 = vld [vmem:[%s485 + $0x20] sm:$0xff]
        %v1308 = vld [vmem:[%s485 + $0x28] sm:$0xff]
        %v1309 = vld [vmem:[%s485 + $0x30] sm:$0xff]
        %v1310 = vld [vmem:[%s485 + $0x38] sm:$0xff]
        %v1311 = vld [vmem:[%s485 + $0x40] sm:$0xff]
        %v1312 = vld [vmem:[%s485 + $0x48] sm:$0xff]
        %v1313 = vld [vmem:[%s485 + $0x50] sm:$0xff]
        %v1314 = vld [vmem:[%s485 + $0x58] sm:$0xff]
        %v1315 = vld [vmem:[%s485 + $0x60] sm:$0xff]
        %v1316 = vld [vmem:[%s485 + $0x68] sm:$0xff]
        %v1317 = vld [vmem:[%s485 + $0x70] sm:$0xff]
        %v1318 = vld [vmem:[%s485 + $0x78] sm:$0xff]
        %v1319 = vld [vmem:[%s485 + $0x80] sm:$0xff]
        %v1320 = vld [vmem:[%s485 + $0x88] sm:$0xff]
        %v1321 = vld [vmem:[%s485 + $0x90] sm:$0xff]
        %v1322 = vld [vmem:[%s485 + $0x98] sm:$0xff]
        %v1323 = vld [vmem:[%s485 + $0xa0] sm:$0xff]
        %v1324 = vld [vmem:[%s485 + $0xa8] sm:$0xff]
        %v1325 = vld [vmem:[%s485 + $0xb0] sm:$0xff]
        %v1326 = vld [vmem:[%s485 + $0xb8] sm:$0xff]
        %v1327 = vld [vmem:[%s485 + $0xc0] sm:$0xff]
        %v1328 = vld [vmem:[%s485 + $0xc8] sm:$0xff]
        %v1329 = vld [vmem:[%s485 + $0xd0] sm:$0xff]
        %v1330 = vld [vmem:[%s485 + $0xd8] sm:$0xff]
        %v1331 = vld [vmem:[%s485 + $0xe0] sm:$0xff]
        %v1332 = vld [vmem:[%s485 + $0xe8] sm:$0xff]
        %v1333 = vld [vmem:[%s485 + $0xf0] sm:$0xff]
        %v1334 = vld [vmem:[%s485 + $0xf8] sm:$0xff]
        %v1367 = vunpack.c.l.b16 %v1303
        %v1368 = vunpack.c.h.b16 %v1303
        %v1369 = vunpack.c.l.b16 %v1304
        %v1370 = vunpack.c.h.b16 %v1304
        %v1371 = vunpack.c.l.b16 %v1305
        %v1372 = vunpack.c.h.b16 %v1305
        %v1373 = vunpack.c.l.b16 %v1306
        %v1374 = vunpack.c.h.b16 %v1306
        %v1375 = vunpack.c.l.b16 %v1307
        %v1376 = vunpack.c.h.b16 %v1307
        %v1377 = vunpack.c.l.b16 %v1308
        %v1378 = vunpack.c.h.b16 %v1308
        %v1379 = vunpack.c.l.b16 %v1309
        %v1380 = vunpack.c.h.b16 %v1309
        %v1381 = vunpack.c.l.b16 %v1310
        %v1382 = vunpack.c.h.b16 %v1310
        %v1383 = vunpack.c.l.b16 %v1311
        %v1384 = vunpack.c.h.b16 %v1311
        %v1385 = vunpack.c.l.b16 %v1312
        %v1386 = vunpack.c.h.b16 %v1312
        %v1387 = vunpack.c.l.b16 %v1313
        %v1388 = vunpack.c.h.b16 %v1313
        %v1389 = vunpack.c.l.b16 %v1314
        %v1390 = vunpack.c.h.b16 %v1314
        %v1391 = vunpack.c.l.b16 %v1315
        %v1392 = vunpack.c.h.b16 %v1315
        %v1393 = vunpack.c.l.b16 %v1316
        %v1394 = vunpack.c.h.b16 %v1316
        %v1395 = vunpack.c.l.b16 %v1317
        %v1396 = vunpack.c.h.b16 %v1317
        %v1397 = vunpack.c.l.b16 %v1318
        %v1398 = vunpack.c.h.b16 %v1318
        %v1399 = vunpack.c.l.b16 %v1319
        %v1400 = vunpack.c.h.b16 %v1319
        %v1401 = vunpack.c.l.b16 %v1320
        %v1402 = vunpack.c.h.b16 %v1320
        %v1403 = vunpack.c.l.b16 %v1321
        %v1404 = vunpack.c.h.b16 %v1321
        %v1405 = vunpack.c.l.b16 %v1322
        %v1406 = vunpack.c.h.b16 %v1322
        %v1407 = vunpack.c.l.b16 %v1323
        %v1408 = vunpack.c.h.b16 %v1323
        %v1409 = vunpack.c.l.b16 %v1324
        %v1410 = vunpack.c.h.b16 %v1324
        %v1411 = vunpack.c.l.b16 %v1325
        %v1412 = vunpack.c.h.b16 %v1325
        %v1413 = vunpack.c.l.b16 %v1326
        %v1414 = vunpack.c.h.b16 %v1326
        %v1415 = vunpack.c.l.b16 %v1327
        %v1416 = vunpack.c.h.b16 %v1327
        %v1417 = vunpack.c.l.b16 %v1328
        %v1418 = vunpack.c.h.b16 %v1328
        %v1419 = vunpack.c.l.b16 %v1329
        %v1420 = vunpack.c.h.b16 %v1329
        %v1421 = vunpack.c.l.b16 %v1330
        %v1422 = vunpack.c.h.b16 %v1330
        %v1423 = vunpack.c.l.b16 %v1331
        %v1424 = vunpack.c.h.b16 %v1331
        %v1425 = vunpack.c.l.b16 %v1332
        %v1426 = vunpack.c.h.b16 %v1332
        %v1427 = vunpack.c.l.b16 %v1333
        %v1428 = vunpack.c.h.b16 %v1333
        %v1429 = vunpack.c.l.b16 %v1334
        %v1430 = vunpack.c.h.b16 %v1334
        %v1431 = vpack.c.b16 %v1371, %v1367
        %v1432 = vpack.c.b16 %v1372, %v1368
        %v1433 = vpack.c.b16 %v1373, %v1369
        %v1434 = vpack.c.b16 %v1374, %v1370
        %v1435 = vpack.c.b16 %v1379, %v1375
        %v1436 = vpack.c.b16 %v1380, %v1376
        %v1437 = vpack.c.b16 %v1381, %v1377
        %v1438 = vpack.c.b16 %v1382, %v1378
        %v1439 = vpack.c.b16 %v1387, %v1383
        %v1440 = vpack.c.b16 %v1388, %v1384
        %v1441 = vpack.c.b16 %v1389, %v1385
        %v1442 = vpack.c.b16 %v1390, %v1386
        %v1443 = vpack.c.b16 %v1395, %v1391
        %v1444 = vpack.c.b16 %v1396, %v1392
        %v1445 = vpack.c.b16 %v1397, %v1393
        %v1446 = vpack.c.b16 %v1398, %v1394
        %v1447 = vpack.c.b16 %v1403, %v1399
        %v1448 = vpack.c.b16 %v1404, %v1400
        %v1449 = vpack.c.b16 %v1405, %v1401
        %v1450 = vpack.c.b16 %v1406, %v1402
        %v1451 = vpack.c.b16 %v1411, %v1407
        %v1452 = vpack.c.b16 %v1412, %v1408
        %v1453 = vpack.c.b16 %v1413, %v1409
        %v1454 = vpack.c.b16 %v1414, %v1410
        %v1455 = vpack.c.b16 %v1419, %v1415
        %v1456 = vpack.c.b16 %v1420, %v1416
        %v1457 = vpack.c.b16 %v1421, %v1417
        %v1458 = vpack.c.b16 %v1422, %v1418
        %v1459 = vpack.c.b16 %v1427, %v1423
        %v1460 = vpack.c.b16 %v1428, %v1424
        %v1461 = vpack.c.b16 %v1429, %v1425
        %v1462 = vpack.c.b16 %v1430, %v1426
        %1495 = vmatprep.subr.bf16.mxu0 %v1432
        %1496 = vmatpush1.bf16.msra.mxu0 %v1431
        %1497 = vmatprep.subr.bf16.mxu0 %v1436
        %1498 = vmatpush1.bf16.msra.mxu0 %v1435
        %1499 = vmatprep.subr.bf16.mxu0 %v1440
        %1500 = vmatpush1.bf16.msra.mxu0 %v1439
        %1501 = vmatprep.subr.bf16.mxu0 %v1444
        %1502 = vmatpush1.bf16.msra.mxu0 %v1443
        %1503 = vmatprep.subr.bf16.mxu0 %v1448
        %1504 = vmatpush1.bf16.msra.mxu0 %v1447
        %1505 = vmatprep.subr.bf16.mxu0 %v1452
        %1506 = vmatpush1.bf16.msra.mxu0 %v1451
        %1507 = vmatprep.subr.bf16.mxu0 %v1456
        %1508 = vmatpush1.bf16.msra.mxu0 %v1455
        %1509 = vmatprep.subr.bf16.mxu0 %v1460
        %1510 = vmatpush1.bf16.msra.mxu0 %v1459
        %1511 = vmatprep.subr.bf16.mxu0 0
        %1512 = vmatpush1.bf16.msra.mxu0 0
        %1513 = vmatprep.subr.bf16.mxu0 0
        %1514 = vmatpush1.bf16.msra.mxu0 0
        %1515 = vmatprep.subr.bf16.mxu0 0
        %1516 = vmatpush1.bf16.msra.mxu0 0
        %1517 = vmatprep.subr.bf16.mxu0 0
        %1518 = vmatpush1.bf16.msra.mxu0 0
        %1519 = vmatprep.subr.bf16.mxu0 0
        %1520 = vmatpush1.bf16.msra.mxu0 0
        %1521 = vmatprep.subr.bf16.mxu0 0
        %1522 = vmatpush1.bf16.msra.mxu0 0
        %1523 = vmatprep.subr.bf16.mxu0 0
        %1524 = vmatpush1.bf16.msra.mxu0 0
        %1525 = vmatprep.subr.bf16.mxu0 0
        %1526 = vmatpush1.bf16.msra.mxu0 0
        %1527 = vmatprep.mubr.bf16.mxu0 0
        %1528 = vmatmul.mubr.bf16.gmra.mrb[0].mxu0 %v1302
        %v1529 = vpop.f32.mrb[0].mxu0
        %v1530 = vadd.f32 0.0, %v1529
        %v1531 = vpop.f32.mrb[0].mxu0
        %v1532 = vadd.f32 0.0, %v1531
        %v1533 = vpop.f32.mrb[0].mxu0
        %v1534 = vpop.f32.mrb[0].mxu0
        %1535 = vdwg.mxu0
        %1536 = vmatprep.subr.bf16.mxu0 %v1434
        %1537 = vmatpush1.bf16.msra.mxu0 %v1433
        %1538 = vmatprep.subr.bf16.mxu0 %v1438
        %1539 = vmatpush1.bf16.msra.mxu0 %v1437
        %1540 = vmatprep.subr.bf16.mxu0 %v1442
        %1541 = vmatpush1.bf16.msra.mxu0 %v1441
        %1542 = vmatprep.subr.bf16.mxu0 %v1446
        %1543 = vmatpush1.bf16.msra.mxu0 %v1445
        %1544 = vmatprep.subr.bf16.mxu0 %v1450
        %1545 = vmatpush1.bf16.msra.mxu0 %v1449
        %1546 = vmatprep.subr.bf16.mxu0 %v1454
        %1547 = vmatpush1.bf16.msra.mxu0 %v1453
        %1548 = vmatprep.subr.bf16.mxu0 %v1458
        %1549 = vmatpush1.bf16.msra.mxu0 %v1457
        %1550 = vmatprep.subr.bf16.mxu0 %v1462
        %1551 = vmatpush1.bf16.msra.mxu0 %v1461
        %1552 = vmatprep.subr.bf16.mxu0 0
        %1553 = vmatpush1.bf16.msra.mxu0 0
        %1554 = vmatprep.subr.bf16.mxu0 0
        %1555 = vmatpush1.bf16.msra.mxu0 0
        %1556 = vmatprep.subr.bf16.mxu0 0
        %1557 = vmatpush1.bf16.msra.mxu0 0
        %1558 = vmatprep.subr.bf16.mxu0 0
        %1559 = vmatpush1.bf16.msra.mxu0 0
        %1560 = vmatprep.subr.bf16.mxu0 0
        %1561 = vmatpush1.bf16.msra.mxu0 0
        %1562 = vmatprep.subr.bf16.mxu0 0
        %1563 = vmatpush1.bf16.msra.mxu0 0
        %1564 = vmatprep.subr.bf16.mxu0 0
        %1565 = vmatpush1.bf16.msra.mxu0 0
        %1566 = vmatprep.subr.bf16.mxu0 0
        %1567 = vmatpush1.bf16.msra.mxu0 0
        %1568 = vmatprep.mubr.bf16.mxu0 0
        %1569 = vmatmul.mubr.bf16.gmra.mrb[0].mxu0 %v1302
        %v1570 = vpop.f32.mrb[0].mxu0
        %v1571 = vadd.f32 0.0, %v1570
        %v1572 = vpop.f32.mrb[0].mxu0
        %v1573 = vadd.f32 0.0, %v1572
        %v1574 = vpop.f32.mrb[0].mxu0
        %v1575 = vpop.f32.mrb[0].mxu0
        %1576 = vdwg.mxu0
        %v1577 = vadd.f32 %v1298, %v1530
        %v1578 = vadd.f32 %v1299, %v1532
        %v1579 = vadd.f32 %v1300, %v1571
        %v1580 = vadd.f32 %v1301, %v1573
        %v1581 = vxor.u32 %v1577, 2147483648
        %v1582 = vmul.f32 %v1581, 1.442695
        %v1583 = vpow.pop %v1582
        %v1584 = vadd.f32 %v1583, 1.0
        %v1585 = vrcp.pop %v1584
        %v1586 = vmul.f32 1.0, %v1585
        %v1587 = vxor.u32 %v1578, 2147483648
        %v1588 = vmul.f32 %v1587, 1.442695
        %v1589 = vpow.pop %v1588
        %v1590 = vadd.f32 %v1589, 1.0
        %v1591 = vrcp.pop %v1590
        %v1592 = vmul.f32 1.0, %v1591
        %v1593 = vtanh.pop %v1579
        %v1594 = vxor.u32 %v1580, 2147483648
        %v1595 = vmul.f32 %v1594, 1.442695
        %v1596 = vpow.pop %v1595
        %v1597 = vadd.f32 %v1596, 1.0
        %v1598 = vrcp.pop %v1597
        %v1599 = vmul.f32 1.0, %v1598
        %v1600 = vmul.f32 %v1592, %v1296
        %v1601 = vmul.f32 %v1586, %v1593
        %v1602 = vadd.f32 %v1600, %v1601
        %v1603 = vtanh.pop %v1602
        %v1604 = vmul.f32 %v1599, %v1603
        %vm1605 = vcmp.gt.s32.totalorder %v597, 1
        %v1606 = vsel %vm1605, 1, 0
        %1607 = vset.pattern.permute.xlu0 0
        %1608 = vperm.xlu0 %1607, %v1606
        %v1609 = vpop.permute.xlu0 %1608
        %vm1610 = vcmp.eq.s32.totalorder %v1609, 1
        %v1611 = vsel %vm1610, %v1604, %v1295
        %v1612 = vsel %vm1610, %v1602, %v1296
        %1613 = vst [vmem:[#allocation4] sm:$0xff] %v1611
        %1614 = vst [vmem:[#allocation5] sm:$0xff] %v1612
        %s1615 = scalar_lea.vmem [#allocation3], 8
        %1616 = vst [vmem:[%s1615] sm:$0xff] %v1611
        %v1617 = vld [vmem:[#allocation4] sm:$0xff]
        %v1618 = vld [vmem:[#allocation5] sm:$0xff]
        %s1619 = scalar_lea.vmem [#allocation2], 64
        %v1620 = vld [vmem:[%s1619] sm:$0xff]
        %v1621 = vld [vmem:[%s1619 + $0x8] sm:$0xff]
        %v1622 = vld [vmem:[%s1619 + $0x10] sm:$0xff]
        %v1623 = vld [vmem:[%s1619 + $0x18] sm:$0xff]
        %v1624 = vpack.c.bf16 %v1617, %v1617
        %v1625 = vld [vmem:[%s485] sm:$0xff]
        %v1626 = vld [vmem:[%s485 + $0x8] sm:$0xff]
        %v1627 = vld [vmem:[%s485 + $0x10] sm:$0xff]
        %v1628 = vld [vmem:[%s485 + $0x18] sm:$0xff]
        %v1629 = vld [vmem:[%s485 + $0x20] sm:$0xff]
        %v1630 = vld [vmem:[%s485 + $0x28] sm:$0xff]
        %v1631 = vld [vmem:[%s485 + $0x30] sm:$0xff]
        %v1632 = vld [vmem:[%s485 + $0x38] sm:$0xff]
        %v1633 = vld [vmem:[%s485 + $0x40] sm:$0xff]
        %v1634 = vld [vmem:[%s485 + $0x48] sm:$0xff]
        %v1635 = vld [vmem:[%s485 + $0x50] sm:$0xff]
        %v1636 = vld [vmem:[%s485 + $0x58] sm:$0xff]
        %v1637 = vld [vmem:[%s485 + $0x60] sm:$0xff]
        %v1638 = vld [vmem:[%s485 + $0x68] sm:$0xff]
        %v1639 = vld [vmem:[%s485 + $0x70] sm:$0xff]
        %v1640 = vld [vmem:[%s485 + $0x78] sm:$0xff]
        %v1641 = vld [vmem:[%s485 + $0x80] sm:$0xff]
        %v1642 = vld [vmem:[%s485 + $0x88] sm:$0xff]
        %v1643 = vld [vmem:[%s485 + $0x90] sm:$0xff]
        %v1644 = vld [vmem:[%s485 + $0x98] sm:$0xff]
        %v1645 = vld [vmem:[%s485 + $0xa0] sm:$0xff]
        %v1646 = vld [vmem:[%s485 + $0xa8] sm:$0xff]
        %v1647 = vld [vmem:[%s485 + $0xb0] sm:$0xff]
        %v1648 = vld [vmem:[%s485 + $0xb8] sm:$0xff]
        %v1649 = vld [vmem:[%s485 + $0xc0] sm:$0xff]
        %v1650 = vld [vmem:[%s485 + $0xc8] sm:$0xff]
        %v1651 = vld [vmem:[%s485 + $0xd0] sm:$0xff]
        %v1652 = vld [vmem:[%s485 + $0xd8] sm:$0xff]
        %v1653 = vld [vmem:[%s485 + $0xe0] sm:$0xff]
        %v1654 = vld [vmem:[%s485 + $0xe8] sm:$0xff]
        %v1655 = vld [vmem:[%s485 + $0xf0] sm:$0xff]
        %v1656 = vld [vmem:[%s485 + $0xf8] sm:$0xff]
        %v1689 = vunpack.c.l.b16 %v1625
        %v1690 = vunpack.c.h.b16 %v1625
        %v1691 = vunpack.c.l.b16 %v1626
        %v1692 = vunpack.c.h.b16 %v1626
        %v1693 = vunpack.c.l.b16 %v1627
        %v1694 = vunpack.c.h.b16 %v1627
        %v1695 = vunpack.c.l.b16 %v1628
        %v1696 = vunpack.c.h.b16 %v1628
        %v1697 = vunpack.c.l.b16 %v1629
        %v1698 = vunpack.c.h.b16 %v1629
        %v1699 = vunpack.c.l.b16 %v1630
        %v1700 = vunpack.c.h.b16 %v1630
        %v1701 = vunpack.c.l.b16 %v1631
        %v1702 = vunpack.c.h.b16 %v1631
        %v1703 = vunpack.c.l.b16 %v1632
        %v1704 = vunpack.c.h.b16 %v1632
        %v1705 = vunpack.c.l.b16 %v1633
        %v1706 = vunpack.c.h.b16 %v1633
        %v1707 = vunpack.c.l.b16 %v1634
        %v1708 = vunpack.c.h.b16 %v1634
        %v1709 = vunpack.c.l.b16 %v1635
        %v1710 = vunpack.c.h.b16 %v1635
        %v1711 = vunpack.c.l.b16 %v1636
        %v1712 = vunpack.c.h.b16 %v1636
        %v1713 = vunpack.c.l.b16 %v1637
        %v1714 = vunpack.c.h.b16 %v1637
        %v1715 = vunpack.c.l.b16 %v1638
        %v1716 = vunpack.c.h.b16 %v1638
        %v1717 = vunpack.c.l.b16 %v1639
        %v1718 = vunpack.c.h.b16 %v1639
        %v1719 = vunpack.c.l.b16 %v1640
        %v1720 = vunpack.c.h.b16 %v1640
        %v1721 = vunpack.c.l.b16 %v1641
        %v1722 = vunpack.c.h.b16 %v1641
        %v1723 = vunpack.c.l.b16 %v1642
        %v1724 = vunpack.c.h.b16 %v1642
        %v1725 = vunpack.c.l.b16 %v1643
        %v1726 = vunpack.c.h.b16 %v1643
        %v1727 = vunpack.c.l.b16 %v1644
        %v1728 = vunpack.c.h.b16 %v1644
        %v1729 = vunpack.c.l.b16 %v1645
        %v1730 = vunpack.c.h.b16 %v1645
        %v1731 = vunpack.c.l.b16 %v1646
        %v1732 = vunpack.c.h.b16 %v1646
        %v1733 = vunpack.c.l.b16 %v1647
        %v1734 = vunpack.c.h.b16 %v1647
        %v1735 = vunpack.c.l.b16 %v1648
        %v1736 = vunpack.c.h.b16 %v1648
        %v1737 = vunpack.c.l.b16 %v1649
        %v1738 = vunpack.c.h.b16 %v1649
        %v1739 = vunpack.c.l.b16 %v1650
        %v1740 = vunpack.c.h.b16 %v1650
        %v1741 = vunpack.c.l.b16 %v1651
        %v1742 = vunpack.c.h.b16 %v1651
        %v1743 = vunpack.c.l.b16 %v1652
        %v1744 = vunpack.c.h.b16 %v1652
        %v1745 = vunpack.c.l.b16 %v1653
        %v1746 = vunpack.c.h.b16 %v1653
        %v1747 = vunpack.c.l.b16 %v1654
        %v1748 = vunpack.c.h.b16 %v1654
        %v1749 = vunpack.c.l.b16 %v1655
        %v1750 = vunpack.c.h.b16 %v1655
        %v1751 = vunpack.c.l.b16 %v1656
        %v1752 = vunpack.c.h.b16 %v1656
        %v1753 = vpack.c.b16 %v1693, %v1689
        %v1754 = vpack.c.b16 %v1694, %v1690
        %v1755 = vpack.c.b16 %v1695, %v1691
        %v1756 = vpack.c.b16 %v1696, %v1692
        %v1757 = vpack.c.b16 %v1701, %v1697
        %v1758 = vpack.c.b16 %v1702, %v1698
        %v1759 = vpack.c.b16 %v1703, %v1699
        %v1760 = vpack.c.b16 %v1704, %v1700
        %v1761 = vpack.c.b16 %v1709, %v1705
        %v1762 = vpack.c.b16 %v1710, %v1706
        %v1763 = vpack.c.b16 %v1711, %v1707
        %v1764 = vpack.c.b16 %v1712, %v1708
        %v1765 = vpack.c.b16 %v1717, %v1713
        %v1766 = vpack.c.b16 %v1718, %v1714
        %v1767 = vpack.c.b16 %v1719, %v1715
        %v1768 = vpack.c.b16 %v1720, %v1716
        %v1769 = vpack.c.b16 %v1725, %v1721
        %v1770 = vpack.c.b16 %v1726, %v1722
        %v1771 = vpack.c.b16 %v1727, %v1723
        %v1772 = vpack.c.b16 %v1728, %v1724
        %v1773 = vpack.c.b16 %v1733, %v1729
        %v1774 = vpack.c.b16 %v1734, %v1730
        %v1775 = vpack.c.b16 %v1735, %v1731
        %v1776 = vpack.c.b16 %v1736, %v1732
        %v1777 = vpack.c.b16 %v1741, %v1737
        %v1778 = vpack.c.b16 %v1742, %v1738
        %v1779 = vpack.c.b16 %v1743, %v1739
        %v1780 = vpack.c.b16 %v1744, %v1740
        %v1781 = vpack.c.b16 %v1749, %v1745
        %v1782 = vpack.c.b16 %v1750, %v1746
        %v1783 = vpack.c.b16 %v1751, %v1747
        %v1784 = vpack.c.b16 %v1752, %v1748
        %1817 = vmatprep.subr.bf16.mxu0 %v1754
        %1818 = vmatpush1.bf16.msra.mxu0 %v1753
        %1819 = vmatprep.subr.bf16.mxu0 %v1758
        %1820 = vmatpush1.bf16.msra.mxu0 %v1757
        %1821 = vmatprep.subr.bf16.mxu0 %v1762
        %1822 = vmatpush1.bf16.msra.mxu0 %v1761
        %1823 = vmatprep.subr.bf16.mxu0 %v1766
        %1824 = vmatpush1.bf16.msra.mxu0 %v1765
        %1825 = vmatprep.subr.bf16.mxu0 %v1770
        %1826 = vmatpush1.bf16.msra.mxu0 %v1769
        %1827 = vmatprep.subr.bf16.mxu0 %v1774
        %1828 = vmatpush1.bf16.msra.mxu0 %v1773
        %1829 = vmatprep.subr.bf16.mxu0 %v1778
        %1830 = vmatpush1.bf16.msra.mxu0 %v1777
        %1831 = vmatprep.subr.bf16.mxu0 %v1782
        %1832 = vmatpush1.bf16.msra.mxu0 %v1781
        %1833 = vmatprep.subr.bf16.mxu0 0
        %1834 = vmatpush1.bf16.msra.mxu0 0
        %1835 = vmatprep.subr.bf16.mxu0 0
        %1836 = vmatpush1.bf16.msra.mxu0 0
        %1837 = vmatprep.subr.bf16.mxu0 0
        %1838 = vmatpush1.bf16.msra.mxu0 0
        %1839 = vmatprep.subr.bf16.mxu0 0
        %1840 = vmatpush1.bf16.msra.mxu0 0
        %1841 = vmatprep.subr.bf16.mxu0 0
        %1842 = vmatpush1.bf16.msra.mxu0 0
        %1843 = vmatprep.subr.bf16.mxu0 0
        %1844 = vmatpush1.bf16.msra.mxu0 0
        %1845 = vmatprep.subr.bf16.mxu0 0
        %1846 = vmatpush1.bf16.msra.mxu0 0
        %1847 = vmatprep.subr.bf16.mxu0 0
        %1848 = vmatpush1.bf16.msra.mxu0 0
        %1849 = vmatprep.mubr.bf16.mxu0 0
        %1850 = vmatmul.mubr.bf16.gmra.mrb[0].mxu0 %v1624
        %v1851 = vpop.f32.mrb[0].mxu0
        %v1852 = vadd.f32 0.0, %v1851
        %v1853 = vpop.f32.mrb[0].mxu0
        %v1854 = vadd.f32 0.0, %v1853
        %v1855 = vpop.f32.mrb[0].mxu0
        %v1856 = vpop.f32.mrb[0].mxu0
        %1857 = vdwg.mxu0
        %1858 = vmatprep.subr.bf16.mxu0 %v1756
        %1859 = vmatpush1.bf16.msra.mxu0 %v1755
        %1860 = vmatprep.subr.bf16.mxu0 %v1760
        %1861 = vmatpush1.bf16.msra.mxu0 %v1759
        %1862 = vmatprep.subr.bf16.mxu0 %v1764
        %1863 = vmatpush1.bf16.msra.mxu0 %v1763
        %1864 = vmatprep.subr.bf16.mxu0 %v1768
        %1865 = vmatpush1.bf16.msra.mxu0 %v1767
        %1866 = vmatprep.subr.bf16.mxu0 %v1772
        %1867 = vmatpush1.bf16.msra.mxu0 %v1771
        %1868 = vmatprep.subr.bf16.mxu0 %v1776
        %1869 = vmatpush1.bf16.msra.mxu0 %v1775
        %1870 = vmatprep.subr.bf16.mxu0 %v1780
        %1871 = vmatpush1.bf16.msra.mxu0 %v1779
        %1872 = vmatprep.subr.bf16.mxu0 %v1784
        %1873 = vmatpush1.bf16.msra.mxu0 %v1783
        %1874 = vmatprep.subr.bf16.mxu0 0
        %1875 = vmatpush1.bf16.msra.mxu0 0
        %1876 = vmatprep.subr.bf16.mxu0 0
        %1877 = vmatpush1.bf16.msra.mxu0 0
        %1878 = vmatprep.subr.bf16.mxu0 0
        %1879 = vmatpush1.bf16.msra.mxu0 0
        %1880 = vmatprep.subr.bf16.mxu0 0
        %1881 = vmatpush1.bf16.msra.mxu0 0
        %1882 = vmatprep.subr.bf16.mxu0 0
        %1883 = vmatpush1.bf16.msra.mxu0 0
        %1884 = vmatprep.subr.bf16.mxu0 0
        %1885 = vmatpush1.bf16.msra.mxu0 0
        %1886 = vmatprep.subr.bf16.mxu0 0
        %1887 = vmatpush1.bf16.msra.mxu0 0
        %1888 = vmatprep.subr.bf16.mxu0 0
        %1889 = vmatpush1.bf16.msra.mxu0 0
        %1890 = vmatprep.mubr.bf16.mxu0 0
        %1891 = vmatmul.mubr.bf16.gmra.mrb[0].mxu0 %v1624
        %v1892 = vpop.f32.mrb[0].mxu0
        %v1893 = vadd.f32 0.0, %v1892
        %v1894 = vpop.f32.mrb[0].mxu0
        %v1895 = vadd.f32 0.0, %v1894
        %v1896 = vpop.f32.mrb[0].mxu0
        %v1897 = vpop.f32.mrb[0].mxu0
        %1898 = vdwg.mxu0
        %v1899 = vadd.f32 %v1620, %v1852
        %v1900 = vadd.f32 %v1621, %v1854
        %v1901 = vadd.f32 %v1622, %v1893
        %v1902 = vadd.f32 %v1623, %v1895
        %v1903 = vxor.u32 %v1899, 2147483648
        %v1904 = vmul.f32 %v1903, 1.442695
        %v1905 = vpow.pop %v1904
        %v1906 = vadd.f32 %v1905, 1.0
        %v1907 = vrcp.pop %v1906
        %v1908 = vmul.f32 1.0, %v1907
        %v1909 = vxor.u32 %v1900, 2147483648
        %v1910 = vmul.f32 %v1909, 1.442695
        %v1911 = vpow.pop %v1910
        %v1912 = vadd.f32 %v1911, 1.0
        %v1913 = vrcp.pop %v1912
        %v1914 = vmul.f32 1.0, %v1913
        %v1915 = vtanh.pop %v1901
        %v1916 = vxor.u32 %v1902, 2147483648
        %v1917 = vmul.f32 %v1916, 1.442695
        %v1918 = vpow.pop %v1917
        %v1919 = vadd.f32 %v1918, 1.0
        %v1920 = vrcp.pop %v1919
        %v1921 = vmul.f32 1.0, %v1920
        %v1922 = vmul.f32 %v1914, %v1618
        %v1923 = vmul.f32 %v1908, %v1915
        %v1924 = vadd.f32 %v1922, %v1923
        %v1925 = vtanh.pop %v1924
        %v1926 = vmul.f32 %v1921, %v1925
        %vm1927 = vcmp.gt.s32.totalorder %v597, 2
        %v1928 = vsel %vm1927, 1, 0
        %1929 = vset.pattern.permute.xlu0 0
        %1930 = vperm.xlu0 %1929, %v1928
        %v1931 = vpop.permute.xlu0 %1930
        %vm1932 = vcmp.eq.s32.totalorder %v1931, 1
        %v1933 = vsel %vm1932, %v1926, %v1617
        %v1934 = vsel %vm1932, %v1924, %v1618
        %1935 = vst [vmem:[#allocation4] sm:$0xff] %v1933
        %1936 = vst [vmem:[#allocation5] sm:$0xff] %v1934
        %s1937 = scalar_lea.vmem [#allocation3], 16
        %1938 = vst [vmem:[%s1937] sm:$0xff] %v1933
        %v1939 = vld [vmem:[#allocation4] sm:$0xff]
        %v1940 = vld [vmem:[#allocation5] sm:$0xff]
        %s1941 = scalar_lea.vmem [#allocation2], 96
        %v1942 = vld [vmem:[%s1941] sm:$0xff]
        %v1943 = vld [vmem:[%s1941 + $0x8] sm:$0xff]
        %v1944 = vld [vmem:[%s1941 + $0x10] sm:$0xff]
        %v1945 = vld [vmem:[%s1941 + $0x18] sm:$0xff]
        %v1946 = vpack.c.bf16 %v1939, %v1939
        %v1947 = vld [vmem:[%s485] sm:$0xff]
        %v1948 = vld [vmem:[%s485 + $0x8] sm:$0xff]
        %v1949 = vld [vmem:[%s485 + $0x10] sm:$0xff]
        %v1950 = vld [vmem:[%s485 + $0x18] sm:$0xff]
        %v1951 = vld [vmem:[%s485 + $0x20] sm:$0xff]
        %v1952 = vld [vmem:[%s485 + $0x28] sm:$0xff]
        %v1953 = vld [vmem:[%s485 + $0x30] sm:$0xff]
        %v1954 = vld [vmem:[%s485 + $0x38] sm:$0xff]
        %v1955 = vld [vmem:[%s485 + $0x40] sm:$0xff]
        %v1956 = vld [vmem:[%s485 + $0x48] sm:$0xff]
        %v1957 = vld [vmem:[%s485 + $0x50] sm:$0xff]
        %v1958 = vld [vmem:[%s485 + $0x58] sm:$0xff]
        %v1959 = vld [vmem:[%s485 + $0x60] sm:$0xff]
        %v1960 = vld [vmem:[%s485 + $0x68] sm:$0xff]
        %v1961 = vld [vmem:[%s485 + $0x70] sm:$0xff]
        %v1962 = vld [vmem:[%s485 + $0x78] sm:$0xff]
        %v1963 = vld [vmem:[%s485 + $0x80] sm:$0xff]
        %v1964 = vld [vmem:[%s485 + $0x88] sm:$0xff]
        %v1965 = vld [vmem:[%s485 + $0x90] sm:$0xff]
        %v1966 = vld [vmem:[%s485 + $0x98] sm:$0xff]
        %v1967 = vld [vmem:[%s485 + $0xa0] sm:$0xff]
        %v1968 = vld [vmem:[%s485 + $0xa8] sm:$0xff]
        %v1969 = vld [vmem:[%s485 + $0xb0] sm:$0xff]
        %v1970 = vld [vmem:[%s485 + $0xb8] sm:$0xff]
        %v1971 = vld [vmem:[%s485 + $0xc0] sm:$0xff]
        %v1972 = vld [vmem:[%s485 + $0xc8] sm:$0xff]
        %v1973 = vld [vmem:[%s485 + $0xd0] sm:$0xff]
        %v1974 = vld [vmem:[%s485 + $0xd8] sm:$0xff]
        %v1975 = vld [vmem:[%s485 + $0xe0] sm:$0xff]
        %v1976 = vld [vmem:[%s485 + $0xe8] sm:$0xff]
        %v1977 = vld [vmem:[%s485 + $0xf0] sm:$0xff]
        %v1978 = vld [vmem:[%s485 + $0xf8] sm:$0xff]
        %v2011 = vunpack.c.l.b16 %v1947
        %v2012 = vunpack.c.h.b16 %v1947
        %v2013 = vunpack.c.l.b16 %v1948
        %v2014 = vunpack.c.h.b16 %v1948
        %v2015 = vunpack.c.l.b16 %v1949
        %v2016 = vunpack.c.h.b16 %v1949
        %v2017 = vunpack.c.l.b16 %v1950
        %v2018 = vunpack.c.h.b16 %v1950
        %v2019 = vunpack.c.l.b16 %v1951
        %v2020 = vunpack.c.h.b16 %v1951
        %v2021 = vunpack.c.l.b16 %v1952
        %v2022 = vunpack.c.h.b16 %v1952
        %v2023 = vunpack.c.l.b16 %v1953
        %v2024 = vunpack.c.h.b16 %v1953
        %v2025 = vunpack.c.l.b16 %v1954
        %v2026 = vunpack.c.h.b16 %v1954
        %v2027 = vunpack.c.l.b16 %v1955
        %v2028 = vunpack.c.h.b16 %v1955
        %v2029 = vunpack.c.l.b16 %v1956
        %v2030 = vunpack.c.h.b16 %v1956
        %v2031 = vunpack.c.l.b16 %v1957
        %v2032 = vunpack.c.h.b16 %v1957
        %v2033 = vunpack.c.l.b16 %v1958
        %v2034 = vunpack.c.h.b16 %v1958
        %v2035 = vunpack.c.l.b16 %v1959
        %v2036 = vunpack.c.h.b16 %v1959
        %v2037 = vunpack.c.l.b16 %v1960
        %v2038 = vunpack.c.h.b16 %v1960
        %v2039 = vunpack.c.l.b16 %v1961
        %v2040 = vunpack.c.h.b16 %v1961
        %v2041 = vunpack.c.l.b16 %v1962
        %v2042 = vunpack.c.h.b16 %v1962
        %v2043 = vunpack.c.l.b16 %v1963
        %v2044 = vunpack.c.h.b16 %v1963
        %v2045 = vunpack.c.l.b16 %v1964
        %v2046 = vunpack.c.h.b16 %v1964
        %v2047 = vunpack.c.l.b16 %v1965
        %v2048 = vunpack.c.h.b16 %v1965
        %v2049 = vunpack.c.l.b16 %v1966
        %v2050 = vunpack.c.h.b16 %v1966
        %v2051 = vunpack.c.l.b16 %v1967
        %v2052 = vunpack.c.h.b16 %v1967
        %v2053 = vunpack.c.l.b16 %v1968
        %v2054 = vunpack.c.h.b16 %v1968
        %v2055 = vunpack.c.l.b16 %v1969
        %v2056 = vunpack.c.h.b16 %v1969
        %v2057 = vunpack.c.l.b16 %v1970
        %v2058 = vunpack.c.h.b16 %v1970
        %v2059 = vunpack.c.l.b16 %v1971
        %v2060 = vunpack.c.h.b16 %v1971
        %v2061 = vunpack.c.l.b16 %v1972
        %v2062 = vunpack.c.h.b16 %v1972
        %v2063 = vunpack.c.l.b16 %v1973
        %v2064 = vunpack.c.h.b16 %v1973
        %v2065 = vunpack.c.l.b16 %v1974
        %v2066 = vunpack.c.h.b16 %v1974
        %v2067 = vunpack.c.l.b16 %v1975
        %v2068 = vunpack.c.h.b16 %v1975
        %v2069 = vunpack.c.l.b16 %v1976
        %v2070 = vunpack.c.h.b16 %v1976
        %v2071 = vunpack.c.l.b16 %v1977
        %v2072 = vunpack.c.h.b16 %v1977
        %v2073 = vunpack.c.l.b16 %v1978
        %v2074 = vunpack.c.h.b16 %v1978
        %v2075 = vpack.c.b16 %v2015, %v2011
        %v2076 = vpack.c.b16 %v2016, %v2012
        %v2077 = vpack.c.b16 %v2017, %v2013
        %v2078 = vpack.c.b16 %v2018, %v2014
        %v2079 = vpack.c.b16 %v2023, %v2019
        %v2080 = vpack.c.b16 %v2024, %v2020
        %v2081 = vpack.c.b16 %v2025, %v2021
        %v2082 = vpack.c.b16 %v2026, %v2022
        %v2083 = vpack.c.b16 %v2031, %v2027
        %v2084 = vpack.c.b16 %v2032, %v2028
        %v2085 = vpack.c.b16 %v2033, %v2029
        %v2086 = vpack.c.b16 %v2034, %v2030
        %v2087 = vpack.c.b16 %v2039, %v2035
        %v2088 = vpack.c.b16 %v2040, %v2036
        %v2089 = vpack.c.b16 %v2041, %v2037
        %v2090 = vpack.c.b16 %v2042, %v2038
        %v2091 = vpack.c.b16 %v2047, %v2043
        %v2092 = vpack.c.b16 %v2048, %v2044
        %v2093 = vpack.c.b16 %v2049, %v2045
        %v2094 = vpack.c.b16 %v2050, %v2046
        %v2095 = vpack.c.b16 %v2055, %v2051
        %v2096 = vpack.c.b16 %v2056, %v2052
        %v2097 = vpack.c.b16 %v2057, %v2053
        %v2098 = vpack.c.b16 %v2058, %v2054
        %v2099 = vpack.c.b16 %v2063, %v2059
        %v2100 = vpack.c.b16 %v2064, %v2060
        %v2101 = vpack.c.b16 %v2065, %v2061
        %v2102 = vpack.c.b16 %v2066, %v2062
        %v2103 = vpack.c.b16 %v2071, %v2067
        %v2104 = vpack.c.b16 %v2072, %v2068
        %v2105 = vpack.c.b16 %v2073, %v2069
        %v2106 = vpack.c.b16 %v2074, %v2070
        %2139 = vmatprep.subr.bf16.mxu0 %v2076
        %2140 = vmatpush1.bf16.msra.mxu0 %v2075
        %2141 = vmatprep.subr.bf16.mxu0 %v2080
        %2142 = vmatpush1.bf16.msra.mxu0 %v2079
        %2143 = vmatprep.subr.bf16.mxu0 %v2084
        %2144 = vmatpush1.bf16.msra.mxu0 %v2083
        %2145 = vmatprep.subr.bf16.mxu0 %v2088
        %2146 = vmatpush1.bf16.msra.mxu0 %v2087
        %2147 = vmatprep.subr.bf16.mxu0 %v2092
        %2148 = vmatpush1.bf16.msra.mxu0 %v2091
        %2149 = vmatprep.subr.bf16.mxu0 %v2096
        %2150 = vmatpush1.bf16.msra.mxu0 %v2095
        %2151 = vmatprep.subr.bf16.mxu0 %v2100
        %2152 = vmatpush1.bf16.msra.mxu0 %v2099
        %2153 = vmatprep.subr.bf16.mxu0 %v2104
        %2154 = vmatpush1.bf16.msra.mxu0 %v2103
        %2155 = vmatprep.subr.bf16.mxu0 0
        %2156 = vmatpush1.bf16.msra.mxu0 0
        %2157 = vmatprep.subr.bf16.mxu0 0
        %2158 = vmatpush1.bf16.msra.mxu0 0
        %2159 = vmatprep.subr.bf16.mxu0 0
        %2160 = vmatpush1.bf16.msra.mxu0 0
        %2161 = vmatprep.subr.bf16.mxu0 0
        %2162 = vmatpush1.bf16.msra.mxu0 0
        %2163 = vmatprep.subr.bf16.mxu0 0
        %2164 = vmatpush1.bf16.msra.mxu0 0
        %2165 = vmatprep.subr.bf16.mxu0 0
        %2166 = vmatpush1.bf16.msra.mxu0 0
        %2167 = vmatprep.subr.bf16.mxu0 0
        %2168 = vmatpush1.bf16.msra.mxu0 0
        %2169 = vmatprep.subr.bf16.mxu0 0
        %2170 = vmatpush1.bf16.msra.mxu0 0
        %2171 = vmatprep.mubr.bf16.mxu0 0
        %2172 = vmatmul.mubr.bf16.gmra.mrb[0].mxu0 %v1946
        %v2173 = vpop.f32.mrb[0].mxu0
        %v2174 = vadd.f32 0.0, %v2173
        %v2175 = vpop.f32.mrb[0].mxu0
        %v2176 = vadd.f32 0.0, %v2175
        %v2177 = vpop.f32.mrb[0].mxu0
        %v2178 = vpop.f32.mrb[0].mxu0
        %2179 = vdwg.mxu0
        %2180 = vmatprep.subr.bf16.mxu0 %v2078
        %2181 = vmatpush1.bf16.msra.mxu0 %v2077
        %2182 = vmatprep.subr.bf16.mxu0 %v2082
        %2183 = vmatpush1.bf16.msra.mxu0 %v2081
        %2184 = vmatprep.subr.bf16.mxu0 %v2086
        %2185 = vmatpush1.bf16.msra.mxu0 %v2085
        %2186 = vmatprep.subr.bf16.mxu0 %v2090
        %2187 = vmatpush1.bf16.msra.mxu0 %v2089
        %2188 = vmatprep.subr.bf16.mxu0 %v2094
        %2189 = vmatpush1.bf16.msra.mxu0 %v2093
        %2190 = vmatprep.subr.bf16.mxu0 %v2098
        %2191 = vmatpush1.bf16.msra.mxu0 %v2097
        %2192 = vmatprep.subr.bf16.mxu0 %v2102
        %2193 = vmatpush1.bf16.msra.mxu0 %v2101
        %2194 = vmatprep.subr.bf16.mxu0 %v2106
        %2195 = vmatpush1.bf16.msra.mxu0 %v2105
        %2196 = vmatprep.subr.bf16.mxu0 0
        %2197 = vmatpush1.bf16.msra.mxu0 0
        %2198 = vmatprep.subr.bf16.mxu0 0
        %2199 = vmatpush1.bf16.msra.mxu0 0
        %2200 = vmatprep.subr.bf16.mxu0 0
        %2201 = vmatpush1.bf16.msra.mxu0 0
        %2202 = vmatprep.subr.bf16.mxu0 0
        %2203 = vmatpush1.bf16.msra.mxu0 0
        %2204 = vmatprep.subr.bf16.mxu0 0
        %2205 = vmatpush1.bf16.msra.mxu0 0
        %2206 = vmatprep.subr.bf16.mxu0 0
        %2207 = vmatpush1.bf16.msra.mxu0 0
        %2208 = vmatprep.subr.bf16.mxu0 0
        %2209 = vmatpush1.bf16.msra.mxu0 0
        %2210 = vmatprep.subr.bf16.mxu0 0
        %2211 = vmatpush1.bf16.msra.mxu0 0
        %2212 = vmatprep.mubr.bf16.mxu0 0
        %2213 = vmatmul.mubr.bf16.gmra.mrb[0].mxu0 %v1946
        %v2214 = vpop.f32.mrb[0].mxu0
        %v2215 = vadd.f32 0.0, %v2214
        %v2216 = vpop.f32.mrb[0].mxu0
        %v2217 = vadd.f32 0.0, %v2216
        %v2218 = vpop.f32.mrb[0].mxu0
        %v2219 = vpop.f32.mrb[0].mxu0
        %2220 = vdwg.mxu0
        %v2221 = vadd.f32 %v1942, %v2174
        %v2222 = vadd.f32 %v1943, %v2176
        %v2223 = vadd.f32 %v1944, %v2215
        %v2224 = vadd.f32 %v1945, %v2217
        %v2225 = vxor.u32 %v2221, 2147483648
        %v2226 = vmul.f32 %v2225, 1.442695
        %v2227 = vpow.pop %v2226
        %v2228 = vadd.f32 %v2227, 1.0
        %v2229 = vrcp.pop %v2228
        %v2230 = vmul.f32 1.0, %v2229
        %v2231 = vxor.u32 %v2222, 2147483648
        %v2232 = vmul.f32 %v2231, 1.442695
        %v2233 = vpow.pop %v2232
        %v2234 = vadd.f32 %v2233, 1.0
        %v2235 = vrcp.pop %v2234
        %v2236 = vmul.f32 1.0, %v2235
        %v2237 = vtanh.pop %v2223
        %v2238 = vxor.u32 %v2224, 2147483648
        %v2239 = vmul.f32 %v2238, 1.442695
        %v2240 = vpow.pop %v2239
        %v2241 = vadd.f32 %v2240, 1.0
        %v2242 = vrcp.pop %v2241
        %v2243 = vmul.f32 1.0, %v2242
        %v2244 = vmul.f32 %v2236, %v1940
        %v2245 = vmul.f32 %v2230, %v2237
        %v2246 = vadd.f32 %v2244, %v2245
        %v2247 = vtanh.pop %v2246
        %v2248 = vmul.f32 %v2243, %v2247
        %vm2249 = vcmp.gt.s32.totalorder %v597, 3
        %v2250 = vsel %vm2249, 1, 0
        %2251 = vset.pattern.permute.xlu0 0
        %2252 = vperm.xlu0 %2251, %v2250
        %v2253 = vpop.permute.xlu0 %2252
        %vm2254 = vcmp.eq.s32.totalorder %v2253, 1
        %v2255 = vsel %vm2254, %v2248, %v1939
        %v2256 = vsel %vm2254, %v2246, %v1940
        %2257 = vst [vmem:[#allocation4] sm:$0xff] %v2255
        %2258 = vst [vmem:[#allocation5] sm:$0xff] %v2256
        %s2259 = scalar_lea.vmem [#allocation3], 24
        %2260 = vst [vmem:[%s2259] sm:$0xff] %v2255
        %v2261 = vld [vmem:[#allocation4] sm:$0xff]
        %v2262 = vld [vmem:[#allocation5] sm:$0xff]
        %s2263 = scalar_lea.vmem [#allocation2], 128
        %v2264 = vld [vmem:[%s2263] sm:$0xff]
        %v2265 = vld [vmem:[%s2263 + $0x8] sm:$0xff]
        %v2266 = vld [vmem:[%s2263 + $0x10] sm:$0xff]
        %v2267 = vld [vmem:[%s2263 + $0x18] sm:$0xff]
        %v2268 = vpack.c.bf16 %v2261, %v2261
        %v2269 = vld [vmem:[%s485] sm:$0xff]
        %v2270 = vld [vmem:[%s485 + $0x8] sm:$0xff]
        %v2271 = vld [vmem:[%s485 + $0x10] sm:$0xff]
        %v2272 = vld [vmem:[%s485 + $0x18] sm:$0xff]
        %v2273 = vld [vmem:[%s485 + $0x20] sm:$0xff]
        %v2274 = vld [vmem:[%s485 + $0x28] sm:$0xff]
        %v2275 = vld [vmem:[%s485 + $0x30] sm:$0xff]
        %v2276 = vld [vmem:[%s485 + $0x38] sm:$0xff]
        %v2277 = vld [vmem:[%s485 + $0x40] sm:$0xff]
        %v2278 = vld [vmem:[%s485 + $0x48] sm:$0xff]
        %v2279 = vld [vmem:[%s485 + $0x50] sm:$0xff]
        %v2280 = vld [vmem:[%s485 + $0x58] sm:$0xff]
        %v2281 = vld [vmem:[%s485 + $0x60] sm:$0xff]
        %v2282 = vld [vmem:[%s485 + $0x68] sm:$0xff]
        %v2283 = vld [vmem:[%s485 + $0x70] sm:$0xff]
        %v2284 = vld [vmem:[%s485 + $0x78] sm:$0xff]
        %v2285 = vld [vmem:[%s485 + $0x80] sm:$0xff]
        %v2286 = vld [vmem:[%s485 + $0x88] sm:$0xff]
        %v2287 = vld [vmem:[%s485 + $0x90] sm:$0xff]
        %v2288 = vld [vmem:[%s485 + $0x98] sm:$0xff]
        %v2289 = vld [vmem:[%s485 + $0xa0] sm:$0xff]
        %v2290 = vld [vmem:[%s485 + $0xa8] sm:$0xff]
        %v2291 = vld [vmem:[%s485 + $0xb0] sm:$0xff]
        %v2292 = vld [vmem:[%s485 + $0xb8] sm:$0xff]
        %v2293 = vld [vmem:[%s485 + $0xc0] sm:$0xff]
        %v2294 = vld [vmem:[%s485 + $0xc8] sm:$0xff]
        %v2295 = vld [vmem:[%s485 + $0xd0] sm:$0xff]
        %v2296 = vld [vmem:[%s485 + $0xd8] sm:$0xff]
        %v2297 = vld [vmem:[%s485 + $0xe0] sm:$0xff]
        %v2298 = vld [vmem:[%s485 + $0xe8] sm:$0xff]
        %v2299 = vld [vmem:[%s485 + $0xf0] sm:$0xff]
        %v2300 = vld [vmem:[%s485 + $0xf8] sm:$0xff]
        %v2333 = vunpack.c.l.b16 %v2269
        %v2334 = vunpack.c.h.b16 %v2269
        %v2335 = vunpack.c.l.b16 %v2270
        %v2336 = vunpack.c.h.b16 %v2270
        %v2337 = vunpack.c.l.b16 %v2271
        %v2338 = vunpack.c.h.b16 %v2271
        %v2339 = vunpack.c.l.b16 %v2272
        %v2340 = vunpack.c.h.b16 %v2272
        %v2341 = vunpack.c.l.b16 %v2273
        %v2342 = vunpack.c.h.b16 %v2273
        %v2343 = vunpack.c.l.b16 %v2274
        %v2344 = vunpack.c.h.b16 %v2274
        %v2345 = vunpack.c.l.b16 %v2275
        %v2346 = vunpack.c.h.b16 %v2275
        %v2347 = vunpack.c.l.b16 %v2276
        %v2348 = vunpack.c.h.b16 %v2276
        %v2349 = vunpack.c.l.b16 %v2277
        %v2350 = vunpack.c.h.b16 %v2277
        %v2351 = vunpack.c.l.b16 %v2278
        %v2352 = vunpack.c.h.b16 %v2278
        %v2353 = vunpack.c.l.b16 %v2279
        %v2354 = vunpack.c.h.b16 %v2279
        %v2355 = vunpack.c.l.b16 %v2280
        %v2356 = vunpack.c.h.b16 %v2280
        %v2357 = vunpack.c.l.b16 %v2281
        %v2358 = vunpack.c.h.b16 %v2281
        %v2359 = vunpack.c.l.b16 %v2282
        %v2360 = vunpack.c.h.b16 %v2282
        %v2361 = vunpack.c.l.b16 %v2283
        %v2362 = vunpack.c.h.b16 %v2283
        %v2363 = vunpack.c.l.b16 %v2284
        %v2364 = vunpack.c.h.b16 %v2284
        %v2365 = vunpack.c.l.b16 %v2285
        %v2366 = vunpack.c.h.b16 %v2285
        %v2367 = vunpack.c.l.b16 %v2286
        %v2368 = vunpack.c.h.b16 %v2286
        %v2369 = vunpack.c.l.b16 %v2287
        %v2370 = vunpack.c.h.b16 %v2287
        %v2371 = vunpack.c.l.b16 %v2288
        %v2372 = vunpack.c.h.b16 %v2288
        %v2373 = vunpack.c.l.b16 %v2289
        %v2374 = vunpack.c.h.b16 %v2289
        %v2375 = vunpack.c.l.b16 %v2290
        %v2376 = vunpack.c.h.b16 %v2290
        %v2377 = vunpack.c.l.b16 %v2291
        %v2378 = vunpack.c.h.b16 %v2291
        %v2379 = vunpack.c.l.b16 %v2292
        %v2380 = vunpack.c.h.b16 %v2292
        %v2381 = vunpack.c.l.b16 %v2293
        %v2382 = vunpack.c.h.b16 %v2293
        %v2383 = vunpack.c.l.b16 %v2294
        %v2384 = vunpack.c.h.b16 %v2294
        %v2385 = vunpack.c.l.b16 %v2295
        %v2386 = vunpack.c.h.b16 %v2295
        %v2387 = vunpack.c.l.b16 %v2296
        %v2388 = vunpack.c.h.b16 %v2296
        %v2389 = vunpack.c.l.b16 %v2297
        %v2390 = vunpack.c.h.b16 %v2297
        %v2391 = vunpack.c.l.b16 %v2298
        %v2392 = vunpack.c.h.b16 %v2298
        %v2393 = vunpack.c.l.b16 %v2299
        %v2394 = vunpack.c.h.b16 %v2299
        %v2395 = vunpack.c.l.b16 %v2300
        %v2396 = vunpack.c.h.b16 %v2300
        %v2397 = vpack.c.b16 %v2337, %v2333
        %v2398 = vpack.c.b16 %v2338, %v2334
        %v2399 = vpack.c.b16 %v2339, %v2335
        %v2400 = vpack.c.b16 %v2340, %v2336
        %v2401 = vpack.c.b16 %v2345, %v2341
        %v2402 = vpack.c.b16 %v2346, %v2342
        %v2403 = vpack.c.b16 %v2347, %v2343
        %v2404 = vpack.c.b16 %v2348, %v2344
        %v2405 = vpack.c.b16 %v2353, %v2349
        %v2406 = vpack.c.b16 %v2354, %v2350
        %v2407 = vpack.c.b16 %v2355, %v2351
        %v2408 = vpack.c.b16 %v2356, %v2352
        %v2409 = vpack.c.b16 %v2361, %v2357
        %v2410 = vpack.c.b16 %v2362, %v2358
        %v2411 = vpack.c.b16 %v2363, %v2359
        %v2412 = vpack.c.b16 %v2364, %v2360
        %v2413 = vpack.c.b16 %v2369, %v2365
        %v2414 = vpack.c.b16 %v2370, %v2366
        %v2415 = vpack.c.b16 %v2371, %v2367
        %v2416 = vpack.c.b16 %v2372, %v2368
        %v2417 = vpack.c.b16 %v2377, %v2373
        %v2418 = vpack.c.b16 %v2378, %v2374
        %v2419 = vpack.c.b16 %v2379, %v2375
        %v2420 = vpack.c.b16 %v2380, %v2376
        %v2421 = vpack.c.b16 %v2385, %v2381
        %v2422 = vpack.c.b16 %v2386, %v2382
        %v2423 = vpack.c.b16 %v2387, %v2383
        %v2424 = vpack.c.b16 %v2388, %v2384
        %v2425 = vpack.c.b16 %v2393, %v2389
        %v2426 = vpack.c.b16 %v2394, %v2390
        %v2427 = vpack.c.b16 %v2395, %v2391
        %v2428 = vpack.c.b16 %v2396, %v2392
        %2461 = vmatprep.subr.bf16.mxu0 %v2398
        %2462 = vmatpush1.bf16.msra.mxu0 %v2397
        %2463 = vmatprep.subr.bf16.mxu0 %v2402
        %2464 = vmatpush1.bf16.msra.mxu0 %v2401
        %2465 = vmatprep.subr.bf16.mxu0 %v2406
        %2466 = vmatpush1.bf16.msra.mxu0 %v2405
        %2467 = vmatprep.subr.bf16.mxu0 %v2410
        %2468 = vmatpush1.bf16.msra.mxu0 %v2409
        %2469 = vmatprep.subr.bf16.mxu0 %v2414
        %2470 = vmatpush1.bf16.msra.mxu0 %v2413
        %2471 = vmatprep.subr.bf16.mxu0 %v2418
        %2472 = vmatpush1.bf16.msra.mxu0 %v2417
        %2473 = vmatprep.subr.bf16.mxu0 %v2422
        %2474 = vmatpush1.bf16.msra.mxu0 %v2421
        %2475 = vmatprep.subr.bf16.mxu0 %v2426
        %2476 = vmatpush1.bf16.msra.mxu0 %v2425
        %2477 = vmatprep.subr.bf16.mxu0 0
        %2478 = vmatpush1.bf16.msra.mxu0 0
        %2479 = vmatprep.subr.bf16.mxu0 0
        %2480 = vmatpush1.bf16.msra.mxu0 0
        %2481 = vmatprep.subr.bf16.mxu0 0
        %2482 = vmatpush1.bf16.msra.mxu0 0
        %2483 = vmatprep.subr.bf16.mxu0 0
        %2484 = vmatpush1.bf16.msra.mxu0 0
        %2485 = vmatprep.subr.bf16.mxu0 0
        %2486 = vmatpush1.bf16.msra.mxu0 0
        %2487 = vmatprep.subr.bf16.mxu0 0
        %2488 = vmatpush1.bf16.msra.mxu0 0
        %2489 = vmatprep.subr.bf16.mxu0 0
        %2490 = vmatpush1.bf16.msra.mxu0 0
        %2491 = vmatprep.subr.bf16.mxu0 0
        %2492 = vmatpush1.bf16.msra.mxu0 0
        %2493 = vmatprep.mubr.bf16.mxu0 0
        %2494 = vmatmul.mubr.bf16.gmra.mrb[0].mxu0 %v2268
        %v2495 = vpop.f32.mrb[0].mxu0
        %v2496 = vadd.f32 0.0, %v2495
        %v2497 = vpop.f32.mrb[0].mxu0
        %v2498 = vadd.f32 0.0, %v2497
        %v2499 = vpop.f32.mrb[0].mxu0
        %v2500 = vpop.f32.mrb[0].mxu0
        %2501 = vdwg.mxu0
        %2502 = vmatprep.subr.bf16.mxu0 %v2400
        %2503 = vmatpush1.bf16.msra.mxu0 %v2399
        %2504 = vmatprep.subr.bf16.mxu0 %v2404
        %2505 = vmatpush1.bf16.msra.mxu0 %v2403
        %2506 = vmatprep.subr.bf16.mxu0 %v2408
        %2507 = vmatpush1.bf16.msra.mxu0 %v2407
        %2508 = vmatprep.subr.bf16.mxu0 %v2412
        %2509 = vmatpush1.bf16.msra.mxu0 %v2411
        %2510 = vmatprep.subr.bf16.mxu0 %v2416
        %2511 = vmatpush1.bf16.msra.mxu0 %v2415
        %2512 = vmatprep.subr.bf16.mxu0 %v2420
        %2513 = vmatpush1.bf16.msra.mxu0 %v2419
        %2514 = vmatprep.subr.bf16.mxu0 %v2424
        %2515 = vmatpush1.bf16.msra.mxu0 %v2423
        %2516 = vmatprep.subr.bf16.mxu0 %v2428
        %2517 = vmatpush1.bf16.msra.mxu0 %v2427
        %2518 = vmatprep.subr.bf16.mxu0 0
        %2519 = vmatpush1.bf16.msra.mxu0 0
        %2520 = vmatprep.subr.bf16.mxu0 0
        %2521 = vmatpush1.bf16.msra.mxu0 0
        %2522 = vmatprep.subr.bf16.mxu0 0
        %2523 = vmatpush1.bf16.msra.mxu0 0
        %2524 = vmatprep.subr.bf16.mxu0 0
        %2525 = vmatpush1.bf16.msra.mxu0 0
        %2526 = vmatprep.subr.bf16.mxu0 0
        %2527 = vmatpush1.bf16.msra.mxu0 0
        %2528 = vmatprep.subr.bf16.mxu0 0
        %2529 = vmatpush1.bf16.msra.mxu0 0
        %2530 = vmatprep.subr.bf16.mxu0 0
        %2531 = vmatpush1.bf16.msra.mxu0 0
        %2532 = vmatprep.subr.bf16.mxu0 0
        %2533 = vmatpush1.bf16.msra.mxu0 0
        %2534 = vmatprep.mubr.bf16.mxu0 0
        %2535 = vmatmul.mubr.bf16.gmra.mrb[0].mxu0 %v2268
        %v2536 = vpop.f32.mrb[0].mxu0
        %v2537 = vadd.f32 0.0, %v2536
        %v2538 = vpop.f32.mrb[0].mxu0
        %v2539 = vadd.f32 0.0, %v2538
        %v2540 = vpop.f32.mrb[0].mxu0
        %v2541 = vpop.f32.mrb[0].mxu0
        %2542 = vdwg.mxu0
        %v2543 = vadd.f32 %v2264, %v2496
        %v2544 = vadd.f32 %v2265, %v2498
        %v2545 = vadd.f32 %v2266, %v2537
        %v2546 = vadd.f32 %v2267, %v2539
        %v2547 = vxor.u32 %v2543, 2147483648
        %v2548 = vmul.f32 %v2547, 1.442695
        %v2549 = vpow.pop %v2548
        %v2550 = vadd.f32 %v2549, 1.0
        %v2551 = vrcp.pop %v2550
        %v2552 = vmul.f32 1.0, %v2551
        %v2553 = vxor.u32 %v2544, 2147483648
        %v2554 = vmul.f32 %v2553, 1.442695
        %v2555 = vpow.pop %v2554
        %v2556 = vadd.f32 %v2555, 1.0
        %v2557 = vrcp.pop %v2556
        %v2558 = vmul.f32 1.0, %v2557
        %v2559 = vtanh.pop %v2545
        %v2560 = vxor.u32 %v2546, 2147483648
        %v2561 = vmul.f32 %v2560, 1.442695
        %v2562 = vpow.pop %v2561
        %v2563 = vadd.f32 %v2562, 1.0
        %v2564 = vrcp.pop %v2563
        %v2565 = vmul.f32 1.0, %v2564
        %v2566 = vmul.f32 %v2558, %v2262
        %v2567 = vmul.f32 %v2552, %v2559
        %v2568 = vadd.f32 %v2566, %v2567
        %v2569 = vtanh.pop %v2568
        %v2570 = vmul.f32 %v2565, %v2569
        %vm2571 = vcmp.gt.s32.totalorder %v597, 4
        %v2572 = vsel %vm2571, 1, 0
        %2573 = vset.pattern.permute.xlu0 0
        %2574 = vperm.xlu0 %2573, %v2572
        %v2575 = vpop.permute.xlu0 %2574
        %vm2576 = vcmp.eq.s32.totalorder %v2575, 1
        %v2577 = vsel %vm2576, %v2570, %v2261
        %v2578 = vsel %vm2576, %v2568, %v2262
        %2579 = vst [vmem:[#allocation4] sm:$0xff] %v2577
        %2580 = vst [vmem:[#allocation5] sm:$0xff] %v2578
        %s2581 = scalar_lea.vmem [#allocation3], 32
        %2582 = vst [vmem:[%s2581] sm:$0xff] %v2577
        %v2583 = vld [vmem:[#allocation4] sm:$0xff]
        %v2584 = vld [vmem:[#allocation5] sm:$0xff]
        %s2585 = scalar_lea.vmem [#allocation2], 160
        %v2586 = vld [vmem:[%s2585] sm:$0xff]
        %v2587 = vld [vmem:[%s2585 + $0x8] sm:$0xff]
        %v2588 = vld [vmem:[%s2585 + $0x10] sm:$0xff]
        %v2589 = vld [vmem:[%s2585 + $0x18] sm:$0xff]
        %v2590 = vpack.c.bf16 %v2583, %v2583
        %v2591 = vld [vmem:[%s485] sm:$0xff]
        %v2592 = vld [vmem:[%s485 + $0x8] sm:$0xff]
        %v2593 = vld [vmem:[%s485 + $0x10] sm:$0xff]
        %v2594 = vld [vmem:[%s485 + $0x18] sm:$0xff]
        %v2595 = vld [vmem:[%s485 + $0x20] sm:$0xff]
        %v2596 = vld [vmem:[%s485 + $0x28] sm:$0xff]
        %v2597 = vld [vmem:[%s485 + $0x30] sm:$0xff]
        %v2598 = vld [vmem:[%s485 + $0x38] sm:$0xff]
        %v2599 = vld [vmem:[%s485 + $0x40] sm:$0xff]
        %v2600 = vld [vmem:[%s485 + $0x48] sm:$0xff]
        %v2601 = vld [vmem:[%s485 + $0x50] sm:$0xff]
        %v2602 = vld [vmem:[%s485 + $0x58] sm:$0xff]
        %v2603 = vld [vmem:[%s485 + $0x60] sm:$0xff]
        %v2604 = vld [vmem:[%s485 + $0x68] sm:$0xff]
        %v2605 = vld [vmem:[%s485 + $0x70] sm:$0xff]
        %v2606 = vld [vmem:[%s485 + $0x78] sm:$0xff]
        %v2607 = vld [vmem:[%s485 + $0x80] sm:$0xff]
        %v2608 = vld [vmem:[%s485 + $0x88] sm:$0xff]
        %v2609 = vld [vmem:[%s485 + $0x90] sm:$0xff]
        %v2610 = vld [vmem:[%s485 + $0x98] sm:$0xff]
        %v2611 = vld [vmem:[%s485 + $0xa0] sm:$0xff]
        %v2612 = vld [vmem:[%s485 + $0xa8] sm:$0xff]
        %v2613 = vld [vmem:[%s485 + $0xb0] sm:$0xff]
        %v2614 = vld [vmem:[%s485 + $0xb8] sm:$0xff]
        %v2615 = vld [vmem:[%s485 + $0xc0] sm:$0xff]
        %v2616 = vld [vmem:[%s485 + $0xc8] sm:$0xff]
        %v2617 = vld [vmem:[%s485 + $0xd0] sm:$0xff]
        %v2618 = vld [vmem:[%s485 + $0xd8] sm:$0xff]
        %v2619 = vld [vmem:[%s485 + $0xe0] sm:$0xff]
        %v2620 = vld [vmem:[%s485 + $0xe8] sm:$0xff]
        %v2621 = vld [vmem:[%s485 + $0xf0] sm:$0xff]
        %v2622 = vld [vmem:[%s485 + $0xf8] sm:$0xff]
        %v2655 = vunpack.c.l.b16 %v2591
        %v2656 = vunpack.c.h.b16 %v2591
        %v2657 = vunpack.c.l.b16 %v2592
        %v2658 = vunpack.c.h.b16 %v2592
        %v2659 = vunpack.c.l.b16 %v2593
        %v2660 = vunpack.c.h.b16 %v2593
        %v2661 = vunpack.c.l.b16 %v2594
        %v2662 = vunpack.c.h.b16 %v2594
        %v2663 = vunpack.c.l.b16 %v2595
        %v2664 = vunpack.c.h.b16 %v2595
        %v2665 = vunpack.c.l.b16 %v2596
        %v2666 = vunpack.c.h.b16 %v2596
        %v2667 = vunpack.c.l.b16 %v2597
        %v2668 = vunpack.c.h.b16 %v2597
        %v2669 = vunpack.c.l.b16 %v2598
        %v2670 = vunpack.c.h.b16 %v2598
        %v2671 = vunpack.c.l.b16 %v2599
        %v2672 = vunpack.c.h.b16 %v2599
        %v2673 = vunpack.c.l.b16 %v2600
        %v2674 = vunpack.c.h.b16 %v2600
        %v2675 = vunpack.c.l.b16 %v2601
        %v2676 = vunpack.c.h.b16 %v2601
        %v2677 = vunpack.c.l.b16 %v2602
        %v2678 = vunpack.c.h.b16 %v2602
        %v2679 = vunpack.c.l.b16 %v2603
        %v2680 = vunpack.c.h.b16 %v2603
        %v2681 = vunpack.c.l.b16 %v2604
        %v2682 = vunpack.c.h.b16 %v2604
        %v2683 = vunpack.c.l.b16 %v2605
        %v2684 = vunpack.c.h.b16 %v2605
        %v2685 = vunpack.c.l.b16 %v2606
        %v2686 = vunpack.c.h.b16 %v2606
        %v2687 = vunpack.c.l.b16 %v2607
        %v2688 = vunpack.c.h.b16 %v2607
        %v2689 = vunpack.c.l.b16 %v2608
        %v2690 = vunpack.c.h.b16 %v2608
        %v2691 = vunpack.c.l.b16 %v2609
        %v2692 = vunpack.c.h.b16 %v2609
        %v2693 = vunpack.c.l.b16 %v2610
        %v2694 = vunpack.c.h.b16 %v2610
        %v2695 = vunpack.c.l.b16 %v2611
        %v2696 = vunpack.c.h.b16 %v2611
        %v2697 = vunpack.c.l.b16 %v2612
        %v2698 = vunpack.c.h.b16 %v2612
        %v2699 = vunpack.c.l.b16 %v2613
        %v2700 = vunpack.c.h.b16 %v2613
        %v2701 = vunpack.c.l.b16 %v2614
        %v2702 = vunpack.c.h.b16 %v2614
        %v2703 = vunpack.c.l.b16 %v2615
        %v2704 = vunpack.c.h.b16 %v2615
        %v2705 = vunpack.c.l.b16 %v2616
        %v2706 = vunpack.c.h.b16 %v2616
        %v2707 = vunpack.c.l.b16 %v2617
        %v2708 = vunpack.c.h.b16 %v2617
        %v2709 = vunpack.c.l.b16 %v2618
        %v2710 = vunpack.c.h.b16 %v2618
        %v2711 = vunpack.c.l.b16 %v2619
        %v2712 = vunpack.c.h.b16 %v2619
        %v2713 = vunpack.c.l.b16 %v2620
        %v2714 = vunpack.c.h.b16 %v2620
        %v2715 = vunpack.c.l.b16 %v2621
        %v2716 = vunpack.c.h.b16 %v2621
        %v2717 = vunpack.c.l.b16 %v2622
        %v2718 = vunpack.c.h.b16 %v2622
        %v2719 = vpack.c.b16 %v2659, %v2655
        %v2720 = vpack.c.b16 %v2660, %v2656
        %v2721 = vpack.c.b16 %v2661, %v2657
        %v2722 = vpack.c.b16 %v2662, %v2658
        %v2723 = vpack.c.b16 %v2667, %v2663
        %v2724 = vpack.c.b16 %v2668, %v2664
        %v2725 = vpack.c.b16 %v2669, %v2665
        %v2726 = vpack.c.b16 %v2670, %v2666
        %v2727 = vpack.c.b16 %v2675, %v2671
        %v2728 = vpack.c.b16 %v2676, %v2672
        %v2729 = vpack.c.b16 %v2677, %v2673
        %v2730 = vpack.c.b16 %v2678, %v2674
        %v2731 = vpack.c.b16 %v2683, %v2679
        %v2732 = vpack.c.b16 %v2684, %v2680
        %v2733 = vpack.c.b16 %v2685, %v2681
        %v2734 = vpack.c.b16 %v2686, %v2682
        %v2735 = vpack.c.b16 %v2691, %v2687
        %v2736 = vpack.c.b16 %v2692, %v2688
        %v2737 = vpack.c.b16 %v2693, %v2689
        %v2738 = vpack.c.b16 %v2694, %v2690
        %v2739 = vpack.c.b16 %v2699, %v2695
        %v2740 = vpack.c.b16 %v2700, %v2696
        %v2741 = vpack.c.b16 %v2701, %v2697
        %v2742 = vpack.c.b16 %v2702, %v2698
        %v2743 = vpack.c.b16 %v2707, %v2703
        %v2744 = vpack.c.b16 %v2708, %v2704
        %v2745 = vpack.c.b16 %v2709, %v2705
        %v2746 = vpack.c.b16 %v2710, %v2706
        %v2747 = vpack.c.b16 %v2715, %v2711
        %v2748 = vpack.c.b16 %v2716, %v2712
        %v2749 = vpack.c.b16 %v2717, %v2713
        %v2750 = vpack.c.b16 %v2718, %v2714
        %2783 = vmatprep.subr.bf16.mxu0 %v2720
        %2784 = vmatpush1.bf16.msra.mxu0 %v2719
        %2785 = vmatprep.subr.bf16.mxu0 %v2724
        %2786 = vmatpush1.bf16.msra.mxu0 %v2723
        %2787 = vmatprep.subr.bf16.mxu0 %v2728
        %2788 = vmatpush1.bf16.msra.mxu0 %v2727
        %2789 = vmatprep.subr.bf16.mxu0 %v2732
        %2790 = vmatpush1.bf16.msra.mxu0 %v2731
        %2791 = vmatprep.subr.bf16.mxu0 %v2736
        %2792 = vmatpush1.bf16.msra.mxu0 %v2735
        %2793 = vmatprep.subr.bf16.mxu0 %v2740
        %2794 = vmatpush1.bf16.msra.mxu0 %v2739
        %2795 = vmatprep.subr.bf16.mxu0 %v2744
        %2796 = vmatpush1.bf16.msra.mxu0 %v2743
        %2797 = vmatprep.subr.bf16.mxu0 %v2748
        %2798 = vmatpush1.bf16.msra.mxu0 %v2747
        %2799 = vmatprep.subr.bf16.mxu0 0
        %2800 = vmatpush1.bf16.msra.mxu0 0
        %2801 = vmatprep.subr.bf16.mxu0 0
        %2802 = vmatpush1.bf16.msra.mxu0 0
        %2803 = vmatprep.subr.bf16.mxu0 0
        %2804 = vmatpush1.bf16.msra.mxu0 0
        %2805 = vmatprep.subr.bf16.mxu0 0
        %2806 = vmatpush1.bf16.msra.mxu0 0
        %2807 = vmatprep.subr.bf16.mxu0 0
        %2808 = vmatpush1.bf16.msra.mxu0 0
        %2809 = vmatprep.subr.bf16.mxu0 0
        %2810 = vmatpush1.bf16.msra.mxu0 0
        %2811 = vmatprep.subr.bf16.mxu0 0
        %2812 = vmatpush1.bf16.msra.mxu0 0
        %2813 = vmatprep.subr.bf16.mxu0 0
        %2814 = vmatpush1.bf16.msra.mxu0 0
        %2815 = vmatprep.mubr.bf16.mxu0 0
        %2816 = vmatmul.mubr.bf16.gmra.mrb[0].mxu0 %v2590
        %v2817 = vpop.f32.mrb[0].mxu0
        %v2818 = vadd.f32 0.0, %v2817
        %v2819 = vpop.f32.mrb[0].mxu0
        %v2820 = vadd.f32 0.0, %v2819
        %v2821 = vpop.f32.mrb[0].mxu0
        %v2822 = vpop.f32.mrb[0].mxu0
        %2823 = vdwg.mxu0
        %2824 = vmatprep.subr.bf16.mxu0 %v2722
        %2825 = vmatpush1.bf16.msra.mxu0 %v2721
        %2826 = vmatprep.subr.bf16.mxu0 %v2726
        %2827 = vmatpush1.bf16.msra.mxu0 %v2725
        %2828 = vmatprep.subr.bf16.mxu0 %v2730
        %2829 = vmatpush1.bf16.msra.mxu0 %v2729
        %2830 = vmatprep.subr.bf16.mxu0 %v2734
        %2831 = vmatpush1.bf16.msra.mxu0 %v2733
        %2832 = vmatprep.subr.bf16.mxu0 %v2738
        %2833 = vmatpush1.bf16.msra.mxu0 %v2737
        %2834 = vmatprep.subr.bf16.mxu0 %v2742
        %2835 = vmatpush1.bf16.msra.mxu0 %v2741
        %2836 = vmatprep.subr.bf16.mxu0 %v2746
        %2837 = vmatpush1.bf16.msra.mxu0 %v2745
        %2838 = vmatprep.subr.bf16.mxu0 %v2750
        %2839 = vmatpush1.bf16.msra.mxu0 %v2749
        %2840 = vmatprep.subr.bf16.mxu0 0
        %2841 = vmatpush1.bf16.msra.mxu0 0
        %2842 = vmatprep.subr.bf16.mxu0 0
        %2843 = vmatpush1.bf16.msra.mxu0 0
        %2844 = vmatprep.subr.bf16.mxu0 0
        %2845 = vmatpush1.bf16.msra.mxu0 0
        %2846 = vmatprep.subr.bf16.mxu0 0
        %2847 = vmatpush1.bf16.msra.mxu0 0
        %2848 = vmatprep.subr.bf16.mxu0 0
        %2849 = vmatpush1.bf16.msra.mxu0 0
        %2850 = vmatprep.subr.bf16.mxu0 0
        %2851 = vmatpush1.bf16.msra.mxu0 0
        %2852 = vmatprep.subr.bf16.mxu0 0
        %2853 = vmatpush1.bf16.msra.mxu0 0
        %2854 = vmatprep.subr.bf16.mxu0 0
        %2855 = vmatpush1.bf16.msra.mxu0 0
        %2856 = vmatprep.mubr.bf16.mxu0 0
        %2857 = vmatmul.mubr.bf16.gmra.mrb[0].mxu0 %v2590
        %v2858 = vpop.f32.mrb[0].mxu0
        %v2859 = vadd.f32 0.0, %v2858
        %v2860 = vpop.f32.mrb[0].mxu0
        %v2861 = vadd.f32 0.0, %v2860
        %v2862 = vpop.f32.mrb[0].mxu0
        %v2863 = vpop.f32.mrb[0].mxu0
        %2864 = vdwg.mxu0
        %v2865 = vadd.f32 %v2586, %v2818
        %v2866 = vadd.f32 %v2587, %v2820
        %v2867 = vadd.f32 %v2588, %v2859
        %v2868 = vadd.f32 %v2589, %v2861
        %v2869 = vxor.u32 %v2865, 2147483648
        %v2870 = vmul.f32 %v2869, 1.442695
        %v2871 = vpow.pop %v2870
        %v2872 = vadd.f32 %v2871, 1.0
        %v2873 = vrcp.pop %v2872
        %v2874 = vmul.f32 1.0, %v2873
        %v2875 = vxor.u32 %v2866, 2147483648
        %v2876 = vmul.f32 %v2875, 1.442695
        %v2877 = vpow.pop %v2876
        %v2878 = vadd.f32 %v2877, 1.0
        %v2879 = vrcp.pop %v2878
        %v2880 = vmul.f32 1.0, %v2879
        %v2881 = vtanh.pop %v2867
        %v2882 = vxor.u32 %v2868, 2147483648
        %v2883 = vmul.f32 %v2882, 1.442695
        %v2884 = vpow.pop %v2883
        %v2885 = vadd.f32 %v2884, 1.0
        %v2886 = vrcp.pop %v2885
        %v2887 = vmul.f32 1.0, %v2886
        %v2888 = vmul.f32 %v2880, %v2584
        %v2889 = vmul.f32 %v2874, %v2881
        %v2890 = vadd.f32 %v2888, %v2889
        %v2891 = vtanh.pop %v2890
        %v2892 = vmul.f32 %v2887, %v2891
        %vm2893 = vcmp.gt.s32.totalorder %v597, 5
        %v2894 = vsel %vm2893, 1, 0
        %2895 = vset.pattern.permute.xlu0 0
        %2896 = vperm.xlu0 %2895, %v2894
        %v2897 = vpop.permute.xlu0 %2896
        %vm2898 = vcmp.eq.s32.totalorder %v2897, 1
        %v2899 = vsel %vm2898, %v2892, %v2583
        %v2900 = vsel %vm2898, %v2890, %v2584
        %2901 = vst [vmem:[#allocation4] sm:$0xff] %v2899
        %2902 = vst [vmem:[#allocation5] sm:$0xff] %v2900
        %s2903 = scalar_lea.vmem [#allocation3], 40
        %2904 = vst [vmem:[%s2903] sm:$0xff] %v2899
        %v2905 = vld [vmem:[#allocation4] sm:$0xff]
        %v2906 = vld [vmem:[#allocation5] sm:$0xff]
        %s2907 = scalar_lea.vmem [#allocation2], 192
        %v2908 = vld [vmem:[%s2907] sm:$0xff]
        %v2909 = vld [vmem:[%s2907 + $0x8] sm:$0xff]
        %v2910 = vld [vmem:[%s2907 + $0x10] sm:$0xff]
        %v2911 = vld [vmem:[%s2907 + $0x18] sm:$0xff]
        %v2912 = vpack.c.bf16 %v2905, %v2905
        %v2913 = vld [vmem:[%s485] sm:$0xff]
        %v2914 = vld [vmem:[%s485 + $0x8] sm:$0xff]
        %v2915 = vld [vmem:[%s485 + $0x10] sm:$0xff]
        %v2916 = vld [vmem:[%s485 + $0x18] sm:$0xff]
        %v2917 = vld [vmem:[%s485 + $0x20] sm:$0xff]
        %v2918 = vld [vmem:[%s485 + $0x28] sm:$0xff]
        %v2919 = vld [vmem:[%s485 + $0x30] sm:$0xff]
        %v2920 = vld [vmem:[%s485 + $0x38] sm:$0xff]
        %v2921 = vld [vmem:[%s485 + $0x40] sm:$0xff]
        %v2922 = vld [vmem:[%s485 + $0x48] sm:$0xff]
        %v2923 = vld [vmem:[%s485 + $0x50] sm:$0xff]
        %v2924 = vld [vmem:[%s485 + $0x58] sm:$0xff]
        %v2925 = vld [vmem:[%s485 + $0x60] sm:$0xff]
        %v2926 = vld [vmem:[%s485 + $0x68] sm:$0xff]
        %v2927 = vld [vmem:[%s485 + $0x70] sm:$0xff]
        %v2928 = vld [vmem:[%s485 + $0x78] sm:$0xff]
        %v2929 = vld [vmem:[%s485 + $0x80] sm:$0xff]
        %v2930 = vld [vmem:[%s485 + $0x88] sm:$0xff]
        %v2931 = vld [vmem:[%s485 + $0x90] sm:$0xff]
        %v2932 = vld [vmem:[%s485 + $0x98] sm:$0xff]
        %v2933 = vld [vmem:[%s485 + $0xa0] sm:$0xff]
        %v2934 = vld [vmem:[%s485 + $0xa8] sm:$0xff]
        %v2935 = vld [vmem:[%s485 + $0xb0] sm:$0xff]
        %v2936 = vld [vmem:[%s485 + $0xb8] sm:$0xff]
        %v2937 = vld [vmem:[%s485 + $0xc0] sm:$0xff]
        %v2938 = vld [vmem:[%s485 + $0xc8] sm:$0xff]
        %v2939 = vld [vmem:[%s485 + $0xd0] sm:$0xff]
        %v2940 = vld [vmem:[%s485 + $0xd8] sm:$0xff]
        %v2941 = vld [vmem:[%s485 + $0xe0] sm:$0xff]
        %v2942 = vld [vmem:[%s485 + $0xe8] sm:$0xff]
        %v2943 = vld [vmem:[%s485 + $0xf0] sm:$0xff]
        %v2944 = vld [vmem:[%s485 + $0xf8] sm:$0xff]
        %v2977 = vunpack.c.l.b16 %v2913
        %v2978 = vunpack.c.h.b16 %v2913
        %v2979 = vunpack.c.l.b16 %v2914
        %v2980 = vunpack.c.h.b16 %v2914
        %v2981 = vunpack.c.l.b16 %v2915
        %v2982 = vunpack.c.h.b16 %v2915
        %v2983 = vunpack.c.l.b16 %v2916
        %v2984 = vunpack.c.h.b16 %v2916
        %v2985 = vunpack.c.l.b16 %v2917
        %v2986 = vunpack.c.h.b16 %v2917
        %v2987 = vunpack.c.l.b16 %v2918
        %v2988 = vunpack.c.h.b16 %v2918
        %v2989 = vunpack.c.l.b16 %v2919
        %v2990 = vunpack.c.h.b16 %v2919
        %v2991 = vunpack.c.l.b16 %v2920
        %v2992 = vunpack.c.h.b16 %v2920
        %v2993 = vunpack.c.l.b16 %v2921
        %v2994 = vunpack.c.h.b16 %v2921
        %v2995 = vunpack.c.l.b16 %v2922
        %v2996 = vunpack.c.h.b16 %v2922
        %v2997 = vunpack.c.l.b16 %v2923
        %v2998 = vunpack.c.h.b16 %v2923
        %v2999 = vunpack.c.l.b16 %v2924
        %v3000 = vunpack.c.h.b16 %v2924
        %v3001 = vunpack.c.l.b16 %v2925
        %v3002 = vunpack.c.h.b16 %v2925
        %v3003 = vunpack.c.l.b16 %v2926
        %v3004 = vunpack.c.h.b16 %v2926
        %v3005 = vunpack.c.l.b16 %v2927
        %v3006 = vunpack.c.h.b16 %v2927
        %v3007 = vunpack.c.l.b16 %v2928
        %v3008 = vunpack.c.h.b16 %v2928
        %v3009 = vunpack.c.l.b16 %v2929
        %v3010 = vunpack.c.h.b16 %v2929
        %v3011 = vunpack.c.l.b16 %v2930
        %v3012 = vunpack.c.h.b16 %v2930
        %v3013 = vunpack.c.l.b16 %v2931
        %v3014 = vunpack.c.h.b16 %v2931
        %v3015 = vunpack.c.l.b16 %v2932
        %v3016 = vunpack.c.h.b16 %v2932
        %v3017 = vunpack.c.l.b16 %v2933
        %v3018 = vunpack.c.h.b16 %v2933
        %v3019 = vunpack.c.l.b16 %v2934
        %v3020 = vunpack.c.h.b16 %v2934
        %v3021 = vunpack.c.l.b16 %v2935
        %v3022 = vunpack.c.h.b16 %v2935
        %v3023 = vunpack.c.l.b16 %v2936
        %v3024 = vunpack.c.h.b16 %v2936
        %v3025 = vunpack.c.l.b16 %v2937
        %v3026 = vunpack.c.h.b16 %v2937
        %v3027 = vunpack.c.l.b16 %v2938
        %v3028 = vunpack.c.h.b16 %v2938
        %v3029 = vunpack.c.l.b16 %v2939
        %v3030 = vunpack.c.h.b16 %v2939
        %v3031 = vunpack.c.l.b16 %v2940
        %v3032 = vunpack.c.h.b16 %v2940
        %v3033 = vunpack.c.l.b16 %v2941
        %v3034 = vunpack.c.h.b16 %v2941
        %v3035 = vunpack.c.l.b16 %v2942
        %v3036 = vunpack.c.h.b16 %v2942
        %v3037 = vunpack.c.l.b16 %v2943
        %v3038 = vunpack.c.h.b16 %v2943
        %v3039 = vunpack.c.l.b16 %v2944
        %v3040 = vunpack.c.h.b16 %v2944
        %v3041 = vpack.c.b16 %v2981, %v2977
        %v3042 = vpack.c.b16 %v2982, %v2978
        %v3043 = vpack.c.b16 %v2983, %v2979
        %v3044 = vpack.c.b16 %v2984, %v2980
        %v3045 = vpack.c.b16 %v2989, %v2985
        %v3046 = vpack.c.b16 %v2990, %v2986
        %v3047 = vpack.c.b16 %v2991, %v2987
        %v3048 = vpack.c.b16 %v2992, %v2988
        %v3049 = vpack.c.b16 %v2997, %v2993
        %v3050 = vpack.c.b16 %v2998, %v2994
        %v3051 = vpack.c.b16 %v2999, %v2995
        %v3052 = vpack.c.b16 %v3000, %v2996
        %v3053 = vpack.c.b16 %v3005, %v3001
        %v3054 = vpack.c.b16 %v3006, %v3002
        %v3055 = vpack.c.b16 %v3007, %v3003
        %v3056 = vpack.c.b16 %v3008, %v3004
        %v3057 = vpack.c.b16 %v3013, %v3009
        %v3058 = vpack.c.b16 %v3014, %v3010
        %v3059 = vpack.c.b16 %v3015, %v3011
        %v3060 = vpack.c.b16 %v3016, %v3012
        %v3061 = vpack.c.b16 %v3021, %v3017
        %v3062 = vpack.c.b16 %v3022, %v3018
        %v3063 = vpack.c.b16 %v3023, %v3019
        %v3064 = vpack.c.b16 %v3024, %v3020
        %v3065 = vpack.c.b16 %v3029, %v3025
        %v3066 = vpack.c.b16 %v3030, %v3026
        %v3067 = vpack.c.b16 %v3031, %v3027
        %v3068 = vpack.c.b16 %v3032, %v3028
        %v3069 = vpack.c.b16 %v3037, %v3033
        %v3070 = vpack.c.b16 %v3038, %v3034
        %v3071 = vpack.c.b16 %v3039, %v3035
        %v3072 = vpack.c.b16 %v3040, %v3036
        %3105 = vmatprep.subr.bf16.mxu0 %v3042
        %3106 = vmatpush1.bf16.msra.mxu0 %v3041
        %3107 = vmatprep.subr.bf16.mxu0 %v3046
        %3108 = vmatpush1.bf16.msra.mxu0 %v3045
        %3109 = vmatprep.subr.bf16.mxu0 %v3050
        %3110 = vmatpush1.bf16.msra.mxu0 %v3049
        %3111 = vmatprep.subr.bf16.mxu0 %v3054
        %3112 = vmatpush1.bf16.msra.mxu0 %v3053
        %3113 = vmatprep.subr.bf16.mxu0 %v3058
        %3114 = vmatpush1.bf16.msra.mxu0 %v3057
        %3115 = vmatprep.subr.bf16.mxu0 %v3062
        %3116 = vmatpush1.bf16.msra.mxu0 %v3061
        %3117 = vmatprep.subr.bf16.mxu0 %v3066
        %3118 = vmatpush1.bf16.msra.mxu0 %v3065
        %3119 = vmatprep.subr.bf16.mxu0 %v3070
        %3120 = vmatpush1.bf16.msra.mxu0 %v3069
        %3121 = vmatprep.subr.bf16.mxu0 0
        %3122 = vmatpush1.bf16.msra.mxu0 0
        %3123 = vmatprep.subr.bf16.mxu0 0
        %3124 = vmatpush1.bf16.msra.mxu0 0
        %3125 = vmatprep.subr.bf16.mxu0 0
        %3126 = vmatpush1.bf16.msra.mxu0 0
        %3127 = vmatprep.subr.bf16.mxu0 0
        %3128 = vmatpush1.bf16.msra.mxu0 0
        %3129 = vmatprep.subr.bf16.mxu0 0
        %3130 = vmatpush1.bf16.msra.mxu0 0
        %3131 = vmatprep.subr.bf16.mxu0 0
        %3132 = vmatpush1.bf16.msra.mxu0 0
        %3133 = vmatprep.subr.bf16.mxu0 0
        %3134 = vmatpush1.bf16.msra.mxu0 0
        %3135 = vmatprep.subr.bf16.mxu0 0
        %3136 = vmatpush1.bf16.msra.mxu0 0
        %3137 = vmatprep.mubr.bf16.mxu0 0
        %3138 = vmatmul.mubr.bf16.gmra.mrb[0].mxu0 %v2912
        %v3139 = vpop.f32.mrb[0].mxu0
        %v3140 = vadd.f32 0.0, %v3139
        %v3141 = vpop.f32.mrb[0].mxu0
        %v3142 = vadd.f32 0.0, %v3141
        %v3143 = vpop.f32.mrb[0].mxu0
        %v3144 = vpop.f32.mrb[0].mxu0
        %3145 = vdwg.mxu0
        %3146 = vmatprep.subr.bf16.mxu0 %v3044
        %3147 = vmatpush1.bf16.msra.mxu0 %v3043
        %3148 = vmatprep.subr.bf16.mxu0 %v3048
        %3149 = vmatpush1.bf16.msra.mxu0 %v3047
        %3150 = vmatprep.subr.bf16.mxu0 %v3052
        %3151 = vmatpush1.bf16.msra.mxu0 %v3051
        %3152 = vmatprep.subr.bf16.mxu0 %v3056
        %3153 = vmatpush1.bf16.msra.mxu0 %v3055
        %3154 = vmatprep.subr.bf16.mxu0 %v3060
        %3155 = vmatpush1.bf16.msra.mxu0 %v3059
        %3156 = vmatprep.subr.bf16.mxu0 %v3064
        %3157 = vmatpush1.bf16.msra.mxu0 %v3063
        %3158 = vmatprep.subr.bf16.mxu0 %v3068
        %3159 = vmatpush1.bf16.msra.mxu0 %v3067
        %3160 = vmatprep.subr.bf16.mxu0 %v3072
        %3161 = vmatpush1.bf16.msra.mxu0 %v3071
        %3162 = vmatprep.subr.bf16.mxu0 0
        %3163 = vmatpush1.bf16.msra.mxu0 0
        %3164 = vmatprep.subr.bf16.mxu0 0
        %3165 = vmatpush1.bf16.msra.mxu0 0
        %3166 = vmatprep.subr.bf16.mxu0 0
        %3167 = vmatpush1.bf16.msra.mxu0 0
        %3168 = vmatprep.subr.bf16.mxu0 0
        %3169 = vmatpush1.bf16.msra.mxu0 0
        %3170 = vmatprep.subr.bf16.mxu0 0
        %3171 = vmatpush1.bf16.msra.mxu0 0
        %3172 = vmatprep.subr.bf16.mxu0 0
        %3173 = vmatpush1.bf16.msra.mxu0 0
        %3174 = vmatprep.subr.bf16.mxu0 0
        %3175 = vmatpush1.bf16.msra.mxu0 0
        %3176 = vmatprep.subr.bf16.mxu0 0
        %3177 = vmatpush1.bf16.msra.mxu0 0
        %3178 = vmatprep.mubr.bf16.mxu0 0
        %3179 = vmatmul.mubr.bf16.gmra.mrb[0].mxu0 %v2912
        %v3180 = vpop.f32.mrb[0].mxu0
        %v3181 = vadd.f32 0.0, %v3180
        %v3182 = vpop.f32.mrb[0].mxu0
        %v3183 = vadd.f32 0.0, %v3182
        %v3184 = vpop.f32.mrb[0].mxu0
        %v3185 = vpop.f32.mrb[0].mxu0
        %3186 = vdwg.mxu0
        %v3187 = vadd.f32 %v2908, %v3140
        %v3188 = vadd.f32 %v2909, %v3142
        %v3189 = vadd.f32 %v2910, %v3181
        %v3190 = vadd.f32 %v2911, %v3183
        %v3191 = vxor.u32 %v3187, 2147483648
        %v3192 = vmul.f32 %v3191, 1.442695
        %v3193 = vpow.pop %v3192
        %v3194 = vadd.f32 %v3193, 1.0
        %v3195 = vrcp.pop %v3194
        %v3196 = vmul.f32 1.0, %v3195
        %v3197 = vxor.u32 %v3188, 2147483648
        %v3198 = vmul.f32 %v3197, 1.442695
        %v3199 = vpow.pop %v3198
        %v3200 = vadd.f32 %v3199, 1.0
        %v3201 = vrcp.pop %v3200
        %v3202 = vmul.f32 1.0, %v3201
        %v3203 = vtanh.pop %v3189
        %v3204 = vxor.u32 %v3190, 2147483648
        %v3205 = vmul.f32 %v3204, 1.442695
        %v3206 = vpow.pop %v3205
        %v3207 = vadd.f32 %v3206, 1.0
        %v3208 = vrcp.pop %v3207
        %v3209 = vmul.f32 1.0, %v3208
        %v3210 = vmul.f32 %v3202, %v2906
        %v3211 = vmul.f32 %v3196, %v3203
        %v3212 = vadd.f32 %v3210, %v3211
        %v3213 = vtanh.pop %v3212
        %v3214 = vmul.f32 %v3209, %v3213
        %vm3215 = vcmp.gt.s32.totalorder %v597, 6
        %v3216 = vsel %vm3215, 1, 0
        %3217 = vset.pattern.permute.xlu0 0
        %3218 = vperm.xlu0 %3217, %v3216
        %v3219 = vpop.permute.xlu0 %3218
        %vm3220 = vcmp.eq.s32.totalorder %v3219, 1
        %v3221 = vsel %vm3220, %v3214, %v2905
        %v3222 = vsel %vm3220, %v3212, %v2906
        %3223 = vst [vmem:[#allocation4] sm:$0xff] %v3221
        %3224 = vst [vmem:[#allocation5] sm:$0xff] %v3222
        %s3225 = scalar_lea.vmem [#allocation3], 48
        %3226 = vst [vmem:[%s3225] sm:$0xff] %v3221
        %v3227 = vld [vmem:[#allocation4] sm:$0xff]
        %v3228 = vld [vmem:[#allocation5] sm:$0xff]
        %s3229 = scalar_lea.vmem [#allocation2], 224
        %v3230 = vld [vmem:[%s3229] sm:$0xff]
        %v3231 = vld [vmem:[%s3229 + $0x8] sm:$0xff]
        %v3232 = vld [vmem:[%s3229 + $0x10] sm:$0xff]
        %v3233 = vld [vmem:[%s3229 + $0x18] sm:$0xff]
        %v3234 = vpack.c.bf16 %v3227, %v3227
        %v3235 = vld [vmem:[%s485] sm:$0xff]
        %v3236 = vld [vmem:[%s485 + $0x8] sm:$0xff]
        %v3237 = vld [vmem:[%s485 + $0x10] sm:$0xff]
        %v3238 = vld [vmem:[%s485 + $0x18] sm:$0xff]
        %v3239 = vld [vmem:[%s485 + $0x20] sm:$0xff]
        %v3240 = vld [vmem:[%s485 + $0x28] sm:$0xff]
        %v3241 = vld [vmem:[%s485 + $0x30] sm:$0xff]
        %v3242 = vld [vmem:[%s485 + $0x38] sm:$0xff]
        %v3243 = vld [vmem:[%s485 + $0x40] sm:$0xff]
        %v3244 = vld [vmem:[%s485 + $0x48] sm:$0xff]
        %v3245 = vld [vmem:[%s485 + $0x50] sm:$0xff]
        %v3246 = vld [vmem:[%s485 + $0x58] sm:$0xff]
        %v3247 = vld [vmem:[%s485 + $0x60] sm:$0xff]
        %v3248 = vld [vmem:[%s485 + $0x68] sm:$0xff]
        %v3249 = vld [vmem:[%s485 + $0x70] sm:$0xff]
        %v3250 = vld [vmem:[%s485 + $0x78] sm:$0xff]
        %v3251 = vld [vmem:[%s485 + $0x80] sm:$0xff]
        %v3252 = vld [vmem:[%s485 + $0x88] sm:$0xff]
        %v3253 = vld [vmem:[%s485 + $0x90] sm:$0xff]
        %v3254 = vld [vmem:[%s485 + $0x98] sm:$0xff]
        %v3255 = vld [vmem:[%s485 + $0xa0] sm:$0xff]
        %v3256 = vld [vmem:[%s485 + $0xa8] sm:$0xff]
        %v3257 = vld [vmem:[%s485 + $0xb0] sm:$0xff]
        %v3258 = vld [vmem:[%s485 + $0xb8] sm:$0xff]
        %v3259 = vld [vmem:[%s485 + $0xc0] sm:$0xff]
        %v3260 = vld [vmem:[%s485 + $0xc8] sm:$0xff]
        %v3261 = vld [vmem:[%s485 + $0xd0] sm:$0xff]
        %v3262 = vld [vmem:[%s485 + $0xd8] sm:$0xff]
        %v3263 = vld [vmem:[%s485 + $0xe0] sm:$0xff]
        %v3264 = vld [vmem:[%s485 + $0xe8] sm:$0xff]
        %v3265 = vld [vmem:[%s485 + $0xf0] sm:$0xff]
        %v3266 = vld [vmem:[%s485 + $0xf8] sm:$0xff]
        %v3299 = vunpack.c.l.b16 %v3235
        %v3300 = vunpack.c.h.b16 %v3235
        %v3301 = vunpack.c.l.b16 %v3236
        %v3302 = vunpack.c.h.b16 %v3236
        %v3303 = vunpack.c.l.b16 %v3237
        %v3304 = vunpack.c.h.b16 %v3237
        %v3305 = vunpack.c.l.b16 %v3238
        %v3306 = vunpack.c.h.b16 %v3238
        %v3307 = vunpack.c.l.b16 %v3239
        %v3308 = vunpack.c.h.b16 %v3239
        %v3309 = vunpack.c.l.b16 %v3240
        %v3310 = vunpack.c.h.b16 %v3240
        %v3311 = vunpack.c.l.b16 %v3241
        %v3312 = vunpack.c.h.b16 %v3241
        %v3313 = vunpack.c.l.b16 %v3242
        %v3314 = vunpack.c.h.b16 %v3242
        %v3315 = vunpack.c.l.b16 %v3243
        %v3316 = vunpack.c.h.b16 %v3243
        %v3317 = vunpack.c.l.b16 %v3244
        %v3318 = vunpack.c.h.b16 %v3244
        %v3319 = vunpack.c.l.b16 %v3245
        %v3320 = vunpack.c.h.b16 %v3245
        %v3321 = vunpack.c.l.b16 %v3246
        %v3322 = vunpack.c.h.b16 %v3246
        %v3323 = vunpack.c.l.b16 %v3247
        %v3324 = vunpack.c.h.b16 %v3247
        %v3325 = vunpack.c.l.b16 %v3248
        %v3326 = vunpack.c.h.b16 %v3248
        %v3327 = vunpack.c.l.b16 %v3249
        %v3328 = vunpack.c.h.b16 %v3249
        %v3329 = vunpack.c.l.b16 %v3250
        %v3330 = vunpack.c.h.b16 %v3250
        %v3331 = vunpack.c.l.b16 %v3251
        %v3332 = vunpack.c.h.b16 %v3251
        %v3333 = vunpack.c.l.b16 %v3252
        %v3334 = vunpack.c.h.b16 %v3252
        %v3335 = vunpack.c.l.b16 %v3253
        %v3336 = vunpack.c.h.b16 %v3253
        %v3337 = vunpack.c.l.b16 %v3254
        %v3338 = vunpack.c.h.b16 %v3254
        %v3339 = vunpack.c.l.b16 %v3255
        %v3340 = vunpack.c.h.b16 %v3255
        %v3341 = vunpack.c.l.b16 %v3256
        %v3342 = vunpack.c.h.b16 %v3256
        %v3343 = vunpack.c.l.b16 %v3257
        %v3344 = vunpack.c.h.b16 %v3257
        %v3345 = vunpack.c.l.b16 %v3258
        %v3346 = vunpack.c.h.b16 %v3258
        %v3347 = vunpack.c.l.b16 %v3259
        %v3348 = vunpack.c.h.b16 %v3259
        %v3349 = vunpack.c.l.b16 %v3260
        %v3350 = vunpack.c.h.b16 %v3260
        %v3351 = vunpack.c.l.b16 %v3261
        %v3352 = vunpack.c.h.b16 %v3261
        %v3353 = vunpack.c.l.b16 %v3262
        %v3354 = vunpack.c.h.b16 %v3262
        %v3355 = vunpack.c.l.b16 %v3263
        %v3356 = vunpack.c.h.b16 %v3263
        %v3357 = vunpack.c.l.b16 %v3264
        %v3358 = vunpack.c.h.b16 %v3264
        %v3359 = vunpack.c.l.b16 %v3265
        %v3360 = vunpack.c.h.b16 %v3265
        %v3361 = vunpack.c.l.b16 %v3266
        %v3362 = vunpack.c.h.b16 %v3266
        %v3363 = vpack.c.b16 %v3303, %v3299
        %v3364 = vpack.c.b16 %v3304, %v3300
        %v3365 = vpack.c.b16 %v3305, %v3301
        %v3366 = vpack.c.b16 %v3306, %v3302
        %v3367 = vpack.c.b16 %v3311, %v3307
        %v3368 = vpack.c.b16 %v3312, %v3308
        %v3369 = vpack.c.b16 %v3313, %v3309
        %v3370 = vpack.c.b16 %v3314, %v3310
        %v3371 = vpack.c.b16 %v3319, %v3315
        %v3372 = vpack.c.b16 %v3320, %v3316
        %v3373 = vpack.c.b16 %v3321, %v3317
        %v3374 = vpack.c.b16 %v3322, %v3318
        %v3375 = vpack.c.b16 %v3327, %v3323
        %v3376 = vpack.c.b16 %v3328, %v3324
        %v3377 = vpack.c.b16 %v3329, %v3325
        %v3378 = vpack.c.b16 %v3330, %v3326
        %v3379 = vpack.c.b16 %v3335, %v3331
        %v3380 = vpack.c.b16 %v3336, %v3332
        %v3381 = vpack.c.b16 %v3337, %v3333
        %v3382 = vpack.c.b16 %v3338, %v3334
        %v3383 = vpack.c.b16 %v3343, %v3339
        %v3384 = vpack.c.b16 %v3344, %v3340
        %v3385 = vpack.c.b16 %v3345, %v3341
        %v3386 = vpack.c.b16 %v3346, %v3342
        %v3387 = vpack.c.b16 %v3351, %v3347
        %v3388 = vpack.c.b16 %v3352, %v3348
        %v3389 = vpack.c.b16 %v3353, %v3349
        %v3390 = vpack.c.b16 %v3354, %v3350
        %v3391 = vpack.c.b16 %v3359, %v3355
        %v3392 = vpack.c.b16 %v3360, %v3356
        %v3393 = vpack.c.b16 %v3361, %v3357
        %v3394 = vpack.c.b16 %v3362, %v3358
        %3427 = vmatprep.subr.bf16.mxu0 %v3364
        %3428 = vmatpush1.bf16.msra.mxu0 %v3363
        %3429 = vmatprep.subr.bf16.mxu0 %v3368
        %3430 = vmatpush1.bf16.msra.mxu0 %v3367
        %3431 = vmatprep.subr.bf16.mxu0 %v3372
        %3432 = vmatpush1.bf16.msra.mxu0 %v3371
        %3433 = vmatprep.subr.bf16.mxu0 %v3376
        %3434 = vmatpush1.bf16.msra.mxu0 %v3375
        %3435 = vmatprep.subr.bf16.mxu0 %v3380
        %3436 = vmatpush1.bf16.msra.mxu0 %v3379
        %3437 = vmatprep.subr.bf16.mxu0 %v3384
        %3438 = vmatpush1.bf16.msra.mxu0 %v3383
        %3439 = vmatprep.subr.bf16.mxu0 %v3388
        %3440 = vmatpush1.bf16.msra.mxu0 %v3387
        %3441 = vmatprep.subr.bf16.mxu0 %v3392
        %3442 = vmatpush1.bf16.msra.mxu0 %v3391
        %3443 = vmatprep.subr.bf16.mxu0 0
        %3444 = vmatpush1.bf16.msra.mxu0 0
        %3445 = vmatprep.subr.bf16.mxu0 0
        %3446 = vmatpush1.bf16.msra.mxu0 0
        %3447 = vmatprep.subr.bf16.mxu0 0
        %3448 = vmatpush1.bf16.msra.mxu0 0
        %3449 = vmatprep.subr.bf16.mxu0 0
        %3450 = vmatpush1.bf16.msra.mxu0 0
        %3451 = vmatprep.subr.bf16.mxu0 0
        %3452 = vmatpush1.bf16.msra.mxu0 0
        %3453 = vmatprep.subr.bf16.mxu0 0
        %3454 = vmatpush1.bf16.msra.mxu0 0
        %3455 = vmatprep.subr.bf16.mxu0 0
        %3456 = vmatpush1.bf16.msra.mxu0 0
        %3457 = vmatprep.subr.bf16.mxu0 0
        %3458 = vmatpush1.bf16.msra.mxu0 0
        %3459 = vmatprep.mubr.bf16.mxu0 0
        %3460 = vmatmul.mubr.bf16.gmra.mrb[0].mxu0 %v3234
        %v3461 = vpop.f32.mrb[0].mxu0
        %v3462 = vadd.f32 0.0, %v3461
        %v3463 = vpop.f32.mrb[0].mxu0
        %v3464 = vadd.f32 0.0, %v3463
        %v3465 = vpop.f32.mrb[0].mxu0
        %v3466 = vpop.f32.mrb[0].mxu0
        %3467 = vdwg.mxu0
        %3468 = vmatprep.subr.bf16.mxu0 %v3366
        %3469 = vmatpush1.bf16.msra.mxu0 %v3365
        %3470 = vmatprep.subr.bf16.mxu0 %v3370
        %3471 = vmatpush1.bf16.msra.mxu0 %v3369
        %3472 = vmatprep.subr.bf16.mxu0 %v3374
        %3473 = vmatpush1.bf16.msra.mxu0 %v3373
        %3474 = vmatprep.subr.bf16.mxu0 %v3378
        %3475 = vmatpush1.bf16.msra.mxu0 %v3377
        %3476 = vmatprep.subr.bf16.mxu0 %v3382
        %3477 = vmatpush1.bf16.msra.mxu0 %v3381
        %3478 = vmatprep.subr.bf16.mxu0 %v3386
        %3479 = vmatpush1.bf16.msra.mxu0 %v3385
        %3480 = vmatprep.subr.bf16.mxu0 %v3390
        %3481 = vmatpush1.bf16.msra.mxu0 %v3389
        %3482 = vmatprep.subr.bf16.mxu0 %v3394
        %3483 = vmatpush1.bf16.msra.mxu0 %v3393
        %3484 = vmatprep.subr.bf16.mxu0 0
        %3485 = vmatpush1.bf16.msra.mxu0 0
        %3486 = vmatprep.subr.bf16.mxu0 0
        %3487 = vmatpush1.bf16.msra.mxu0 0
        %3488 = vmatprep.subr.bf16.mxu0 0
        %3489 = vmatpush1.bf16.msra.mxu0 0
        %3490 = vmatprep.subr.bf16.mxu0 0
        %3491 = vmatpush1.bf16.msra.mxu0 0
        %3492 = vmatprep.subr.bf16.mxu0 0
        %3493 = vmatpush1.bf16.msra.mxu0 0
        %3494 = vmatprep.subr.bf16.mxu0 0
        %3495 = vmatpush1.bf16.msra.mxu0 0
        %3496 = vmatprep.subr.bf16.mxu0 0
        %3497 = vmatpush1.bf16.msra.mxu0 0
        %3498 = vmatprep.subr.bf16.mxu0 0
        %3499 = vmatpush1.bf16.msra.mxu0 0
        %3500 = vmatprep.mubr.bf16.mxu0 0
        %3501 = vmatmul.mubr.bf16.gmra.mrb[0].mxu0 %v3234
        %v3502 = vpop.f32.mrb[0].mxu0
        %v3503 = vadd.f32 0.0, %v3502
        %v3504 = vpop.f32.mrb[0].mxu0
        %v3505 = vadd.f32 0.0, %v3504
        %v3506 = vpop.f32.mrb[0].mxu0
        %v3507 = vpop.f32.mrb[0].mxu0
        %3508 = vdwg.mxu0
        %v3509 = vadd.f32 %v3230, %v3462
        %v3510 = vadd.f32 %v3231, %v3464
        %v3511 = vadd.f32 %v3232, %v3503
        %v3512 = vadd.f32 %v3233, %v3505
        %v3513 = vxor.u32 %v3509, 2147483648
        %v3514 = vmul.f32 %v3513, 1.442695
        %v3515 = vpow.pop %v3514
        %v3516 = vadd.f32 %v3515, 1.0
        %v3517 = vrcp.pop %v3516
        %v3518 = vmul.f32 1.0, %v3517
        %v3519 = vxor.u32 %v3510, 2147483648
        %v3520 = vmul.f32 %v3519, 1.442695
        %v3521 = vpow.pop %v3520
        %v3522 = vadd.f32 %v3521, 1.0
        %v3523 = vrcp.pop %v3522
        %v3524 = vmul.f32 1.0, %v3523
        %v3525 = vtanh.pop %v3511
        %v3526 = vxor.u32 %v3512, 2147483648
        %v3527 = vmul.f32 %v3526, 1.442695
        %v3528 = vpow.pop %v3527
        %v3529 = vadd.f32 %v3528, 1.0
        %v3530 = vrcp.pop %v3529
        %v3531 = vmul.f32 1.0, %v3530
        %v3532 = vmul.f32 %v3524, %v3228
        %v3533 = vmul.f32 %v3518, %v3525
        %v3534 = vadd.f32 %v3532, %v3533
        %v3535 = vtanh.pop %v3534
        %v3536 = vmul.f32 %v3531, %v3535
        %vm3537 = vcmp.gt.s32.totalorder %v597, 7
        %v3538 = vsel %vm3537, 1, 0
        %3539 = vset.pattern.permute.xlu0 0
        %3540 = vperm.xlu0 %3539, %v3538
        %v3541 = vpop.permute.xlu0 %3540
        %vm3542 = vcmp.eq.s32.totalorder %v3541, 1
        %v3543 = vsel %vm3542, %v3536, %v3227
        %v3544 = vsel %vm3542, %v3534, %v3228
        %3545 = vst [vmem:[#allocation4] sm:$0xff] %v3543
        %3546 = vst [vmem:[#allocation5] sm:$0xff] %v3544
        %s3547 = scalar_lea.vmem [#allocation3], 56
        %3548 = vst [vmem:[%s3547] sm:$0xff] %v3543
        %v3549 = vld [vmem:[#allocation4] sm:$0xff]
        %v3550 = vld [vmem:[#allocation5] sm:$0xff]
        %s3551 = scalar_lea.vmem [#allocation2], 256
        %v3552 = vld [vmem:[%s3551] sm:$0xff]
        %v3553 = vld [vmem:[%s3551 + $0x8] sm:$0xff]
        %v3554 = vld [vmem:[%s3551 + $0x10] sm:$0xff]
        %v3555 = vld [vmem:[%s3551 + $0x18] sm:$0xff]
        %v3556 = vpack.c.bf16 %v3549, %v3549
        %v3557 = vld [vmem:[%s485] sm:$0xff]
        %v3558 = vld [vmem:[%s485 + $0x8] sm:$0xff]
        %v3559 = vld [vmem:[%s485 + $0x10] sm:$0xff]
        %v3560 = vld [vmem:[%s485 + $0x18] sm:$0xff]
        %v3561 = vld [vmem:[%s485 + $0x20] sm:$0xff]
        %v3562 = vld [vmem:[%s485 + $0x28] sm:$0xff]
        %v3563 = vld [vmem:[%s485 + $0x30] sm:$0xff]
        %v3564 = vld [vmem:[%s485 + $0x38] sm:$0xff]
        %v3565 = vld [vmem:[%s485 + $0x40] sm:$0xff]
        %v3566 = vld [vmem:[%s485 + $0x48] sm:$0xff]
        %v3567 = vld [vmem:[%s485 + $0x50] sm:$0xff]
        %v3568 = vld [vmem:[%s485 + $0x58] sm:$0xff]
        %v3569 = vld [vmem:[%s485 + $0x60] sm:$0xff]
        %v3570 = vld [vmem:[%s485 + $0x68] sm:$0xff]
        %v3571 = vld [vmem:[%s485 + $0x70] sm:$0xff]
        %v3572 = vld [vmem:[%s485 + $0x78] sm:$0xff]
        %v3573 = vld [vmem:[%s485 + $0x80] sm:$0xff]
        %v3574 = vld [vmem:[%s485 + $0x88] sm:$0xff]
        %v3575 = vld [vmem:[%s485 + $0x90] sm:$0xff]
        %v3576 = vld [vmem:[%s485 + $0x98] sm:$0xff]
        %v3577 = vld [vmem:[%s485 + $0xa0] sm:$0xff]
        %v3578 = vld [vmem:[%s485 + $0xa8] sm:$0xff]
        %v3579 = vld [vmem:[%s485 + $0xb0] sm:$0xff]
        %v3580 = vld [vmem:[%s485 + $0xb8] sm:$0xff]
        %v3581 = vld [vmem:[%s485 + $0xc0] sm:$0xff]
        %v3582 = vld [vmem:[%s485 + $0xc8] sm:$0xff]
        %v3583 = vld [vmem:[%s485 + $0xd0] sm:$0xff]
        %v3584 = vld [vmem:[%s485 + $0xd8] sm:$0xff]
        %v3585 = vld [vmem:[%s485 + $0xe0] sm:$0xff]
        %v3586 = vld [vmem:[%s485 + $0xe8] sm:$0xff]
        %v3587 = vld [vmem:[%s485 + $0xf0] sm:$0xff]
        %v3588 = vld [vmem:[%s485 + $0xf8] sm:$0xff]
        %v3621 = vunpack.c.l.b16 %v3557
        %v3622 = vunpack.c.h.b16 %v3557
        %v3623 = vunpack.c.l.b16 %v3558
        %v3624 = vunpack.c.h.b16 %v3558
        %v3625 = vunpack.c.l.b16 %v3559
        %v3626 = vunpack.c.h.b16 %v3559
        %v3627 = vunpack.c.l.b16 %v3560
        %v3628 = vunpack.c.h.b16 %v3560
        %v3629 = vunpack.c.l.b16 %v3561
        %v3630 = vunpack.c.h.b16 %v3561
        %v3631 = vunpack.c.l.b16 %v3562
        %v3632 = vunpack.c.h.b16 %v3562
        %v3633 = vunpack.c.l.b16 %v3563
        %v3634 = vunpack.c.h.b16 %v3563
        %v3635 = vunpack.c.l.b16 %v3564
        %v3636 = vunpack.c.h.b16 %v3564
        %v3637 = vunpack.c.l.b16 %v3565
        %v3638 = vunpack.c.h.b16 %v3565
        %v3639 = vunpack.c.l.b16 %v3566
        %v3640 = vunpack.c.h.b16 %v3566
        %v3641 = vunpack.c.l.b16 %v3567
        %v3642 = vunpack.c.h.b16 %v3567
        %v3643 = vunpack.c.l.b16 %v3568
        %v3644 = vunpack.c.h.b16 %v3568
        %v3645 = vunpack.c.l.b16 %v3569
        %v3646 = vunpack.c.h.b16 %v3569
        %v3647 = vunpack.c.l.b16 %v3570
        %v3648 = vunpack.c.h.b16 %v3570
        %v3649 = vunpack.c.l.b16 %v3571
        %v3650 = vunpack.c.h.b16 %v3571
        %v3651 = vunpack.c.l.b16 %v3572
        %v3652 = vunpack.c.h.b16 %v3572
        %v3653 = vunpack.c.l.b16 %v3573
        %v3654 = vunpack.c.h.b16 %v3573
        %v3655 = vunpack.c.l.b16 %v3574
        %v3656 = vunpack.c.h.b16 %v3574
        %v3657 = vunpack.c.l.b16 %v3575
        %v3658 = vunpack.c.h.b16 %v3575
        %v3659 = vunpack.c.l.b16 %v3576
        %v3660 = vunpack.c.h.b16 %v3576
        %v3661 = vunpack.c.l.b16 %v3577
        %v3662 = vunpack.c.h.b16 %v3577
        %v3663 = vunpack.c.l.b16 %v3578
        %v3664 = vunpack.c.h.b16 %v3578
        %v3665 = vunpack.c.l.b16 %v3579
        %v3666 = vunpack.c.h.b16 %v3579
        %v3667 = vunpack.c.l.b16 %v3580
        %v3668 = vunpack.c.h.b16 %v3580
        %v3669 = vunpack.c.l.b16 %v3581
        %v3670 = vunpack.c.h.b16 %v3581
        %v3671 = vunpack.c.l.b16 %v3582
        %v3672 = vunpack.c.h.b16 %v3582
        %v3673 = vunpack.c.l.b16 %v3583
        %v3674 = vunpack.c.h.b16 %v3583
        %v3675 = vunpack.c.l.b16 %v3584
        %v3676 = vunpack.c.h.b16 %v3584
        %v3677 = vunpack.c.l.b16 %v3585
        %v3678 = vunpack.c.h.b16 %v3585
        %v3679 = vunpack.c.l.b16 %v3586
        %v3680 = vunpack.c.h.b16 %v3586
        %v3681 = vunpack.c.l.b16 %v3587
        %v3682 = vunpack.c.h.b16 %v3587
        %v3683 = vunpack.c.l.b16 %v3588
        %v3684 = vunpack.c.h.b16 %v3588
        %v3685 = vpack.c.b16 %v3625, %v3621
        %v3686 = vpack.c.b16 %v3626, %v3622
        %v3687 = vpack.c.b16 %v3627, %v3623
        %v3688 = vpack.c.b16 %v3628, %v3624
        %v3689 = vpack.c.b16 %v3633, %v3629
        %v3690 = vpack.c.b16 %v3634, %v3630
        %v3691 = vpack.c.b16 %v3635, %v3631
        %v3692 = vpack.c.b16 %v3636, %v3632
        %v3693 = vpack.c.b16 %v3641, %v3637
        %v3694 = vpack.c.b16 %v3642, %v3638
        %v3695 = vpack.c.b16 %v3643, %v3639
        %v3696 = vpack.c.b16 %v3644, %v3640
        %v3697 = vpack.c.b16 %v3649, %v3645
        %v3698 = vpack.c.b16 %v3650, %v3646
        %v3699 = vpack.c.b16 %v3651, %v3647
        %v3700 = vpack.c.b16 %v3652, %v3648
        %v3701 = vpack.c.b16 %v3657, %v3653
        %v3702 = vpack.c.b16 %v3658, %v3654
        %v3703 = vpack.c.b16 %v3659, %v3655
        %v3704 = vpack.c.b16 %v3660, %v3656
        %v3705 = vpack.c.b16 %v3665, %v3661
        %v3706 = vpack.c.b16 %v3666, %v3662
        %v3707 = vpack.c.b16 %v3667, %v3663
        %v3708 = vpack.c.b16 %v3668, %v3664
        %v3709 = vpack.c.b16 %v3673, %v3669
        %v3710 = vpack.c.b16 %v3674, %v3670
        %v3711 = vpack.c.b16 %v3675, %v3671
        %v3712 = vpack.c.b16 %v3676, %v3672
        %v3713 = vpack.c.b16 %v3681, %v3677
        %v3714 = vpack.c.b16 %v3682, %v3678
        %v3715 = vpack.c.b16 %v3683, %v3679
        %v3716 = vpack.c.b16 %v3684, %v3680
        %3749 = vmatprep.subr.bf16.mxu0 %v3686
        %3750 = vmatpush1.bf16.msra.mxu0 %v3685
        %3751 = vmatprep.subr.bf16.mxu0 %v3690
        %3752 = vmatpush1.bf16.msra.mxu0 %v3689
        %3753 = vmatprep.subr.bf16.mxu0 %v3694
        %3754 = vmatpush1.bf16.msra.mxu0 %v3693
        %3755 = vmatprep.subr.bf16.mxu0 %v3698
        %3756 = vmatpush1.bf16.msra.mxu0 %v3697
        %3757 = vmatprep.subr.bf16.mxu0 %v3702
        %3758 = vmatpush1.bf16.msra.mxu0 %v3701
        %3759 = vmatprep.subr.bf16.mxu0 %v3706
        %3760 = vmatpush1.bf16.msra.mxu0 %v3705
        %3761 = vmatprep.subr.bf16.mxu0 %v3710
        %3762 = vmatpush1.bf16.msra.mxu0 %v3709
        %3763 = vmatprep.subr.bf16.mxu0 %v3714
        %3764 = vmatpush1.bf16.msra.mxu0 %v3713
        %3765 = vmatprep.subr.bf16.mxu0 0
        %3766 = vmatpush1.bf16.msra.mxu0 0
        %3767 = vmatprep.subr.bf16.mxu0 0
        %3768 = vmatpush1.bf16.msra.mxu0 0
        %3769 = vmatprep.subr.bf16.mxu0 0
        %3770 = vmatpush1.bf16.msra.mxu0 0
        %3771 = vmatprep.subr.bf16.mxu0 0
        %3772 = vmatpush1.bf16.msra.mxu0 0
        %3773 = vmatprep.subr.bf16.mxu0 0
        %3774 = vmatpush1.bf16.msra.mxu0 0
        %3775 = vmatprep.subr.bf16.mxu0 0
        %3776 = vmatpush1.bf16.msra.mxu0 0
        %3777 = vmatprep.subr.bf16.mxu0 0
        %3778 = vmatpush1.bf16.msra.mxu0 0
        %3779 = vmatprep.subr.bf16.mxu0 0
        %3780 = vmatpush1.bf16.msra.mxu0 0
        %3781 = vmatprep.mubr.bf16.mxu0 0
        %3782 = vmatmul.mubr.bf16.gmra.mrb[0].mxu0 %v3556
        %v3783 = vpop.f32.mrb[0].mxu0
        %v3784 = vadd.f32 0.0, %v3783
        %v3785 = vpop.f32.mrb[0].mxu0
        %v3786 = vadd.f32 0.0, %v3785
        %v3787 = vpop.f32.mrb[0].mxu0
        %v3788 = vpop.f32.mrb[0].mxu0
        %3789 = vdwg.mxu0
        %3790 = vmatprep.subr.bf16.mxu0 %v3688
        %3791 = vmatpush1.bf16.msra.mxu0 %v3687
        %3792 = vmatprep.subr.bf16.mxu0 %v3692
        %3793 = vmatpush1.bf16.msra.mxu0 %v3691
        %3794 = vmatprep.subr.bf16.mxu0 %v3696
        %3795 = vmatpush1.bf16.msra.mxu0 %v3695
        %3796 = vmatprep.subr.bf16.mxu0 %v3700
        %3797 = vmatpush1.bf16.msra.mxu0 %v3699
        %3798 = vmatprep.subr.bf16.mxu0 %v3704
        %3799 = vmatpush1.bf16.msra.mxu0 %v3703
        %3800 = vmatprep.subr.bf16.mxu0 %v3708
        %3801 = vmatpush1.bf16.msra.mxu0 %v3707
        %3802 = vmatprep.subr.bf16.mxu0 %v3712
        %3803 = vmatpush1.bf16.msra.mxu0 %v3711
        %3804 = vmatprep.subr.bf16.mxu0 %v3716
        %3805 = vmatpush1.bf16.msra.mxu0 %v3715
        %3806 = vmatprep.subr.bf16.mxu0 0
        %3807 = vmatpush1.bf16.msra.mxu0 0
        %3808 = vmatprep.subr.bf16.mxu0 0
        %3809 = vmatpush1.bf16.msra.mxu0 0
        %3810 = vmatprep.subr.bf16.mxu0 0
        %3811 = vmatpush1.bf16.msra.mxu0 0
        %3812 = vmatprep.subr.bf16.mxu0 0
        %3813 = vmatpush1.bf16.msra.mxu0 0
        %3814 = vmatprep.subr.bf16.mxu0 0
        %3815 = vmatpush1.bf16.msra.mxu0 0
        %3816 = vmatprep.subr.bf16.mxu0 0
        %3817 = vmatpush1.bf16.msra.mxu0 0
        %3818 = vmatprep.subr.bf16.mxu0 0
        %3819 = vmatpush1.bf16.msra.mxu0 0
        %3820 = vmatprep.subr.bf16.mxu0 0
        %3821 = vmatpush1.bf16.msra.mxu0 0
        %3822 = vmatprep.mubr.bf16.mxu0 0
        %3823 = vmatmul.mubr.bf16.gmra.mrb[0].mxu0 %v3556
        %v3824 = vpop.f32.mrb[0].mxu0
        %v3825 = vadd.f32 0.0, %v3824
        %v3826 = vpop.f32.mrb[0].mxu0
        %v3827 = vadd.f32 0.0, %v3826
        %v3828 = vpop.f32.mrb[0].mxu0
        %v3829 = vpop.f32.mrb[0].mxu0
        %3830 = vdwg.mxu0
        %v3831 = vadd.f32 %v3552, %v3784
        %v3832 = vadd.f32 %v3553, %v3786
        %v3833 = vadd.f32 %v3554, %v3825
        %v3834 = vadd.f32 %v3555, %v3827
        %v3835 = vxor.u32 %v3831, 2147483648
        %v3836 = vmul.f32 %v3835, 1.442695
        %v3837 = vpow.pop %v3836
        %v3838 = vadd.f32 %v3837, 1.0
        %v3839 = vrcp.pop %v3838
        %v3840 = vmul.f32 1.0, %v3839
        %v3841 = vxor.u32 %v3832, 2147483648
        %v3842 = vmul.f32 %v3841, 1.442695
        %v3843 = vpow.pop %v3842
        %v3844 = vadd.f32 %v3843, 1.0
        %v3845 = vrcp.pop %v3844
        %v3846 = vmul.f32 1.0, %v3845
        %v3847 = vtanh.pop %v3833
        %v3848 = vxor.u32 %v3834, 2147483648
        %v3849 = vmul.f32 %v3848, 1.442695
        %v3850 = vpow.pop %v3849
        %v3851 = vadd.f32 %v3850, 1.0
        %v3852 = vrcp.pop %v3851
        %v3853 = vmul.f32 1.0, %v3852
        %v3854 = vmul.f32 %v3846, %v3550
        %v3855 = vmul.f32 %v3840, %v3847
        %v3856 = vadd.f32 %v3854, %v3855
        %v3857 = vtanh.pop %v3856
        %v3858 = vmul.f32 %v3853, %v3857
        %vm3859 = vcmp.gt.s32.totalorder %v597, 8
        %v3860 = vsel %vm3859, 1, 0
        %3861 = vset.pattern.permute.xlu0 0
        %3862 = vperm.xlu0 %3861, %v3860
        %v3863 = vpop.permute.xlu0 %3862
        %vm3864 = vcmp.eq.s32.totalorder %v3863, 1
        %v3865 = vsel %vm3864, %v3858, %v3549
        %v3866 = vsel %vm3864, %v3856, %v3550
        %3867 = vst [vmem:[#allocation4] sm:$0xff] %v3865
        %3868 = vst [vmem:[#allocation5] sm:$0xff] %v3866
        %s3869 = scalar_lea.vmem [#allocation3], 64
        %3870 = vst [vmem:[%s3869] sm:$0xff] %v3865
        %v3871 = vld [vmem:[#allocation4] sm:$0xff]
        %v3872 = vld [vmem:[#allocation5] sm:$0xff]
        %s3873 = scalar_lea.vmem [#allocation2], 288
        %v3874 = vld [vmem:[%s3873] sm:$0xff]
        %v3875 = vld [vmem:[%s3873 + $0x8] sm:$0xff]
        %v3876 = vld [vmem:[%s3873 + $0x10] sm:$0xff]
        %v3877 = vld [vmem:[%s3873 + $0x18] sm:$0xff]
        %v3878 = vpack.c.bf16 %v3871, %v3871
        %v3879 = vld [vmem:[%s485] sm:$0xff]
        %v3880 = vld [vmem:[%s485 + $0x8] sm:$0xff]
        %v3881 = vld [vmem:[%s485 + $0x10] sm:$0xff]
        %v3882 = vld [vmem:[%s485 + $0x18] sm:$0xff]
        %v3883 = vld [vmem:[%s485 + $0x20] sm:$0xff]
        %v3884 = vld [vmem:[%s485 + $0x28] sm:$0xff]
        %v3885 = vld [vmem:[%s485 + $0x30] sm:$0xff]
        %v3886 = vld [vmem:[%s485 + $0x38] sm:$0xff]
        %v3887 = vld [vmem:[%s485 + $0x40] sm:$0xff]
        %v3888 = vld [vmem:[%s485 + $0x48] sm:$0xff]
        %v3889 = vld [vmem:[%s485 + $0x50] sm:$0xff]
        %v3890 = vld [vmem:[%s485 + $0x58] sm:$0xff]
        %v3891 = vld [vmem:[%s485 + $0x60] sm:$0xff]
        %v3892 = vld [vmem:[%s485 + $0x68] sm:$0xff]
        %v3893 = vld [vmem:[%s485 + $0x70] sm:$0xff]
        %v3894 = vld [vmem:[%s485 + $0x78] sm:$0xff]
        %v3895 = vld [vmem:[%s485 + $0x80] sm:$0xff]
        %v3896 = vld [vmem:[%s485 + $0x88] sm:$0xff]
        %v3897 = vld [vmem:[%s485 + $0x90] sm:$0xff]
        %v3898 = vld [vmem:[%s485 + $0x98] sm:$0xff]
        %v3899 = vld [vmem:[%s485 + $0xa0] sm:$0xff]
        %v3900 = vld [vmem:[%s485 + $0xa8] sm:$0xff]
        %v3901 = vld [vmem:[%s485 + $0xb0] sm:$0xff]
        %v3902 = vld [vmem:[%s485 + $0xb8] sm:$0xff]
        %v3903 = vld [vmem:[%s485 + $0xc0] sm:$0xff]
        %v3904 = vld [vmem:[%s485 + $0xc8] sm:$0xff]
        %v3905 = vld [vmem:[%s485 + $0xd0] sm:$0xff]
        %v3906 = vld [vmem:[%s485 + $0xd8] sm:$0xff]
        %v3907 = vld [vmem:[%s485 + $0xe0] sm:$0xff]
        %v3908 = vld [vmem:[%s485 + $0xe8] sm:$0xff]
        %v3909 = vld [vmem:[%s485 + $0xf0] sm:$0xff]
        %v3910 = vld [vmem:[%s485 + $0xf8] sm:$0xff]
        %v3943 = vunpack.c.l.b16 %v3879
        %v3944 = vunpack.c.h.b16 %v3879
        %v3945 = vunpack.c.l.b16 %v3880
        %v3946 = vunpack.c.h.b16 %v3880
        %v3947 = vunpack.c.l.b16 %v3881
        %v3948 = vunpack.c.h.b16 %v3881
        %v3949 = vunpack.c.l.b16 %v3882
        %v3950 = vunpack.c.h.b16 %v3882
        %v3951 = vunpack.c.l.b16 %v3883
        %v3952 = vunpack.c.h.b16 %v3883
        %v3953 = vunpack.c.l.b16 %v3884
        %v3954 = vunpack.c.h.b16 %v3884
        %v3955 = vunpack.c.l.b16 %v3885
        %v3956 = vunpack.c.h.b16 %v3885
        %v3957 = vunpack.c.l.b16 %v3886
        %v3958 = vunpack.c.h.b16 %v3886
        %v3959 = vunpack.c.l.b16 %v3887
        %v3960 = vunpack.c.h.b16 %v3887
        %v3961 = vunpack.c.l.b16 %v3888
        %v3962 = vunpack.c.h.b16 %v3888
        %v3963 = vunpack.c.l.b16 %v3889
        %v3964 = vunpack.c.h.b16 %v3889
        %v3965 = vunpack.c.l.b16 %v3890
        %v3966 = vunpack.c.h.b16 %v3890
        %v3967 = vunpack.c.l.b16 %v3891
        %v3968 = vunpack.c.h.b16 %v3891
        %v3969 = vunpack.c.l.b16 %v3892
        %v3970 = vunpack.c.h.b16 %v3892
        %v3971 = vunpack.c.l.b16 %v3893
        %v3972 = vunpack.c.h.b16 %v3893
        %v3973 = vunpack.c.l.b16 %v3894
        %v3974 = vunpack.c.h.b16 %v3894
        %v3975 = vunpack.c.l.b16 %v3895
        %v3976 = vunpack.c.h.b16 %v3895
        %v3977 = vunpack.c.l.b16 %v3896
        %v3978 = vunpack.c.h.b16 %v3896
        %v3979 = vunpack.c.l.b16 %v3897
        %v3980 = vunpack.c.h.b16 %v3897
        %v3981 = vunpack.c.l.b16 %v3898
        %v3982 = vunpack.c.h.b16 %v3898
        %v3983 = vunpack.c.l.b16 %v3899
        %v3984 = vunpack.c.h.b16 %v3899
        %v3985 = vunpack.c.l.b16 %v3900
        %v3986 = vunpack.c.h.b16 %v3900
        %v3987 = vunpack.c.l.b16 %v3901
        %v3988 = vunpack.c.h.b16 %v3901
        %v3989 = vunpack.c.l.b16 %v3902
        %v3990 = vunpack.c.h.b16 %v3902
        %v3991 = vunpack.c.l.b16 %v3903
        %v3992 = vunpack.c.h.b16 %v3903
        %v3993 = vunpack.c.l.b16 %v3904
        %v3994 = vunpack.c.h.b16 %v3904
        %v3995 = vunpack.c.l.b16 %v3905
        %v3996 = vunpack.c.h.b16 %v3905
        %v3997 = vunpack.c.l.b16 %v3906
        %v3998 = vunpack.c.h.b16 %v3906
        %v3999 = vunpack.c.l.b16 %v3907
        %v4000 = vunpack.c.h.b16 %v3907
        %v4001 = vunpack.c.l.b16 %v3908
        %v4002 = vunpack.c.h.b16 %v3908
        %v4003 = vunpack.c.l.b16 %v3909
        %v4004 = vunpack.c.h.b16 %v3909
        %v4005 = vunpack.c.l.b16 %v3910
        %v4006 = vunpack.c.h.b16 %v3910
        %v4007 = vpack.c.b16 %v3947, %v3943
        %v4008 = vpack.c.b16 %v3948, %v3944
        %v4009 = vpack.c.b16 %v3949, %v3945
        %v4010 = vpack.c.b16 %v3950, %v3946
        %v4011 = vpack.c.b16 %v3955, %v3951
        %v4012 = vpack.c.b16 %v3956, %v3952
        %v4013 = vpack.c.b16 %v3957, %v3953
        %v4014 = vpack.c.b16 %v3958, %v3954
        %v4015 = vpack.c.b16 %v3963, %v3959
        %v4016 = vpack.c.b16 %v3964, %v3960
        %v4017 = vpack.c.b16 %v3965, %v3961
        %v4018 = vpack.c.b16 %v3966, %v3962
        %v4019 = vpack.c.b16 %v3971, %v3967
        %v4020 = vpack.c.b16 %v3972, %v3968
        %v4021 = vpack.c.b16 %v3973, %v3969
        %v4022 = vpack.c.b16 %v3974, %v3970
        %v4023 = vpack.c.b16 %v3979, %v3975
        %v4024 = vpack.c.b16 %v3980, %v3976
        %v4025 = vpack.c.b16 %v3981, %v3977
        %v4026 = vpack.c.b16 %v3982, %v3978
        %v4027 = vpack.c.b16 %v3987, %v3983
        %v4028 = vpack.c.b16 %v3988, %v3984
        %v4029 = vpack.c.b16 %v3989, %v3985
        %v4030 = vpack.c.b16 %v3990, %v3986
        %v4031 = vpack.c.b16 %v3995, %v3991
        %v4032 = vpack.c.b16 %v3996, %v3992
        %v4033 = vpack.c.b16 %v3997, %v3993
        %v4034 = vpack.c.b16 %v3998, %v3994
        %v4035 = vpack.c.b16 %v4003, %v3999
        %v4036 = vpack.c.b16 %v4004, %v4000
        %v4037 = vpack.c.b16 %v4005, %v4001
        %v4038 = vpack.c.b16 %v4006, %v4002
        %4071 = vmatprep.subr.bf16.mxu0 %v4008
        %4072 = vmatpush1.bf16.msra.mxu0 %v4007
        %4073 = vmatprep.subr.bf16.mxu0 %v4012
        %4074 = vmatpush1.bf16.msra.mxu0 %v4011
        %4075 = vmatprep.subr.bf16.mxu0 %v4016
        %4076 = vmatpush1.bf16.msra.mxu0 %v4015
        %4077 = vmatprep.subr.bf16.mxu0 %v4020
        %4078 = vmatpush1.bf16.msra.mxu0 %v4019
        %4079 = vmatprep.subr.bf16.mxu0 %v4024
        %4080 = vmatpush1.bf16.msra.mxu0 %v4023
        %4081 = vmatprep.subr.bf16.mxu0 %v4028
        %4082 = vmatpush1.bf16.msra.mxu0 %v4027
        %4083 = vmatprep.subr.bf16.mxu0 %v4032
        %4084 = vmatpush1.bf16.msra.mxu0 %v4031
        %4085 = vmatprep.subr.bf16.mxu0 %v4036
        %4086 = vmatpush1.bf16.msra.mxu0 %v4035
        %4087 = vmatprep.subr.bf16.mxu0 0
        %4088 = vmatpush1.bf16.msra.mxu0 0
        %4089 = vmatprep.subr.bf16.mxu0 0
        %4090 = vmatpush1.bf16.msra.mxu0 0
        %4091 = vmatprep.subr.bf16.mxu0 0
        %4092 = vmatpush1.bf16.msra.mxu0 0
        %4093 = vmatprep.subr.bf16.mxu0 0
        %4094 = vmatpush1.bf16.msra.mxu0 0
        %4095 = vmatprep.subr.bf16.mxu0 0
        %4096 = vmatpush1.bf16.msra.mxu0 0
        %4097 = vmatprep.subr.bf16.mxu0 0
        %4098 = vmatpush1.bf16.msra.mxu0 0
        %4099 = vmatprep.subr.bf16.mxu0 0
        %4100 = vmatpush1.bf16.msra.mxu0 0
        %4101 = vmatprep.subr.bf16.mxu0 0
        %4102 = vmatpush1.bf16.msra.mxu0 0
        %4103 = vmatprep.mubr.bf16.mxu0 0
        %4104 = vmatmul.mubr.bf16.gmra.mrb[0].mxu0 %v3878
        %v4105 = vpop.f32.mrb[0].mxu0
        %v4106 = vadd.f32 0.0, %v4105
        %v4107 = vpop.f32.mrb[0].mxu0
        %v4108 = vadd.f32 0.0, %v4107
        %v4109 = vpop.f32.mrb[0].mxu0
        %v4110 = vpop.f32.mrb[0].mxu0
        %4111 = vdwg.mxu0
        %4112 = vmatprep.subr.bf16.mxu0 %v4010
        %4113 = vmatpush1.bf16.msra.mxu0 %v4009
        %4114 = vmatprep.subr.bf16.mxu0 %v4014
        %4115 = vmatpush1.bf16.msra.mxu0 %v4013
        %4116 = vmatprep.subr.bf16.mxu0 %v4018
        %4117 = vmatpush1.bf16.msra.mxu0 %v4017
        %4118 = vmatprep.subr.bf16.mxu0 %v4022
        %4119 = vmatpush1.bf16.msra.mxu0 %v4021
        %4120 = vmatprep.subr.bf16.mxu0 %v4026
        %4121 = vmatpush1.bf16.msra.mxu0 %v4025
        %4122 = vmatprep.subr.bf16.mxu0 %v4030
        %4123 = vmatpush1.bf16.msra.mxu0 %v4029
        %4124 = vmatprep.subr.bf16.mxu0 %v4034
        %4125 = vmatpush1.bf16.msra.mxu0 %v4033
        %4126 = vmatprep.subr.bf16.mxu0 %v4038
        %4127 = vmatpush1.bf16.msra.mxu0 %v4037
        %4128 = vmatprep.subr.bf16.mxu0 0
        %4129 = vmatpush1.bf16.msra.mxu0 0
        %4130 = vmatprep.subr.bf16.mxu0 0
        %4131 = vmatpush1.bf16.msra.mxu0 0
        %4132 = vmatprep.subr.bf16.mxu0 0
        %4133 = vmatpush1.bf16.msra.mxu0 0
        %4134 = vmatprep.subr.bf16.mxu0 0
        %4135 = vmatpush1.bf16.msra.mxu0 0
        %4136 = vmatprep.subr.bf16.mxu0 0
        %4137 = vmatpush1.bf16.msra.mxu0 0
        %4138 = vmatprep.subr.bf16.mxu0 0
        %4139 = vmatpush1.bf16.msra.mxu0 0
        %4140 = vmatprep.subr.bf16.mxu0 0
        %4141 = vmatpush1.bf16.msra.mxu0 0
        %4142 = vmatprep.subr.bf16.mxu0 0
        %4143 = vmatpush1.bf16.msra.mxu0 0
        %4144 = vmatprep.mubr.bf16.mxu0 0
        %4145 = vmatmul.mubr.bf16.gmra.mrb[0].mxu0 %v3878
        %v4146 = vpop.f32.mrb[0].mxu0
        %v4147 = vadd.f32 0.0, %v4146
        %v4148 = vpop.f32.mrb[0].mxu0
        %v4149 = vadd.f32 0.0, %v4148
        %v4150 = vpop.f32.mrb[0].mxu0
        %v4151 = vpop.f32.mrb[0].mxu0
        %4152 = vdwg.mxu0
        %v4153 = vadd.f32 %v3874, %v4106
        %v4154 = vadd.f32 %v3875, %v4108
        %v4155 = vadd.f32 %v3876, %v4147
        %v4156 = vadd.f32 %v3877, %v4149
        %v4157 = vxor.u32 %v4153, 2147483648
        %v4158 = vmul.f32 %v4157, 1.442695
        %v4159 = vpow.pop %v4158
        %v4160 = vadd.f32 %v4159, 1.0
        %v4161 = vrcp.pop %v4160
        %v4162 = vmul.f32 1.0, %v4161
        %v4163 = vxor.u32 %v4154, 2147483648
        %v4164 = vmul.f32 %v4163, 1.442695
        %v4165 = vpow.pop %v4164
        %v4166 = vadd.f32 %v4165, 1.0
        %v4167 = vrcp.pop %v4166
        %v4168 = vmul.f32 1.0, %v4167
        %v4169 = vtanh.pop %v4155
        %v4170 = vxor.u32 %v4156, 2147483648
        %v4171 = vmul.f32 %v4170, 1.442695
        %v4172 = vpow.pop %v4171
        %v4173 = vadd.f32 %v4172, 1.0
        %v4174 = vrcp.pop %v4173
        %v4175 = vmul.f32 1.0, %v4174
        %v4176 = vmul.f32 %v4168, %v3872
        %v4177 = vmul.f32 %v4162, %v4169
        %v4178 = vadd.f32 %v4176, %v4177
        %v4179 = vtanh.pop %v4178
        %v4180 = vmul.f32 %v4175, %v4179
        %vm4181 = vcmp.gt.s32.totalorder %v597, 9
        %v4182 = vsel %vm4181, 1, 0
        %4183 = vset.pattern.permute.xlu0 0
        %4184 = vperm.xlu0 %4183, %v4182
        %v4185 = vpop.permute.xlu0 %4184
        %vm4186 = vcmp.eq.s32.totalorder %v4185, 1
        %v4187 = vsel %vm4186, %v4180, %v3871
        %v4188 = vsel %vm4186, %v4178, %v3872
        %4189 = vst [vmem:[#allocation4] sm:$0xff] %v4187
        %4190 = vst [vmem:[#allocation5] sm:$0xff] %v4188
        %s4191 = scalar_lea.vmem [#allocation3], 72
        %4192 = vst [vmem:[%s4191] sm:$0xff] %v4187
        %v4193 = vld [vmem:[#allocation3] sm:$0xff]
        %v4194 = vld [vmem:[#allocation3 + $0x8] sm:$0xff]
        %v4195 = vld [vmem:[#allocation3 + $0x10] sm:$0xff]
        %v4196 = vld [vmem:[#allocation3 + $0x18] sm:$0xff]
        %v4197 = vld [vmem:[#allocation3 + $0x20] sm:$0xff]
        %v4198 = vld [vmem:[#allocation3 + $0x28] sm:$0xff]
        %v4199 = vld [vmem:[#allocation3 + $0x30] sm:$0xff]
        %v4200 = vld [vmem:[#allocation3 + $0x38] sm:$0xff]
        %v4201 = vld [vmem:[#allocation3 + $0x40] sm:$0xff]
        %v4202 = vld [vmem:[#allocation3 + $0x48] sm:$0xff]
        %v4203 = vpack.c.bf16 %v4194, %v4193
        %v4204 = vpack.c.bf16 %v4196, %v4195
        %v4205 = vpack.c.bf16 %v4198, %v4197
        %v4206 = vpack.c.bf16 %v4200, %v4199
        %v4207 = vpack.c.bf16 %v4202, %v4201
        %v4208 = vld [vmem:[%s494] sm:$0xff]
        %v4209 = vld [vmem:[%s494 + $0x8] sm:$0xff]
        %v4210 = vld [vmem:[%s494 + $0x10] sm:$0xff]
        %v4211 = vld [vmem:[%s494 + $0x18] sm:$0xff]
        %v4212 = vld [vmem:[%s494 + $0x20] sm:$0xff]
        %v4213 = vld [vmem:[%s494 + $0x28] sm:$0xff]
        %v4214 = vld [vmem:[%s494 + $0x30] sm:$0xff]
        %v4215 = vld [vmem:[%s494 + $0x38] sm:$0xff]
        %v4216 = vld [vmem:[%s494 + $0x40] sm:$0xff]
        %v4217 = vld [vmem:[%s494 + $0x48] sm:$0xff]
        %v4218 = vld [vmem:[%s494 + $0x50] sm:$0xff]
        %v4219 = vld [vmem:[%s494 + $0x58] sm:$0xff]
        %v4220 = vld [vmem:[%s494 + $0x60] sm:$0xff]
        %v4221 = vld [vmem:[%s494 + $0x68] sm:$0xff]
        %v4222 = vld [vmem:[%s494 + $0x70] sm:$0xff]
        %v4223 = vld [vmem:[%s494 + $0x78] sm:$0xff]
        %v4224 = vld [vmem:[%s494 + $0x80] sm:$0xff]
        %v4225 = vld [vmem:[%s494 + $0x88] sm:$0xff]
        %v4226 = vld [vmem:[%s494 + $0x90] sm:$0xff]
        %v4227 = vld [vmem:[%s494 + $0x98] sm:$0xff]
        %v4228 = vld [vmem:[%s494 + $0xa0] sm:$0xff]
        %v4229 = vld [vmem:[%s494 + $0xa8] sm:$0xff]
        %v4230 = vld [vmem:[%s494 + $0xb0] sm:$0xff]
        %v4231 = vld [vmem:[%s494 + $0xb8] sm:$0xff]
        %v4232 = vld [vmem:[%s494 + $0xc0] sm:$0xff]
        %v4233 = vld [vmem:[%s494 + $0xc8] sm:$0xff]
        %v4234 = vld [vmem:[%s494 + $0xd0] sm:$0xff]
        %v4235 = vld [vmem:[%s494 + $0xd8] sm:$0xff]
        %v4236 = vld [vmem:[%s494 + $0xe0] sm:$0xff]
        %v4237 = vld [vmem:[%s494 + $0xe8] sm:$0xff]
        %v4238 = vld [vmem:[%s494 + $0xf0] sm:$0xff]
        %v4239 = vld [vmem:[%s494 + $0xf8] sm:$0xff]
        %v4240 = vld [vmem:[%s595] sm:$0xf]
        %v4242 = vlaneseq
        %v4243 = vshrl.u32 %v4242, 7
        %v4244 = vsub.s32 0, %v4243
        %v4245 = vrot.slane %v4240, %v4244
        %v4246 = vlaneseq
        %v4247 = vshrl.u32 %v4246, 7
        %v4248 = vsub.s32 1, %v4247
        %v4249 = vrot.slane %v4240, %v4248
        %v4250 = vlaneseq
        %v4251 = vshrl.u32 %v4250, 7
        %v4252 = vsub.s32 2, %v4251
        %v4253 = vrot.slane %v4240, %v4252
        %v4254 = vlaneseq
        %v4255 = vshrl.u32 %v4254, 7
        %v4256 = vsub.s32 3, %v4255
        %v4257 = vrot.slane %v4240, %v4256
        %v4294 = vunpack.c.l.b16 %v4208
        %v4295 = vunpack.c.h.b16 %v4208
        %v4296 = vunpack.c.l.b16 %v4209
        %v4297 = vunpack.c.h.b16 %v4209
        %v4298 = vunpack.c.l.b16 %v4210
        %v4299 = vunpack.c.h.b16 %v4210
        %v4300 = vunpack.c.l.b16 %v4211
        %v4301 = vunpack.c.h.b16 %v4211
        %v4302 = vunpack.c.l.b16 %v4212
        %v4303 = vunpack.c.h.b16 %v4212
        %v4304 = vunpack.c.l.b16 %v4213
        %v4305 = vunpack.c.h.b16 %v4213
        %v4306 = vunpack.c.l.b16 %v4214
        %v4307 = vunpack.c.h.b16 %v4214
        %v4308 = vunpack.c.l.b16 %v4215
        %v4309 = vunpack.c.h.b16 %v4215
        %v4310 = vunpack.c.l.b16 %v4216
        %v4311 = vunpack.c.h.b16 %v4216
        %v4312 = vunpack.c.l.b16 %v4217
        %v4313 = vunpack.c.h.b16 %v4217
        %v4314 = vunpack.c.l.b16 %v4218
        %v4315 = vunpack.c.h.b16 %v4218
        %v4316 = vunpack.c.l.b16 %v4219
        %v4317 = vunpack.c.h.b16 %v4219
        %v4318 = vunpack.c.l.b16 %v4220
        %v4319 = vunpack.c.h.b16 %v4220
        %v4320 = vunpack.c.l.b16 %v4221
        %v4321 = vunpack.c.h.b16 %v4221
        %v4322 = vunpack.c.l.b16 %v4222
        %v4323 = vunpack.c.h.b16 %v4222
        %v4324 = vunpack.c.l.b16 %v4223
        %v4325 = vunpack.c.h.b16 %v4223
        %v4326 = vunpack.c.l.b16 %v4224
        %v4327 = vunpack.c.h.b16 %v4224
        %v4328 = vunpack.c.l.b16 %v4225
        %v4329 = vunpack.c.h.b16 %v4225
        %v4330 = vunpack.c.l.b16 %v4226
        %v4331 = vunpack.c.h.b16 %v4226
        %v4332 = vunpack.c.l.b16 %v4227
        %v4333 = vunpack.c.h.b16 %v4227
        %v4334 = vunpack.c.l.b16 %v4228
        %v4335 = vunpack.c.h.b16 %v4228
        %v4336 = vunpack.c.l.b16 %v4229
        %v4337 = vunpack.c.h.b16 %v4229
        %v4338 = vunpack.c.l.b16 %v4230
        %v4339 = vunpack.c.h.b16 %v4230
        %v4340 = vunpack.c.l.b16 %v4231
        %v4341 = vunpack.c.h.b16 %v4231
        %v4342 = vunpack.c.l.b16 %v4232
        %v4343 = vunpack.c.h.b16 %v4232
        %v4344 = vunpack.c.l.b16 %v4233
        %v4345 = vunpack.c.h.b16 %v4233
        %v4346 = vunpack.c.l.b16 %v4234
        %v4347 = vunpack.c.h.b16 %v4234
        %v4348 = vunpack.c.l.b16 %v4235
        %v4349 = vunpack.c.h.b16 %v4235
        %v4350 = vunpack.c.l.b16 %v4236
        %v4351 = vunpack.c.h.b16 %v4236
        %v4352 = vunpack.c.l.b16 %v4237
        %v4353 = vunpack.c.h.b16 %v4237
        %v4354 = vunpack.c.l.b16 %v4238
        %v4355 = vunpack.c.h.b16 %v4238
        %v4356 = vunpack.c.l.b16 %v4239
        %v4357 = vunpack.c.h.b16 %v4239
        %v4358 = vpack.c.b16 %v4298, %v4294
        %v4359 = vpack.c.b16 %v4299, %v4295
        %v4360 = vpack.c.b16 %v4300, %v4296
        %v4361 = vpack.c.b16 %v4301, %v4297
        %v4362 = vpack.c.b16 %v4306, %v4302
        %v4363 = vpack.c.b16 %v4307, %v4303
        %v4364 = vpack.c.b16 %v4308, %v4304
        %v4365 = vpack.c.b16 %v4309, %v4305
        %v4366 = vpack.c.b16 %v4314, %v4310
        %v4367 = vpack.c.b16 %v4315, %v4311
        %v4368 = vpack.c.b16 %v4316, %v4312
        %v4369 = vpack.c.b16 %v4317, %v4313
        %v4370 = vpack.c.b16 %v4322, %v4318
        %v4371 = vpack.c.b16 %v4323, %v4319
        %v4372 = vpack.c.b16 %v4324, %v4320
        %v4373 = vpack.c.b16 %v4325, %v4321
        %v4374 = vpack.c.b16 %v4330, %v4326
        %v4375 = vpack.c.b16 %v4331, %v4327
        %v4376 = vpack.c.b16 %v4332, %v4328
        %v4377 = vpack.c.b16 %v4333, %v4329
        %v4378 = vpack.c.b16 %v4338, %v4334
        %v4379 = vpack.c.b16 %v4339, %v4335
        %v4380 = vpack.c.b16 %v4340, %v4336
        %v4381 = vpack.c.b16 %v4341, %v4337
        %v4382 = vpack.c.b16 %v4346, %v4342
        %v4383 = vpack.c.b16 %v4347, %v4343
        %v4384 = vpack.c.b16 %v4348, %v4344
        %v4385 = vpack.c.b16 %v4349, %v4345
        %v4386 = vpack.c.b16 %v4354, %v4350
        %v4387 = vpack.c.b16 %v4355, %v4351
        %v4388 = vpack.c.b16 %v4356, %v4352
        %v4389 = vpack.c.b16 %v4357, %v4353
        %4422 = vmatprep.subr.bf16.mxu0 %v4359
        %4423 = vmatpush1.bf16.msra.mxu0 %v4358
        %4424 = vmatprep.subr.bf16.mxu0 %v4363
        %4425 = vmatpush1.bf16.msra.mxu0 %v4362
        %4426 = vmatprep.subr.bf16.mxu0 %v4367
        %4427 = vmatpush1.bf16.msra.mxu0 %v4366
        %4428 = vmatprep.subr.bf16.mxu0 %v4371
        %4429 = vmatpush1.bf16.msra.mxu0 %v4370
        %4430 = vmatprep.subr.bf16.mxu0 %v4375
        %4431 = vmatpush1.bf16.msra.mxu0 %v4374
        %4432 = vmatprep.subr.bf16.mxu0 %v4379
        %4433 = vmatpush1.bf16.msra.mxu0 %v4378
        %4434 = vmatprep.subr.bf16.mxu0 %v4383
        %4435 = vmatpush1.bf16.msra.mxu0 %v4382
        %4436 = vmatprep.subr.bf16.mxu0 %v4387
        %4437 = vmatpush1.bf16.msra.mxu0 %v4386
        %4438 = vmatprep.subr.bf16.mxu0 0
        %4439 = vmatpush1.bf16.msra.mxu0 0
        %4440 = vmatprep.subr.bf16.mxu0 0
        %4441 = vmatpush1.bf16.msra.mxu0 0
        %4442 = vmatprep.subr.bf16.mxu0 0
        %4443 = vmatpush1.bf16.msra.mxu0 0
        %4444 = vmatprep.subr.bf16.mxu0 0
        %4445 = vmatpush1.bf16.msra.mxu0 0
        %4446 = vmatprep.subr.bf16.mxu0 0
        %4447 = vmatpush1.bf16.msra.mxu0 0
        %4448 = vmatprep.subr.bf16.mxu0 0
        %4449 = vmatpush1.bf16.msra.mxu0 0
        %4450 = vmatprep.subr.bf16.mxu0 0
        %4451 = vmatpush1.bf16.msra.mxu0 0
        %4452 = vmatprep.subr.bf16.mxu0 0
        %4453 = vmatpush1.bf16.msra.mxu0 0
        %4454 = vmatprep.mubr.bf16.mxu0 0
        %4455 = vmatmul.mubr.bf16.gmra.mrb[0].mxu0 %v4203
        %v4456 = vpop.f32.mrb[0].mxu0
        %v4457 = vadd.f32 %v4245, %v4456
        %v4458 = vpop.f32.mrb[0].mxu0
        %v4459 = vadd.f32 %v4249, %v4458
        %v4460 = vpop.f32.mrb[0].mxu0
        %v4461 = vadd.f32 %v4245, %v4460
        %v4462 = vpop.f32.mrb[0].mxu0
        %v4463 = vadd.f32 %v4249, %v4462
        %4464 = vmatprep.mubr.bf16.mxu0 0
        %4465 = vmatmul.mubr.bf16.gmra.mrb[0].mxu0 %v4204
        %v4466 = vpop.f32.mrb[0].mxu0
        %v4467 = vadd.f32 %v4245, %v4466
        %v4468 = vpop.f32.mrb[0].mxu0
        %v4469 = vadd.f32 %v4249, %v4468
        %v4470 = vpop.f32.mrb[0].mxu0
        %v4471 = vadd.f32 %v4245, %v4470
        %v4472 = vpop.f32.mrb[0].mxu0
        %v4473 = vadd.f32 %v4249, %v4472
        %4474 = vmatprep.mubr.bf16.mxu0 0
        %4475 = vmatmul.mubr.bf16.gmra.mrb[0].mxu0 %v4205
        %v4476 = vpop.f32.mrb[0].mxu0
        %v4477 = vadd.f32 %v4245, %v4476
        %v4478 = vpop.f32.mrb[0].mxu0
        %v4479 = vadd.f32 %v4249, %v4478
        %v4480 = vpop.f32.mrb[0].mxu0
        %v4481 = vadd.f32 %v4245, %v4480
        %v4482 = vpop.f32.mrb[0].mxu0
        %v4483 = vadd.f32 %v4249, %v4482
        %4484 = vmatprep.mubr.bf16.mxu0 0
        %4485 = vmatmul.mubr.bf16.gmra.mrb[0].mxu0 %v4206
        %v4486 = vpop.f32.mrb[0].mxu0
        %v4487 = vadd.f32 %v4245, %v4486
        %v4488 = vpop.f32.mrb[0].mxu0
        %v4489 = vadd.f32 %v4249, %v4488
        %v4490 = vpop.f32.mrb[0].mxu0
        %v4491 = vadd.f32 %v4245, %v4490
        %v4492 = vpop.f32.mrb[0].mxu0
        %v4493 = vadd.f32 %v4249, %v4492
        %4494 = vmatprep.mubr.bf16.mxu0 0
        %4495 = vmatmul.mubr.bf16.gmra.mrb[0].mxu0 %v4207
        %v4496 = vpop.f32.mrb[0].mxu0
        %v4497 = vadd.f32 %v4245, %v4496
        %v4498 = vpop.f32.mrb[0].mxu0
        %v4499 = vadd.f32 %v4249, %v4498
        %v4500 = vpop.f32.mrb[0].mxu0
        %v4501 = vadd.f32 %v4245, %v4500
        %v4502 = vpop.f32.mrb[0].mxu0
        %v4503 = vadd.f32 %v4249, %v4502
        %4504 = vdwg.mxu0
        %4505 = vmatprep.subr.bf16.mxu0 %v4361
        %4506 = vmatpush1.bf16.msra.mxu0 %v4360
        %4507 = vmatprep.subr.bf16.mxu0 %v4365
        %4508 = vmatpush1.bf16.msra.mxu0 %v4364
        %4509 = vmatprep.subr.bf16.mxu0 %v4369
        %4510 = vmatpush1.bf16.msra.mxu0 %v4368
        %4511 = vmatprep.subr.bf16.mxu0 %v4373
        %4512 = vmatpush1.bf16.msra.mxu0 %v4372
        %4513 = vmatprep.subr.bf16.mxu0 %v4377
        %4514 = vmatpush1.bf16.msra.mxu0 %v4376
        %4515 = vmatprep.subr.bf16.mxu0 %v4381
        %4516 = vmatpush1.bf16.msra.mxu0 %v4380
        %4517 = vmatprep.subr.bf16.mxu0 %v4385
        %4518 = vmatpush1.bf16.msra.mxu0 %v4384
        %4519 = vmatprep.subr.bf16.mxu0 %v4389
        %4520 = vmatpush1.bf16.msra.mxu0 %v4388
        %4521 = vmatprep.subr.bf16.mxu0 0
        %4522 = vmatpush1.bf16.msra.mxu0 0
        %4523 = vmatprep.subr.bf16.mxu0 0
        %4524 = vmatpush1.bf16.msra.mxu0 0
        %4525 = vmatprep.subr.bf16.mxu0 0
        %4526 = vmatpush1.bf16.msra.mxu0 0
        %4527 = vmatprep.subr.bf16.mxu0 0
        %4528 = vmatpush1.bf16.msra.mxu0 0
        %4529 = vmatprep.subr.bf16.mxu0 0
        %4530 = vmatpush1.bf16.msra.mxu0 0
        %4531 = vmatprep.subr.bf16.mxu0 0
        %4532 = vmatpush1.bf16.msra.mxu0 0
        %4533 = vmatprep.subr.bf16.mxu0 0
        %4534 = vmatpush1.bf16.msra.mxu0 0
        %4535 = vmatprep.subr.bf16.mxu0 0
        %4536 = vmatpush1.bf16.msra.mxu0 0
        %4537 = vmatprep.mubr.bf16.mxu0 0
        %4538 = vmatmul.mubr.bf16.gmra.mrb[0].mxu0 %v4203
        %v4539 = vpop.f32.mrb[0].mxu0
        %v4540 = vadd.f32 %v4253, %v4539
        %v4541 = vpop.f32.mrb[0].mxu0
        %v4542 = vadd.f32 %v4257, %v4541
        %v4543 = vpop.f32.mrb[0].mxu0
        %v4544 = vadd.f32 %v4253, %v4543
        %v4545 = vpop.f32.mrb[0].mxu0
        %v4546 = vadd.f32 %v4257, %v4545
        %4547 = vmatprep.mubr.bf16.mxu0 0
        %4548 = vmatmul.mubr.bf16.gmra.mrb[0].mxu0 %v4204
        %v4549 = vpop.f32.mrb[0].mxu0
        %v4550 = vadd.f32 %v4253, %v4549
        %v4551 = vpop.f32.mrb[0].mxu0
        %v4552 = vadd.f32 %v4257, %v4551
        %v4553 = vpop.f32.mrb[0].mxu0
        %v4554 = vadd.f32 %v4253, %v4553
        %v4555 = vpop.f32.mrb[0].mxu0
        %v4556 = vadd.f32 %v4257, %v4555
        %4557 = vmatprep.mubr.bf16.mxu0 0
        %4558 = vmatmul.mubr.bf16.gmra.mrb[0].mxu0 %v4205
        %v4559 = vpop.f32.mrb[0].mxu0
        %v4560 = vadd.f32 %v4253, %v4559
        %v4561 = vpop.f32.mrb[0].mxu0
        %v4562 = vadd.f32 %v4257, %v4561
        %v4563 = vpop.f32.mrb[0].mxu0
        %v4564 = vadd.f32 %v4253, %v4563
        %v4565 = vpop.f32.mrb[0].mxu0
        %v4566 = vadd.f32 %v4257, %v4565
        %4567 = vmatprep.mubr.bf16.mxu0 0
        %4568 = vmatmul.mubr.bf16.gmra.mrb[0].mxu0 %v4206
        %v4569 = vpop.f32.mrb[0].mxu0
        %v4570 = vadd.f32 %v4253, %v4569
        %v4571 = vpop.f32.mrb[0].mxu0
        %v4572 = vadd.f32 %v4257, %v4571
        %v4573 = vpop.f32.mrb[0].mxu0
        %v4574 = vadd.f32 %v4253, %v4573
        %v4575 = vpop.f32.mrb[0].mxu0
        %v4576 = vadd.f32 %v4257, %v4575
        %4577 = vmatprep.mubr.bf16.mxu0 0
        %4578 = vmatmul.mubr.bf16.gmra.mrb[0].mxu0 %v4207
        %v4579 = vpop.f32.mrb[0].mxu0
        %v4580 = vadd.f32 %v4253, %v4579
        %v4581 = vpop.f32.mrb[0].mxu0
        %v4582 = vadd.f32 %v4257, %v4581
        %v4583 = vpop.f32.mrb[0].mxu0
        %v4584 = vadd.f32 %v4253, %v4583
        %v4585 = vpop.f32.mrb[0].mxu0
        %v4586 = vadd.f32 %v4257, %v4585
        %4587 = vdwg.mxu0
        %4588 = vst [vmem:[#allocation2] sm:$0xff] %v4457
        %4589 = vst [vmem:[#allocation2 + $0x8] sm:$0xff] %v4459
        %4590 = vst [vmem:[#allocation2 + $0x10] sm:$0xff] %v4540
        %4591 = vst [vmem:[#allocation2 + $0x18] sm:$0xff] %v4542
        %4592 = vst [vmem:[#allocation2 + $0x20] sm:$0xff] %v4461
        %4593 = vst [vmem:[#allocation2 + $0x28] sm:$0xff] %v4463
        %4594 = vst [vmem:[#allocation2 + $0x30] sm:$0xff] %v4544
        %4595 = vst [vmem:[#allocation2 + $0x38] sm:$0xff] %v4546
        %4596 = vst [vmem:[#allocation2 + $0x40] sm:$0xff] %v4467
        %4597 = vst [vmem:[#allocation2 + $0x48] sm:$0xff] %v4469
        %4598 = vst [vmem:[#allocation2 + $0x50] sm:$0xff] %v4550
        %4599 = vst [vmem:[#allocation2 + $0x58] sm:$0xff] %v4552
        %4600 = vst [vmem:[#allocation2 + $0x60] sm:$0xff] %v4471
        %4601 = vst [vmem:[#allocation2 + $0x68] sm:$0xff] %v4473
        %4602 = vst [vmem:[#allocation2 + $0x70] sm:$0xff] %v4554
        %4603 = vst [vmem:[#allocation2 + $0x78] sm:$0xff] %v4556
        %4604 = vst [vmem:[#allocation2 + $0x80] sm:$0xff] %v4477
        %4605 = vst [vmem:[#allocation2 + $0x88] sm:$0xff] %v4479
        %4606 = vst [vmem:[#allocation2 + $0x90] sm:$0xff] %v4560
        %4607 = vst [vmem:[#allocation2 + $0x98] sm:$0xff] %v4562
        %4608 = vst [vmem:[#allocation2 + $0xa0] sm:$0xff] %v4481
        %4609 = vst [vmem:[#allocation2 + $0xa8] sm:$0xff] %v4483
        %4610 = vst [vmem:[#allocation2 + $0xb0] sm:$0xff] %v4564
        %4611 = vst [vmem:[#allocation2 + $0xb8] sm:$0xff] %v4566
        %4612 = vst [vmem:[#allocation2 + $0xc0] sm:$0xff] %v4487
        %4613 = vst [vmem:[#allocation2 + $0xc8] sm:$0xff] %v4489
        %4614 = vst [vmem:[#allocation2 + $0xd0] sm:$0xff] %v4570
        %4615 = vst [vmem:[#allocation2 + $0xd8] sm:$0xff] %v4572
        %4616 = vst [vmem:[#allocation2 + $0xe0] sm:$0xff] %v4491
        %4617 = vst [vmem:[#allocation2 + $0xe8] sm:$0xff] %v4493
        %4618 = vst [vmem:[#allocation2 + $0xf0] sm:$0xff] %v4574
        %4619 = vst [vmem:[#allocation2 + $0xf8] sm:$0xff] %v4576
        %4620 = vst [vmem:[#allocation2 + $0x100] sm:$0xff] %v4497
        %4621 = vst [vmem:[#allocation2 + $0x108] sm:$0xff] %v4499
        %4622 = vst [vmem:[#allocation2 + $0x110] sm:$0xff] %v4580
        %4623 = vst [vmem:[#allocation2 + $0x118] sm:$0xff] %v4582
        %4624 = vst [vmem:[#allocation2 + $0x120] sm:$0xff] %v4501
        %4625 = vst [vmem:[#allocation2 + $0x128] sm:$0xff] %v4503
        %4626 = vst [vmem:[#allocation2 + $0x130] sm:$0xff] %v4584
        %4627 = vst [vmem:[#allocation2 + $0x138] sm:$0xff] %v4586
        %4628 = vst [vmem:[#allocation4] sm:$0xff] 0.0
        %4629 = vst [vmem:[#allocation5] sm:$0xff] 0.0
        %v4630 = vld [vmem:[#allocation4] sm:$0xff]
        %v4631 = vld [vmem:[#allocation5] sm:$0xff]
        %v4632 = vld [vmem:[#allocation2] sm:$0xff]
        %v4633 = vld [vmem:[#allocation2 + $0x8] sm:$0xff]
        %v4634 = vld [vmem:[#allocation2 + $0x10] sm:$0xff]
        %v4635 = vld [vmem:[#allocation2 + $0x18] sm:$0xff]
        %v4636 = vpack.c.bf16 %v4630, %v4630
        %v4637 = vld [vmem:[%s503] sm:$0xff]
        %v4638 = vld [vmem:[%s503 + $0x8] sm:$0xff]
        %v4639 = vld [vmem:[%s503 + $0x10] sm:$0xff]
        %v4640 = vld [vmem:[%s503 + $0x18] sm:$0xff]
        %v4641 = vld [vmem:[%s503 + $0x20] sm:$0xff]
        %v4642 = vld [vmem:[%s503 + $0x28] sm:$0xff]
        %v4643 = vld [vmem:[%s503 + $0x30] sm:$0xff]
        %v4644 = vld [vmem:[%s503 + $0x38] sm:$0xff]
        %v4645 = vld [vmem:[%s503 + $0x40] sm:$0xff]
        %v4646 = vld [vmem:[%s503 + $0x48] sm:$0xff]
        %v4647 = vld [vmem:[%s503 + $0x50] sm:$0xff]
        %v4648 = vld [vmem:[%s503 + $0x58] sm:$0xff]
        %v4649 = vld [vmem:[%s503 + $0x60] sm:$0xff]
        %v4650 = vld [vmem:[%s503 + $0x68] sm:$0xff]
        %v4651 = vld [vmem:[%s503 + $0x70] sm:$0xff]
        %v4652 = vld [vmem:[%s503 + $0x78] sm:$0xff]
        %v4653 = vld [vmem:[%s503 + $0x80] sm:$0xff]
        %v4654 = vld [vmem:[%s503 + $0x88] sm:$0xff]
        %v4655 = vld [vmem:[%s503 + $0x90] sm:$0xff]
        %v4656 = vld [vmem:[%s503 + $0x98] sm:$0xff]
        %v4657 = vld [vmem:[%s503 + $0xa0] sm:$0xff]
        %v4658 = vld [vmem:[%s503 + $0xa8] sm:$0xff]
        %v4659 = vld [vmem:[%s503 + $0xb0] sm:$0xff]
        %v4660 = vld [vmem:[%s503 + $0xb8] sm:$0xff]
        %v4661 = vld [vmem:[%s503 + $0xc0] sm:$0xff]
        %v4662 = vld [vmem:[%s503 + $0xc8] sm:$0xff]
        %v4663 = vld [vmem:[%s503 + $0xd0] sm:$0xff]
        %v4664 = vld [vmem:[%s503 + $0xd8] sm:$0xff]
        %v4665 = vld [vmem:[%s503 + $0xe0] sm:$0xff]
        %v4666 = vld [vmem:[%s503 + $0xe8] sm:$0xff]
        %v4667 = vld [vmem:[%s503 + $0xf0] sm:$0xff]
        %v4668 = vld [vmem:[%s503 + $0xf8] sm:$0xff]
        %v4701 = vunpack.c.l.b16 %v4637
        %v4702 = vunpack.c.h.b16 %v4637
        %v4703 = vunpack.c.l.b16 %v4638
        %v4704 = vunpack.c.h.b16 %v4638
        %v4705 = vunpack.c.l.b16 %v4639
        %v4706 = vunpack.c.h.b16 %v4639
        %v4707 = vunpack.c.l.b16 %v4640
        %v4708 = vunpack.c.h.b16 %v4640
        %v4709 = vunpack.c.l.b16 %v4641
        %v4710 = vunpack.c.h.b16 %v4641
        %v4711 = vunpack.c.l.b16 %v4642
        %v4712 = vunpack.c.h.b16 %v4642
        %v4713 = vunpack.c.l.b16 %v4643
        %v4714 = vunpack.c.h.b16 %v4643
        %v4715 = vunpack.c.l.b16 %v4644
        %v4716 = vunpack.c.h.b16 %v4644
        %v4717 = vunpack.c.l.b16 %v4645
        %v4718 = vunpack.c.h.b16 %v4645
        %v4719 = vunpack.c.l.b16 %v4646
        %v4720 = vunpack.c.h.b16 %v4646
        %v4721 = vunpack.c.l.b16 %v4647
        %v4722 = vunpack.c.h.b16 %v4647
        %v4723 = vunpack.c.l.b16 %v4648
        %v4724 = vunpack.c.h.b16 %v4648
        %v4725 = vunpack.c.l.b16 %v4649
        %v4726 = vunpack.c.h.b16 %v4649
        %v4727 = vunpack.c.l.b16 %v4650
        %v4728 = vunpack.c.h.b16 %v4650
        %v4729 = vunpack.c.l.b16 %v4651
        %v4730 = vunpack.c.h.b16 %v4651
        %v4731 = vunpack.c.l.b16 %v4652
        %v4732 = vunpack.c.h.b16 %v4652
        %v4733 = vunpack.c.l.b16 %v4653
        %v4734 = vunpack.c.h.b16 %v4653
        %v4735 = vunpack.c.l.b16 %v4654
        %v4736 = vunpack.c.h.b16 %v4654
        %v4737 = vunpack.c.l.b16 %v4655
        %v4738 = vunpack.c.h.b16 %v4655
        %v4739 = vunpack.c.l.b16 %v4656
        %v4740 = vunpack.c.h.b16 %v4656
        %v4741 = vunpack.c.l.b16 %v4657
        %v4742 = vunpack.c.h.b16 %v4657
        %v4743 = vunpack.c.l.b16 %v4658
        %v4744 = vunpack.c.h.b16 %v4658
        %v4745 = vunpack.c.l.b16 %v4659
        %v4746 = vunpack.c.h.b16 %v4659
        %v4747 = vunpack.c.l.b16 %v4660
        %v4748 = vunpack.c.h.b16 %v4660
        %v4749 = vunpack.c.l.b16 %v4661
        %v4750 = vunpack.c.h.b16 %v4661
        %v4751 = vunpack.c.l.b16 %v4662
        %v4752 = vunpack.c.h.b16 %v4662
        %v4753 = vunpack.c.l.b16 %v4663
        %v4754 = vunpack.c.h.b16 %v4663
        %v4755 = vunpack.c.l.b16 %v4664
        %v4756 = vunpack.c.h.b16 %v4664
        %v4757 = vunpack.c.l.b16 %v4665
        %v4758 = vunpack.c.h.b16 %v4665
        %v4759 = vunpack.c.l.b16 %v4666
        %v4760 = vunpack.c.h.b16 %v4666
        %v4761 = vunpack.c.l.b16 %v4667
        %v4762 = vunpack.c.h.b16 %v4667
        %v4763 = vunpack.c.l.b16 %v4668
        %v4764 = vunpack.c.h.b16 %v4668
        %v4765 = vpack.c.b16 %v4705, %v4701
        %v4766 = vpack.c.b16 %v4706, %v4702
        %v4767 = vpack.c.b16 %v4707, %v4703
        %v4768 = vpack.c.b16 %v4708, %v4704
        %v4769 = vpack.c.b16 %v4713, %v4709
        %v4770 = vpack.c.b16 %v4714, %v4710
        %v4771 = vpack.c.b16 %v4715, %v4711
        %v4772 = vpack.c.b16 %v4716, %v4712
        %v4773 = vpack.c.b16 %v4721, %v4717
        %v4774 = vpack.c.b16 %v4722, %v4718
        %v4775 = vpack.c.b16 %v4723, %v4719
        %v4776 = vpack.c.b16 %v4724, %v4720
        %v4777 = vpack.c.b16 %v4729, %v4725
        %v4778 = vpack.c.b16 %v4730, %v4726
        %v4779 = vpack.c.b16 %v4731, %v4727
        %v4780 = vpack.c.b16 %v4732, %v4728
        %v4781 = vpack.c.b16 %v4737, %v4733
        %v4782 = vpack.c.b16 %v4738, %v4734
        %v4783 = vpack.c.b16 %v4739, %v4735
        %v4784 = vpack.c.b16 %v4740, %v4736
        %v4785 = vpack.c.b16 %v4745, %v4741
        %v4786 = vpack.c.b16 %v4746, %v4742
        %v4787 = vpack.c.b16 %v4747, %v4743
        %v4788 = vpack.c.b16 %v4748, %v4744
        %v4789 = vpack.c.b16 %v4753, %v4749
        %v4790 = vpack.c.b16 %v4754, %v4750
        %v4791 = vpack.c.b16 %v4755, %v4751
        %v4792 = vpack.c.b16 %v4756, %v4752
        %v4793 = vpack.c.b16 %v4761, %v4757
        %v4794 = vpack.c.b16 %v4762, %v4758
        %v4795 = vpack.c.b16 %v4763, %v4759
        %v4796 = vpack.c.b16 %v4764, %v4760
        %4829 = vmatprep.subr.bf16.mxu0 %v4766
        %4830 = vmatpush1.bf16.msra.mxu0 %v4765
        %4831 = vmatprep.subr.bf16.mxu0 %v4770
        %4832 = vmatpush1.bf16.msra.mxu0 %v4769
        %4833 = vmatprep.subr.bf16.mxu0 %v4774
        %4834 = vmatpush1.bf16.msra.mxu0 %v4773
        %4835 = vmatprep.subr.bf16.mxu0 %v4778
        %4836 = vmatpush1.bf16.msra.mxu0 %v4777
        %4837 = vmatprep.subr.bf16.mxu0 %v4782
        %4838 = vmatpush1.bf16.msra.mxu0 %v4781
        %4839 = vmatprep.subr.bf16.mxu0 %v4786
        %4840 = vmatpush1.bf16.msra.mxu0 %v4785
        %4841 = vmatprep.subr.bf16.mxu0 %v4790
        %4842 = vmatpush1.bf16.msra.mxu0 %v4789
        %4843 = vmatprep.subr.bf16.mxu0 %v4794
        %4844 = vmatpush1.bf16.msra.mxu0 %v4793
        %4845 = vmatprep.subr.bf16.mxu0 0
        %4846 = vmatpush1.bf16.msra.mxu0 0
        %4847 = vmatprep.subr.bf16.mxu0 0
        %4848 = vmatpush1.bf16.msra.mxu0 0
        %4849 = vmatprep.subr.bf16.mxu0 0
        %4850 = vmatpush1.bf16.msra.mxu0 0
        %4851 = vmatprep.subr.bf16.mxu0 0
        %4852 = vmatpush1.bf16.msra.mxu0 0
        %4853 = vmatprep.subr.bf16.mxu0 0
        %4854 = vmatpush1.bf16.msra.mxu0 0
        %4855 = vmatprep.subr.bf16.mxu0 0
        %4856 = vmatpush1.bf16.msra.mxu0 0
        %4857 = vmatprep.subr.bf16.mxu0 0
        %4858 = vmatpush1.bf16.msra.mxu0 0
        %4859 = vmatprep.subr.bf16.mxu0 0
        %4860 = vmatpush1.bf16.msra.mxu0 0
        %4861 = vmatprep.mubr.bf16.mxu0 0
        %4862 = vmatmul.mubr.bf16.gmra.mrb[0].mxu0 %v4636
        %v4863 = vpop.f32.mrb[0].mxu0
        %v4864 = vadd.f32 0.0, %v4863
        %v4865 = vpop.f32.mrb[0].mxu0
        %v4866 = vadd.f32 0.0, %v4865
        %v4867 = vpop.f32.mrb[0].mxu0
        %v4868 = vpop.f32.mrb[0].mxu0
        %4869 = vdwg.mxu0
        %4870 = vmatprep.subr.bf16.mxu0 %v4768
        %4871 = vmatpush1.bf16.msra.mxu0 %v4767
        %4872 = vmatprep.subr.bf16.mxu0 %v4772
        %4873 = vmatpush1.bf16.msra.mxu0 %v4771
        %4874 = vmatprep.subr.bf16.mxu0 %v4776
        %4875 = vmatpush1.bf16.msra.mxu0 %v4775
        %4876 = vmatprep.subr.bf16.mxu0 %v4780
        %4877 = vmatpush1.bf16.msra.mxu0 %v4779
        %4878 = vmatprep.subr.bf16.mxu0 %v4784
        %4879 = vmatpush1.bf16.msra.mxu0 %v4783
        %4880 = vmatprep.subr.bf16.mxu0 %v4788
        %4881 = vmatpush1.bf16.msra.mxu0 %v4787
        %4882 = vmatprep.subr.bf16.mxu0 %v4792
        %4883 = vmatpush1.bf16.msra.mxu0 %v4791
        %4884 = vmatprep.subr.bf16.mxu0 %v4796
        %4885 = vmatpush1.bf16.msra.mxu0 %v4795
        %4886 = vmatprep.subr.bf16.mxu0 0
        %4887 = vmatpush1.bf16.msra.mxu0 0
        %4888 = vmatprep.subr.bf16.mxu0 0
        %4889 = vmatpush1.bf16.msra.mxu0 0
        %4890 = vmatprep.subr.bf16.mxu0 0
        %4891 = vmatpush1.bf16.msra.mxu0 0
        %4892 = vmatprep.subr.bf16.mxu0 0
        %4893 = vmatpush1.bf16.msra.mxu0 0
        %4894 = vmatprep.subr.bf16.mxu0 0
        %4895 = vmatpush1.bf16.msra.mxu0 0
        %4896 = vmatprep.subr.bf16.mxu0 0
        %4897 = vmatpush1.bf16.msra.mxu0 0
        %4898 = vmatprep.subr.bf16.mxu0 0
        %4899 = vmatpush1.bf16.msra.mxu0 0
        %4900 = vmatprep.subr.bf16.mxu0 0
        %4901 = vmatpush1.bf16.msra.mxu0 0
        %4902 = vmatprep.mubr.bf16.mxu0 0
        %4903 = vmatmul.mubr.bf16.gmra.mrb[0].mxu0 %v4636
        %v4904 = vpop.f32.mrb[0].mxu0
        %v4905 = vadd.f32 0.0, %v4904
        %v4906 = vpop.f32.mrb[0].mxu0
        %v4907 = vadd.f32 0.0, %v4906
        %v4908 = vpop.f32.mrb[0].mxu0
        %v4909 = vpop.f32.mrb[0].mxu0
        %4910 = vdwg.mxu0
        %v4911 = vadd.f32 %v4632, %v4864
        %v4912 = vadd.f32 %v4633, %v4866
        %v4913 = vadd.f32 %v4634, %v4905
        %v4914 = vadd.f32 %v4635, %v4907
        %v4915 = vxor.u32 %v4911, 2147483648
        %v4916 = vmul.f32 %v4915, 1.442695
        %v4917 = vpow.pop %v4916
        %v4918 = vadd.f32 %v4917, 1.0
        %v4919 = vrcp.pop %v4918
        %v4920 = vmul.f32 1.0, %v4919
        %v4921 = vxor.u32 %v4912, 2147483648
        %v4922 = vmul.f32 %v4921, 1.442695
        %v4923 = vpow.pop %v4922
        %v4924 = vadd.f32 %v4923, 1.0
        %v4925 = vrcp.pop %v4924
        %v4926 = vmul.f32 1.0, %v4925
        %v4927 = vtanh.pop %v4913
        %v4928 = vxor.u32 %v4914, 2147483648
        %v4929 = vmul.f32 %v4928, 1.442695
        %v4930 = vpow.pop %v4929
        %v4931 = vadd.f32 %v4930, 1.0
        %v4932 = vrcp.pop %v4931
        %v4933 = vmul.f32 1.0, %v4932
        %v4934 = vmul.f32 %v4926, %v4631
        %v4935 = vmul.f32 %v4920, %v4927
        %v4936 = vadd.f32 %v4934, %v4935
        %v4937 = vtanh.pop %v4936
        %v4938 = vmul.f32 %v4933, %v4937
        %v4939 = vsel %vm1289, %v4938, %v4630
        %v4940 = vsel %vm1289, %v4936, %v4631
        %4941 = vst [vmem:[#allocation4] sm:$0xff] %v4939
        %4942 = vst [vmem:[#allocation5] sm:$0xff] %v4940
        %v4943 = vld [vmem:[#allocation4] sm:$0xff]
        %v4944 = vld [vmem:[#allocation5] sm:$0xff]
        %v4945 = vld [vmem:[%s1297] sm:$0xff]
        %v4946 = vld [vmem:[%s1297 + $0x8] sm:$0xff]
        %v4947 = vld [vmem:[%s1297 + $0x10] sm:$0xff]
        %v4948 = vld [vmem:[%s1297 + $0x18] sm:$0xff]
        %v4949 = vpack.c.bf16 %v4943, %v4943
        %v4950 = vld [vmem:[%s503] sm:$0xff]
        %v4951 = vld [vmem:[%s503 + $0x8] sm:$0xff]
        %v4952 = vld [vmem:[%s503 + $0x10] sm:$0xff]
        %v4953 = vld [vmem:[%s503 + $0x18] sm:$0xff]
        %v4954 = vld [vmem:[%s503 + $0x20] sm:$0xff]
        %v4955 = vld [vmem:[%s503 + $0x28] sm:$0xff]
        %v4956 = vld [vmem:[%s503 + $0x30] sm:$0xff]
        %v4957 = vld [vmem:[%s503 + $0x38] sm:$0xff]
        %v4958 = vld [vmem:[%s503 + $0x40] sm:$0xff]
        %v4959 = vld [vmem:[%s503 + $0x48] sm:$0xff]
        %v4960 = vld [vmem:[%s503 + $0x50] sm:$0xff]
        %v4961 = vld [vmem:[%s503 + $0x58] sm:$0xff]
        %v4962 = vld [vmem:[%s503 + $0x60] sm:$0xff]
        %v4963 = vld [vmem:[%s503 + $0x68] sm:$0xff]
        %v4964 = vld [vmem:[%s503 + $0x70] sm:$0xff]
        %v4965 = vld [vmem:[%s503 + $0x78] sm:$0xff]
        %v4966 = vld [vmem:[%s503 + $0x80] sm:$0xff]
        %v4967 = vld [vmem:[%s503 + $0x88] sm:$0xff]
        %v4968 = vld [vmem:[%s503 + $0x90] sm:$0xff]
        %v4969 = vld [vmem:[%s503 + $0x98] sm:$0xff]
        %v4970 = vld [vmem:[%s503 + $0xa0] sm:$0xff]
        %v4971 = vld [vmem:[%s503 + $0xa8] sm:$0xff]
        %v4972 = vld [vmem:[%s503 + $0xb0] sm:$0xff]
        %v4973 = vld [vmem:[%s503 + $0xb8] sm:$0xff]
        %v4974 = vld [vmem:[%s503 + $0xc0] sm:$0xff]
        %v4975 = vld [vmem:[%s503 + $0xc8] sm:$0xff]
        %v4976 = vld [vmem:[%s503 + $0xd0] sm:$0xff]
        %v4977 = vld [vmem:[%s503 + $0xd8] sm:$0xff]
        %v4978 = vld [vmem:[%s503 + $0xe0] sm:$0xff]
        %v4979 = vld [vmem:[%s503 + $0xe8] sm:$0xff]
        %v4980 = vld [vmem:[%s503 + $0xf0] sm:$0xff]
        %v4981 = vld [vmem:[%s503 + $0xf8] sm:$0xff]
        %v5014 = vunpack.c.l.b16 %v4950
        %v5015 = vunpack.c.h.b16 %v4950
        %v5016 = vunpack.c.l.b16 %v4951
        %v5017 = vunpack.c.h.b16 %v4951
        %v5018 = vunpack.c.l.b16 %v4952
        %v5019 = vunpack.c.h.b16 %v4952
        %v5020 = vunpack.c.l.b16 %v4953
        %v5021 = vunpack.c.h.b16 %v4953
        %v5022 = vunpack.c.l.b16 %v4954
        %v5023 = vunpack.c.h.b16 %v4954
        %v5024 = vunpack.c.l.b16 %v4955
        %v5025 = vunpack.c.h.b16 %v4955
        %v5026 = vunpack.c.l.b16 %v4956
        %v5027 = vunpack.c.h.b16 %v4956
        %v5028 = vunpack.c.l.b16 %v4957
        %v5029 = vunpack.c.h.b16 %v4957
        %v5030 = vunpack.c.l.b16 %v4958
        %v5031 = vunpack.c.h.b16 %v4958
        %v5032 = vunpack.c.l.b16 %v4959
        %v5033 = vunpack.c.h.b16 %v4959
        %v5034 = vunpack.c.l.b16 %v4960
        %v5035 = vunpack.c.h.b16 %v4960
        %v5036 = vunpack.c.l.b16 %v4961
        %v5037 = vunpack.c.h.b16 %v4961
        %v5038 = vunpack.c.l.b16 %v4962
        %v5039 = vunpack.c.h.b16 %v4962
        %v5040 = vunpack.c.l.b16 %v4963
        %v5041 = vunpack.c.h.b16 %v4963
        %v5042 = vunpack.c.l.b16 %v4964
        %v5043 = vunpack.c.h.b16 %v4964
        %v5044 = vunpack.c.l.b16 %v4965
        %v5045 = vunpack.c.h.b16 %v4965
        %v5046 = vunpack.c.l.b16 %v4966
        %v5047 = vunpack.c.h.b16 %v4966
        %v5048 = vunpack.c.l.b16 %v4967
        %v5049 = vunpack.c.h.b16 %v4967
        %v5050 = vunpack.c.l.b16 %v4968
        %v5051 = vunpack.c.h.b16 %v4968
        %v5052 = vunpack.c.l.b16 %v4969
        %v5053 = vunpack.c.h.b16 %v4969
        %v5054 = vunpack.c.l.b16 %v4970
        %v5055 = vunpack.c.h.b16 %v4970
        %v5056 = vunpack.c.l.b16 %v4971
        %v5057 = vunpack.c.h.b16 %v4971
        %v5058 = vunpack.c.l.b16 %v4972
        %v5059 = vunpack.c.h.b16 %v4972
        %v5060 = vunpack.c.l.b16 %v4973
        %v5061 = vunpack.c.h.b16 %v4973
        %v5062 = vunpack.c.l.b16 %v4974
        %v5063 = vunpack.c.h.b16 %v4974
        %v5064 = vunpack.c.l.b16 %v4975
        %v5065 = vunpack.c.h.b16 %v4975
        %v5066 = vunpack.c.l.b16 %v4976
        %v5067 = vunpack.c.h.b16 %v4976
        %v5068 = vunpack.c.l.b16 %v4977
        %v5069 = vunpack.c.h.b16 %v4977
        %v5070 = vunpack.c.l.b16 %v4978
        %v5071 = vunpack.c.h.b16 %v4978
        %v5072 = vunpack.c.l.b16 %v4979
        %v5073 = vunpack.c.h.b16 %v4979
        %v5074 = vunpack.c.l.b16 %v4980
        %v5075 = vunpack.c.h.b16 %v4980
        %v5076 = vunpack.c.l.b16 %v4981
        %v5077 = vunpack.c.h.b16 %v4981
        %v5078 = vpack.c.b16 %v5018, %v5014
        %v5079 = vpack.c.b16 %v5019, %v5015
        %v5080 = vpack.c.b16 %v5020, %v5016
        %v5081 = vpack.c.b16 %v5021, %v5017
        %v5082 = vpack.c.b16 %v5026, %v5022
        %v5083 = vpack.c.b16 %v5027, %v5023
        %v5084 = vpack.c.b16 %v5028, %v5024
        %v5085 = vpack.c.b16 %v5029, %v5025
        %v5086 = vpack.c.b16 %v5034, %v5030
        %v5087 = vpack.c.b16 %v5035, %v5031
        %v5088 = vpack.c.b16 %v5036, %v5032
        %v5089 = vpack.c.b16 %v5037, %v5033
        %v5090 = vpack.c.b16 %v5042, %v5038
        %v5091 = vpack.c.b16 %v5043, %v5039
        %v5092 = vpack.c.b16 %v5044, %v5040
        %v5093 = vpack.c.b16 %v5045, %v5041
        %v5094 = vpack.c.b16 %v5050, %v5046
        %v5095 = vpack.c.b16 %v5051, %v5047
        %v5096 = vpack.c.b16 %v5052, %v5048
        %v5097 = vpack.c.b16 %v5053, %v5049
        %v5098 = vpack.c.b16 %v5058, %v5054
        %v5099 = vpack.c.b16 %v5059, %v5055
        %v5100 = vpack.c.b16 %v5060, %v5056
        %v5101 = vpack.c.b16 %v5061, %v5057
        %v5102 = vpack.c.b16 %v5066, %v5062
        %v5103 = vpack.c.b16 %v5067, %v5063
        %v5104 = vpack.c.b16 %v5068, %v5064
        %v5105 = vpack.c.b16 %v5069, %v5065
        %v5106 = vpack.c.b16 %v5074, %v5070
        %v5107 = vpack.c.b16 %v5075, %v5071
        %v5108 = vpack.c.b16 %v5076, %v5072
        %v5109 = vpack.c.b16 %v5077, %v5073
        %5142 = vmatprep.subr.bf16.mxu0 %v5079
        %5143 = vmatpush1.bf16.msra.mxu0 %v5078
        %5144 = vmatprep.subr.bf16.mxu0 %v5083
        %5145 = vmatpush1.bf16.msra.mxu0 %v5082
        %5146 = vmatprep.subr.bf16.mxu0 %v5087
        %5147 = vmatpush1.bf16.msra.mxu0 %v5086
        %5148 = vmatprep.subr.bf16.mxu0 %v5091
        %5149 = vmatpush1.bf16.msra.mxu0 %v5090
        %5150 = vmatprep.subr.bf16.mxu0 %v5095
        %5151 = vmatpush1.bf16.msra.mxu0 %v5094
        %5152 = vmatprep.subr.bf16.mxu0 %v5099
        %5153 = vmatpush1.bf16.msra.mxu0 %v5098
        %5154 = vmatprep.subr.bf16.mxu0 %v5103
        %5155 = vmatpush1.bf16.msra.mxu0 %v5102
        %5156 = vmatprep.subr.bf16.mxu0 %v5107
        %5157 = vmatpush1.bf16.msra.mxu0 %v5106
        %5158 = vmatprep.subr.bf16.mxu0 0
        %5159 = vmatpush1.bf16.msra.mxu0 0
        %5160 = vmatprep.subr.bf16.mxu0 0
        %5161 = vmatpush1.bf16.msra.mxu0 0
        %5162 = vmatprep.subr.bf16.mxu0 0
        %5163 = vmatpush1.bf16.msra.mxu0 0
        %5164 = vmatprep.subr.bf16.mxu0 0
        %5165 = vmatpush1.bf16.msra.mxu0 0
        %5166 = vmatprep.subr.bf16.mxu0 0
        %5167 = vmatpush1.bf16.msra.mxu0 0
        %5168 = vmatprep.subr.bf16.mxu0 0
        %5169 = vmatpush1.bf16.msra.mxu0 0
        %5170 = vmatprep.subr.bf16.mxu0 0
        %5171 = vmatpush1.bf16.msra.mxu0 0
        %5172 = vmatprep.subr.bf16.mxu0 0
        %5173 = vmatpush1.bf16.msra.mxu0 0
        %5174 = vmatprep.mubr.bf16.mxu0 0
        %5175 = vmatmul.mubr.bf16.gmra.mrb[0].mxu0 %v4949
        %v5176 = vpop.f32.mrb[0].mxu0
        %v5177 = vadd.f32 0.0, %v5176
        %v5178 = vpop.f32.mrb[0].mxu0
        %v5179 = vadd.f32 0.0, %v5178
        %v5180 = vpop.f32.mrb[0].mxu0
        %v5181 = vpop.f32.mrb[0].mxu0
        %5182 = vdwg.mxu0
        %5183 = vmatprep.subr.bf16.mxu0 %v5081
        %5184 = vmatpush1.bf16.msra.mxu0 %v5080
        %5185 = vmatprep.subr.bf16.mxu0 %v5085
        %5186 = vmatpush1.bf16.msra.mxu0 %v5084
        %5187 = vmatprep.subr.bf16.mxu0 %v5089
        %5188 = vmatpush1.bf16.msra.mxu0 %v5088
        %5189 = vmatprep.subr.bf16.mxu0 %v5093
        %5190 = vmatpush1.bf16.msra.mxu0 %v5092
        %5191 = vmatprep.subr.bf16.mxu0 %v5097
        %5192 = vmatpush1.bf16.msra.mxu0 %v5096
        %5193 = vmatprep.subr.bf16.mxu0 %v5101
        %5194 = vmatpush1.bf16.msra.mxu0 %v5100
        %5195 = vmatprep.subr.bf16.mxu0 %v5105
        %5196 = vmatpush1.bf16.msra.mxu0 %v5104
        %5197 = vmatprep.subr.bf16.mxu0 %v5109
        %5198 = vmatpush1.bf16.msra.mxu0 %v5108
        %5199 = vmatprep.subr.bf16.mxu0 0
        %5200 = vmatpush1.bf16.msra.mxu0 0
        %5201 = vmatprep.subr.bf16.mxu0 0
        %5202 = vmatpush1.bf16.msra.mxu0 0
        %5203 = vmatprep.subr.bf16.mxu0 0
        %5204 = vmatpush1.bf16.msra.mxu0 0
        %5205 = vmatprep.subr.bf16.mxu0 0
        %5206 = vmatpush1.bf16.msra.mxu0 0
        %5207 = vmatprep.subr.bf16.mxu0 0
        %5208 = vmatpush1.bf16.msra.mxu0 0
        %5209 = vmatprep.subr.bf16.mxu0 0
        %5210 = vmatpush1.bf16.msra.mxu0 0
        %5211 = vmatprep.subr.bf16.mxu0 0
        %5212 = vmatpush1.bf16.msra.mxu0 0
        %5213 = vmatprep.subr.bf16.mxu0 0
        %5214 = vmatpush1.bf16.msra.mxu0 0
        %5215 = vmatprep.mubr.bf16.mxu0 0
        %5216 = vmatmul.mubr.bf16.gmra.mrb[0].mxu0 %v4949
        %v5217 = vpop.f32.mrb[0].mxu0
        %v5218 = vadd.f32 0.0, %v5217
        %v5219 = vpop.f32.mrb[0].mxu0
        %v5220 = vadd.f32 0.0, %v5219
        %v5221 = vpop.f32.mrb[0].mxu0
        %v5222 = vpop.f32.mrb[0].mxu0
        %5223 = vdwg.mxu0
        %v5224 = vadd.f32 %v4945, %v5177
        %v5225 = vadd.f32 %v4946, %v5179
        %v5226 = vadd.f32 %v4947, %v5218
        %v5227 = vadd.f32 %v4948, %v5220
        %v5228 = vxor.u32 %v5224, 2147483648
        %v5229 = vmul.f32 %v5228, 1.442695
        %v5230 = vpow.pop %v5229
        %v5231 = vadd.f32 %v5230, 1.0
        %v5232 = vrcp.pop %v5231
        %v5233 = vmul.f32 1.0, %v5232
        %v5234 = vxor.u32 %v5225, 2147483648
        %v5235 = vmul.f32 %v5234, 1.442695
        %v5236 = vpow.pop %v5235
        %v5237 = vadd.f32 %v5236, 1.0
        %v5238 = vrcp.pop %v5237
        %v5239 = vmul.f32 1.0, %v5238
        %v5240 = vtanh.pop %v5226
        %v5241 = vxor.u32 %v5227, 2147483648
        %v5242 = vmul.f32 %v5241, 1.442695
        %v5243 = vpow.pop %v5242
        %v5244 = vadd.f32 %v5243, 1.0
        %v5245 = vrcp.pop %v5244
        %v5246 = vmul.f32 1.0, %v5245
        %v5247 = vmul.f32 %v5239, %v4944
        %v5248 = vmul.f32 %v5233, %v5240
        %v5249 = vadd.f32 %v5247, %v5248
        %v5250 = vtanh.pop %v5249
        %v5251 = vmul.f32 %v5246, %v5250
        %v5252 = vsel %vm1610, %v5251, %v4943
        %v5253 = vsel %vm1610, %v5249, %v4944
        %5254 = vst [vmem:[#allocation4] sm:$0xff] %v5252
        %5255 = vst [vmem:[#allocation5] sm:$0xff] %v5253
        %v5256 = vld [vmem:[#allocation4] sm:$0xff]
        %v5257 = vld [vmem:[#allocation5] sm:$0xff]
        %v5258 = vld [vmem:[%s1619] sm:$0xff]
        %v5259 = vld [vmem:[%s1619 + $0x8] sm:$0xff]
        %v5260 = vld [vmem:[%s1619 + $0x10] sm:$0xff]
        %v5261 = vld [vmem:[%s1619 + $0x18] sm:$0xff]
        %v5262 = vpack.c.bf16 %v5256, %v5256
        %v5263 = vld [vmem:[%s503] sm:$0xff]
        %v5264 = vld [vmem:[%s503 + $0x8] sm:$0xff]
        %v5265 = vld [vmem:[%s503 + $0x10] sm:$0xff]
        %v5266 = vld [vmem:[%s503 + $0x18] sm:$0xff]
        %v5267 = vld [vmem:[%s503 + $0x20] sm:$0xff]
        %v5268 = vld [vmem:[%s503 + $0x28] sm:$0xff]
        %v5269 = vld [vmem:[%s503 + $0x30] sm:$0xff]
        %v5270 = vld [vmem:[%s503 + $0x38] sm:$0xff]
        %v5271 = vld [vmem:[%s503 + $0x40] sm:$0xff]
        %v5272 = vld [vmem:[%s503 + $0x48] sm:$0xff]
        %v5273 = vld [vmem:[%s503 + $0x50] sm:$0xff]
        %v5274 = vld [vmem:[%s503 + $0x58] sm:$0xff]
        %v5275 = vld [vmem:[%s503 + $0x60] sm:$0xff]
        %v5276 = vld [vmem:[%s503 + $0x68] sm:$0xff]
        %v5277 = vld [vmem:[%s503 + $0x70] sm:$0xff]
        %v5278 = vld [vmem:[%s503 + $0x78] sm:$0xff]
        %v5279 = vld [vmem:[%s503 + $0x80] sm:$0xff]
        %v5280 = vld [vmem:[%s503 + $0x88] sm:$0xff]
        %v5281 = vld [vmem:[%s503 + $0x90] sm:$0xff]
        %v5282 = vld [vmem:[%s503 + $0x98] sm:$0xff]
        %v5283 = vld [vmem:[%s503 + $0xa0] sm:$0xff]
        %v5284 = vld [vmem:[%s503 + $0xa8] sm:$0xff]
        %v5285 = vld [vmem:[%s503 + $0xb0] sm:$0xff]
        %v5286 = vld [vmem:[%s503 + $0xb8] sm:$0xff]
        %v5287 = vld [vmem:[%s503 + $0xc0] sm:$0xff]
        %v5288 = vld [vmem:[%s503 + $0xc8] sm:$0xff]
        %v5289 = vld [vmem:[%s503 + $0xd0] sm:$0xff]
        %v5290 = vld [vmem:[%s503 + $0xd8] sm:$0xff]
        %v5291 = vld [vmem:[%s503 + $0xe0] sm:$0xff]
        %v5292 = vld [vmem:[%s503 + $0xe8] sm:$0xff]
        %v5293 = vld [vmem:[%s503 + $0xf0] sm:$0xff]
        %v5294 = vld [vmem:[%s503 + $0xf8] sm:$0xff]
        %v5327 = vunpack.c.l.b16 %v5263
        %v5328 = vunpack.c.h.b16 %v5263
        %v5329 = vunpack.c.l.b16 %v5264
        %v5330 = vunpack.c.h.b16 %v5264
        %v5331 = vunpack.c.l.b16 %v5265
        %v5332 = vunpack.c.h.b16 %v5265
        %v5333 = vunpack.c.l.b16 %v5266
        %v5334 = vunpack.c.h.b16 %v5266
        %v5335 = vunpack.c.l.b16 %v5267
        %v5336 = vunpack.c.h.b16 %v5267
        %v5337 = vunpack.c.l.b16 %v5268
        %v5338 = vunpack.c.h.b16 %v5268
        %v5339 = vunpack.c.l.b16 %v5269
        %v5340 = vunpack.c.h.b16 %v5269
        %v5341 = vunpack.c.l.b16 %v5270
        %v5342 = vunpack.c.h.b16 %v5270
        %v5343 = vunpack.c.l.b16 %v5271
        %v5344 = vunpack.c.h.b16 %v5271
        %v5345 = vunpack.c.l.b16 %v5272
        %v5346 = vunpack.c.h.b16 %v5272
        %v5347 = vunpack.c.l.b16 %v5273
        %v5348 = vunpack.c.h.b16 %v5273
        %v5349 = vunpack.c.l.b16 %v5274
        %v5350 = vunpack.c.h.b16 %v5274
        %v5351 = vunpack.c.l.b16 %v5275
        %v5352 = vunpack.c.h.b16 %v5275
        %v5353 = vunpack.c.l.b16 %v5276
        %v5354 = vunpack.c.h.b16 %v5276
        %v5355 = vunpack.c.l.b16 %v5277
        %v5356 = vunpack.c.h.b16 %v5277
        %v5357 = vunpack.c.l.b16 %v5278
        %v5358 = vunpack.c.h.b16 %v5278
        %v5359 = vunpack.c.l.b16 %v5279
        %v5360 = vunpack.c.h.b16 %v5279
        %v5361 = vunpack.c.l.b16 %v5280
        %v5362 = vunpack.c.h.b16 %v5280
        %v5363 = vunpack.c.l.b16 %v5281
        %v5364 = vunpack.c.h.b16 %v5281
        %v5365 = vunpack.c.l.b16 %v5282
        %v5366 = vunpack.c.h.b16 %v5282
        %v5367 = vunpack.c.l.b16 %v5283
        %v5368 = vunpack.c.h.b16 %v5283
        %v5369 = vunpack.c.l.b16 %v5284
        %v5370 = vunpack.c.h.b16 %v5284
        %v5371 = vunpack.c.l.b16 %v5285
        %v5372 = vunpack.c.h.b16 %v5285
        %v5373 = vunpack.c.l.b16 %v5286
        %v5374 = vunpack.c.h.b16 %v5286
        %v5375 = vunpack.c.l.b16 %v5287
        %v5376 = vunpack.c.h.b16 %v5287
        %v5377 = vunpack.c.l.b16 %v5288
        %v5378 = vunpack.c.h.b16 %v5288
        %v5379 = vunpack.c.l.b16 %v5289
        %v5380 = vunpack.c.h.b16 %v5289
        %v5381 = vunpack.c.l.b16 %v5290
        %v5382 = vunpack.c.h.b16 %v5290
        %v5383 = vunpack.c.l.b16 %v5291
        %v5384 = vunpack.c.h.b16 %v5291
        %v5385 = vunpack.c.l.b16 %v5292
        %v5386 = vunpack.c.h.b16 %v5292
        %v5387 = vunpack.c.l.b16 %v5293
        %v5388 = vunpack.c.h.b16 %v5293
        %v5389 = vunpack.c.l.b16 %v5294
        %v5390 = vunpack.c.h.b16 %v5294
        %v5391 = vpack.c.b16 %v5331, %v5327
        %v5392 = vpack.c.b16 %v5332, %v5328
        %v5393 = vpack.c.b16 %v5333, %v5329
        %v5394 = vpack.c.b16 %v5334, %v5330
        %v5395 = vpack.c.b16 %v5339, %v5335
        %v5396 = vpack.c.b16 %v5340, %v5336
        %v5397 = vpack.c.b16 %v5341, %v5337
        %v5398 = vpack.c.b16 %v5342, %v5338
        %v5399 = vpack.c.b16 %v5347, %v5343
        %v5400 = vpack.c.b16 %v5348, %v5344
        %v5401 = vpack.c.b16 %v5349, %v5345
        %v5402 = vpack.c.b16 %v5350, %v5346
        %v5403 = vpack.c.b16 %v5355, %v5351
        %v5404 = vpack.c.b16 %v5356, %v5352
        %v5405 = vpack.c.b16 %v5357, %v5353
        %v5406 = vpack.c.b16 %v5358, %v5354
        %v5407 = vpack.c.b16 %v5363, %v5359
        %v5408 = vpack.c.b16 %v5364, %v5360
        %v5409 = vpack.c.b16 %v5365, %v5361
        %v5410 = vpack.c.b16 %v5366, %v5362
        %v5411 = vpack.c.b16 %v5371, %v5367
        %v5412 = vpack.c.b16 %v5372, %v5368
        %v5413 = vpack.c.b16 %v5373, %v5369
        %v5414 = vpack.c.b16 %v5374, %v5370
        %v5415 = vpack.c.b16 %v5379, %v5375
        %v5416 = vpack.c.b16 %v5380, %v5376
        %v5417 = vpack.c.b16 %v5381, %v5377
        %v5418 = vpack.c.b16 %v5382, %v5378
        %v5419 = vpack.c.b16 %v5387, %v5383
        %v5420 = vpack.c.b16 %v5388, %v5384
        %v5421 = vpack.c.b16 %v5389, %v5385
        %v5422 = vpack.c.b16 %v5390, %v5386
        %5455 = vmatprep.subr.bf16.mxu0 %v5392
        %5456 = vmatpush1.bf16.msra.mxu0 %v5391
        %5457 = vmatprep.subr.bf16.mxu0 %v5396
        %5458 = vmatpush1.bf16.msra.mxu0 %v5395
        %5459 = vmatprep.subr.bf16.mxu0 %v5400
        %5460 = vmatpush1.bf16.msra.mxu0 %v5399
        %5461 = vmatprep.subr.bf16.mxu0 %v5404
        %5462 = vmatpush1.bf16.msra.mxu0 %v5403
        %5463 = vmatprep.subr.bf16.mxu0 %v5408
        %5464 = vmatpush1.bf16.msra.mxu0 %v5407
        %5465 = vmatprep.subr.bf16.mxu0 %v5412
        %5466 = vmatpush1.bf16.msra.mxu0 %v5411
        %5467 = vmatprep.subr.bf16.mxu0 %v5416
        %5468 = vmatpush1.bf16.msra.mxu0 %v5415
        %5469 = vmatprep.subr.bf16.mxu0 %v5420
        %5470 = vmatpush1.bf16.msra.mxu0 %v5419
        %5471 = vmatprep.subr.bf16.mxu0 0
        %5472 = vmatpush1.bf16.msra.mxu0 0
        %5473 = vmatprep.subr.bf16.mxu0 0
        %5474 = vmatpush1.bf16.msra.mxu0 0
        %5475 = vmatprep.subr.bf16.mxu0 0
        %5476 = vmatpush1.bf16.msra.mxu0 0
        %5477 = vmatprep.subr.bf16.mxu0 0
        %5478 = vmatpush1.bf16.msra.mxu0 0
        %5479 = vmatprep.subr.bf16.mxu0 0
        %5480 = vmatpush1.bf16.msra.mxu0 0
        %5481 = vmatprep.subr.bf16.mxu0 0
        %5482 = vmatpush1.bf16.msra.mxu0 0
        %5483 = vmatprep.subr.bf16.mxu0 0
        %5484 = vmatpush1.bf16.msra.mxu0 0
        %5485 = vmatprep.subr.bf16.mxu0 0
        %5486 = vmatpush1.bf16.msra.mxu0 0
        %5487 = vmatprep.mubr.bf16.mxu0 0
        %5488 = vmatmul.mubr.bf16.gmra.mrb[0].mxu0 %v5262
        %v5489 = vpop.f32.mrb[0].mxu0
        %v5490 = vadd.f32 0.0, %v5489
        %v5491 = vpop.f32.mrb[0].mxu0
        %v5492 = vadd.f32 0.0, %v5491
        %v5493 = vpop.f32.mrb[0].mxu0
        %v5494 = vpop.f32.mrb[0].mxu0
        %5495 = vdwg.mxu0
        %5496 = vmatprep.subr.bf16.mxu0 %v5394
        %5497 = vmatpush1.bf16.msra.mxu0 %v5393
        %5498 = vmatprep.subr.bf16.mxu0 %v5398
        %5499 = vmatpush1.bf16.msra.mxu0 %v5397
        %5500 = vmatprep.subr.bf16.mxu0 %v5402
        %5501 = vmatpush1.bf16.msra.mxu0 %v5401
        %5502 = vmatprep.subr.bf16.mxu0 %v5406
        %5503 = vmatpush1.bf16.msra.mxu0 %v5405
        %5504 = vmatprep.subr.bf16.mxu0 %v5410
        %5505 = vmatpush1.bf16.msra.mxu0 %v5409
        %5506 = vmatprep.subr.bf16.mxu0 %v5414
        %5507 = vmatpush1.bf16.msra.mxu0 %v5413
        %5508 = vmatprep.subr.bf16.mxu0 %v5418
        %5509 = vmatpush1.bf16.msra.mxu0 %v5417
        %5510 = vmatprep.subr.bf16.mxu0 %v5422
        %5511 = vmatpush1.bf16.msra.mxu0 %v5421
        %5512 = vmatprep.subr.bf16.mxu0 0
        %5513 = vmatpush1.bf16.msra.mxu0 0
        %5514 = vmatprep.subr.bf16.mxu0 0
        %5515 = vmatpush1.bf16.msra.mxu0 0
        %5516 = vmatprep.subr.bf16.mxu0 0
        %5517 = vmatpush1.bf16.msra.mxu0 0
        %5518 = vmatprep.subr.bf16.mxu0 0
        %5519 = vmatpush1.bf16.msra.mxu0 0
        %5520 = vmatprep.subr.bf16.mxu0 0
        %5521 = vmatpush1.bf16.msra.mxu0 0
        %5522 = vmatprep.subr.bf16.mxu0 0
        %5523 = vmatpush1.bf16.msra.mxu0 0
        %5524 = vmatprep.subr.bf16.mxu0 0
        %5525 = vmatpush1.bf16.msra.mxu0 0
        %5526 = vmatprep.subr.bf16.mxu0 0
        %5527 = vmatpush1.bf16.msra.mxu0 0
        %5528 = vmatprep.mubr.bf16.mxu0 0
        %5529 = vmatmul.mubr.bf16.gmra.mrb[0].mxu0 %v5262
        %v5530 = vpop.f32.mrb[0].mxu0
        %v5531 = vadd.f32 0.0, %v5530
        %v5532 = vpop.f32.mrb[0].mxu0
        %v5533 = vadd.f32 0.0, %v5532
        %v5534 = vpop.f32.mrb[0].mxu0
        %v5535 = vpop.f32.mrb[0].mxu0
        %5536 = vdwg.mxu0
        %v5537 = vadd.f32 %v5258, %v5490
        %v5538 = vadd.f32 %v5259, %v5492
        %v5539 = vadd.f32 %v5260, %v5531
        %v5540 = vadd.f32 %v5261, %v5533
        %v5541 = vxor.u32 %v5537, 2147483648
        %v5542 = vmul.f32 %v5541, 1.442695
        %v5543 = vpow.pop %v5542
        %v5544 = vadd.f32 %v5543, 1.0
        %v5545 = vrcp.pop %v5544
        %v5546 = vmul.f32 1.0, %v5545
        %v5547 = vxor.u32 %v5538, 2147483648
        %v5548 = vmul.f32 %v5547, 1.442695
        %v5549 = vpow.pop %v5548
        %v5550 = vadd.f32 %v5549, 1.0
        %v5551 = vrcp.pop %v5550
        %v5552 = vmul.f32 1.0, %v5551
        %v5553 = vtanh.pop %v5539
        %v5554 = vxor.u32 %v5540, 2147483648
        %v5555 = vmul.f32 %v5554, 1.442695
        %v5556 = vpow.pop %v5555
        %v5557 = vadd.f32 %v5556, 1.0
        %v5558 = vrcp.pop %v5557
        %v5559 = vmul.f32 1.0, %v5558
        %v5560 = vmul.f32 %v5552, %v5257
        %v5561 = vmul.f32 %v5546, %v5553
        %v5562 = vadd.f32 %v5560, %v5561
        %v5563 = vtanh.pop %v5562
        %v5564 = vmul.f32 %v5559, %v5563
        %v5565 = vsel %vm1932, %v5564, %v5256
        %v5566 = vsel %vm1932, %v5562, %v5257
        %5567 = vst [vmem:[#allocation4] sm:$0xff] %v5565
        %5568 = vst [vmem:[#allocation5] sm:$0xff] %v5566
        %v5569 = vld [vmem:[#allocation4] sm:$0xff]
        %v5570 = vld [vmem:[#allocation5] sm:$0xff]
        %v5571 = vld [vmem:[%s1941] sm:$0xff]
        %v5572 = vld [vmem:[%s1941 + $0x8] sm:$0xff]
        %v5573 = vld [vmem:[%s1941 + $0x10] sm:$0xff]
        %v5574 = vld [vmem:[%s1941 + $0x18] sm:$0xff]
        %v5575 = vpack.c.bf16 %v5569, %v5569
        %v5576 = vld [vmem:[%s503] sm:$0xff]
        %v5577 = vld [vmem:[%s503 + $0x8] sm:$0xff]
        %v5578 = vld [vmem:[%s503 + $0x10] sm:$0xff]
        %v5579 = vld [vmem:[%s503 + $0x18] sm:$0xff]
        %v5580 = vld [vmem:[%s503 + $0x20] sm:$0xff]
        %v5581 = vld [vmem:[%s503 + $0x28] sm:$0xff]
        %v5582 = vld [vmem:[%s503 + $0x30] sm:$0xff]
        %v5583 = vld [vmem:[%s503 + $0x38] sm:$0xff]
        %v5584 = vld [vmem:[%s503 + $0x40] sm:$0xff]
        %v5585 = vld [vmem:[%s503 + $0x48] sm:$0xff]
        %v5586 = vld [vmem:[%s503 + $0x50] sm:$0xff]
        %v5587 = vld [vmem:[%s503 + $0x58] sm:$0xff]
        %v5588 = vld [vmem:[%s503 + $0x60] sm:$0xff]
        %v5589 = vld [vmem:[%s503 + $0x68] sm:$0xff]
        %v5590 = vld [vmem:[%s503 + $0x70] sm:$0xff]
        %v5591 = vld [vmem:[%s503 + $0x78] sm:$0xff]
        %v5592 = vld [vmem:[%s503 + $0x80] sm:$0xff]
        %v5593 = vld [vmem:[%s503 + $0x88] sm:$0xff]
        %v5594 = vld [vmem:[%s503 + $0x90] sm:$0xff]
        %v5595 = vld [vmem:[%s503 + $0x98] sm:$0xff]
        %v5596 = vld [vmem:[%s503 + $0xa0] sm:$0xff]
        %v5597 = vld [vmem:[%s503 + $0xa8] sm:$0xff]
        %v5598 = vld [vmem:[%s503 + $0xb0] sm:$0xff]
        %v5599 = vld [vmem:[%s503 + $0xb8] sm:$0xff]
        %v5600 = vld [vmem:[%s503 + $0xc0] sm:$0xff]
        %v5601 = vld [vmem:[%s503 + $0xc8] sm:$0xff]
        %v5602 = vld [vmem:[%s503 + $0xd0] sm:$0xff]
        %v5603 = vld [vmem:[%s503 + $0xd8] sm:$0xff]
        %v5604 = vld [vmem:[%s503 + $0xe0] sm:$0xff]
        %v5605 = vld [vmem:[%s503 + $0xe8] sm:$0xff]
        %v5606 = vld [vmem:[%s503 + $0xf0] sm:$0xff]
        %v5607 = vld [vmem:[%s503 + $0xf8] sm:$0xff]
        %v5640 = vunpack.c.l.b16 %v5576
        %v5641 = vunpack.c.h.b16 %v5576
        %v5642 = vunpack.c.l.b16 %v5577
        %v5643 = vunpack.c.h.b16 %v5577
        %v5644 = vunpack.c.l.b16 %v5578
        %v5645 = vunpack.c.h.b16 %v5578
        %v5646 = vunpack.c.l.b16 %v5579
        %v5647 = vunpack.c.h.b16 %v5579
        %v5648 = vunpack.c.l.b16 %v5580
        %v5649 = vunpack.c.h.b16 %v5580
        %v5650 = vunpack.c.l.b16 %v5581
        %v5651 = vunpack.c.h.b16 %v5581
        %v5652 = vunpack.c.l.b16 %v5582
        %v5653 = vunpack.c.h.b16 %v5582
        %v5654 = vunpack.c.l.b16 %v5583
        %v5655 = vunpack.c.h.b16 %v5583
        %v5656 = vunpack.c.l.b16 %v5584
        %v5657 = vunpack.c.h.b16 %v5584
        %v5658 = vunpack.c.l.b16 %v5585
        %v5659 = vunpack.c.h.b16 %v5585
        %v5660 = vunpack.c.l.b16 %v5586
        %v5661 = vunpack.c.h.b16 %v5586
        %v5662 = vunpack.c.l.b16 %v5587
        %v5663 = vunpack.c.h.b16 %v5587
        %v5664 = vunpack.c.l.b16 %v5588
        %v5665 = vunpack.c.h.b16 %v5588
        %v5666 = vunpack.c.l.b16 %v5589
        %v5667 = vunpack.c.h.b16 %v5589
        %v5668 = vunpack.c.l.b16 %v5590
        %v5669 = vunpack.c.h.b16 %v5590
        %v5670 = vunpack.c.l.b16 %v5591
        %v5671 = vunpack.c.h.b16 %v5591
        %v5672 = vunpack.c.l.b16 %v5592
        %v5673 = vunpack.c.h.b16 %v5592
        %v5674 = vunpack.c.l.b16 %v5593
        %v5675 = vunpack.c.h.b16 %v5593
        %v5676 = vunpack.c.l.b16 %v5594
        %v5677 = vunpack.c.h.b16 %v5594
        %v5678 = vunpack.c.l.b16 %v5595
        %v5679 = vunpack.c.h.b16 %v5595
        %v5680 = vunpack.c.l.b16 %v5596
        %v5681 = vunpack.c.h.b16 %v5596
        %v5682 = vunpack.c.l.b16 %v5597
        %v5683 = vunpack.c.h.b16 %v5597
        %v5684 = vunpack.c.l.b16 %v5598
        %v5685 = vunpack.c.h.b16 %v5598
        %v5686 = vunpack.c.l.b16 %v5599
        %v5687 = vunpack.c.h.b16 %v5599
        %v5688 = vunpack.c.l.b16 %v5600
        %v5689 = vunpack.c.h.b16 %v5600
        %v5690 = vunpack.c.l.b16 %v5601
        %v5691 = vunpack.c.h.b16 %v5601
        %v5692 = vunpack.c.l.b16 %v5602
        %v5693 = vunpack.c.h.b16 %v5602
        %v5694 = vunpack.c.l.b16 %v5603
        %v5695 = vunpack.c.h.b16 %v5603
        %v5696 = vunpack.c.l.b16 %v5604
        %v5697 = vunpack.c.h.b16 %v5604
        %v5698 = vunpack.c.l.b16 %v5605
        %v5699 = vunpack.c.h.b16 %v5605
        %v5700 = vunpack.c.l.b16 %v5606
        %v5701 = vunpack.c.h.b16 %v5606
        %v5702 = vunpack.c.l.b16 %v5607
        %v5703 = vunpack.c.h.b16 %v5607
        %v5704 = vpack.c.b16 %v5644, %v5640
        %v5705 = vpack.c.b16 %v5645, %v5641
        %v5706 = vpack.c.b16 %v5646, %v5642
        %v5707 = vpack.c.b16 %v5647, %v5643
        %v5708 = vpack.c.b16 %v5652, %v5648
        %v5709 = vpack.c.b16 %v5653, %v5649
        %v5710 = vpack.c.b16 %v5654, %v5650
        %v5711 = vpack.c.b16 %v5655, %v5651
        %v5712 = vpack.c.b16 %v5660, %v5656
        %v5713 = vpack.c.b16 %v5661, %v5657
        %v5714 = vpack.c.b16 %v5662, %v5658
        %v5715 = vpack.c.b16 %v5663, %v5659
        %v5716 = vpack.c.b16 %v5668, %v5664
        %v5717 = vpack.c.b16 %v5669, %v5665
        %v5718 = vpack.c.b16 %v5670, %v5666
        %v5719 = vpack.c.b16 %v5671, %v5667
        %v5720 = vpack.c.b16 %v5676, %v5672
        %v5721 = vpack.c.b16 %v5677, %v5673
        %v5722 = vpack.c.b16 %v5678, %v5674
        %v5723 = vpack.c.b16 %v5679, %v5675
        %v5724 = vpack.c.b16 %v5684, %v5680
        %v5725 = vpack.c.b16 %v5685, %v5681
        %v5726 = vpack.c.b16 %v5686, %v5682
        %v5727 = vpack.c.b16 %v5687, %v5683
        %v5728 = vpack.c.b16 %v5692, %v5688
        %v5729 = vpack.c.b16 %v5693, %v5689
        %v5730 = vpack.c.b16 %v5694, %v5690
        %v5731 = vpack.c.b16 %v5695, %v5691
        %v5732 = vpack.c.b16 %v5700, %v5696
        %v5733 = vpack.c.b16 %v5701, %v5697
        %v5734 = vpack.c.b16 %v5702, %v5698
        %v5735 = vpack.c.b16 %v5703, %v5699
        %5768 = vmatprep.subr.bf16.mxu0 %v5705
        %5769 = vmatpush1.bf16.msra.mxu0 %v5704
        %5770 = vmatprep.subr.bf16.mxu0 %v5709
        %5771 = vmatpush1.bf16.msra.mxu0 %v5708
        %5772 = vmatprep.subr.bf16.mxu0 %v5713
        %5773 = vmatpush1.bf16.msra.mxu0 %v5712
        %5774 = vmatprep.subr.bf16.mxu0 %v5717
        %5775 = vmatpush1.bf16.msra.mxu0 %v5716
        %5776 = vmatprep.subr.bf16.mxu0 %v5721
        %5777 = vmatpush1.bf16.msra.mxu0 %v5720
        %5778 = vmatprep.subr.bf16.mxu0 %v5725
        %5779 = vmatpush1.bf16.msra.mxu0 %v5724
        %5780 = vmatprep.subr.bf16.mxu0 %v5729
        %5781 = vmatpush1.bf16.msra.mxu0 %v5728
        %5782 = vmatprep.subr.bf16.mxu0 %v5733
        %5783 = vmatpush1.bf16.msra.mxu0 %v5732
        %5784 = vmatprep.subr.bf16.mxu0 0
        %5785 = vmatpush1.bf16.msra.mxu0 0
        %5786 = vmatprep.subr.bf16.mxu0 0
        %5787 = vmatpush1.bf16.msra.mxu0 0
        %5788 = vmatprep.subr.bf16.mxu0 0
        %5789 = vmatpush1.bf16.msra.mxu0 0
        %5790 = vmatprep.subr.bf16.mxu0 0
        %5791 = vmatpush1.bf16.msra.mxu0 0
        %5792 = vmatprep.subr.bf16.mxu0 0
        %5793 = vmatpush1.bf16.msra.mxu0 0
        %5794 = vmatprep.subr.bf16.mxu0 0
        %5795 = vmatpush1.bf16.msra.mxu0 0
        %5796 = vmatprep.subr.bf16.mxu0 0
        %5797 = vmatpush1.bf16.msra.mxu0 0
        %5798 = vmatprep.subr.bf16.mxu0 0
        %5799 = vmatpush1.bf16.msra.mxu0 0
        %5800 = vmatprep.mubr.bf16.mxu0 0
        %5801 = vmatmul.mubr.bf16.gmra.mrb[0].mxu0 %v5575
        %v5802 = vpop.f32.mrb[0].mxu0
        %v5803 = vadd.f32 0.0, %v5802
        %v5804 = vpop.f32.mrb[0].mxu0
        %v5805 = vadd.f32 0.0, %v5804
        %v5806 = vpop.f32.mrb[0].mxu0
        %v5807 = vpop.f32.mrb[0].mxu0
        %5808 = vdwg.mxu0
        %5809 = vmatprep.subr.bf16.mxu0 %v5707
        %5810 = vmatpush1.bf16.msra.mxu0 %v5706
        %5811 = vmatprep.subr.bf16.mxu0 %v5711
        %5812 = vmatpush1.bf16.msra.mxu0 %v5710
        %5813 = vmatprep.subr.bf16.mxu0 %v5715
        %5814 = vmatpush1.bf16.msra.mxu0 %v5714
        %5815 = vmatprep.subr.bf16.mxu0 %v5719
        %5816 = vmatpush1.bf16.msra.mxu0 %v5718
        %5817 = vmatprep.subr.bf16.mxu0 %v5723
        %5818 = vmatpush1.bf16.msra.mxu0 %v5722
        %5819 = vmatprep.subr.bf16.mxu0 %v5727
        %5820 = vmatpush1.bf16.msra.mxu0 %v5726
        %5821 = vmatprep.subr.bf16.mxu0 %v5731
        %5822 = vmatpush1.bf16.msra.mxu0 %v5730
        %5823 = vmatprep.subr.bf16.mxu0 %v5735
        %5824 = vmatpush1.bf16.msra.mxu0 %v5734
        %5825 = vmatprep.subr.bf16.mxu0 0
        %5826 = vmatpush1.bf16.msra.mxu0 0
        %5827 = vmatprep.subr.bf16.mxu0 0
        %5828 = vmatpush1.bf16.msra.mxu0 0
        %5829 = vmatprep.subr.bf16.mxu0 0
        %5830 = vmatpush1.bf16.msra.mxu0 0
        %5831 = vmatprep.subr.bf16.mxu0 0
        %5832 = vmatpush1.bf16.msra.mxu0 0
        %5833 = vmatprep.subr.bf16.mxu0 0
        %5834 = vmatpush1.bf16.msra.mxu0 0
        %5835 = vmatprep.subr.bf16.mxu0 0
        %5836 = vmatpush1.bf16.msra.mxu0 0
        %5837 = vmatprep.subr.bf16.mxu0 0
        %5838 = vmatpush1.bf16.msra.mxu0 0
        %5839 = vmatprep.subr.bf16.mxu0 0
        %5840 = vmatpush1.bf16.msra.mxu0 0
        %5841 = vmatprep.mubr.bf16.mxu0 0
        %5842 = vmatmul.mubr.bf16.gmra.mrb[0].mxu0 %v5575
        %v5843 = vpop.f32.mrb[0].mxu0
        %v5844 = vadd.f32 0.0, %v5843
        %v5845 = vpop.f32.mrb[0].mxu0
        %v5846 = vadd.f32 0.0, %v5845
        %v5847 = vpop.f32.mrb[0].mxu0
        %v5848 = vpop.f32.mrb[0].mxu0
        %5849 = vdwg.mxu0
        %v5850 = vadd.f32 %v5571, %v5803
        %v5851 = vadd.f32 %v5572, %v5805
        %v5852 = vadd.f32 %v5573, %v5844
        %v5853 = vadd.f32 %v5574, %v5846
        %v5854 = vxor.u32 %v5850, 2147483648
        %v5855 = vmul.f32 %v5854, 1.442695
        %v5856 = vpow.pop %v5855
        %v5857 = vadd.f32 %v5856, 1.0
        %v5858 = vrcp.pop %v5857
        %v5859 = vmul.f32 1.0, %v5858
        %v5860 = vxor.u32 %v5851, 2147483648
        %v5861 = vmul.f32 %v5860, 1.442695
        %v5862 = vpow.pop %v5861
        %v5863 = vadd.f32 %v5862, 1.0
        %v5864 = vrcp.pop %v5863
        %v5865 = vmul.f32 1.0, %v5864
        %v5866 = vtanh.pop %v5852
        %v5867 = vxor.u32 %v5853, 2147483648
        %v5868 = vmul.f32 %v5867, 1.442695
        %v5869 = vpow.pop %v5868
        %v5870 = vadd.f32 %v5869, 1.0
        %v5871 = vrcp.pop %v5870
        %v5872 = vmul.f32 1.0, %v5871
        %v5873 = vmul.f32 %v5865, %v5570
        %v5874 = vmul.f32 %v5859, %v5866
        %v5875 = vadd.f32 %v5873, %v5874
        %v5876 = vtanh.pop %v5875
        %v5877 = vmul.f32 %v5872, %v5876
        %v5878 = vsel %vm2254, %v5877, %v5569
        %v5879 = vsel %vm2254, %v5875, %v5570
        %5880 = vst [vmem:[#allocation4] sm:$0xff] %v5878
        %5881 = vst [vmem:[#allocation5] sm:$0xff] %v5879
        %v5882 = vld [vmem:[#allocation4] sm:$0xff]
        %v5883 = vld [vmem:[#allocation5] sm:$0xff]
        %v5884 = vld [vmem:[%s2263] sm:$0xff]
        %v5885 = vld [vmem:[%s2263 + $0x8] sm:$0xff]
        %v5886 = vld [vmem:[%s2263 + $0x10] sm:$0xff]
        %v5887 = vld [vmem:[%s2263 + $0x18] sm:$0xff]
        %v5888 = vpack.c.bf16 %v5882, %v5882
        %v5889 = vld [vmem:[%s503] sm:$0xff]
        %v5890 = vld [vmem:[%s503 + $0x8] sm:$0xff]
        %v5891 = vld [vmem:[%s503 + $0x10] sm:$0xff]
        %v5892 = vld [vmem:[%s503 + $0x18] sm:$0xff]
        %v5893 = vld [vmem:[%s503 + $0x20] sm:$0xff]
        %v5894 = vld [vmem:[%s503 + $0x28] sm:$0xff]
        %v5895 = vld [vmem:[%s503 + $0x30] sm:$0xff]
        %v5896 = vld [vmem:[%s503 + $0x38] sm:$0xff]
        %v5897 = vld [vmem:[%s503 + $0x40] sm:$0xff]
        %v5898 = vld [vmem:[%s503 + $0x48] sm:$0xff]
        %v5899 = vld [vmem:[%s503 + $0x50] sm:$0xff]
        %v5900 = vld [vmem:[%s503 + $0x58] sm:$0xff]
        %v5901 = vld [vmem:[%s503 + $0x60] sm:$0xff]
        %v5902 = vld [vmem:[%s503 + $0x68] sm:$0xff]
        %v5903 = vld [vmem:[%s503 + $0x70] sm:$0xff]
        %v5904 = vld [vmem:[%s503 + $0x78] sm:$0xff]
        %v5905 = vld [vmem:[%s503 + $0x80] sm:$0xff]
        %v5906 = vld [vmem:[%s503 + $0x88] sm:$0xff]
        %v5907 = vld [vmem:[%s503 + $0x90] sm:$0xff]
        %v5908 = vld [vmem:[%s503 + $0x98] sm:$0xff]
        %v5909 = vld [vmem:[%s503 + $0xa0] sm:$0xff]
        %v5910 = vld [vmem:[%s503 + $0xa8] sm:$0xff]
        %v5911 = vld [vmem:[%s503 + $0xb0] sm:$0xff]
        %v5912 = vld [vmem:[%s503 + $0xb8] sm:$0xff]
        %v5913 = vld [vmem:[%s503 + $0xc0] sm:$0xff]
        %v5914 = vld [vmem:[%s503 + $0xc8] sm:$0xff]
        %v5915 = vld [vmem:[%s503 + $0xd0] sm:$0xff]
        %v5916 = vld [vmem:[%s503 + $0xd8] sm:$0xff]
        %v5917 = vld [vmem:[%s503 + $0xe0] sm:$0xff]
        %v5918 = vld [vmem:[%s503 + $0xe8] sm:$0xff]
        %v5919 = vld [vmem:[%s503 + $0xf0] sm:$0xff]
        %v5920 = vld [vmem:[%s503 + $0xf8] sm:$0xff]
        %v5953 = vunpack.c.l.b16 %v5889
        %v5954 = vunpack.c.h.b16 %v5889
        %v5955 = vunpack.c.l.b16 %v5890
        %v5956 = vunpack.c.h.b16 %v5890
        %v5957 = vunpack.c.l.b16 %v5891
        %v5958 = vunpack.c.h.b16 %v5891
        %v5959 = vunpack.c.l.b16 %v5892
        %v5960 = vunpack.c.h.b16 %v5892
        %v5961 = vunpack.c.l.b16 %v5893
        %v5962 = vunpack.c.h.b16 %v5893
        %v5963 = vunpack.c.l.b16 %v5894
        %v5964 = vunpack.c.h.b16 %v5894
        %v5965 = vunpack.c.l.b16 %v5895
        %v5966 = vunpack.c.h.b16 %v5895
        %v5967 = vunpack.c.l.b16 %v5896
        %v5968 = vunpack.c.h.b16 %v5896
        %v5969 = vunpack.c.l.b16 %v5897
        %v5970 = vunpack.c.h.b16 %v5897
        %v5971 = vunpack.c.l.b16 %v5898
        %v5972 = vunpack.c.h.b16 %v5898
        %v5973 = vunpack.c.l.b16 %v5899
        %v5974 = vunpack.c.h.b16 %v5899
        %v5975 = vunpack.c.l.b16 %v5900
        %v5976 = vunpack.c.h.b16 %v5900
        %v5977 = vunpack.c.l.b16 %v5901
        %v5978 = vunpack.c.h.b16 %v5901
        %v5979 = vunpack.c.l.b16 %v5902
        %v5980 = vunpack.c.h.b16 %v5902
        %v5981 = vunpack.c.l.b16 %v5903
        %v5982 = vunpack.c.h.b16 %v5903
        %v5983 = vunpack.c.l.b16 %v5904
        %v5984 = vunpack.c.h.b16 %v5904
        %v5985 = vunpack.c.l.b16 %v5905
        %v5986 = vunpack.c.h.b16 %v5905
        %v5987 = vunpack.c.l.b16 %v5906
        %v5988 = vunpack.c.h.b16 %v5906
        %v5989 = vunpack.c.l.b16 %v5907
        %v5990 = vunpack.c.h.b16 %v5907
        %v5991 = vunpack.c.l.b16 %v5908
        %v5992 = vunpack.c.h.b16 %v5908
        %v5993 = vunpack.c.l.b16 %v5909
        %v5994 = vunpack.c.h.b16 %v5909
        %v5995 = vunpack.c.l.b16 %v5910
        %v5996 = vunpack.c.h.b16 %v5910
        %v5997 = vunpack.c.l.b16 %v5911
        %v5998 = vunpack.c.h.b16 %v5911
        %v5999 = vunpack.c.l.b16 %v5912
        %v6000 = vunpack.c.h.b16 %v5912
        %v6001 = vunpack.c.l.b16 %v5913
        %v6002 = vunpack.c.h.b16 %v5913
        %v6003 = vunpack.c.l.b16 %v5914
        %v6004 = vunpack.c.h.b16 %v5914
        %v6005 = vunpack.c.l.b16 %v5915
        %v6006 = vunpack.c.h.b16 %v5915
        %v6007 = vunpack.c.l.b16 %v5916
        %v6008 = vunpack.c.h.b16 %v5916
        %v6009 = vunpack.c.l.b16 %v5917
        %v6010 = vunpack.c.h.b16 %v5917
        %v6011 = vunpack.c.l.b16 %v5918
        %v6012 = vunpack.c.h.b16 %v5918
        %v6013 = vunpack.c.l.b16 %v5919
        %v6014 = vunpack.c.h.b16 %v5919
        %v6015 = vunpack.c.l.b16 %v5920
        %v6016 = vunpack.c.h.b16 %v5920
        %v6017 = vpack.c.b16 %v5957, %v5953
        %v6018 = vpack.c.b16 %v5958, %v5954
        %v6019 = vpack.c.b16 %v5959, %v5955
        %v6020 = vpack.c.b16 %v5960, %v5956
        %v6021 = vpack.c.b16 %v5965, %v5961
        %v6022 = vpack.c.b16 %v5966, %v5962
        %v6023 = vpack.c.b16 %v5967, %v5963
        %v6024 = vpack.c.b16 %v5968, %v5964
        %v6025 = vpack.c.b16 %v5973, %v5969
        %v6026 = vpack.c.b16 %v5974, %v5970
        %v6027 = vpack.c.b16 %v5975, %v5971
        %v6028 = vpack.c.b16 %v5976, %v5972
        %v6029 = vpack.c.b16 %v5981, %v5977
        %v6030 = vpack.c.b16 %v5982, %v5978
        %v6031 = vpack.c.b16 %v5983, %v5979
        %v6032 = vpack.c.b16 %v5984, %v5980
        %v6033 = vpack.c.b16 %v5989, %v5985
        %v6034 = vpack.c.b16 %v5990, %v5986
        %v6035 = vpack.c.b16 %v5991, %v5987
        %v6036 = vpack.c.b16 %v5992, %v5988
        %v6037 = vpack.c.b16 %v5997, %v5993
        %v6038 = vpack.c.b16 %v5998, %v5994
        %v6039 = vpack.c.b16 %v5999, %v5995
        %v6040 = vpack.c.b16 %v6000, %v5996
        %v6041 = vpack.c.b16 %v6005, %v6001
        %v6042 = vpack.c.b16 %v6006, %v6002
        %v6043 = vpack.c.b16 %v6007, %v6003
        %v6044 = vpack.c.b16 %v6008, %v6004
        %v6045 = vpack.c.b16 %v6013, %v6009
        %v6046 = vpack.c.b16 %v6014, %v6010
        %v6047 = vpack.c.b16 %v6015, %v6011
        %v6048 = vpack.c.b16 %v6016, %v6012
        %6081 = vmatprep.subr.bf16.mxu0 %v6018
        %6082 = vmatpush1.bf16.msra.mxu0 %v6017
        %6083 = vmatprep.subr.bf16.mxu0 %v6022
        %6084 = vmatpush1.bf16.msra.mxu0 %v6021
        %6085 = vmatprep.subr.bf16.mxu0 %v6026
        %6086 = vmatpush1.bf16.msra.mxu0 %v6025
        %6087 = vmatprep.subr.bf16.mxu0 %v6030
        %6088 = vmatpush1.bf16.msra.mxu0 %v6029
        %6089 = vmatprep.subr.bf16.mxu0 %v6034
        %6090 = vmatpush1.bf16.msra.mxu0 %v6033
        %6091 = vmatprep.subr.bf16.mxu0 %v6038
        %6092 = vmatpush1.bf16.msra.mxu0 %v6037
        %6093 = vmatprep.subr.bf16.mxu0 %v6042
        %6094 = vmatpush1.bf16.msra.mxu0 %v6041
        %6095 = vmatprep.subr.bf16.mxu0 %v6046
        %6096 = vmatpush1.bf16.msra.mxu0 %v6045
        %6097 = vmatprep.subr.bf16.mxu0 0
        %6098 = vmatpush1.bf16.msra.mxu0 0
        %6099 = vmatprep.subr.bf16.mxu0 0
        %6100 = vmatpush1.bf16.msra.mxu0 0
        %6101 = vmatprep.subr.bf16.mxu0 0
        %6102 = vmatpush1.bf16.msra.mxu0 0
        %6103 = vmatprep.subr.bf16.mxu0 0
        %6104 = vmatpush1.bf16.msra.mxu0 0
        %6105 = vmatprep.subr.bf16.mxu0 0
        %6106 = vmatpush1.bf16.msra.mxu0 0
        %6107 = vmatprep.subr.bf16.mxu0 0
        %6108 = vmatpush1.bf16.msra.mxu0 0
        %6109 = vmatprep.subr.bf16.mxu0 0
        %6110 = vmatpush1.bf16.msra.mxu0 0
        %6111 = vmatprep.subr.bf16.mxu0 0
        %6112 = vmatpush1.bf16.msra.mxu0 0
        %6113 = vmatprep.mubr.bf16.mxu0 0
        %6114 = vmatmul.mubr.bf16.gmra.mrb[0].mxu0 %v5888
        %v6115 = vpop.f32.mrb[0].mxu0
        %v6116 = vadd.f32 0.0, %v6115
        %v6117 = vpop.f32.mrb[0].mxu0
        %v6118 = vadd.f32 0.0, %v6117
        %v6119 = vpop.f32.mrb[0].mxu0
        %v6120 = vpop.f32.mrb[0].mxu0
        %6121 = vdwg.mxu0
        %6122 = vmatprep.subr.bf16.mxu0 %v6020
        %6123 = vmatpush1.bf16.msra.mxu0 %v6019
        %6124 = vmatprep.subr.bf16.mxu0 %v6024
        %6125 = vmatpush1.bf16.msra.mxu0 %v6023
        %6126 = vmatprep.subr.bf16.mxu0 %v6028
        %6127 = vmatpush1.bf16.msra.mxu0 %v6027
        %6128 = vmatprep.subr.bf16.mxu0 %v6032
        %6129 = vmatpush1.bf16.msra.mxu0 %v6031
        %6130 = vmatprep.subr.bf16.mxu0 %v6036
        %6131 = vmatpush1.bf16.msra.mxu0 %v6035
        %6132 = vmatprep.subr.bf16.mxu0 %v6040
        %6133 = vmatpush1.bf16.msra.mxu0 %v6039
        %6134 = vmatprep.subr.bf16.mxu0 %v6044
        %6135 = vmatpush1.bf16.msra.mxu0 %v6043
        %6136 = vmatprep.subr.bf16.mxu0 %v6048
        %6137 = vmatpush1.bf16.msra.mxu0 %v6047
        %6138 = vmatprep.subr.bf16.mxu0 0
        %6139 = vmatpush1.bf16.msra.mxu0 0
        %6140 = vmatprep.subr.bf16.mxu0 0
        %6141 = vmatpush1.bf16.msra.mxu0 0
        %6142 = vmatprep.subr.bf16.mxu0 0
        %6143 = vmatpush1.bf16.msra.mxu0 0
        %6144 = vmatprep.subr.bf16.mxu0 0
        %6145 = vmatpush1.bf16.msra.mxu0 0
        %6146 = vmatprep.subr.bf16.mxu0 0
        %6147 = vmatpush1.bf16.msra.mxu0 0
        %6148 = vmatprep.subr.bf16.mxu0 0
        %6149 = vmatpush1.bf16.msra.mxu0 0
        %6150 = vmatprep.subr.bf16.mxu0 0
        %6151 = vmatpush1.bf16.msra.mxu0 0
        %6152 = vmatprep.subr.bf16.mxu0 0
        %6153 = vmatpush1.bf16.msra.mxu0 0
        %6154 = vmatprep.mubr.bf16.mxu0 0
        %6155 = vmatmul.mubr.bf16.gmra.mrb[0].mxu0 %v5888
        %v6156 = vpop.f32.mrb[0].mxu0
        %v6157 = vadd.f32 0.0, %v6156
        %v6158 = vpop.f32.mrb[0].mxu0
        %v6159 = vadd.f32 0.0, %v6158
        %v6160 = vpop.f32.mrb[0].mxu0
        %v6161 = vpop.f32.mrb[0].mxu0
        %6162 = vdwg.mxu0
        %v6163 = vadd.f32 %v5884, %v6116
        %v6164 = vadd.f32 %v5885, %v6118
        %v6165 = vadd.f32 %v5886, %v6157
        %v6166 = vadd.f32 %v5887, %v6159
        %v6167 = vxor.u32 %v6163, 2147483648
        %v6168 = vmul.f32 %v6167, 1.442695
        %v6169 = vpow.pop %v6168
        %v6170 = vadd.f32 %v6169, 1.0
        %v6171 = vrcp.pop %v6170
        %v6172 = vmul.f32 1.0, %v6171
        %v6173 = vxor.u32 %v6164, 2147483648
        %v6174 = vmul.f32 %v6173, 1.442695
        %v6175 = vpow.pop %v6174
        %v6176 = vadd.f32 %v6175, 1.0
        %v6177 = vrcp.pop %v6176
        %v6178 = vmul.f32 1.0, %v6177
        %v6179 = vtanh.pop %v6165
        %v6180 = vxor.u32 %v6166, 2147483648
        %v6181 = vmul.f32 %v6180, 1.442695
        %v6182 = vpow.pop %v6181
        %v6183 = vadd.f32 %v6182, 1.0
        %v6184 = vrcp.pop %v6183
        %v6185 = vmul.f32 1.0, %v6184
        %v6186 = vmul.f32 %v6178, %v5883
        %v6187 = vmul.f32 %v6172, %v6179
        %v6188 = vadd.f32 %v6186, %v6187
        %v6189 = vtanh.pop %v6188
        %v6190 = vmul.f32 %v6185, %v6189
        %v6191 = vsel %vm2576, %v6190, %v5882
        %v6192 = vsel %vm2576, %v6188, %v5883
        %6193 = vst [vmem:[#allocation4] sm:$0xff] %v6191
        %6194 = vst [vmem:[#allocation5] sm:$0xff] %v6192
        %v6195 = vld [vmem:[#allocation4] sm:$0xff]
        %v6196 = vld [vmem:[#allocation5] sm:$0xff]
        %v6197 = vld [vmem:[%s2585] sm:$0xff]
        %v6198 = vld [vmem:[%s2585 + $0x8] sm:$0xff]
        %v6199 = vld [vmem:[%s2585 + $0x10] sm:$0xff]
        %v6200 = vld [vmem:[%s2585 + $0x18] sm:$0xff]
        %v6201 = vpack.c.bf16 %v6195, %v6195
        %v6202 = vld [vmem:[%s503] sm:$0xff]
        %v6203 = vld [vmem:[%s503 + $0x8] sm:$0xff]
        %v6204 = vld [vmem:[%s503 + $0x10] sm:$0xff]
        %v6205 = vld [vmem:[%s503 + $0x18] sm:$0xff]
        %v6206 = vld [vmem:[%s503 + $0x20] sm:$0xff]
        %v6207 = vld [vmem:[%s503 + $0x28] sm:$0xff]
        %v6208 = vld [vmem:[%s503 + $0x30] sm:$0xff]
        %v6209 = vld [vmem:[%s503 + $0x38] sm:$0xff]
        %v6210 = vld [vmem:[%s503 + $0x40] sm:$0xff]
        %v6211 = vld [vmem:[%s503 + $0x48] sm:$0xff]
        %v6212 = vld [vmem:[%s503 + $0x50] sm:$0xff]
        %v6213 = vld [vmem:[%s503 + $0x58] sm:$0xff]
        %v6214 = vld [vmem:[%s503 + $0x60] sm:$0xff]
        %v6215 = vld [vmem:[%s503 + $0x68] sm:$0xff]
        %v6216 = vld [vmem:[%s503 + $0x70] sm:$0xff]
        %v6217 = vld [vmem:[%s503 + $0x78] sm:$0xff]
        %v6218 = vld [vmem:[%s503 + $0x80] sm:$0xff]
        %v6219 = vld [vmem:[%s503 + $0x88] sm:$0xff]
        %v6220 = vld [vmem:[%s503 + $0x90] sm:$0xff]
        %v6221 = vld [vmem:[%s503 + $0x98] sm:$0xff]
        %v6222 = vld [vmem:[%s503 + $0xa0] sm:$0xff]
        %v6223 = vld [vmem:[%s503 + $0xa8] sm:$0xff]
        %v6224 = vld [vmem:[%s503 + $0xb0] sm:$0xff]
        %v6225 = vld [vmem:[%s503 + $0xb8] sm:$0xff]
        %v6226 = vld [vmem:[%s503 + $0xc0] sm:$0xff]
        %v6227 = vld [vmem:[%s503 + $0xc8] sm:$0xff]
        %v6228 = vld [vmem:[%s503 + $0xd0] sm:$0xff]
        %v6229 = vld [vmem:[%s503 + $0xd8] sm:$0xff]
        %v6230 = vld [vmem:[%s503 + $0xe0] sm:$0xff]
        %v6231 = vld [vmem:[%s503 + $0xe8] sm:$0xff]
        %v6232 = vld [vmem:[%s503 + $0xf0] sm:$0xff]
        %v6233 = vld [vmem:[%s503 + $0xf8] sm:$0xff]
        %v6266 = vunpack.c.l.b16 %v6202
        %v6267 = vunpack.c.h.b16 %v6202
        %v6268 = vunpack.c.l.b16 %v6203
        %v6269 = vunpack.c.h.b16 %v6203
        %v6270 = vunpack.c.l.b16 %v6204
        %v6271 = vunpack.c.h.b16 %v6204
        %v6272 = vunpack.c.l.b16 %v6205
        %v6273 = vunpack.c.h.b16 %v6205
        %v6274 = vunpack.c.l.b16 %v6206
        %v6275 = vunpack.c.h.b16 %v6206
        %v6276 = vunpack.c.l.b16 %v6207
        %v6277 = vunpack.c.h.b16 %v6207
        %v6278 = vunpack.c.l.b16 %v6208
        %v6279 = vunpack.c.h.b16 %v6208
        %v6280 = vunpack.c.l.b16 %v6209
        %v6281 = vunpack.c.h.b16 %v6209
        %v6282 = vunpack.c.l.b16 %v6210
        %v6283 = vunpack.c.h.b16 %v6210
        %v6284 = vunpack.c.l.b16 %v6211
        %v6285 = vunpack.c.h.b16 %v6211
        %v6286 = vunpack.c.l.b16 %v6212
        %v6287 = vunpack.c.h.b16 %v6212
        %v6288 = vunpack.c.l.b16 %v6213
        %v6289 = vunpack.c.h.b16 %v6213
        %v6290 = vunpack.c.l.b16 %v6214
        %v6291 = vunpack.c.h.b16 %v6214
        %v6292 = vunpack.c.l.b16 %v6215
        %v6293 = vunpack.c.h.b16 %v6215
        %v6294 = vunpack.c.l.b16 %v6216
        %v6295 = vunpack.c.h.b16 %v6216
        %v6296 = vunpack.c.l.b16 %v6217
        %v6297 = vunpack.c.h.b16 %v6217
        %v6298 = vunpack.c.l.b16 %v6218
        %v6299 = vunpack.c.h.b16 %v6218
        %v6300 = vunpack.c.l.b16 %v6219
        %v6301 = vunpack.c.h.b16 %v6219
        %v6302 = vunpack.c.l.b16 %v6220
        %v6303 = vunpack.c.h.b16 %v6220
        %v6304 = vunpack.c.l.b16 %v6221
        %v6305 = vunpack.c.h.b16 %v6221
        %v6306 = vunpack.c.l.b16 %v6222
        %v6307 = vunpack.c.h.b16 %v6222
        %v6308 = vunpack.c.l.b16 %v6223
        %v6309 = vunpack.c.h.b16 %v6223
        %v6310 = vunpack.c.l.b16 %v6224
        %v6311 = vunpack.c.h.b16 %v6224
        %v6312 = vunpack.c.l.b16 %v6225
        %v6313 = vunpack.c.h.b16 %v6225
        %v6314 = vunpack.c.l.b16 %v6226
        %v6315 = vunpack.c.h.b16 %v6226
        %v6316 = vunpack.c.l.b16 %v6227
        %v6317 = vunpack.c.h.b16 %v6227
        %v6318 = vunpack.c.l.b16 %v6228
        %v6319 = vunpack.c.h.b16 %v6228
        %v6320 = vunpack.c.l.b16 %v6229
        %v6321 = vunpack.c.h.b16 %v6229
        %v6322 = vunpack.c.l.b16 %v6230
        %v6323 = vunpack.c.h.b16 %v6230
        %v6324 = vunpack.c.l.b16 %v6231
        %v6325 = vunpack.c.h.b16 %v6231
        %v6326 = vunpack.c.l.b16 %v6232
        %v6327 = vunpack.c.h.b16 %v6232
        %v6328 = vunpack.c.l.b16 %v6233
        %v6329 = vunpack.c.h.b16 %v6233
        %v6330 = vpack.c.b16 %v6270, %v6266
        %v6331 = vpack.c.b16 %v6271, %v6267
        %v6332 = vpack.c.b16 %v6272, %v6268
        %v6333 = vpack.c.b16 %v6273, %v6269
        %v6334 = vpack.c.b16 %v6278, %v6274
        %v6335 = vpack.c.b16 %v6279, %v6275
        %v6336 = vpack.c.b16 %v6280, %v6276
        %v6337 = vpack.c.b16 %v6281, %v6277
        %v6338 = vpack.c.b16 %v6286, %v6282
        %v6339 = vpack.c.b16 %v6287, %v6283
        %v6340 = vpack.c.b16 %v6288, %v6284
        %v6341 = vpack.c.b16 %v6289, %v6285
        %v6342 = vpack.c.b16 %v6294, %v6290
        %v6343 = vpack.c.b16 %v6295, %v6291
        %v6344 = vpack.c.b16 %v6296, %v6292
        %v6345 = vpack.c.b16 %v6297, %v6293
        %v6346 = vpack.c.b16 %v6302, %v6298
        %v6347 = vpack.c.b16 %v6303, %v6299
        %v6348 = vpack.c.b16 %v6304, %v6300
        %v6349 = vpack.c.b16 %v6305, %v6301
        %v6350 = vpack.c.b16 %v6310, %v6306
        %v6351 = vpack.c.b16 %v6311, %v6307
        %v6352 = vpack.c.b16 %v6312, %v6308
        %v6353 = vpack.c.b16 %v6313, %v6309
        %v6354 = vpack.c.b16 %v6318, %v6314
        %v6355 = vpack.c.b16 %v6319, %v6315
        %v6356 = vpack.c.b16 %v6320, %v6316
        %v6357 = vpack.c.b16 %v6321, %v6317
        %v6358 = vpack.c.b16 %v6326, %v6322
        %v6359 = vpack.c.b16 %v6327, %v6323
        %v6360 = vpack.c.b16 %v6328, %v6324
        %v6361 = vpack.c.b16 %v6329, %v6325
        %6394 = vmatprep.subr.bf16.mxu0 %v6331
        %6395 = vmatpush1.bf16.msra.mxu0 %v6330
        %6396 = vmatprep.subr.bf16.mxu0 %v6335
        %6397 = vmatpush1.bf16.msra.mxu0 %v6334
        %6398 = vmatprep.subr.bf16.mxu0 %v6339
        %6399 = vmatpush1.bf16.msra.mxu0 %v6338
        %6400 = vmatprep.subr.bf16.mxu0 %v6343
        %6401 = vmatpush1.bf16.msra.mxu0 %v6342
        %6402 = vmatprep.subr.bf16.mxu0 %v6347
        %6403 = vmatpush1.bf16.msra.mxu0 %v6346
        %6404 = vmatprep.subr.bf16.mxu0 %v6351
        %6405 = vmatpush1.bf16.msra.mxu0 %v6350
        %6406 = vmatprep.subr.bf16.mxu0 %v6355
        %6407 = vmatpush1.bf16.msra.mxu0 %v6354
        %6408 = vmatprep.subr.bf16.mxu0 %v6359
        %6409 = vmatpush1.bf16.msra.mxu0 %v6358
        %6410 = vmatprep.subr.bf16.mxu0 0
        %6411 = vmatpush1.bf16.msra.mxu0 0
        %6412 = vmatprep.subr.bf16.mxu0 0
        %6413 = vmatpush1.bf16.msra.mxu0 0
        %6414 = vmatprep.subr.bf16.mxu0 0
        %6415 = vmatpush1.bf16.msra.mxu0 0
        %6416 = vmatprep.subr.bf16.mxu0 0
        %6417 = vmatpush1.bf16.msra.mxu0 0
        %6418 = vmatprep.subr.bf16.mxu0 0
        %6419 = vmatpush1.bf16.msra.mxu0 0
        %6420 = vmatprep.subr.bf16.mxu0 0
        %6421 = vmatpush1.bf16.msra.mxu0 0
        %6422 = vmatprep.subr.bf16.mxu0 0
        %6423 = vmatpush1.bf16.msra.mxu0 0
        %6424 = vmatprep.subr.bf16.mxu0 0
        %6425 = vmatpush1.bf16.msra.mxu0 0
        %6426 = vmatprep.mubr.bf16.mxu0 0
        %6427 = vmatmul.mubr.bf16.gmra.mrb[0].mxu0 %v6201
        %v6428 = vpop.f32.mrb[0].mxu0
        %v6429 = vadd.f32 0.0, %v6428
        %v6430 = vpop.f32.mrb[0].mxu0
        %v6431 = vadd.f32 0.0, %v6430
        %v6432 = vpop.f32.mrb[0].mxu0
        %v6433 = vpop.f32.mrb[0].mxu0
        %6434 = vdwg.mxu0
        %6435 = vmatprep.subr.bf16.mxu0 %v6333
        %6436 = vmatpush1.bf16.msra.mxu0 %v6332
        %6437 = vmatprep.subr.bf16.mxu0 %v6337
        %6438 = vmatpush1.bf16.msra.mxu0 %v6336
        %6439 = vmatprep.subr.bf16.mxu0 %v6341
        %6440 = vmatpush1.bf16.msra.mxu0 %v6340
        %6441 = vmatprep.subr.bf16.mxu0 %v6345
        %6442 = vmatpush1.bf16.msra.mxu0 %v6344
        %6443 = vmatprep.subr.bf16.mxu0 %v6349
        %6444 = vmatpush1.bf16.msra.mxu0 %v6348
        %6445 = vmatprep.subr.bf16.mxu0 %v6353
        %6446 = vmatpush1.bf16.msra.mxu0 %v6352
        %6447 = vmatprep.subr.bf16.mxu0 %v6357
        %6448 = vmatpush1.bf16.msra.mxu0 %v6356
        %6449 = vmatprep.subr.bf16.mxu0 %v6361
        %6450 = vmatpush1.bf16.msra.mxu0 %v6360
        %6451 = vmatprep.subr.bf16.mxu0 0
        %6452 = vmatpush1.bf16.msra.mxu0 0
        %6453 = vmatprep.subr.bf16.mxu0 0
        %6454 = vmatpush1.bf16.msra.mxu0 0
        %6455 = vmatprep.subr.bf16.mxu0 0
        %6456 = vmatpush1.bf16.msra.mxu0 0
        %6457 = vmatprep.subr.bf16.mxu0 0
        %6458 = vmatpush1.bf16.msra.mxu0 0
        %6459 = vmatprep.subr.bf16.mxu0 0
        %6460 = vmatpush1.bf16.msra.mxu0 0
        %6461 = vmatprep.subr.bf16.mxu0 0
        %6462 = vmatpush1.bf16.msra.mxu0 0
        %6463 = vmatprep.subr.bf16.mxu0 0
        %6464 = vmatpush1.bf16.msra.mxu0 0
        %6465 = vmatprep.subr.bf16.mxu0 0
        %6466 = vmatpush1.bf16.msra.mxu0 0
        %6467 = vmatprep.mubr.bf16.mxu0 0
        %6468 = vmatmul.mubr.bf16.gmra.mrb[0].mxu0 %v6201
        %v6469 = vpop.f32.mrb[0].mxu0
        %v6470 = vadd.f32 0.0, %v6469
        %v6471 = vpop.f32.mrb[0].mxu0
        %v6472 = vadd.f32 0.0, %v6471
        %v6473 = vpop.f32.mrb[0].mxu0
        %v6474 = vpop.f32.mrb[0].mxu0
        %6475 = vdwg.mxu0
        %v6476 = vadd.f32 %v6197, %v6429
        %v6477 = vadd.f32 %v6198, %v6431
        %v6478 = vadd.f32 %v6199, %v6470
        %v6479 = vadd.f32 %v6200, %v6472
        %v6480 = vxor.u32 %v6476, 2147483648
        %v6481 = vmul.f32 %v6480, 1.442695
        %v6482 = vpow.pop %v6481
        %v6483 = vadd.f32 %v6482, 1.0
        %v6484 = vrcp.pop %v6483
        %v6485 = vmul.f32 1.0, %v6484
        %v6486 = vxor.u32 %v6477, 2147483648
        %v6487 = vmul.f32 %v6486, 1.442695
        %v6488 = vpow.pop %v6487
        %v6489 = vadd.f32 %v6488, 1.0
        %v6490 = vrcp.pop %v6489
        %v6491 = vmul.f32 1.0, %v6490
        %v6492 = vtanh.pop %v6478
        %v6493 = vxor.u32 %v6479, 2147483648
        %v6494 = vmul.f32 %v6493, 1.442695
        %v6495 = vpow.pop %v6494
        %v6496 = vadd.f32 %v6495, 1.0
        %v6497 = vrcp.pop %v6496
        %v6498 = vmul.f32 1.0, %v6497
        %v6499 = vmul.f32 %v6491, %v6196
        %v6500 = vmul.f32 %v6485, %v6492
        %v6501 = vadd.f32 %v6499, %v6500
        %v6502 = vtanh.pop %v6501
        %v6503 = vmul.f32 %v6498, %v6502
        %v6504 = vsel %vm2898, %v6503, %v6195
        %v6505 = vsel %vm2898, %v6501, %v6196
        %6506 = vst [vmem:[#allocation4] sm:$0xff] %v6504
        %6507 = vst [vmem:[#allocation5] sm:$0xff] %v6505
        %v6508 = vld [vmem:[#allocation4] sm:$0xff]
        %v6509 = vld [vmem:[#allocation5] sm:$0xff]
        %v6510 = vld [vmem:[%s2907] sm:$0xff]
        %v6511 = vld [vmem:[%s2907 + $0x8] sm:$0xff]
        %v6512 = vld [vmem:[%s2907 + $0x10] sm:$0xff]
        %v6513 = vld [vmem:[%s2907 + $0x18] sm:$0xff]
        %v6514 = vpack.c.bf16 %v6508, %v6508
        %v6515 = vld [vmem:[%s503] sm:$0xff]
        %v6516 = vld [vmem:[%s503 + $0x8] sm:$0xff]
        %v6517 = vld [vmem:[%s503 + $0x10] sm:$0xff]
        %v6518 = vld [vmem:[%s503 + $0x18] sm:$0xff]
        %v6519 = vld [vmem:[%s503 + $0x20] sm:$0xff]
        %v6520 = vld [vmem:[%s503 + $0x28] sm:$0xff]
        %v6521 = vld [vmem:[%s503 + $0x30] sm:$0xff]
        %v6522 = vld [vmem:[%s503 + $0x38] sm:$0xff]
        %v6523 = vld [vmem:[%s503 + $0x40] sm:$0xff]
        %v6524 = vld [vmem:[%s503 + $0x48] sm:$0xff]
        %v6525 = vld [vmem:[%s503 + $0x50] sm:$0xff]
        %v6526 = vld [vmem:[%s503 + $0x58] sm:$0xff]
        %v6527 = vld [vmem:[%s503 + $0x60] sm:$0xff]
        %v6528 = vld [vmem:[%s503 + $0x68] sm:$0xff]
        %v6529 = vld [vmem:[%s503 + $0x70] sm:$0xff]
        %v6530 = vld [vmem:[%s503 + $0x78] sm:$0xff]
        %v6531 = vld [vmem:[%s503 + $0x80] sm:$0xff]
        %v6532 = vld [vmem:[%s503 + $0x88] sm:$0xff]
        %v6533 = vld [vmem:[%s503 + $0x90] sm:$0xff]
        %v6534 = vld [vmem:[%s503 + $0x98] sm:$0xff]
        %v6535 = vld [vmem:[%s503 + $0xa0] sm:$0xff]
        %v6536 = vld [vmem:[%s503 + $0xa8] sm:$0xff]
        %v6537 = vld [vmem:[%s503 + $0xb0] sm:$0xff]
        %v6538 = vld [vmem:[%s503 + $0xb8] sm:$0xff]
        %v6539 = vld [vmem:[%s503 + $0xc0] sm:$0xff]
        %v6540 = vld [vmem:[%s503 + $0xc8] sm:$0xff]
        %v6541 = vld [vmem:[%s503 + $0xd0] sm:$0xff]
        %v6542 = vld [vmem:[%s503 + $0xd8] sm:$0xff]
        %v6543 = vld [vmem:[%s503 + $0xe0] sm:$0xff]
        %v6544 = vld [vmem:[%s503 + $0xe8] sm:$0xff]
        %v6545 = vld [vmem:[%s503 + $0xf0] sm:$0xff]
        %v6546 = vld [vmem:[%s503 + $0xf8] sm:$0xff]
        %v6579 = vunpack.c.l.b16 %v6515
        %v6580 = vunpack.c.h.b16 %v6515
        %v6581 = vunpack.c.l.b16 %v6516
        %v6582 = vunpack.c.h.b16 %v6516
        %v6583 = vunpack.c.l.b16 %v6517
        %v6584 = vunpack.c.h.b16 %v6517
        %v6585 = vunpack.c.l.b16 %v6518
        %v6586 = vunpack.c.h.b16 %v6518
        %v6587 = vunpack.c.l.b16 %v6519
        %v6588 = vunpack.c.h.b16 %v6519
        %v6589 = vunpack.c.l.b16 %v6520
        %v6590 = vunpack.c.h.b16 %v6520
        %v6591 = vunpack.c.l.b16 %v6521
        %v6592 = vunpack.c.h.b16 %v6521
        %v6593 = vunpack.c.l.b16 %v6522
        %v6594 = vunpack.c.h.b16 %v6522
        %v6595 = vunpack.c.l.b16 %v6523
        %v6596 = vunpack.c.h.b16 %v6523
        %v6597 = vunpack.c.l.b16 %v6524
        %v6598 = vunpack.c.h.b16 %v6524
        %v6599 = vunpack.c.l.b16 %v6525
        %v6600 = vunpack.c.h.b16 %v6525
        %v6601 = vunpack.c.l.b16 %v6526
        %v6602 = vunpack.c.h.b16 %v6526
        %v6603 = vunpack.c.l.b16 %v6527
        %v6604 = vunpack.c.h.b16 %v6527
        %v6605 = vunpack.c.l.b16 %v6528
        %v6606 = vunpack.c.h.b16 %v6528
        %v6607 = vunpack.c.l.b16 %v6529
        %v6608 = vunpack.c.h.b16 %v6529
        %v6609 = vunpack.c.l.b16 %v6530
        %v6610 = vunpack.c.h.b16 %v6530
        %v6611 = vunpack.c.l.b16 %v6531
        %v6612 = vunpack.c.h.b16 %v6531
        %v6613 = vunpack.c.l.b16 %v6532
        %v6614 = vunpack.c.h.b16 %v6532
        %v6615 = vunpack.c.l.b16 %v6533
        %v6616 = vunpack.c.h.b16 %v6533
        %v6617 = vunpack.c.l.b16 %v6534
        %v6618 = vunpack.c.h.b16 %v6534
        %v6619 = vunpack.c.l.b16 %v6535
        %v6620 = vunpack.c.h.b16 %v6535
        %v6621 = vunpack.c.l.b16 %v6536
        %v6622 = vunpack.c.h.b16 %v6536
        %v6623 = vunpack.c.l.b16 %v6537
        %v6624 = vunpack.c.h.b16 %v6537
        %v6625 = vunpack.c.l.b16 %v6538
        %v6626 = vunpack.c.h.b16 %v6538
        %v6627 = vunpack.c.l.b16 %v6539
        %v6628 = vunpack.c.h.b16 %v6539
        %v6629 = vunpack.c.l.b16 %v6540
        %v6630 = vunpack.c.h.b16 %v6540
        %v6631 = vunpack.c.l.b16 %v6541
        %v6632 = vunpack.c.h.b16 %v6541
        %v6633 = vunpack.c.l.b16 %v6542
        %v6634 = vunpack.c.h.b16 %v6542
        %v6635 = vunpack.c.l.b16 %v6543
        %v6636 = vunpack.c.h.b16 %v6543
        %v6637 = vunpack.c.l.b16 %v6544
        %v6638 = vunpack.c.h.b16 %v6544
        %v6639 = vunpack.c.l.b16 %v6545
        %v6640 = vunpack.c.h.b16 %v6545
        %v6641 = vunpack.c.l.b16 %v6546
        %v6642 = vunpack.c.h.b16 %v6546
        %v6643 = vpack.c.b16 %v6583, %v6579
        %v6644 = vpack.c.b16 %v6584, %v6580
        %v6645 = vpack.c.b16 %v6585, %v6581
        %v6646 = vpack.c.b16 %v6586, %v6582
        %v6647 = vpack.c.b16 %v6591, %v6587
        %v6648 = vpack.c.b16 %v6592, %v6588
        %v6649 = vpack.c.b16 %v6593, %v6589
        %v6650 = vpack.c.b16 %v6594, %v6590
        %v6651 = vpack.c.b16 %v6599, %v6595
        %v6652 = vpack.c.b16 %v6600, %v6596
        %v6653 = vpack.c.b16 %v6601, %v6597
        %v6654 = vpack.c.b16 %v6602, %v6598
        %v6655 = vpack.c.b16 %v6607, %v6603
        %v6656 = vpack.c.b16 %v6608, %v6604
        %v6657 = vpack.c.b16 %v6609, %v6605
        %v6658 = vpack.c.b16 %v6610, %v6606
        %v6659 = vpack.c.b16 %v6615, %v6611
        %v6660 = vpack.c.b16 %v6616, %v6612
        %v6661 = vpack.c.b16 %v6617, %v6613
        %v6662 = vpack.c.b16 %v6618, %v6614
        %v6663 = vpack.c.b16 %v6623, %v6619
        %v6664 = vpack.c.b16 %v6624, %v6620
        %v6665 = vpack.c.b16 %v6625, %v6621
        %v6666 = vpack.c.b16 %v6626, %v6622
        %v6667 = vpack.c.b16 %v6631, %v6627
        %v6668 = vpack.c.b16 %v6632, %v6628
        %v6669 = vpack.c.b16 %v6633, %v6629
        %v6670 = vpack.c.b16 %v6634, %v6630
        %v6671 = vpack.c.b16 %v6639, %v6635
        %v6672 = vpack.c.b16 %v6640, %v6636
        %v6673 = vpack.c.b16 %v6641, %v6637
        %v6674 = vpack.c.b16 %v6642, %v6638
        %6707 = vmatprep.subr.bf16.mxu0 %v6644
        %6708 = vmatpush1.bf16.msra.mxu0 %v6643
        %6709 = vmatprep.subr.bf16.mxu0 %v6648
        %6710 = vmatpush1.bf16.msra.mxu0 %v6647
        %6711 = vmatprep.subr.bf16.mxu0 %v6652
        %6712 = vmatpush1.bf16.msra.mxu0 %v6651
        %6713 = vmatprep.subr.bf16.mxu0 %v6656
        %6714 = vmatpush1.bf16.msra.mxu0 %v6655
        %6715 = vmatprep.subr.bf16.mxu0 %v6660
        %6716 = vmatpush1.bf16.msra.mxu0 %v6659
        %6717 = vmatprep.subr.bf16.mxu0 %v6664
        %6718 = vmatpush1.bf16.msra.mxu0 %v6663
        %6719 = vmatprep.subr.bf16.mxu0 %v6668
        %6720 = vmatpush1.bf16.msra.mxu0 %v6667
        %6721 = vmatprep.subr.bf16.mxu0 %v6672
        %6722 = vmatpush1.bf16.msra.mxu0 %v6671
        %6723 = vmatprep.subr.bf16.mxu0 0
        %6724 = vmatpush1.bf16.msra.mxu0 0
        %6725 = vmatprep.subr.bf16.mxu0 0
        %6726 = vmatpush1.bf16.msra.mxu0 0
        %6727 = vmatprep.subr.bf16.mxu0 0
        %6728 = vmatpush1.bf16.msra.mxu0 0
        %6729 = vmatprep.subr.bf16.mxu0 0
        %6730 = vmatpush1.bf16.msra.mxu0 0
        %6731 = vmatprep.subr.bf16.mxu0 0
        %6732 = vmatpush1.bf16.msra.mxu0 0
        %6733 = vmatprep.subr.bf16.mxu0 0
        %6734 = vmatpush1.bf16.msra.mxu0 0
        %6735 = vmatprep.subr.bf16.mxu0 0
        %6736 = vmatpush1.bf16.msra.mxu0 0
        %6737 = vmatprep.subr.bf16.mxu0 0
        %6738 = vmatpush1.bf16.msra.mxu0 0
        %6739 = vmatprep.mubr.bf16.mxu0 0
        %6740 = vmatmul.mubr.bf16.gmra.mrb[0].mxu0 %v6514
        %v6741 = vpop.f32.mrb[0].mxu0
        %v6742 = vadd.f32 0.0, %v6741
        %v6743 = vpop.f32.mrb[0].mxu0
        %v6744 = vadd.f32 0.0, %v6743
        %v6745 = vpop.f32.mrb[0].mxu0
        %v6746 = vpop.f32.mrb[0].mxu0
        %6747 = vdwg.mxu0
        %6748 = vmatprep.subr.bf16.mxu0 %v6646
        %6749 = vmatpush1.bf16.msra.mxu0 %v6645
        %6750 = vmatprep.subr.bf16.mxu0 %v6650
        %6751 = vmatpush1.bf16.msra.mxu0 %v6649
        %6752 = vmatprep.subr.bf16.mxu0 %v6654
        %6753 = vmatpush1.bf16.msra.mxu0 %v6653
        %6754 = vmatprep.subr.bf16.mxu0 %v6658
        %6755 = vmatpush1.bf16.msra.mxu0 %v6657
        %6756 = vmatprep.subr.bf16.mxu0 %v6662
        %6757 = vmatpush1.bf16.msra.mxu0 %v6661
        %6758 = vmatprep.subr.bf16.mxu0 %v6666
        %6759 = vmatpush1.bf16.msra.mxu0 %v6665
        %6760 = vmatprep.subr.bf16.mxu0 %v6670
        %6761 = vmatpush1.bf16.msra.mxu0 %v6669
        %6762 = vmatprep.subr.bf16.mxu0 %v6674
        %6763 = vmatpush1.bf16.msra.mxu0 %v6673
        %6764 = vmatprep.subr.bf16.mxu0 0
        %6765 = vmatpush1.bf16.msra.mxu0 0
        %6766 = vmatprep.subr.bf16.mxu0 0
        %6767 = vmatpush1.bf16.msra.mxu0 0
        %6768 = vmatprep.subr.bf16.mxu0 0
        %6769 = vmatpush1.bf16.msra.mxu0 0
        %6770 = vmatprep.subr.bf16.mxu0 0
        %6771 = vmatpush1.bf16.msra.mxu0 0
        %6772 = vmatprep.subr.bf16.mxu0 0
        %6773 = vmatpush1.bf16.msra.mxu0 0
        %6774 = vmatprep.subr.bf16.mxu0 0
        %6775 = vmatpush1.bf16.msra.mxu0 0
        %6776 = vmatprep.subr.bf16.mxu0 0
        %6777 = vmatpush1.bf16.msra.mxu0 0
        %6778 = vmatprep.subr.bf16.mxu0 0
        %6779 = vmatpush1.bf16.msra.mxu0 0
        %6780 = vmatprep.mubr.bf16.mxu0 0
        %6781 = vmatmul.mubr.bf16.gmra.mrb[0].mxu0 %v6514
        %v6782 = vpop.f32.mrb[0].mxu0
        %v6783 = vadd.f32 0.0, %v6782
        %v6784 = vpop.f32.mrb[0].mxu0
        %v6785 = vadd.f32 0.0, %v6784
        %v6786 = vpop.f32.mrb[0].mxu0
        %v6787 = vpop.f32.mrb[0].mxu0
        %6788 = vdwg.mxu0
        %v6789 = vadd.f32 %v6510, %v6742
        %v6790 = vadd.f32 %v6511, %v6744
        %v6791 = vadd.f32 %v6512, %v6783
        %v6792 = vadd.f32 %v6513, %v6785
        %v6793 = vxor.u32 %v6789, 2147483648
        %v6794 = vmul.f32 %v6793, 1.442695
        %v6795 = vpow.pop %v6794
        %v6796 = vadd.f32 %v6795, 1.0
        %v6797 = vrcp.pop %v6796
        %v6798 = vmul.f32 1.0, %v6797
        %v6799 = vxor.u32 %v6790, 2147483648
        %v6800 = vmul.f32 %v6799, 1.442695
        %v6801 = vpow.pop %v6800
        %v6802 = vadd.f32 %v6801, 1.0
        %v6803 = vrcp.pop %v6802
        %v6804 = vmul.f32 1.0, %v6803
        %v6805 = vtanh.pop %v6791
        %v6806 = vxor.u32 %v6792, 2147483648
        %v6807 = vmul.f32 %v6806, 1.442695
        %v6808 = vpow.pop %v6807
        %v6809 = vadd.f32 %v6808, 1.0
        %v6810 = vrcp.pop %v6809
        %v6811 = vmul.f32 1.0, %v6810
        %v6812 = vmul.f32 %v6804, %v6509
        %v6813 = vmul.f32 %v6798, %v6805
        %v6814 = vadd.f32 %v6812, %v6813
        %v6815 = vtanh.pop %v6814
        %v6816 = vmul.f32 %v6811, %v6815
        %v6817 = vsel %vm3220, %v6816, %v6508
        %v6818 = vsel %vm3220, %v6814, %v6509
        %6819 = vst [vmem:[#allocation4] sm:$0xff] %v6817
        %6820 = vst [vmem:[#allocation5] sm:$0xff] %v6818
        %v6821 = vld [vmem:[#allocation4] sm:$0xff]
        %v6822 = vld [vmem:[#allocation5] sm:$0xff]
        %v6823 = vld [vmem:[%s3229] sm:$0xff]
        %v6824 = vld [vmem:[%s3229 + $0x8] sm:$0xff]
        %v6825 = vld [vmem:[%s3229 + $0x10] sm:$0xff]
        %v6826 = vld [vmem:[%s3229 + $0x18] sm:$0xff]
        %v6827 = vpack.c.bf16 %v6821, %v6821
        %v6828 = vld [vmem:[%s503] sm:$0xff]
        %v6829 = vld [vmem:[%s503 + $0x8] sm:$0xff]
        %v6830 = vld [vmem:[%s503 + $0x10] sm:$0xff]
        %v6831 = vld [vmem:[%s503 + $0x18] sm:$0xff]
        %v6832 = vld [vmem:[%s503 + $0x20] sm:$0xff]
        %v6833 = vld [vmem:[%s503 + $0x28] sm:$0xff]
        %v6834 = vld [vmem:[%s503 + $0x30] sm:$0xff]
        %v6835 = vld [vmem:[%s503 + $0x38] sm:$0xff]
        %v6836 = vld [vmem:[%s503 + $0x40] sm:$0xff]
        %v6837 = vld [vmem:[%s503 + $0x48] sm:$0xff]
        %v6838 = vld [vmem:[%s503 + $0x50] sm:$0xff]
        %v6839 = vld [vmem:[%s503 + $0x58] sm:$0xff]
        %v6840 = vld [vmem:[%s503 + $0x60] sm:$0xff]
        %v6841 = vld [vmem:[%s503 + $0x68] sm:$0xff]
        %v6842 = vld [vmem:[%s503 + $0x70] sm:$0xff]
        %v6843 = vld [vmem:[%s503 + $0x78] sm:$0xff]
        %v6844 = vld [vmem:[%s503 + $0x80] sm:$0xff]
        %v6845 = vld [vmem:[%s503 + $0x88] sm:$0xff]
        %v6846 = vld [vmem:[%s503 + $0x90] sm:$0xff]
        %v6847 = vld [vmem:[%s503 + $0x98] sm:$0xff]
        %v6848 = vld [vmem:[%s503 + $0xa0] sm:$0xff]
        %v6849 = vld [vmem:[%s503 + $0xa8] sm:$0xff]
        %v6850 = vld [vmem:[%s503 + $0xb0] sm:$0xff]
        %v6851 = vld [vmem:[%s503 + $0xb8] sm:$0xff]
        %v6852 = vld [vmem:[%s503 + $0xc0] sm:$0xff]
        %v6853 = vld [vmem:[%s503 + $0xc8] sm:$0xff]
        %v6854 = vld [vmem:[%s503 + $0xd0] sm:$0xff]
        %v6855 = vld [vmem:[%s503 + $0xd8] sm:$0xff]
        %v6856 = vld [vmem:[%s503 + $0xe0] sm:$0xff]
        %v6857 = vld [vmem:[%s503 + $0xe8] sm:$0xff]
        %v6858 = vld [vmem:[%s503 + $0xf0] sm:$0xff]
        %v6859 = vld [vmem:[%s503 + $0xf8] sm:$0xff]
        %v6892 = vunpack.c.l.b16 %v6828
        %v6893 = vunpack.c.h.b16 %v6828
        %v6894 = vunpack.c.l.b16 %v6829
        %v6895 = vunpack.c.h.b16 %v6829
        %v6896 = vunpack.c.l.b16 %v6830
        %v6897 = vunpack.c.h.b16 %v6830
        %v6898 = vunpack.c.l.b16 %v6831
        %v6899 = vunpack.c.h.b16 %v6831
        %v6900 = vunpack.c.l.b16 %v6832
        %v6901 = vunpack.c.h.b16 %v6832
        %v6902 = vunpack.c.l.b16 %v6833
        %v6903 = vunpack.c.h.b16 %v6833
        %v6904 = vunpack.c.l.b16 %v6834
        %v6905 = vunpack.c.h.b16 %v6834
        %v6906 = vunpack.c.l.b16 %v6835
        %v6907 = vunpack.c.h.b16 %v6835
        %v6908 = vunpack.c.l.b16 %v6836
        %v6909 = vunpack.c.h.b16 %v6836
        %v6910 = vunpack.c.l.b16 %v6837
        %v6911 = vunpack.c.h.b16 %v6837
        %v6912 = vunpack.c.l.b16 %v6838
        %v6913 = vunpack.c.h.b16 %v6838
        %v6914 = vunpack.c.l.b16 %v6839
        %v6915 = vunpack.c.h.b16 %v6839
        %v6916 = vunpack.c.l.b16 %v6840
        %v6917 = vunpack.c.h.b16 %v6840
        %v6918 = vunpack.c.l.b16 %v6841
        %v6919 = vunpack.c.h.b16 %v6841
        %v6920 = vunpack.c.l.b16 %v6842
        %v6921 = vunpack.c.h.b16 %v6842
        %v6922 = vunpack.c.l.b16 %v6843
        %v6923 = vunpack.c.h.b16 %v6843
        %v6924 = vunpack.c.l.b16 %v6844
        %v6925 = vunpack.c.h.b16 %v6844
        %v6926 = vunpack.c.l.b16 %v6845
        %v6927 = vunpack.c.h.b16 %v6845
        %v6928 = vunpack.c.l.b16 %v6846
        %v6929 = vunpack.c.h.b16 %v6846
        %v6930 = vunpack.c.l.b16 %v6847
        %v6931 = vunpack.c.h.b16 %v6847
        %v6932 = vunpack.c.l.b16 %v6848
        %v6933 = vunpack.c.h.b16 %v6848
        %v6934 = vunpack.c.l.b16 %v6849
        %v6935 = vunpack.c.h.b16 %v6849
        %v6936 = vunpack.c.l.b16 %v6850
        %v6937 = vunpack.c.h.b16 %v6850
        %v6938 = vunpack.c.l.b16 %v6851
        %v6939 = vunpack.c.h.b16 %v6851
        %v6940 = vunpack.c.l.b16 %v6852
        %v6941 = vunpack.c.h.b16 %v6852
        %v6942 = vunpack.c.l.b16 %v6853
        %v6943 = vunpack.c.h.b16 %v6853
        %v6944 = vunpack.c.l.b16 %v6854
        %v6945 = vunpack.c.h.b16 %v6854
        %v6946 = vunpack.c.l.b16 %v6855
        %v6947 = vunpack.c.h.b16 %v6855
        %v6948 = vunpack.c.l.b16 %v6856
        %v6949 = vunpack.c.h.b16 %v6856
        %v6950 = vunpack.c.l.b16 %v6857
        %v6951 = vunpack.c.h.b16 %v6857
        %v6952 = vunpack.c.l.b16 %v6858
        %v6953 = vunpack.c.h.b16 %v6858
        %v6954 = vunpack.c.l.b16 %v6859
        %v6955 = vunpack.c.h.b16 %v6859
        %v6956 = vpack.c.b16 %v6896, %v6892
        %v6957 = vpack.c.b16 %v6897, %v6893
        %v6958 = vpack.c.b16 %v6898, %v6894
        %v6959 = vpack.c.b16 %v6899, %v6895
        %v6960 = vpack.c.b16 %v6904, %v6900
        %v6961 = vpack.c.b16 %v6905, %v6901
        %v6962 = vpack.c.b16 %v6906, %v6902
        %v6963 = vpack.c.b16 %v6907, %v6903
        %v6964 = vpack.c.b16 %v6912, %v6908
        %v6965 = vpack.c.b16 %v6913, %v6909
        %v6966 = vpack.c.b16 %v6914, %v6910
        %v6967 = vpack.c.b16 %v6915, %v6911
        %v6968 = vpack.c.b16 %v6920, %v6916
        %v6969 = vpack.c.b16 %v6921, %v6917
        %v6970 = vpack.c.b16 %v6922, %v6918
        %v6971 = vpack.c.b16 %v6923, %v6919
        %v6972 = vpack.c.b16 %v6928, %v6924
        %v6973 = vpack.c.b16 %v6929, %v6925
        %v6974 = vpack.c.b16 %v6930, %v6926
        %v6975 = vpack.c.b16 %v6931, %v6927
        %v6976 = vpack.c.b16 %v6936, %v6932
        %v6977 = vpack.c.b16 %v6937, %v6933
        %v6978 = vpack.c.b16 %v6938, %v6934
        %v6979 = vpack.c.b16 %v6939, %v6935
        %v6980 = vpack.c.b16 %v6944, %v6940
        %v6981 = vpack.c.b16 %v6945, %v6941
        %v6982 = vpack.c.b16 %v6946, %v6942
        %v6983 = vpack.c.b16 %v6947, %v6943
        %v6984 = vpack.c.b16 %v6952, %v6948
        %v6985 = vpack.c.b16 %v6953, %v6949
        %v6986 = vpack.c.b16 %v6954, %v6950
        %v6987 = vpack.c.b16 %v6955, %v6951
        %7020 = vmatprep.subr.bf16.mxu0 %v6957
        %7021 = vmatpush1.bf16.msra.mxu0 %v6956
        %7022 = vmatprep.subr.bf16.mxu0 %v6961
        %7023 = vmatpush1.bf16.msra.mxu0 %v6960
        %7024 = vmatprep.subr.bf16.mxu0 %v6965
        %7025 = vmatpush1.bf16.msra.mxu0 %v6964
        %7026 = vmatprep.subr.bf16.mxu0 %v6969
        %7027 = vmatpush1.bf16.msra.mxu0 %v6968
        %7028 = vmatprep.subr.bf16.mxu0 %v6973
        %7029 = vmatpush1.bf16.msra.mxu0 %v6972
        %7030 = vmatprep.subr.bf16.mxu0 %v6977
        %7031 = vmatpush1.bf16.msra.mxu0 %v6976
        %7032 = vmatprep.subr.bf16.mxu0 %v6981
        %7033 = vmatpush1.bf16.msra.mxu0 %v6980
        %7034 = vmatprep.subr.bf16.mxu0 %v6985
        %7035 = vmatpush1.bf16.msra.mxu0 %v6984
        %7036 = vmatprep.subr.bf16.mxu0 0
        %7037 = vmatpush1.bf16.msra.mxu0 0
        %7038 = vmatprep.subr.bf16.mxu0 0
        %7039 = vmatpush1.bf16.msra.mxu0 0
        %7040 = vmatprep.subr.bf16.mxu0 0
        %7041 = vmatpush1.bf16.msra.mxu0 0
        %7042 = vmatprep.subr.bf16.mxu0 0
        %7043 = vmatpush1.bf16.msra.mxu0 0
        %7044 = vmatprep.subr.bf16.mxu0 0
        %7045 = vmatpush1.bf16.msra.mxu0 0
        %7046 = vmatprep.subr.bf16.mxu0 0
        %7047 = vmatpush1.bf16.msra.mxu0 0
        %7048 = vmatprep.subr.bf16.mxu0 0
        %7049 = vmatpush1.bf16.msra.mxu0 0
        %7050 = vmatprep.subr.bf16.mxu0 0
        %7051 = vmatpush1.bf16.msra.mxu0 0
        %7052 = vmatprep.mubr.bf16.mxu0 0
        %7053 = vmatmul.mubr.bf16.gmra.mrb[0].mxu0 %v6827
        %v7054 = vpop.f32.mrb[0].mxu0
        %v7055 = vadd.f32 0.0, %v7054
        %v7056 = vpop.f32.mrb[0].mxu0
        %v7057 = vadd.f32 0.0, %v7056
        %v7058 = vpop.f32.mrb[0].mxu0
        %v7059 = vpop.f32.mrb[0].mxu0
        %7060 = vdwg.mxu0
        %7061 = vmatprep.subr.bf16.mxu0 %v6959
        %7062 = vmatpush1.bf16.msra.mxu0 %v6958
        %7063 = vmatprep.subr.bf16.mxu0 %v6963
        %7064 = vmatpush1.bf16.msra.mxu0 %v6962
        %7065 = vmatprep.subr.bf16.mxu0 %v6967
        %7066 = vmatpush1.bf16.msra.mxu0 %v6966
        %7067 = vmatprep.subr.bf16.mxu0 %v6971
        %7068 = vmatpush1.bf16.msra.mxu0 %v6970
        %7069 = vmatprep.subr.bf16.mxu0 %v6975
        %7070 = vmatpush1.bf16.msra.mxu0 %v6974
        %7071 = vmatprep.subr.bf16.mxu0 %v6979
        %7072 = vmatpush1.bf16.msra.mxu0 %v6978
        %7073 = vmatprep.subr.bf16.mxu0 %v6983
        %7074 = vmatpush1.bf16.msra.mxu0 %v6982
        %7075 = vmatprep.subr.bf16.mxu0 %v6987
        %7076 = vmatpush1.bf16.msra.mxu0 %v6986
        %7077 = vmatprep.subr.bf16.mxu0 0
        %7078 = vmatpush1.bf16.msra.mxu0 0
        %7079 = vmatprep.subr.bf16.mxu0 0
        %7080 = vmatpush1.bf16.msra.mxu0 0
        %7081 = vmatprep.subr.bf16.mxu0 0
        %7082 = vmatpush1.bf16.msra.mxu0 0
        %7083 = vmatprep.subr.bf16.mxu0 0
        %7084 = vmatpush1.bf16.msra.mxu0 0
        %7085 = vmatprep.subr.bf16.mxu0 0
        %7086 = vmatpush1.bf16.msra.mxu0 0
        %7087 = vmatprep.subr.bf16.mxu0 0
        %7088 = vmatpush1.bf16.msra.mxu0 0
        %7089 = vmatprep.subr.bf16.mxu0 0
        %7090 = vmatpush1.bf16.msra.mxu0 0
        %7091 = vmatprep.subr.bf16.mxu0 0
        %7092 = vmatpush1.bf16.msra.mxu0 0
        %7093 = vmatprep.mubr.bf16.mxu0 0
        %7094 = vmatmul.mubr.bf16.gmra.mrb[0].mxu0 %v6827
        %v7095 = vpop.f32.mrb[0].mxu0
        %v7096 = vadd.f32 0.0, %v7095
        %v7097 = vpop.f32.mrb[0].mxu0
        %v7098 = vadd.f32 0.0, %v7097
        %v7099 = vpop.f32.mrb[0].mxu0
        %v7100 = vpop.f32.mrb[0].mxu0
        %7101 = vdwg.mxu0
        %v7102 = vadd.f32 %v6823, %v7055
        %v7103 = vadd.f32 %v6824, %v7057
        %v7104 = vadd.f32 %v6825, %v7096
        %v7105 = vadd.f32 %v6826, %v7098
        %v7106 = vxor.u32 %v7102, 2147483648
        %v7107 = vmul.f32 %v7106, 1.442695
        %v7108 = vpow.pop %v7107
        %v7109 = vadd.f32 %v7108, 1.0
        %v7110 = vrcp.pop %v7109
        %v7111 = vmul.f32 1.0, %v7110
        %v7112 = vxor.u32 %v7103, 2147483648
        %v7113 = vmul.f32 %v7112, 1.442695
        %v7114 = vpow.pop %v7113
        %v7115 = vadd.f32 %v7114, 1.0
        %v7116 = vrcp.pop %v7115
        %v7117 = vmul.f32 1.0, %v7116
        %v7118 = vtanh.pop %v7104
        %v7119 = vxor.u32 %v7105, 2147483648
        %v7120 = vmul.f32 %v7119, 1.442695
        %v7121 = vpow.pop %v7120
        %v7122 = vadd.f32 %v7121, 1.0
        %v7123 = vrcp.pop %v7122
        %v7124 = vmul.f32 1.0, %v7123
        %v7125 = vmul.f32 %v7117, %v6822
        %v7126 = vmul.f32 %v7111, %v7118
        %v7127 = vadd.f32 %v7125, %v7126
        %v7128 = vtanh.pop %v7127
        %v7129 = vmul.f32 %v7124, %v7128
        %v7130 = vsel %vm3542, %v7129, %v6821
        %v7131 = vsel %vm3542, %v7127, %v6822
        %7132 = vst [vmem:[#allocation4] sm:$0xff] %v7130
        %7133 = vst [vmem:[#allocation5] sm:$0xff] %v7131
        %v7134 = vld [vmem:[#allocation4] sm:$0xff]
        %v7135 = vld [vmem:[#allocation5] sm:$0xff]
        %v7136 = vld [vmem:[%s3551] sm:$0xff]
        %v7137 = vld [vmem:[%s3551 + $0x8] sm:$0xff]
        %v7138 = vld [vmem:[%s3551 + $0x10] sm:$0xff]
        %v7139 = vld [vmem:[%s3551 + $0x18] sm:$0xff]
        %v7140 = vpack.c.bf16 %v7134, %v7134
        %v7141 = vld [vmem:[%s503] sm:$0xff]
        %v7142 = vld [vmem:[%s503 + $0x8] sm:$0xff]
        %v7143 = vld [vmem:[%s503 + $0x10] sm:$0xff]
        %v7144 = vld [vmem:[%s503 + $0x18] sm:$0xff]
        %v7145 = vld [vmem:[%s503 + $0x20] sm:$0xff]
        %v7146 = vld [vmem:[%s503 + $0x28] sm:$0xff]
        %v7147 = vld [vmem:[%s503 + $0x30] sm:$0xff]
        %v7148 = vld [vmem:[%s503 + $0x38] sm:$0xff]
        %v7149 = vld [vmem:[%s503 + $0x40] sm:$0xff]
        %v7150 = vld [vmem:[%s503 + $0x48] sm:$0xff]
        %v7151 = vld [vmem:[%s503 + $0x50] sm:$0xff]
        %v7152 = vld [vmem:[%s503 + $0x58] sm:$0xff]
        %v7153 = vld [vmem:[%s503 + $0x60] sm:$0xff]
        %v7154 = vld [vmem:[%s503 + $0x68] sm:$0xff]
        %v7155 = vld [vmem:[%s503 + $0x70] sm:$0xff]
        %v7156 = vld [vmem:[%s503 + $0x78] sm:$0xff]
        %v7157 = vld [vmem:[%s503 + $0x80] sm:$0xff]
        %v7158 = vld [vmem:[%s503 + $0x88] sm:$0xff]
        %v7159 = vld [vmem:[%s503 + $0x90] sm:$0xff]
        %v7160 = vld [vmem:[%s503 + $0x98] sm:$0xff]
        %v7161 = vld [vmem:[%s503 + $0xa0] sm:$0xff]
        %v7162 = vld [vmem:[%s503 + $0xa8] sm:$0xff]
        %v7163 = vld [vmem:[%s503 + $0xb0] sm:$0xff]
        %v7164 = vld [vmem:[%s503 + $0xb8] sm:$0xff]
        %v7165 = vld [vmem:[%s503 + $0xc0] sm:$0xff]
        %v7166 = vld [vmem:[%s503 + $0xc8] sm:$0xff]
        %v7167 = vld [vmem:[%s503 + $0xd0] sm:$0xff]
        %v7168 = vld [vmem:[%s503 + $0xd8] sm:$0xff]
        %v7169 = vld [vmem:[%s503 + $0xe0] sm:$0xff]
        %v7170 = vld [vmem:[%s503 + $0xe8] sm:$0xff]
        %v7171 = vld [vmem:[%s503 + $0xf0] sm:$0xff]
        %v7172 = vld [vmem:[%s503 + $0xf8] sm:$0xff]
        %v7205 = vunpack.c.l.b16 %v7141
        %v7206 = vunpack.c.h.b16 %v7141
        %v7207 = vunpack.c.l.b16 %v7142
        %v7208 = vunpack.c.h.b16 %v7142
        %v7209 = vunpack.c.l.b16 %v7143
        %v7210 = vunpack.c.h.b16 %v7143
        %v7211 = vunpack.c.l.b16 %v7144
        %v7212 = vunpack.c.h.b16 %v7144
        %v7213 = vunpack.c.l.b16 %v7145
        %v7214 = vunpack.c.h.b16 %v7145
        %v7215 = vunpack.c.l.b16 %v7146
        %v7216 = vunpack.c.h.b16 %v7146
        %v7217 = vunpack.c.l.b16 %v7147
        %v7218 = vunpack.c.h.b16 %v7147
        %v7219 = vunpack.c.l.b16 %v7148
        %v7220 = vunpack.c.h.b16 %v7148
        %v7221 = vunpack.c.l.b16 %v7149
        %v7222 = vunpack.c.h.b16 %v7149
        %v7223 = vunpack.c.l.b16 %v7150
        %v7224 = vunpack.c.h.b16 %v7150
        %v7225 = vunpack.c.l.b16 %v7151
        %v7226 = vunpack.c.h.b16 %v7151
        %v7227 = vunpack.c.l.b16 %v7152
        %v7228 = vunpack.c.h.b16 %v7152
        %v7229 = vunpack.c.l.b16 %v7153
        %v7230 = vunpack.c.h.b16 %v7153
        %v7231 = vunpack.c.l.b16 %v7154
        %v7232 = vunpack.c.h.b16 %v7154
        %v7233 = vunpack.c.l.b16 %v7155
        %v7234 = vunpack.c.h.b16 %v7155
        %v7235 = vunpack.c.l.b16 %v7156
        %v7236 = vunpack.c.h.b16 %v7156
        %v7237 = vunpack.c.l.b16 %v7157
        %v7238 = vunpack.c.h.b16 %v7157
        %v7239 = vunpack.c.l.b16 %v7158
        %v7240 = vunpack.c.h.b16 %v7158
        %v7241 = vunpack.c.l.b16 %v7159
        %v7242 = vunpack.c.h.b16 %v7159
        %v7243 = vunpack.c.l.b16 %v7160
        %v7244 = vunpack.c.h.b16 %v7160
        %v7245 = vunpack.c.l.b16 %v7161
        %v7246 = vunpack.c.h.b16 %v7161
        %v7247 = vunpack.c.l.b16 %v7162
        %v7248 = vunpack.c.h.b16 %v7162
        %v7249 = vunpack.c.l.b16 %v7163
        %v7250 = vunpack.c.h.b16 %v7163
        %v7251 = vunpack.c.l.b16 %v7164
        %v7252 = vunpack.c.h.b16 %v7164
        %v7253 = vunpack.c.l.b16 %v7165
        %v7254 = vunpack.c.h.b16 %v7165
        %v7255 = vunpack.c.l.b16 %v7166
        %v7256 = vunpack.c.h.b16 %v7166
        %v7257 = vunpack.c.l.b16 %v7167
        %v7258 = vunpack.c.h.b16 %v7167
        %v7259 = vunpack.c.l.b16 %v7168
        %v7260 = vunpack.c.h.b16 %v7168
        %v7261 = vunpack.c.l.b16 %v7169
        %v7262 = vunpack.c.h.b16 %v7169
        %v7263 = vunpack.c.l.b16 %v7170
        %v7264 = vunpack.c.h.b16 %v7170
        %v7265 = vunpack.c.l.b16 %v7171
        %v7266 = vunpack.c.h.b16 %v7171
        %v7267 = vunpack.c.l.b16 %v7172
        %v7268 = vunpack.c.h.b16 %v7172
        %v7269 = vpack.c.b16 %v7209, %v7205
        %v7270 = vpack.c.b16 %v7210, %v7206
        %v7271 = vpack.c.b16 %v7211, %v7207
        %v7272 = vpack.c.b16 %v7212, %v7208
        %v7273 = vpack.c.b16 %v7217, %v7213
        %v7274 = vpack.c.b16 %v7218, %v7214
        %v7275 = vpack.c.b16 %v7219, %v7215
        %v7276 = vpack.c.b16 %v7220, %v7216
        %v7277 = vpack.c.b16 %v7225, %v7221
        %v7278 = vpack.c.b16 %v7226, %v7222
        %v7279 = vpack.c.b16 %v7227, %v7223
        %v7280 = vpack.c.b16 %v7228, %v7224
        %v7281 = vpack.c.b16 %v7233, %v7229
        %v7282 = vpack.c.b16 %v7234, %v7230
        %v7283 = vpack.c.b16 %v7235, %v7231
        %v7284 = vpack.c.b16 %v7236, %v7232
        %v7285 = vpack.c.b16 %v7241, %v7237
        %v7286 = vpack.c.b16 %v7242, %v7238
        %v7287 = vpack.c.b16 %v7243, %v7239
        %v7288 = vpack.c.b16 %v7244, %v7240
        %v7289 = vpack.c.b16 %v7249, %v7245
        %v7290 = vpack.c.b16 %v7250, %v7246
        %v7291 = vpack.c.b16 %v7251, %v7247
        %v7292 = vpack.c.b16 %v7252, %v7248
        %v7293 = vpack.c.b16 %v7257, %v7253
        %v7294 = vpack.c.b16 %v7258, %v7254
        %v7295 = vpack.c.b16 %v7259, %v7255
        %v7296 = vpack.c.b16 %v7260, %v7256
        %v7297 = vpack.c.b16 %v7265, %v7261
        %v7298 = vpack.c.b16 %v7266, %v7262
        %v7299 = vpack.c.b16 %v7267, %v7263
        %v7300 = vpack.c.b16 %v7268, %v7264
        %7333 = vmatprep.subr.bf16.mxu0 %v7270
        %7334 = vmatpush1.bf16.msra.mxu0 %v7269
        %7335 = vmatprep.subr.bf16.mxu0 %v7274
        %7336 = vmatpush1.bf16.msra.mxu0 %v7273
        %7337 = vmatprep.subr.bf16.mxu0 %v7278
        %7338 = vmatpush1.bf16.msra.mxu0 %v7277
        %7339 = vmatprep.subr.bf16.mxu0 %v7282
        %7340 = vmatpush1.bf16.msra.mxu0 %v7281
        %7341 = vmatprep.subr.bf16.mxu0 %v7286
        %7342 = vmatpush1.bf16.msra.mxu0 %v7285
        %7343 = vmatprep.subr.bf16.mxu0 %v7290
        %7344 = vmatpush1.bf16.msra.mxu0 %v7289
        %7345 = vmatprep.subr.bf16.mxu0 %v7294
        %7346 = vmatpush1.bf16.msra.mxu0 %v7293
        %7347 = vmatprep.subr.bf16.mxu0 %v7298
        %7348 = vmatpush1.bf16.msra.mxu0 %v7297
        %7349 = vmatprep.subr.bf16.mxu0 0
        %7350 = vmatpush1.bf16.msra.mxu0 0
        %7351 = vmatprep.subr.bf16.mxu0 0
        %7352 = vmatpush1.bf16.msra.mxu0 0
        %7353 = vmatprep.subr.bf16.mxu0 0
        %7354 = vmatpush1.bf16.msra.mxu0 0
        %7355 = vmatprep.subr.bf16.mxu0 0
        %7356 = vmatpush1.bf16.msra.mxu0 0
        %7357 = vmatprep.subr.bf16.mxu0 0
        %7358 = vmatpush1.bf16.msra.mxu0 0
        %7359 = vmatprep.subr.bf16.mxu0 0
        %7360 = vmatpush1.bf16.msra.mxu0 0
        %7361 = vmatprep.subr.bf16.mxu0 0
        %7362 = vmatpush1.bf16.msra.mxu0 0
        %7363 = vmatprep.subr.bf16.mxu0 0
        %7364 = vmatpush1.bf16.msra.mxu0 0
        %7365 = vmatprep.mubr.bf16.mxu0 0
        %7366 = vmatmul.mubr.bf16.gmra.mrb[0].mxu0 %v7140
        %v7367 = vpop.f32.mrb[0].mxu0
        %v7368 = vadd.f32 0.0, %v7367
        %v7369 = vpop.f32.mrb[0].mxu0
        %v7370 = vadd.f32 0.0, %v7369
        %v7371 = vpop.f32.mrb[0].mxu0
        %v7372 = vpop.f32.mrb[0].mxu0
        %7373 = vdwg.mxu0
        %7374 = vmatprep.subr.bf16.mxu0 %v7272
        %7375 = vmatpush1.bf16.msra.mxu0 %v7271
        %7376 = vmatprep.subr.bf16.mxu0 %v7276
        %7377 = vmatpush1.bf16.msra.mxu0 %v7275
        %7378 = vmatprep.subr.bf16.mxu0 %v7280
        %7379 = vmatpush1.bf16.msra.mxu0 %v7279
        %7380 = vmatprep.subr.bf16.mxu0 %v7284
        %7381 = vmatpush1.bf16.msra.mxu0 %v7283
        %7382 = vmatprep.subr.bf16.mxu0 %v7288
        %7383 = vmatpush1.bf16.msra.mxu0 %v7287
        %7384 = vmatprep.subr.bf16.mxu0 %v7292
        %7385 = vmatpush1.bf16.msra.mxu0 %v7291
        %7386 = vmatprep.subr.bf16.mxu0 %v7296
        %7387 = vmatpush1.bf16.msra.mxu0 %v7295
        %7388 = vmatprep.subr.bf16.mxu0 %v7300
        %7389 = vmatpush1.bf16.msra.mxu0 %v7299
        %7390 = vmatprep.subr.bf16.mxu0 0
        %7391 = vmatpush1.bf16.msra.mxu0 0
        %7392 = vmatprep.subr.bf16.mxu0 0
        %7393 = vmatpush1.bf16.msra.mxu0 0
        %7394 = vmatprep.subr.bf16.mxu0 0
        %7395 = vmatpush1.bf16.msra.mxu0 0
        %7396 = vmatprep.subr.bf16.mxu0 0
        %7397 = vmatpush1.bf16.msra.mxu0 0
        %7398 = vmatprep.subr.bf16.mxu0 0
        %7399 = vmatpush1.bf16.msra.mxu0 0
        %7400 = vmatprep.subr.bf16.mxu0 0
        %7401 = vmatpush1.bf16.msra.mxu0 0
        %7402 = vmatprep.subr.bf16.mxu0 0
        %7403 = vmatpush1.bf16.msra.mxu0 0
        %7404 = vmatprep.subr.bf16.mxu0 0
        %7405 = vmatpush1.bf16.msra.mxu0 0
        %7406 = vmatprep.mubr.bf16.mxu0 0
        %7407 = vmatmul.mubr.bf16.gmra.mrb[0].mxu0 %v7140
        %v7408 = vpop.f32.mrb[0].mxu0
        %v7409 = vadd.f32 0.0, %v7408
        %v7410 = vpop.f32.mrb[0].mxu0
        %v7411 = vadd.f32 0.0, %v7410
        %v7412 = vpop.f32.mrb[0].mxu0
        %v7413 = vpop.f32.mrb[0].mxu0
        %7414 = vdwg.mxu0
        %v7415 = vadd.f32 %v7136, %v7368
        %v7416 = vadd.f32 %v7137, %v7370
        %v7417 = vadd.f32 %v7138, %v7409
        %v7418 = vadd.f32 %v7139, %v7411
        %v7419 = vxor.u32 %v7415, 2147483648
        %v7420 = vmul.f32 %v7419, 1.442695
        %v7421 = vpow.pop %v7420
        %v7422 = vadd.f32 %v7421, 1.0
        %v7423 = vrcp.pop %v7422
        %v7424 = vmul.f32 1.0, %v7423
        %v7425 = vxor.u32 %v7416, 2147483648
        %v7426 = vmul.f32 %v7425, 1.442695
        %v7427 = vpow.pop %v7426
        %v7428 = vadd.f32 %v7427, 1.0
        %v7429 = vrcp.pop %v7428
        %v7430 = vmul.f32 1.0, %v7429
        %v7431 = vtanh.pop %v7417
        %v7432 = vxor.u32 %v7418, 2147483648
        %v7433 = vmul.f32 %v7432, 1.442695
        %v7434 = vpow.pop %v7433
        %v7435 = vadd.f32 %v7434, 1.0
        %v7436 = vrcp.pop %v7435
        %v7437 = vmul.f32 1.0, %v7436
        %v7438 = vmul.f32 %v7430, %v7135
        %v7439 = vmul.f32 %v7424, %v7431
        %v7440 = vadd.f32 %v7438, %v7439
        %v7441 = vtanh.pop %v7440
        %v7442 = vmul.f32 %v7437, %v7441
        %v7443 = vsel %vm3864, %v7442, %v7134
        %v7444 = vsel %vm3864, %v7440, %v7135
        %7445 = vst [vmem:[#allocation4] sm:$0xff] %v7443
        %7446 = vst [vmem:[#allocation5] sm:$0xff] %v7444
        %v7447 = vld [vmem:[#allocation4] sm:$0xff]
        %v7448 = vld [vmem:[#allocation5] sm:$0xff]
        %v7449 = vld [vmem:[%s3873] sm:$0xff]
        %v7450 = vld [vmem:[%s3873 + $0x8] sm:$0xff]
        %v7451 = vld [vmem:[%s3873 + $0x10] sm:$0xff]
        %v7452 = vld [vmem:[%s3873 + $0x18] sm:$0xff]
        %v7453 = vpack.c.bf16 %v7447, %v7447
        %v7454 = vld [vmem:[%s503] sm:$0xff]
        %v7455 = vld [vmem:[%s503 + $0x8] sm:$0xff]
        %v7456 = vld [vmem:[%s503 + $0x10] sm:$0xff]
        %v7457 = vld [vmem:[%s503 + $0x18] sm:$0xff]
        %v7458 = vld [vmem:[%s503 + $0x20] sm:$0xff]
        %v7459 = vld [vmem:[%s503 + $0x28] sm:$0xff]
        %v7460 = vld [vmem:[%s503 + $0x30] sm:$0xff]
        %v7461 = vld [vmem:[%s503 + $0x38] sm:$0xff]
        %v7462 = vld [vmem:[%s503 + $0x40] sm:$0xff]
        %v7463 = vld [vmem:[%s503 + $0x48] sm:$0xff]
        %v7464 = vld [vmem:[%s503 + $0x50] sm:$0xff]
        %v7465 = vld [vmem:[%s503 + $0x58] sm:$0xff]
        %v7466 = vld [vmem:[%s503 + $0x60] sm:$0xff]
        %v7467 = vld [vmem:[%s503 + $0x68] sm:$0xff]
        %v7468 = vld [vmem:[%s503 + $0x70] sm:$0xff]
        %v7469 = vld [vmem:[%s503 + $0x78] sm:$0xff]
        %v7470 = vld [vmem:[%s503 + $0x80] sm:$0xff]
        %v7471 = vld [vmem:[%s503 + $0x88] sm:$0xff]
        %v7472 = vld [vmem:[%s503 + $0x90] sm:$0xff]
        %v7473 = vld [vmem:[%s503 + $0x98] sm:$0xff]
        %v7474 = vld [vmem:[%s503 + $0xa0] sm:$0xff]
        %v7475 = vld [vmem:[%s503 + $0xa8] sm:$0xff]
        %v7476 = vld [vmem:[%s503 + $0xb0] sm:$0xff]
        %v7477 = vld [vmem:[%s503 + $0xb8] sm:$0xff]
        %v7478 = vld [vmem:[%s503 + $0xc0] sm:$0xff]
        %v7479 = vld [vmem:[%s503 + $0xc8] sm:$0xff]
        %v7480 = vld [vmem:[%s503 + $0xd0] sm:$0xff]
        %v7481 = vld [vmem:[%s503 + $0xd8] sm:$0xff]
        %v7482 = vld [vmem:[%s503 + $0xe0] sm:$0xff]
        %v7483 = vld [vmem:[%s503 + $0xe8] sm:$0xff]
        %v7484 = vld [vmem:[%s503 + $0xf0] sm:$0xff]
        %v7485 = vld [vmem:[%s503 + $0xf8] sm:$0xff]
        %v7518 = vunpack.c.l.b16 %v7454
        %v7519 = vunpack.c.h.b16 %v7454
        %v7520 = vunpack.c.l.b16 %v7455
        %v7521 = vunpack.c.h.b16 %v7455
        %v7522 = vunpack.c.l.b16 %v7456
        %v7523 = vunpack.c.h.b16 %v7456
        %v7524 = vunpack.c.l.b16 %v7457
        %v7525 = vunpack.c.h.b16 %v7457
        %v7526 = vunpack.c.l.b16 %v7458
        %v7527 = vunpack.c.h.b16 %v7458
        %v7528 = vunpack.c.l.b16 %v7459
        %v7529 = vunpack.c.h.b16 %v7459
        %v7530 = vunpack.c.l.b16 %v7460
        %v7531 = vunpack.c.h.b16 %v7460
        %v7532 = vunpack.c.l.b16 %v7461
        %v7533 = vunpack.c.h.b16 %v7461
        %v7534 = vunpack.c.l.b16 %v7462
        %v7535 = vunpack.c.h.b16 %v7462
        %v7536 = vunpack.c.l.b16 %v7463
        %v7537 = vunpack.c.h.b16 %v7463
        %v7538 = vunpack.c.l.b16 %v7464
        %v7539 = vunpack.c.h.b16 %v7464
        %v7540 = vunpack.c.l.b16 %v7465
        %v7541 = vunpack.c.h.b16 %v7465
        %v7542 = vunpack.c.l.b16 %v7466
        %v7543 = vunpack.c.h.b16 %v7466
        %v7544 = vunpack.c.l.b16 %v7467
        %v7545 = vunpack.c.h.b16 %v7467
        %v7546 = vunpack.c.l.b16 %v7468
        %v7547 = vunpack.c.h.b16 %v7468
        %v7548 = vunpack.c.l.b16 %v7469
        %v7549 = vunpack.c.h.b16 %v7469
        %v7550 = vunpack.c.l.b16 %v7470
        %v7551 = vunpack.c.h.b16 %v7470
        %v7552 = vunpack.c.l.b16 %v7471
        %v7553 = vunpack.c.h.b16 %v7471
        %v7554 = vunpack.c.l.b16 %v7472
        %v7555 = vunpack.c.h.b16 %v7472
        %v7556 = vunpack.c.l.b16 %v7473
        %v7557 = vunpack.c.h.b16 %v7473
        %v7558 = vunpack.c.l.b16 %v7474
        %v7559 = vunpack.c.h.b16 %v7474
        %v7560 = vunpack.c.l.b16 %v7475
        %v7561 = vunpack.c.h.b16 %v7475
        %v7562 = vunpack.c.l.b16 %v7476
        %v7563 = vunpack.c.h.b16 %v7476
        %v7564 = vunpack.c.l.b16 %v7477
        %v7565 = vunpack.c.h.b16 %v7477
        %v7566 = vunpack.c.l.b16 %v7478
        %v7567 = vunpack.c.h.b16 %v7478
        %v7568 = vunpack.c.l.b16 %v7479
        %v7569 = vunpack.c.h.b16 %v7479
        %v7570 = vunpack.c.l.b16 %v7480
        %v7571 = vunpack.c.h.b16 %v7480
        %v7572 = vunpack.c.l.b16 %v7481
        %v7573 = vunpack.c.h.b16 %v7481
        %v7574 = vunpack.c.l.b16 %v7482
        %v7575 = vunpack.c.h.b16 %v7482
        %v7576 = vunpack.c.l.b16 %v7483
        %v7577 = vunpack.c.h.b16 %v7483
        %v7578 = vunpack.c.l.b16 %v7484
        %v7579 = vunpack.c.h.b16 %v7484
        %v7580 = vunpack.c.l.b16 %v7485
        %v7581 = vunpack.c.h.b16 %v7485
        %v7582 = vpack.c.b16 %v7522, %v7518
        %v7583 = vpack.c.b16 %v7523, %v7519
        %v7584 = vpack.c.b16 %v7524, %v7520
        %v7585 = vpack.c.b16 %v7525, %v7521
        %v7586 = vpack.c.b16 %v7530, %v7526
        %v7587 = vpack.c.b16 %v7531, %v7527
        %v7588 = vpack.c.b16 %v7532, %v7528
        %v7589 = vpack.c.b16 %v7533, %v7529
        %v7590 = vpack.c.b16 %v7538, %v7534
        %v7591 = vpack.c.b16 %v7539, %v7535
        %v7592 = vpack.c.b16 %v7540, %v7536
        %v7593 = vpack.c.b16 %v7541, %v7537
        %v7594 = vpack.c.b16 %v7546, %v7542
        %v7595 = vpack.c.b16 %v7547, %v7543
        %v7596 = vpack.c.b16 %v7548, %v7544
        %v7597 = vpack.c.b16 %v7549, %v7545
        %v7598 = vpack.c.b16 %v7554, %v7550
        %v7599 = vpack.c.b16 %v7555, %v7551
        %v7600 = vpack.c.b16 %v7556, %v7552
        %v7601 = vpack.c.b16 %v7557, %v7553
        %v7602 = vpack.c.b16 %v7562, %v7558
        %v7603 = vpack.c.b16 %v7563, %v7559
        %v7604 = vpack.c.b16 %v7564, %v7560
        %v7605 = vpack.c.b16 %v7565, %v7561
        %v7606 = vpack.c.b16 %v7570, %v7566
        %v7607 = vpack.c.b16 %v7571, %v7567
        %v7608 = vpack.c.b16 %v7572, %v7568
        %v7609 = vpack.c.b16 %v7573, %v7569
        %v7610 = vpack.c.b16 %v7578, %v7574
        %v7611 = vpack.c.b16 %v7579, %v7575
        %v7612 = vpack.c.b16 %v7580, %v7576
        %v7613 = vpack.c.b16 %v7581, %v7577
        %7646 = vmatprep.subr.bf16.mxu0 %v7583
        %7647 = vmatpush1.bf16.msra.mxu0 %v7582
        %7648 = vmatprep.subr.bf16.mxu0 %v7587
        %7649 = vmatpush1.bf16.msra.mxu0 %v7586
        %7650 = vmatprep.subr.bf16.mxu0 %v7591
        %7651 = vmatpush1.bf16.msra.mxu0 %v7590
        %7652 = vmatprep.subr.bf16.mxu0 %v7595
        %7653 = vmatpush1.bf16.msra.mxu0 %v7594
        %7654 = vmatprep.subr.bf16.mxu0 %v7599
        %7655 = vmatpush1.bf16.msra.mxu0 %v7598
        %7656 = vmatprep.subr.bf16.mxu0 %v7603
        %7657 = vmatpush1.bf16.msra.mxu0 %v7602
        %7658 = vmatprep.subr.bf16.mxu0 %v7607
        %7659 = vmatpush1.bf16.msra.mxu0 %v7606
        %7660 = vmatprep.subr.bf16.mxu0 %v7611
        %7661 = vmatpush1.bf16.msra.mxu0 %v7610
        %7662 = vmatprep.subr.bf16.mxu0 0
        %7663 = vmatpush1.bf16.msra.mxu0 0
        %7664 = vmatprep.subr.bf16.mxu0 0
        %7665 = vmatpush1.bf16.msra.mxu0 0
        %7666 = vmatprep.subr.bf16.mxu0 0
        %7667 = vmatpush1.bf16.msra.mxu0 0
        %7668 = vmatprep.subr.bf16.mxu0 0
        %7669 = vmatpush1.bf16.msra.mxu0 0
        %7670 = vmatprep.subr.bf16.mxu0 0
        %7671 = vmatpush1.bf16.msra.mxu0 0
        %7672 = vmatprep.subr.bf16.mxu0 0
        %7673 = vmatpush1.bf16.msra.mxu0 0
        %7674 = vmatprep.subr.bf16.mxu0 0
        %7675 = vmatpush1.bf16.msra.mxu0 0
        %7676 = vmatprep.subr.bf16.mxu0 0
        %7677 = vmatpush1.bf16.msra.mxu0 0
        %7678 = vmatprep.mubr.bf16.mxu0 0
        %7679 = vmatmul.mubr.bf16.gmra.mrb[0].mxu0 %v7453
        %v7680 = vpop.f32.mrb[0].mxu0
        %v7681 = vadd.f32 0.0, %v7680
        %v7682 = vpop.f32.mrb[0].mxu0
        %v7683 = vadd.f32 0.0, %v7682
        %v7684 = vpop.f32.mrb[0].mxu0
        %v7685 = vpop.f32.mrb[0].mxu0
        %7686 = vdwg.mxu0
        %7687 = vmatprep.subr.bf16.mxu0 %v7585
        %7688 = vmatpush1.bf16.msra.mxu0 %v7584
        %7689 = vmatprep.subr.bf16.mxu0 %v7589
        %7690 = vmatpush1.bf16.msra.mxu0 %v7588
        %7691 = vmatprep.subr.bf16.mxu0 %v7593
        %7692 = vmatpush1.bf16.msra.mxu0 %v7592
        %7693 = vmatprep.subr.bf16.mxu0 %v7597
        %7694 = vmatpush1.bf16.msra.mxu0 %v7596
        %7695 = vmatprep.subr.bf16.mxu0 %v7601
        %7696 = vmatpush1.bf16.msra.mxu0 %v7600
        %7697 = vmatprep.subr.bf16.mxu0 %v7605
        %7698 = vmatpush1.bf16.msra.mxu0 %v7604
        %7699 = vmatprep.subr.bf16.mxu0 %v7609
        %7700 = vmatpush1.bf16.msra.mxu0 %v7608
        %7701 = vmatprep.subr.bf16.mxu0 %v7613
        %7702 = vmatpush1.bf16.msra.mxu0 %v7612
        %7703 = vmatprep.subr.bf16.mxu0 0
        %7704 = vmatpush1.bf16.msra.mxu0 0
        %7705 = vmatprep.subr.bf16.mxu0 0
        %7706 = vmatpush1.bf16.msra.mxu0 0
        %7707 = vmatprep.subr.bf16.mxu0 0
        %7708 = vmatpush1.bf16.msra.mxu0 0
        %7709 = vmatprep.subr.bf16.mxu0 0
        %7710 = vmatpush1.bf16.msra.mxu0 0
        %7711 = vmatprep.subr.bf16.mxu0 0
        %7712 = vmatpush1.bf16.msra.mxu0 0
        %7713 = vmatprep.subr.bf16.mxu0 0
        %7714 = vmatpush1.bf16.msra.mxu0 0
        %7715 = vmatprep.subr.bf16.mxu0 0
        %7716 = vmatpush1.bf16.msra.mxu0 0
        %7717 = vmatprep.subr.bf16.mxu0 0
        %7718 = vmatpush1.bf16.msra.mxu0 0
        %7719 = vmatprep.mubr.bf16.mxu0 0
        %7720 = vmatmul.mubr.bf16.gmra.mrb[0].mxu0 %v7453
        %v7721 = vpop.f32.mrb[0].mxu0
        %v7722 = vadd.f32 0.0, %v7721
        %v7723 = vpop.f32.mrb[0].mxu0
        %v7724 = vadd.f32 0.0, %v7723
        %v7725 = vpop.f32.mrb[0].mxu0
        %v7726 = vpop.f32.mrb[0].mxu0
        %7727 = vdwg.mxu0
        %v7728 = vadd.f32 %v7449, %v7681
        %v7729 = vadd.f32 %v7450, %v7683
        %v7730 = vadd.f32 %v7451, %v7722
        %v7731 = vadd.f32 %v7452, %v7724
        %v7732 = vxor.u32 %v7728, 2147483648
        %v7733 = vmul.f32 %v7732, 1.442695
        %v7734 = vpow.pop %v7733
        %v7735 = vadd.f32 %v7734, 1.0
        %v7736 = vrcp.pop %v7735
        %v7737 = vmul.f32 1.0, %v7736
        %v7738 = vxor.u32 %v7729, 2147483648
        %v7739 = vmul.f32 %v7738, 1.442695
        %v7740 = vpow.pop %v7739
        %v7741 = vadd.f32 %v7740, 1.0
        %v7742 = vrcp.pop %v7741
        %v7743 = vmul.f32 1.0, %v7742
        %v7744 = vtanh.pop %v7730
        %v7745 = vxor.u32 %v7731, 2147483648
        %v7746 = vmul.f32 %v7745, 1.442695
        %v7747 = vpow.pop %v7746
        %v7748 = vadd.f32 %v7747, 1.0
        %v7749 = vrcp.pop %v7748
        %v7750 = vmul.f32 1.0, %v7749
        %v7751 = vmul.f32 %v7743, %v7448
        %v7752 = vmul.f32 %v7737, %v7744
        %v7753 = vadd.f32 %v7751, %v7752
        %v7754 = vtanh.pop %v7753
        %v7755 = vmul.f32 %v7750, %v7754
        %v7756 = vsel %vm4186, %v7755, %v7447
        %v7757 = vsel %vm4186, %v7753, %v7448
        %7758 = vst [vmem:[#allocation4] sm:$0xff] %v7756
        %7759 = vst [vmem:[#allocation5] sm:$0xff] %v7757
        %v7760 = vld [vmem:[#allocation4] sm:$0xff]
        %v7761 = vld [vmem:[%s512] sm:$0xff]
        %v7762 = vld [vmem:[%s512 + $0x8] sm:$0xff]
        %v7763 = vld [vmem:[%s512 + $0x10] sm:$0xff]
        %v7764 = vld [vmem:[%s512 + $0x18] sm:$0xff]
        %v7765 = vld [vmem:[%s512 + $0x20] sm:$0xff]
        %v7766 = vld [vmem:[%s512 + $0x28] sm:$0xff]
        %v7767 = vld [vmem:[%s512 + $0x30] sm:$0xff]
        %v7768 = vld [vmem:[%s512 + $0x38] sm:$0xff]
        %v7769 = vld [vmem:[%s512 + $0x40] sm:$0xff]
        %v7770 = vld [vmem:[%s512 + $0x48] sm:$0xff]
        %v7771 = vld [vmem:[%s512 + $0x50] sm:$0xff]
        %v7772 = vld [vmem:[%s512 + $0x58] sm:$0xff]
        %v7773 = vld [vmem:[%s512 + $0x60] sm:$0xff]
        %v7774 = vld [vmem:[%s512 + $0x68] sm:$0xff]
        %v7775 = vld [vmem:[%s512 + $0x70] sm:$0xff]
        %v7776 = vld [vmem:[%s512 + $0x78] sm:$0xff]
        %7777 = vmatprep.subr.mxu0 0.0
        %7778 = vmatpush1.msra.mxu0 %v7761
        %7779 = vmatprep.subr.mxu0 0.0
        %7780 = vmatpush1.msra.mxu0 %v7762
        %7781 = vmatprep.subr.mxu0 0.0
        %7782 = vmatpush1.msra.mxu0 %v7763
        %7783 = vmatprep.subr.mxu0 0.0
        %7784 = vmatpush1.msra.mxu0 %v7764
        %7785 = vmatprep.subr.mxu0 0.0
        %7786 = vmatpush1.msra.mxu0 %v7765
        %7787 = vmatprep.subr.mxu0 0.0
        %7788 = vmatpush1.msra.mxu0 %v7766
        %7789 = vmatprep.subr.mxu0 0.0
        %7790 = vmatpush1.msra.mxu0 %v7767
        %7791 = vmatprep.subr.mxu0 0.0
        %7792 = vmatpush1.msra.mxu0 %v7768
        %7793 = vmatprep.subr.mxu0 0.0
        %7794 = vmatpush1.msra.mxu0 %v7769
        %7795 = vmatprep.subr.mxu0 0.0
        %7796 = vmatpush1.msra.mxu0 %v7770
        %7797 = vmatprep.subr.mxu0 0.0
        %7798 = vmatpush1.msra.mxu0 %v7771
        %7799 = vmatprep.subr.mxu0 0.0
        %7800 = vmatpush1.msra.mxu0 %v7772
        %7801 = vmatprep.subr.mxu0 0.0
        %7802 = vmatpush1.msra.mxu0 %v7773
        %7803 = vmatprep.subr.mxu0 0.0
        %7804 = vmatpush1.msra.mxu0 %v7774
        %7805 = vmatprep.subr.mxu0 0.0
        %7806 = vmatpush1.msra.mxu0 %v7775
        %7807 = vmatprep.subr.mxu0 0.0
        %7808 = vmatpush1.msra.mxu0 %v7776
        %7809 = vmatprep.subr.mxu0 0.0
        %7810 = vmatpush1.msra.mxu0 0.0
        %7811 = vmatprep.subr.mxu0 0.0
        %7812 = vmatpush1.msra.mxu0 0.0
        %7813 = vmatprep.subr.mxu0 0.0
        %7814 = vmatpush1.msra.mxu0 0.0
        %7815 = vmatprep.subr.mxu0 0.0
        %7816 = vmatpush1.msra.mxu0 0.0
        %7817 = vmatprep.subr.mxu0 0.0
        %7818 = vmatpush1.msra.mxu0 0.0
        %7819 = vmatprep.subr.mxu0 0.0
        %7820 = vmatpush1.msra.mxu0 0.0
        %7821 = vmatprep.subr.mxu0 0.0
        %7822 = vmatpush1.msra.mxu0 0.0
        %7823 = vmatprep.subr.mxu0 0.0
        %7824 = vmatpush1.msra.mxu0 0.0
        %7825 = vmatprep.subr.mxu0 0.0
        %7826 = vmatpush1.msra.mxu0 0.0
        %7827 = vmatprep.subr.mxu0 0.0
        %7828 = vmatpush1.msra.mxu0 0.0
        %7829 = vmatprep.subr.mxu0 0.0
        %7830 = vmatpush1.msra.mxu0 0.0
        %7831 = vmatprep.subr.mxu0 0.0
        %7832 = vmatpush1.msra.mxu0 0.0
        %7833 = vmatprep.subr.mxu0 0.0
        %7834 = vmatpush1.msra.mxu0 0.0
        %7835 = vmatprep.subr.mxu0 0.0
        %7836 = vmatpush1.msra.mxu0 0.0
        %7837 = vmatprep.subr.mxu0 0.0
        %7838 = vmatpush1.msra.mxu0 0.0
        %7839 = vmatprep.subr.mxu0 0.0
        %7840 = vmatpush1.msra.mxu0 0.0
        %7841 = vmatprep.mubr.f32.mxu0 0.0
        %7842 = vmatmul.mubr.f32.gmra.mrb[0].mxu0 %v7760
        %v7843 = vpop.f32.mrb[0].mxu0
        %v7844 = vadd.f32 0.0, %v7843
        %v7845 = vpop.f32.mrb[0].mxu0
        %7846 = vdwg.mxu0
        %7847 = vst [vmem:[%s583] sm:$0xff] %v7844
        %s7848 = sand.u32 %s277, 1
        %s7849 = scalar_lea.sflag [#allocation8], %s7848
        %s7850 = sand.u32 %s277, 1
        %s7851 = smul.addr %s7850, 8
        %s7852 = scalar_lea.vmem [#allocation17], %s7851
        // Predicated region
        $region81: #{tpu_custom_call.1} parent=55 // pred_check
          %p7853 = pneg %p287
        $region82: #{tpu_custom_call.1} parent=55 // pred_check_branch
          %7855 = sbr.rel (%p7853) target = $region84
        $region83: #{tpu_custom_call.1} parent=55 // pred_region
          %s7857 = ssub.s32 128, 128
          %7858 = vsyncadd %s7849, %s7857
          %s7859 = smul.addr %s35, 128
          %s7860 = scalar_lea.hbm %s9, %s7859
          %s7862 = sshll.u32 %s7852, 4
          %s7863 = int_to_ptr.vmem [resolvable:$true] %s7862
          %7865 = dma.vmem_to_hbm [thread:$0]  %s7863, 128, %s7860, %s7849
        $region84: #{tpu_custom_call.1} parent=55 // pred_fallthru
          _
      $region56: #{tpu_custom_call.1} parent=5 // pred_fallthru
        _
      %p7866 = scmp.le.s32.totalorder 2, %s30
      // Predicated region
      $region85: #{tpu_custom_call.1} parent=5 // pred_check
        %p7867 = pneg %p7866
      $region86: #{tpu_custom_call.1} parent=5 // pred_check_branch
        %7869 = sbr.rel (%p7867) target = $region88
      $region87: #{tpu_custom_call.1} parent=5 // pred_region
        %s7870 = ssub.s32 %s30, 2
        // Predicated region
        $region89: #{tpu_custom_call.1} parent=87 // pred_check
          %p7871 = pneg %p293
        $region90: #{tpu_custom_call.1} parent=87 // pred_check_branch
          %7873 = sbr.rel (%p7871) target = $region92
        $region91: #{tpu_custom_call.1} parent=87 // pred_region
          %s7874 = sand.u32 %s278, 1
          %s7875 = scalar_lea.sflag [#allocation8], %s7874
          %s7876 = sand.u32 %s278, 1
          %s7877 = smul.addr %s7876, 8
          %s7878 = scalar_lea.vmem [#allocation17], %s7877
          %7879 = dma.done %s7875, 128
        $region92: #{tpu_custom_call.1} parent=87 // pred_fallthru
          _
      $region88: #{tpu_custom_call.1} parent=5 // pred_fallthru
        _
    $region6: #{tpu_custom_call.1} parent=1 // loop_footer
      %s34 = sadd.s32 1, %s30
    $region7: #{tpu_custom_call.1} parent=1 // loop_footer_branch
      %29 = sbr.rel target = $region3
    $region8: #{tpu_custom_call.1} parent=1 // loop_exit
      _
    %7880 = vsyncpa [#allocation7], 1
    %s7881 = scalar_lea.sflag [#allocation7], 1
    %7882 = vsyncpa %s7881, 1
    %7883 = vsyncpa [#allocation10], 1
    %s7884 = scalar_lea.sflag [#allocation10], 1
    %7885 = vsyncpa %s7884, 1
    %7886 = vsyncpa [#allocation13], 1
    %s7887 = scalar_lea.sflag [#allocation13], 1
    %7888 = vsyncpa %s7887, 1
    %7889 = vsyncpa [#allocation16], 1
    %s7890 = scalar_lea.sflag [#allocation16], 1
    %7891 = vsyncpa %s7890, 1
    %7892 = vsyncpa [#allocation8], 1
    %s7893 = scalar_lea.sflag [#allocation8], 1
    %7894 = vsyncpa %s7893, 1

</llo_original>
